<compile_context>
chip_gen: v6e
topology: v6e:2x2x1
jax: 0.10.0
libtpu: 0.0.40
codegen_flags: <defaults>
</compile_context>

<pallas_src>
import functools

import numpy as np
import jax
import jax.numpy as jnp
from jax.experimental import pallas as pl
from jax.experimental.pallas import tpu as pltpu


# Images per grid step.  14*_TB is conv1's MXU M dimension: _TB=8 targets the
# 128-row MXU on v5e; raise to 16-32 on v6e/v7x (256-row MXU, ample VMEM).
# Must be a multiple of 8 (sublane alignment of the in-kernel row slabs).
_TB = 8

# Fixed layer geometry implied by Linear(32*7*7, 10): 1x28x28 input.
_K1 = 5 * 2 * 16          # 160: conv1 contraction dim (dy-merged, parity-split cols)
_N1 = 2 * 9 * 16          # 288: conv1 output lanes = conv2 parity-split padded input
_K2 = _N1                 # 288: conv2 contraction dim
_N2 = 7 * 32              # 224: conv2 pooled output lanes (x-major, channel-minor)
_NP = 128                 # padded logits (lane-dense output)


# ------------------------------ fused kernel --------------------------------

def _cnn_fused_kernel(x_ref, wb1_ref, b1_ref, wb2_ref, b2_ref, wfc_ref, bfc_ref,
                      o_ref, a1_ref, *, tb):
    """One batch block of `tb` images: conv1+pool -> conv2+pool -> FC.

    x_ref  : (1, 2, 14*tb, 160) bf16  dy-merged conv1 lhs; row = r2*tb + img,
                                      phase qr on dim 1, lane = dy*32 + pc*16 + wh
    wb1_ref: (2, 160, 288)      bf16  conv1 banded weights per col-phase qc;
                                      output lanes already in conv2-input layout
    b1_ref : (1, 288)           f32   conv1 bias (0 at conv2-input padding lanes)
    wb2_ref: (2, 5, 288, 224)   bf16  conv2 banded weights [qc, dy]
    b2_ref : (1, 224)           f32
    wfc_ref: (7, 224, 128)      bf16  FC weights per conv2 pooled row y
    bfc_ref: (1, 128)           f32
    o_ref  : (1, tb, 128)       f32   padded logits
    a1_ref : (2, 9*tb, 288)     bf16  scratch: conv2 parity-split padded input,
                                      row = half_row*tb + img
    """
    # Zero the conv2-input padding rows (half-rows 0 and 8 of both parities).
    zero_slab = jnp.zeros((tb, _N1), jnp.bfloat16)
    for pr in range(2):
        a1_ref[pr, 0:tb, :] = zero_slab
        a1_ref[pr, 8 * tb:9 * tb, :] = zero_slab

    # ---- conv1 (5x5, pad 2) + bias + ReLU + 2x2 maxpool: 4 MXU dots total.
    pooled1 = None
    for qr in range(2):                       # pooling-row phase
        lhs = x_ref[0, qr]                    # (14*tb, 160) bf16
        for qc in range(2):                   # pooling-col phase
            acc = jnp.dot(lhs, wb1_ref[qc], preferred_element_type=jnp.float32)
            pooled1 = acc if pooled1 is None else jnp.maximum(pooled1, acc)
    # bias/ReLU commute with the pooling max (bias constant per channel).
    a1 = jnp.maximum(pooled1 + b1_ref[...], 0.0).astype(jnp.bfloat16)   # (14*tb, 288)

    # Scatter pooled rows into conv2's parity-split padded row layout (VMEM only).
    for r2 in range(14):
        rh = r2 // 2 + 1                      # padded half-row (1..7); 0/8 stay zero
        a1_ref[r2 % 2, rh * tb:(rh + 1) * tb, :] = a1[r2 * tb:(r2 + 1) * tb, :]

    # ---- conv2 (5x5, pad 2) + bias + ReLU + 2x2 maxpool: 20 MXU dots.
    pooled2 = None
    for qr in range(2):
        for qc in range(2):
            acc = None
            for dy in range(5):
                pr = (qr + dy) % 2
                r0 = (qr + dy) // 2
                lhs = a1_ref[pr, r0 * tb:(r0 + 7) * tb, :]          # (7*tb, 288)
                c = jnp.dot(lhs, wb2_ref[qc, dy],
                            preferred_element_type=jnp.float32)
                acc = c if acc is None else acc + c
            pooled2 = acc if pooled2 is None else jnp.maximum(pooled2, acc)
    act = jnp.maximum(pooled2 + b2_ref[...], 0.0).astype(jnp.bfloat16)  # (7*tb, 224)

    # ---- fused FC epilogue: logits[img] = sum_y act[y*tb+img] @ wfc[y] (M = tb).
    logits = None
    for y in range(7):
        c = jnp.dot(act[y * tb:(y + 1) * tb, :], wfc_ref[y],
                    preferred_element_type=jnp.float32)
        logits = c if logits is None else logits + c
    o_ref[0] = (logits + bfc_ref[...]).astype(o_ref.dtype)


def _fused_call(x1, wb1, b1, wb2, b2, wfc, bfc, tb):
    grid_n = x1.shape[0]
    return pl.pallas_call(
        functools.partial(_cnn_fused_kernel, tb=tb),
        out_shape=jax.ShapeDtypeStruct((grid_n, tb, _NP), jnp.float32),
        grid=(grid_n,),
        in_specs=[
            pl.BlockSpec((1, 2, 14 * tb, _K1), lambda i: (i, 0, 0, 0)),
            pl.BlockSpec((2, _K1, _N1), lambda i: (0, 0, 0)),
            pl.BlockSpec((1, _N1), lambda i: (0, 0)),
            pl.BlockSpec((2, 5, _K2, _N2), lambda i: (0, 0, 0, 0)),
            pl.BlockSpec((1, _N2), lambda i: (0, 0)),
            pl.BlockSpec((7, _N2, _NP), lambda i: (0, 0, 0)),
            pl.BlockSpec((1, _NP), lambda i: (0, 0)),
        ],
        out_specs=pl.BlockSpec((1, tb, _NP), lambda i: (i, 0, 0)),
        scratch_shapes=[pltpu.VMEM((2, 9 * tb, _N1), jnp.bfloat16)],
        compiler_params=pltpu.CompilerParams(
            dimension_semantics=("parallel",),
            vmem_limit_bytes=32 * 1024 * 1024),
    )(x1, wb1, b1, wb2, b2, wfc, bfc)


# ------------------------ one-time weight re-layout --------------------------

def _build_conv1_weights(w_oihw, b):
    """Banded, dy-merged conv1 weights whose output lanes are laid out directly
    as conv2's parity-split padded input: n = pc*(9*16) + wh*16 + co, where
    wh in [1, 7] are data columns and wh in {0, 8} stay zero (padding)."""
    w = np.asarray(jax.device_get(w_oihw), np.float32)        # (16, 1, 5, 5)
    bias_src = np.asarray(jax.device_get(b), np.float32)      # (16,)
    cout = w.shape[0]
    wb = np.zeros((2, _K1, _N1), np.float32)                  # [qc, dy*32+pc*16+wh, n]
    bias = np.zeros((_N1,), np.float32)
    for m2 in range(14):                                       # conv1 pooled output col
        n0 = (m2 % 2) * (9 * cout) + (m2 // 2 + 1) * cout
        bias[n0:n0 + cout] = bias_src
        for qc in range(2):
            for dy in range(5):
                for dx in range(5):
                    col = 2 * m2 + qc + dx                     # padded 32-wide input col
                    j = dy * 32 + (col % 2) * 16 + col // 2
                    wb[qc, j, n0:n0 + cout] = w[:, 0, dy, dx]
    return jnp.asarray(wb, jnp.bfloat16), jnp.asarray(bias[None, :], jnp.float32)


def _build_conv2_weights(w_oihw, b):
    """Banded conv2 weights [qc, dy]: rows index the parity-split padded conv2
    input (pc*144 + wh*16 + ci), columns the pooled output (m2*32 + co)."""
    w = np.asarray(jax.device_get(w_oihw), np.float32)        # (32, 16, 5, 5)
    bias_src = np.asarray(jax.device_get(b), np.float32)
    cout, cin = w.shape[0], w.shape[1]
    wb = np.zeros((2, 5, _K2, _N2), np.float32)
    bias = np.zeros((_N2,), np.float32)
    for m2 in range(7):
        bias[m2 * cout:(m2 + 1) * cout] = bias_src
        for qc in range(2):
            for dy in range(5):
                for dx in range(5):
                    col = 2 * m2 + qc + dx                     # padded 18-wide input col
                    j0 = (col % 2) * (9 * cin) + (col // 2) * cin
                    wb[qc, dy, j0:j0 + cin, m2 * cout:(m2 + 1) * cout] = w[:, :, dy, dx].T
    return jnp.asarray(wb, jnp.bfloat16), jnp.asarray(bias[None, :], jnp.float32)


def _build_fc_weights(fc_w, fc_b):
    """FC weights per conv2 pooled row y, matching the in-kernel act layout
    (lane = x*32 + c) and torch's NCHW flatten order (c*49 + y*7 + x)."""
    fw = np.asarray(jax.device_get(fc_w), np.float32)         # (10, 32*7*7)
    n_out = fw.shape[0]
    fw = fw.reshape(n_out, 32, 7, 7)                           # (n, c, y, x)
    wfc = np.zeros((7, 7, 32, _NP), np.float32)
    wfc[:, :, :, :n_out] = np.transpose(fw, (2, 3, 1, 0))      # (y, x, c, n)
    wfc = wfc.reshape(7, _N2, _NP)
    bfc = np.zeros((_NP,), np.float32)
    bfc[:n_out] = np.asarray(jax.device_get(fc_b), np.float32)
    return jnp.asarray(wfc, jnp.bfloat16), jnp.asarray(bfc[None, :], jnp.float32)


def prepare_params(params):
    """Hoisted out of the forward path: build banded/fused weight layouts once."""
    wb1, b1 = _build_conv1_weights(params["conv1_w"], params["conv1_b"])
    wb2, b2 = _build_conv2_weights(params["conv2_w"], params["conv2_b"])
    wfc, bfc = _build_fc_weights(params["fc_w"], params["fc_b"])
    return {"wb1": wb1, "b1": b1, "wb2": wb2, "b2": b2, "wfc": wfc, "bfc": bfc}


# ------------------------------- glue (cheap) --------------------------------

def _prep_conv1_input(x_nchw, tb):
    """(B, 1, 28, 28) -> (B//tb, 2, 14*tb, 160): pad by 2, column-parity split,
    and prebuild the 5 dy-shifted row slices so conv1 is one dot per phase.
    Row index inside a block = r2*tb + img (img folded into the MXU M dim)."""
    b = x_nchw.shape[0]
    x = x_nchw[:, 0].astype(jnp.bfloat16)                       # (B, 28, 28)
    xp = jnp.pad(x, ((0, 0), (2, 2), (2, 2)))                   # (B, 32, 32)
    # column parity split: lane = pc*16 + wh  (Cin = 1)
    xc = xp.reshape(b, 32, 16, 2).transpose(0, 1, 3, 2).reshape(b, 32, 32)
    qr_slabs = []
    for qr in range(2):
        dy_slabs = [xc[:, qr + dy: qr + dy + 28: 2, :] for dy in range(5)]  # (B,14,32)
        qr_slabs.append(jnp.concatenate(dy_slabs, axis=-1))                  # (B,14,160)
    x1 = jnp.stack(qr_slabs, axis=1)                             # (B, 2, 14, 160)
    x1 = x1.reshape(b // tb, tb, 2, 14, _K1)
    x1 = x1.transpose(0, 2, 3, 1, 4)                             # (G, 2, 14, tb, 160)
    return x1.reshape(b // tb, 2, 14 * tb, _K1)


# ------------------------------- full forward --------------------------------

@jax.jit
def cnn_forward(prepped, x_nchw):
    """x_nchw: (B, 1, 28, 28) float32 -> logits (B, 10) float32."""
    b = x_nchw.shape[0]
    tb = _TB
    bp = ((b + tb - 1) // tb) * tb
    if bp != b:
        x_nchw = jnp.pad(x_nchw, ((0, bp - b), (0, 0), (0, 0), (0, 0)))
    x1 = _prep_conv1_input(x_nchw, tb)                           # (G, 2, 14*tb, 160)
    out = _fused_call(x1, prepped["wb1"], prepped["b1"], prepped["wb2"],
                      prepped["b2"], prepped["wfc"], prepped["bfc"], tb)
    return out.reshape(bp, _NP)[:b, :10]


# --------------------------- init + pure-JAX reference -----------------------

def init_params(key):
    """Deterministic PyTorch-default-like (uniform +/- 1/sqrt(fan_in)) init."""
    k = jax.random.split(key, 6)

    def u(kk, shape, fan_in):
        bound = 1.0 / jnp.sqrt(jnp.float32(fan_in))
        return jax.random.uniform(kk, shape, jnp.float32, -bound, bound)

    return {
        "conv1_w": u(k[0], (16, 1, 5, 5), 1 * 5 * 5),
        "conv1_b": u(k[1], (16,), 1 * 5 * 5),
        "conv2_w": u(k[2], (32, 16, 5, 5), 16 * 5 * 5),
        "conv2_b": u(k[3], (32,), 16 * 5 * 5),
        "fc_w": u(k[4], (10, 32 * 7 * 7), 32 * 7 * 7),   # torch Linear: (out, in)
        "fc_b": u(k[5], (10,), 32 * 7 * 7),
    }


def _reference_forward(params, x_nchw):
    """Pure XLA reference (weights/inputs rounded to bf16 like the kernel path)."""
    rw = lambda a: a.astype(jnp.bfloat16).astype(jnp.float32)
    x = rw(x_nchw)
    w1, b1 = rw(params["conv1_w"]), params["conv1_b"]
    w2, b2 = rw(params["conv2_w"]), params["conv2_b"]
    fw, fb = rw(params["fc_w"]), params["fc_b"]
    dn = ("NCHW", "OIHW", "NCHW")
    y = jax.lax.conv_general_dilated(x, w1, (1, 1), ((2, 2), (2, 2)),
                                     dimension_numbers=dn)
    y = jnp.maximum(y + b1[None, :, None, None], 0.0)
    y = jax.lax.reduce_window(y, -jnp.inf, jax.lax.max,
                              (1, 1, 2, 2), (1, 1, 2, 2), "VALID")
    y = jax.lax.conv_general_dilated(y, w2, (1, 1), ((2, 2), (2, 2)),
                                     dimension_numbers=dn)
    y = jnp.maximum(y + b2[None, :, None, None], 0.0)
    y = jax.lax.reduce_window(y, -jnp.inf, jax.lax.max,
                              (1, 1, 2, 2), (1, 1, 2, 2), "VALID")
    y = y.reshape(x.shape[0], -1)
    return y @ fw.T + fb


if __name__ == "__main__":
    params = init_params(jax.random.PRNGKey(42))
    prepped = prepare_params(params)

    x = jax.random.normal(jax.random.PRNGKey(0), (2, 1, 28, 28), dtype=jnp.float32)

    out = cnn_forward(prepped, x)
    out = jax.block_until_ready(out)
    assert out.shape == (2, 10) and out.dtype == jnp.float32

    # Numerical self-check vs. a pure-XLA reference (bf16 weights/activations
    # in the kernel path -> loose tolerance).
    ref = _reference_forward(params, x)
    err = float(jnp.max(jnp.abs(out - ref)))
    assert err < 5e-2, f"kernel/reference mismatch: max abs err = {err:.4f}"

    print("KERNEL_OK")
</pallas_src>

<mosaic_0001>
module attributes {stable_mosaic.version = 11 : i64} {
  func.func @_cnn_fused_kernel(%arg0: i32, %arg1: memref<1x2x112x160xbf16, #tpu.memory_space<vmem>>, %arg2: memref<2x160x288xbf16, #tpu.memory_space<vmem>>, %arg3: memref<1x288xf32, #tpu.memory_space<vmem>>, %arg4: memref<2x5x288x224xbf16, #tpu.memory_space<vmem>>, %arg5: memref<1x224xf32, #tpu.memory_space<vmem>>, %arg6: memref<7x224x128xbf16, #tpu.memory_space<vmem>>, %arg7: memref<1x128xf32, #tpu.memory_space<vmem>>, %arg8: memref<1x8x128xf32, #tpu.memory_space<vmem>>, %arg9: memref<2x72x288xbf16, #tpu.memory_space<vmem>>) attributes {dimension_semantics = [#tpu.dimension_semantics<parallel>], iteration_bounds = array<i64: 1>, scalar_prefetch = 0 : i64, scratch_operands = 1 : i64, tpu.core_type = #tpu.core_type<tc>, window_params = [{transform_indices = @transform_0, window_bounds = array<i64: 1, 2, 112, 160>}, {pipeline_mode = #tpu.pipeline_mode<synchronous>, transform_indices = @transform_1, window_bounds = array<i64: 2, 160, 288>}, {pipeline_mode = #tpu.pipeline_mode<synchronous>, transform_indices = @transform_2, window_bounds = array<i64: 1, 288>}, {pipeline_mode = #tpu.pipeline_mode<synchronous>, transform_indices = @transform_3, window_bounds = array<i64: 2, 5, 288, 224>}, {pipeline_mode = #tpu.pipeline_mode<synchronous>, transform_indices = @transform_4, window_bounds = array<i64: 1, 224>}, {pipeline_mode = #tpu.pipeline_mode<synchronous>, transform_indices = @transform_5, window_bounds = array<i64: 7, 224, 128>}, {pipeline_mode = #tpu.pipeline_mode<synchronous>, transform_indices = @transform_6, window_bounds = array<i64: 1, 128>}, {transform_indices = @transform_7, window_bounds = array<i64: 1, 8, 128>}]} {
    %cst = arith.constant 0.000000e+00 : bf16
    %0 = vector.broadcast %cst : bf16 to vector<8x288xbf16>
    %c0 = arith.constant 0 : index
    %c0_0 = arith.constant 0 : index
    %c0_1 = arith.constant 0 : index
    %1 = vector.load %arg9[%c0, %c0_0, %c0_1] : memref<2x72x288xbf16, #tpu.memory_space<vmem>>, vector<1x8x288xbf16>
    %2 = vector.shape_cast %1 : vector<1x8x288xbf16> to vector<8x288xbf16>
    %3 = vector.shape_cast %0 : vector<8x288xbf16> to vector<1x8x288xbf16>
    tpu.vector_store %arg9[%c0, %c0_0, %c0_1], %3 {strides = array<i32>} : memref<2x72x288xbf16, #tpu.memory_space<vmem>>, vector<1x8x288xbf16>,
    %c0_2 = arith.constant 0 : index
    %c64 = arith.constant 64 : index
    %c0_3 = arith.constant 0 : index
    %4 = vector.load %arg9[%c0_2, %c64, %c0_3] : memref<2x72x288xbf16, #tpu.memory_space<vmem>>, vector<1x8x288xbf16>
    %5 = vector.shape_cast %4 : vector<1x8x288xbf16> to vector<8x288xbf16>
    %6 = vector.shape_cast %0 : vector<8x288xbf16> to vector<1x8x288xbf16>
    tpu.vector_store %arg9[%c0_2, %c64, %c0_3], %6 {strides = array<i32>} : memref<2x72x288xbf16, #tpu.memory_space<vmem>>, vector<1x8x288xbf16>,
    %c1 = arith.constant 1 : index
    %c0_4 = arith.constant 0 : index
    %c0_5 = arith.constant 0 : index
    %7 = vector.load %arg9[%c1, %c0_4, %c0_5] : memref<2x72x288xbf16, #tpu.memory_space<vmem>>, vector<1x8x288xbf16>
    %8 = vector.shape_cast %7 : vector<1x8x288xbf16> to vector<8x288xbf16>
    %9 = vector.shape_cast %0 : vector<8x288xbf16> to vector<1x8x288xbf16>
    tpu.vector_store %arg9[%c1, %c0_4, %c0_5], %9 {strides = array<i32>} : memref<2x72x288xbf16, #tpu.memory_space<vmem>>, vector<1x8x288xbf16>,
    %c1_6 = arith.constant 1 : index
    %c64_7 = arith.constant 64 : index
    %c0_8 = arith.constant 0 : index
    %10 = vector.load %arg9[%c1_6, %c64_7, %c0_8] : memref<2x72x288xbf16, #tpu.memory_space<vmem>>, vector<1x8x288xbf16>
    %11 = vector.shape_cast %10 : vector<1x8x288xbf16> to vector<8x288xbf16>
    %12 = vector.shape_cast %0 : vector<8x288xbf16> to vector<1x8x288xbf16>
    tpu.vector_store %arg9[%c1_6, %c64_7, %c0_8], %12 {strides = array<i32>} : memref<2x72x288xbf16, #tpu.memory_space<vmem>>, vector<1x8x288xbf16>,
    %c0_9 = arith.constant 0 : index
    %c0_10 = arith.constant 0 : index
    %c0_11 = arith.constant 0 : index
    %c0_12 = arith.constant 0 : index
    %13 = vector.load %arg1[%c0_9, %c0_10, %c0_11, %c0_12] : memref<1x2x112x160xbf16, #tpu.memory_space<vmem>>, vector<1x1x112x160xbf16>
    %14 = vector.shape_cast %13 : vector<1x1x112x160xbf16> to vector<112x160xbf16>
    %c0_13 = arith.constant 0 : index
    %c0_14 = arith.constant 0 : index
    %c0_15 = arith.constant 0 : index
    %15 = vector.load %arg2[%c0_13, %c0_14, %c0_15] : memref<2x160x288xbf16, #tpu.memory_space<vmem>>, vector<1x160x288xbf16>
    %16 = vector.shape_cast %15 : vector<1x160x288xbf16> to vector<160x288xbf16>
    %cst_16 = arith.constant dense<0.000000e+00> : vector<112x288xf32>
    %17 = tpu.matmul %14, %16, %cst_16 {dimension_numbers = #tpu.dot_dimension_numbers<[1], [0], [0], [1], [0, 0, 1, 1], [], []>} : vector<112x160xbf16>, vector<160x288xbf16>, vector<112x288xf32> -> vector<112x288xf32>
    %c1_17 = arith.constant 1 : index
    %c0_18 = arith.constant 0 : index
    %c0_19 = arith.constant 0 : index
    %18 = vector.load %arg2[%c1_17, %c0_18, %c0_19] : memref<2x160x288xbf16, #tpu.memory_space<vmem>>, vector<1x160x288xbf16>
    %19 = vector.shape_cast %18 : vector<1x160x288xbf16> to vector<160x288xbf16>
    %cst_20 = arith.constant dense<0.000000e+00> : vector<112x288xf32>
    %20 = tpu.matmul %14, %19, %cst_20 {dimension_numbers = #tpu.dot_dimension_numbers<[1], [0], [0], [1], [0, 0, 1, 1], [], []>} : vector<112x160xbf16>, vector<160x288xbf16>, vector<112x288xf32> -> vector<112x288xf32>
    %21 = arith.maximumf %17, %20 : vector<112x288xf32>
    %c0_21 = arith.constant 0 : index
    %c1_22 = arith.constant 1 : index
    %c0_23 = arith.constant 0 : index
    %c0_24 = arith.constant 0 : index
    %22 = vector.load %arg1[%c0_21, %c1_22, %c0_23, %c0_24] : memref<1x2x112x160xbf16, #tpu.memory_space<vmem>>, vector<1x1x112x160xbf16>
    %23 = vector.shape_cast %22 : vector<1x1x112x160xbf16> to vector<112x160xbf16>
    %c0_25 = arith.constant 0 : index
    %c0_26 = arith.constant 0 : index
    %c0_27 = arith.constant 0 : index
    %24 = vector.load %arg2[%c0_25, %c0_26, %c0_27] : memref<2x160x288xbf16, #tpu.memory_space<vmem>>, vector<1x160x288xbf16>
    %25 = vector.shape_cast %24 : vector<1x160x288xbf16> to vector<160x288xbf16>
    %cst_28 = arith.constant dense<0.000000e+00> : vector<112x288xf32>
    %26 = tpu.matmul %23, %25, %cst_28 {dimension_numbers = #tpu.dot_dimension_numbers<[1], [0], [0], [1], [0, 0, 1, 1], [], []>} : vector<112x160xbf16>, vector<160x288xbf16>, vector<112x288xf32> -> vector<112x288xf32>
    %27 = arith.maximumf %21, %26 : vector<112x288xf32>
    %c1_29 = arith.constant 1 : index
    %c0_30 = arith.constant 0 : index
    %c0_31 = arith.constant 0 : index
    %28 = vector.load %arg2[%c1_29, %c0_30, %c0_31] : memref<2x160x288xbf16, #tpu.memory_space<vmem>>, vector<1x160x288xbf16>
    %29 = vector.shape_cast %28 : vector<1x160x288xbf16> to vector<160x288xbf16>
    %cst_32 = arith.constant dense<0.000000e+00> : vector<112x288xf32>
    %30 = tpu.matmul %23, %29, %cst_32 {dimension_numbers = #tpu.dot_dimension_numbers<[1], [0], [0], [1], [0, 0, 1, 1], [], []>} : vector<112x160xbf16>, vector<160x288xbf16>, vector<112x288xf32> -> vector<112x288xf32>
    %31 = arith.maximumf %27, %30 : vector<112x288xf32>
    %c0_33 = arith.constant 0 : index
    %c0_34 = arith.constant 0 : index
    %32 = vector.load %arg3[%c0_33, %c0_34] : memref<1x288xf32, #tpu.memory_space<vmem>>, vector<1x288xf32>
    %33 = vector.broadcast %32 : vector<1x288xf32> to vector<112x288xf32>
    %34 = arith.addf %31, %33 : vector<112x288xf32>
    %cst_35 = arith.constant 0.000000e+00 : f32
    %35 = vector.broadcast %cst_35 : f32 to vector<112x288xf32>
    %36 = arith.maximumf %34, %35 : vector<112x288xf32>
    %37 = arith.truncf %36 : vector<112x288xf32> to vector<112x288xbf16>
    %38 = vector.extract_strided_slice %37 {offsets = [0, 0], sizes = [8, 288], strides = [1, 1]} : vector<112x288xbf16> to vector<8x288xbf16>
    %c0_36 = arith.constant 0 : index
    %c8 = arith.constant 8 : index
    %c0_37 = arith.constant 0 : index
    %39 = vector.load %arg9[%c0_36, %c8, %c0_37] : memref<2x72x288xbf16, #tpu.memory_space<vmem>>, vector<1x8x288xbf16>
    %40 = vector.shape_cast %39 : vector<1x8x288xbf16> to vector<8x288xbf16>
    %41 = vector.shape_cast %38 : vector<8x288xbf16> to vector<1x8x288xbf16>
    tpu.vector_store %arg9[%c0_36, %c8, %c0_37], %41 {strides = array<i32>} : memref<2x72x288xbf16, #tpu.memory_space<vmem>>, vector<1x8x288xbf16>,
    %42 = vector.extract_strided_slice %37 {offsets = [8, 0], sizes = [8, 288], strides = [1, 1]} : vector<112x288xbf16> to vector<8x288xbf16>
    %c1_38 = arith.constant 1 : index
    %c8_39 = arith.constant 8 : index
    %c0_40 = arith.constant 0 : index
    %43 = vector.load %arg9[%c1_38, %c8_39, %c0_40] : memref<2x72x288xbf16, #tpu.memory_space<vmem>>, vector<1x8x288xbf16>
    %44 = vector.shape_cast %43 : vector<1x8x288xbf16> to vector<8x288xbf16>
    %45 = vector.shape_cast %42 : vector<8x288xbf16> to vector<1x8x288xbf16>
    tpu.vector_store %arg9[%c1_38, %c8_39, %c0_40], %45 {strides = array<i32>} : memref<2x72x288xbf16, #tpu.memory_space<vmem>>, vector<1x8x288xbf16>,
    %46 = vector.extract_strided_slice %37 {offsets = [16, 0], sizes = [8, 288], strides = [1, 1]} : vector<112x288xbf16> to vector<8x288xbf16>
    %c0_41 = arith.constant 0 : index
    %c16 = arith.constant 16 : index
    %c0_42 = arith.constant 0 : index
    %47 = vector.load %arg9[%c0_41, %c16, %c0_42] : memref<2x72x288xbf16, #tpu.memory_space<vmem>>, vector<1x8x288xbf16>
    %48 = vector.shape_cast %47 : vector<1x8x288xbf16> to vector<8x288xbf16>
    %49 = vector.shape_cast %46 : vector<8x288xbf16> to vector<1x8x288xbf16>
    tpu.vector_store %arg9[%c0_41, %c16, %c0_42], %49 {strides = array<i32>} : memref<2x72x288xbf16, #tpu.memory_space<vmem>>, vector<1x8x288xbf16>,
    %50 = vector.extract_strided_slice %37 {offsets = [24, 0], sizes = [8, 288], strides = [1, 1]} : vector<112x288xbf16> to vector<8x288xbf16>
    %c1_43 = arith.constant 1 : index
    %c16_44 = arith.constant 16 : index
    %c0_45 = arith.constant 0 : index
    %51 = vector.load %arg9[%c1_43, %c16_44, %c0_45] : memref<2x72x288xbf16, #tpu.memory_space<vmem>>, vector<1x8x288xbf16>
    %52 = vector.shape_cast %51 : vector<1x8x288xbf16> to vector<8x288xbf16>
    %53 = vector.shape_cast %50 : vector<8x288xbf16> to vector<1x8x288xbf16>
    tpu.vector_store %arg9[%c1_43, %c16_44, %c0_45], %53 {strides = array<i32>} : memref<2x72x288xbf16, #tpu.memory_space<vmem>>, vector<1x8x288xbf16>,
    %54 = vector.extract_strided_slice %37 {offsets = [32, 0], sizes = [8, 288], strides = [1, 1]} : vector<112x288xbf16> to vector<8x288xbf16>
    %c0_46 = arith.constant 0 : index
    %c24 = arith.constant 24 : index
    %c0_47 = arith.constant 0 : index
    %55 = vector.load %arg9[%c0_46, %c24, %c0_47] : memref<2x72x288xbf16, #tpu.memory_space<vmem>>, vector<1x8x288xbf16>
    %56 = vector.shape_cast %55 : vector<1x8x288xbf16> to vector<8x288xbf16>
    %57 = vector.shape_cast %54 : vector<8x288xbf16> to vector<1x8x288xbf16>
    tpu.vector_store %arg9[%c0_46, %c24, %c0_47], %57 {strides = array<i32>} : memref<2x72x288xbf16, #tpu.memory_space<vmem>>, vector<1x8x288xbf16>,
    %58 = vector.extract_strided_slice %37 {offsets = [40, 0], sizes = [8, 288], strides = [1, 1]} : vector<112x288xbf16> to vector<8x288xbf16>
    %c1_48 = arith.constant 1 : index
    %c24_49 = arith.constant 24 : index
    %c0_50 = arith.constant 0 : index
    %59 = vector.load %arg9[%c1_48, %c24_49, %c0_50] : memref<2x72x288xbf16, #tpu.memory_space<vmem>>, vector<1x8x288xbf16>
    %60 = vector.shape_cast %59 : vector<1x8x288xbf16> to vector<8x288xbf16>
    %61 = vector.shape_cast %58 : vector<8x288xbf16> to vector<1x8x288xbf16>
    tpu.vector_store %arg9[%c1_48, %c24_49, %c0_50], %61 {strides = array<i32>} : memref<2x72x288xbf16, #tpu.memory_space<vmem>>, vector<1x8x288xbf16>,
    %62 = vector.extract_strided_slice %37 {offsets = [48, 0], sizes = [8, 288], strides = [1, 1]} : vector<112x288xbf16> to vector<8x288xbf16>
    %c0_51 = arith.constant 0 : index
    %c32 = arith.constant 32 : index
    %c0_52 = arith.constant 0 : index
    %63 = vector.load %arg9[%c0_51, %c32, %c0_52] : memref<2x72x288xbf16, #tpu.memory_space<vmem>>, vector<1x8x288xbf16>
    %64 = vector.shape_cast %63 : vector<1x8x288xbf16> to vector<8x288xbf16>
    %65 = vector.shape_cast %62 : vector<8x288xbf16> to vector<1x8x288xbf16>
    tpu.vector_store %arg9[%c0_51, %c32, %c0_52], %65 {strides = array<i32>} : memref<2x72x288xbf16, #tpu.memory_space<vmem>>, vector<1x8x288xbf16>,
    %66 = vector.extract_strided_slice %37 {offsets = [56, 0], sizes = [8, 288], strides = [1, 1]} : vector<112x288xbf16> to vector<8x288xbf16>
    %c1_53 = arith.constant 1 : index
    %c32_54 = arith.constant 32 : index
    %c0_55 = arith.constant 0 : index
    %67 = vector.load %arg9[%c1_53, %c32_54, %c0_55] : memref<2x72x288xbf16, #tpu.memory_space<vmem>>, vector<1x8x288xbf16>
    %68 = vector.shape_cast %67 : vector<1x8x288xbf16> to vector<8x288xbf16>
    %69 = vector.shape_cast %66 : vector<8x288xbf16> to vector<1x8x288xbf16>
    tpu.vector_store %arg9[%c1_53, %c32_54, %c0_55], %69 {strides = array<i32>} : memref<2x72x288xbf16, #tpu.memory_space<vmem>>, vector<1x8x288xbf16>,
    %70 = vector.extract_strided_slice %37 {offsets = [64, 0], sizes = [8, 288], strides = [1, 1]} : vector<112x288xbf16> to vector<8x288xbf16>
    %c0_56 = arith.constant 0 : index
    %c40 = arith.constant 40 : index
    %c0_57 = arith.constant 0 : index
    %71 = vector.load %arg9[%c0_56, %c40, %c0_57] : memref<2x72x288xbf16, #tpu.memory_space<vmem>>, vector<1x8x288xbf16>
    %72 = vector.shape_cast %71 : vector<1x8x288xbf16> to vector<8x288xbf16>
    %73 = vector.shape_cast %70 : vector<8x288xbf16> to vector<1x8x288xbf16>
    tpu.vector_store %arg9[%c0_56, %c40, %c0_57], %73 {strides = array<i32>} : memref<2x72x288xbf16, #tpu.memory_space<vmem>>, vector<1x8x288xbf16>,
    %74 = vector.extract_strided_slice %37 {offsets = [72, 0], sizes = [8, 288], strides = [1, 1]} : vector<112x288xbf16> to vector<8x288xbf16>
    %c1_58 = arith.constant 1 : index
    %c40_59 = arith.constant 40 : index
    %c0_60 = arith.constant 0 : index
    %75 = vector.load %arg9[%c1_58, %c40_59, %c0_60] : memref<2x72x288xbf16, #tpu.memory_space<vmem>>, vector<1x8x288xbf16>
    %76 = vector.shape_cast %75 : vector<1x8x288xbf16> to vector<8x288xbf16>
    %77 = vector.shape_cast %74 : vector<8x288xbf16> to vector<1x8x288xbf16>
    tpu.vector_store %arg9[%c1_58, %c40_59, %c0_60], %77 {strides = array<i32>} : memref<2x72x288xbf16, #tpu.memory_space<vmem>>, vector<1x8x288xbf16>,
    %78 = vector.extract_strided_slice %37 {offsets = [80, 0], sizes = [8, 288], strides = [1, 1]} : vector<112x288xbf16> to vector<8x288xbf16>
    %c0_61 = arith.constant 0 : index
    %c48 = arith.constant 48 : index
    %c0_62 = arith.constant 0 : index
    %79 = vector.load %arg9[%c0_61, %c48, %c0_62] : memref<2x72x288xbf16, #tpu.memory_space<vmem>>, vector<1x8x288xbf16>
    %80 = vector.shape_cast %79 : vector<1x8x288xbf16> to vector<8x288xbf16>
    %81 = vector.shape_cast %78 : vector<8x288xbf16> to vector<1x8x288xbf16>
    tpu.vector_store %arg9[%c0_61, %c48, %c0_62], %81 {strides = array<i32>} : memref<2x72x288xbf16, #tpu.memory_space<vmem>>, vector<1x8x288xbf16>,
    %82 = vector.extract_strided_slice %37 {offsets = [88, 0], sizes = [8, 288], strides = [1, 1]} : vector<112x288xbf16> to vector<8x288xbf16>
    %c1_63 = arith.constant 1 : index
    %c48_64 = arith.constant 48 : index
    %c0_65 = arith.constant 0 : index
    %83 = vector.load %arg9[%c1_63, %c48_64, %c0_65] : memref<2x72x288xbf16, #tpu.memory_space<vmem>>, vector<1x8x288xbf16>
    %84 = vector.shape_cast %83 : vector<1x8x288xbf16> to vector<8x288xbf16>
    %85 = vector.shape_cast %82 : vector<8x288xbf16> to vector<1x8x288xbf16>
    tpu.vector_store %arg9[%c1_63, %c48_64, %c0_65], %85 {strides = array<i32>} : memref<2x72x288xbf16, #tpu.memory_space<vmem>>, vector<1x8x288xbf16>,
    %86 = vector.extract_strided_slice %37 {offsets = [96, 0], sizes = [8, 288], strides = [1, 1]} : vector<112x288xbf16> to vector<8x288xbf16>
    %c0_66 = arith.constant 0 : index
    %c56 = arith.constant 56 : index
    %c0_67 = arith.constant 0 : index
    %87 = vector.load %arg9[%c0_66, %c56, %c0_67] : memref<2x72x288xbf16, #tpu.memory_space<vmem>>, vector<1x8x288xbf16>
    %88 = vector.shape_cast %87 : vector<1x8x288xbf16> to vector<8x288xbf16>
    %89 = vector.shape_cast %86 : vector<8x288xbf16> to vector<1x8x288xbf16>
    tpu.vector_store %arg9[%c0_66, %c56, %c0_67], %89 {strides = array<i32>} : memref<2x72x288xbf16, #tpu.memory_space<vmem>>, vector<1x8x288xbf16>,
    %90 = vector.extract_strided_slice %37 {offsets = [104, 0], sizes = [8, 288], strides = [1, 1]} : vector<112x288xbf16> to vector<8x288xbf16>
    %c1_68 = arith.constant 1 : index
    %c56_69 = arith.constant 56 : index
    %c0_70 = arith.constant 0 : index
    %91 = vector.load %arg9[%c1_68, %c56_69, %c0_70] : memref<2x72x288xbf16, #tpu.memory_space<vmem>>, vector<1x8x288xbf16>
    %92 = vector.shape_cast %91 : vector<1x8x288xbf16> to vector<8x288xbf16>
    %93 = vector.shape_cast %90 : vector<8x288xbf16> to vector<1x8x288xbf16>
    tpu.vector_store %arg9[%c1_68, %c56_69, %c0_70], %93 {strides = array<i32>} : memref<2x72x288xbf16, #tpu.memory_space<vmem>>, vector<1x8x288xbf16>,
    %c0_71 = arith.constant 0 : index
    %c0_72 = arith.constant 0 : index
    %c0_73 = arith.constant 0 : index
    %94 = vector.load %arg9[%c0_71, %c0_72, %c0_73] : memref<2x72x288xbf16, #tpu.memory_space<vmem>>, vector<1x56x288xbf16>
    %95 = vector.shape_cast %94 : vector<1x56x288xbf16> to vector<56x288xbf16>
    %c0_74 = arith.constant 0 : index
    %c0_75 = arith.constant 0 : index
    %c0_76 = arith.constant 0 : index
    %c0_77 = arith.constant 0 : index
    %96 = vector.load %arg4[%c0_74, %c0_75, %c0_76, %c0_77] : memref<2x5x288x224xbf16, #tpu.memory_space<vmem>>, vector<1x1x288x224xbf16>
    %97 = vector.shape_cast %96 : vector<1x1x288x224xbf16> to vector<288x224xbf16>
    %cst_78 = arith.constant dense<0.000000e+00> : vector<56x224xf32>
    %98 = tpu.matmul %95, %97, %cst_78 {dimension_numbers = #tpu.dot_dimension_numbers<[1], [0], [0], [1], [0, 0, 1, 1], [], []>} : vector<56x288xbf16>, vector<288x224xbf16>, vector<56x224xf32> -> vector<56x224xf32>
    %c1_79 = arith.constant 1 : index
    %c0_80 = arith.constant 0 : index
    %c0_81 = arith.constant 0 : index
    %99 = vector.load %arg9[%c1_79, %c0_80, %c0_81] : memref<2x72x288xbf16, #tpu.memory_space<vmem>>, vector<1x56x288xbf16>
    %100 = vector.shape_cast %99 : vector<1x56x288xbf16> to vector<56x288xbf16>
    %c0_82 = arith.constant 0 : index
    %c1_83 = arith.constant 1 : index
    %c0_84 = arith.constant 0 : index
    %c0_85 = arith.constant 0 : index
    %101 = vector.load %arg4[%c0_82, %c1_83, %c0_84, %c0_85] : memref<2x5x288x224xbf16, #tpu.memory_space<vmem>>, vector<1x1x288x224xbf16>
    %102 = vector.shape_cast %101 : vector<1x1x288x224xbf16> to vector<288x224xbf16>
    %cst_86 = arith.constant dense<0.000000e+00> : vector<56x224xf32>
    %103 = tpu.matmul %100, %102, %cst_86 {dimension_numbers = #tpu.dot_dimension_numbers<[1], [0], [0], [1], [0, 0, 1, 1], [], []>} : vector<56x288xbf16>, vector<288x224xbf16>, vector<56x224xf32> -> vector<56x224xf32>
    %104 = arith.addf %98, %103 : vector<56x224xf32>
    %c0_87 = arith.constant 0 : index
    %c8_88 = arith.constant 8 : index
    %c0_89 = arith.constant 0 : index
    %105 = vector.load %arg9[%c0_87, %c8_88, %c0_89] : memref<2x72x288xbf16, #tpu.memory_space<vmem>>, vector<1x56x288xbf16>
    %106 = vector.shape_cast %105 : vector<1x56x288xbf16> to vector<56x288xbf16>
    %c0_90 = arith.constant 0 : index
    %c2 = arith.constant 2 : index
    %c0_91 = arith.constant 0 : index
    %c0_92 = arith.constant 0 : index
    %107 = vector.load %arg4[%c0_90, %c2, %c0_91, %c0_92] : memref<2x5x288x224xbf16, #tpu.memory_space<vmem>>, vector<1x1x288x224xbf16>
    %108 = vector.shape_cast %107 : vector<1x1x288x224xbf16> to vector<288x224xbf16>
    %cst_93 = arith.constant dense<0.000000e+00> : vector<56x224xf32>
    %109 = tpu.matmul %106, %108, %cst_93 {dimension_numbers = #tpu.dot_dimension_numbers<[1], [0], [0], [1], [0, 0, 1, 1], [], []>} : vector<56x288xbf16>, vector<288x224xbf16>, vector<56x224xf32> -> vector<56x224xf32>
    %110 = arith.addf %104, %109 : vector<56x224xf32>
    %c1_94 = arith.constant 1 : index
    %c8_95 = arith.constant 8 : index
    %c0_96 = arith.constant 0 : index
    %111 = vector.load %arg9[%c1_94, %c8_95, %c0_96] : memref<2x72x288xbf16, #tpu.memory_space<vmem>>, vector<1x56x288xbf16>
    %112 = vector.shape_cast %111 : vector<1x56x288xbf16> to vector<56x288xbf16>
    %c0_97 = arith.constant 0 : index
    %c3 = arith.constant 3 : index
    %c0_98 = arith.constant 0 : index
    %c0_99 = arith.constant 0 : index
    %113 = vector.load %arg4[%c0_97, %c3, %c0_98, %c0_99] : memref<2x5x288x224xbf16, #tpu.memory_space<vmem>>, vector<1x1x288x224xbf16>
    %114 = vector.shape_cast %113 : vector<1x1x288x224xbf16> to vector<288x224xbf16>
    %cst_100 = arith.constant dense<0.000000e+00> : vector<56x224xf32>
    %115 = tpu.matmul %112, %114, %cst_100 {dimension_numbers = #tpu.dot_dimension_numbers<[1], [0], [0], [1], [0, 0, 1, 1], [], []>} : vector<56x288xbf16>, vector<288x224xbf16>, vector<56x224xf32> -> vector<56x224xf32>
    %116 = arith.addf %110, %115 : vector<56x224xf32>
    %c0_101 = arith.constant 0 : index
    %c16_102 = arith.constant 16 : index
    %c0_103 = arith.constant 0 : index
    %117 = vector.load %arg9[%c0_101, %c16_102, %c0_103] : memref<2x72x288xbf16, #tpu.memory_space<vmem>>, vector<1x56x288xbf16>
    %118 = vector.shape_cast %117 : vector<1x56x288xbf16> to vector<56x288xbf16>
    %c0_104 = arith.constant 0 : index
    %c4 = arith.constant 4 : index
    %c0_105 = arith.constant 0 : index
    %c0_106 = arith.constant 0 : index
    %119 = vector.load %arg4[%c0_104, %c4, %c0_105, %c0_106] : memref<2x5x288x224xbf16, #tpu.memory_space<vmem>>, vector<1x1x288x224xbf16>
    %120 = vector.shape_cast %119 : vector<1x1x288x224xbf16> to vector<288x224xbf16>
    %cst_107 = arith.constant dense<0.000000e+00> : vector<56x224xf32>
    %121 = tpu.matmul %118, %120, %cst_107 {dimension_numbers = #tpu.dot_dimension_numbers<[1], [0], [0], [1], [0, 0, 1, 1], [], []>} : vector<56x288xbf16>, vector<288x224xbf16>, vector<56x224xf32> -> vector<56x224xf32>
    %122 = arith.addf %116, %121 : vector<56x224xf32>
    %c0_108 = arith.constant 0 : index
    %c0_109 = arith.constant 0 : index
    %c0_110 = arith.constant 0 : index
    %123 = vector.load %arg9[%c0_108, %c0_109, %c0_110] : memref<2x72x288xbf16, #tpu.memory_space<vmem>>, vector<1x56x288xbf16>
    %124 = vector.shape_cast %123 : vector<1x56x288xbf16> to vector<56x288xbf16>
    %c1_111 = arith.constant 1 : index
    %c0_112 = arith.constant 0 : index
    %c0_113 = arith.constant 0 : index
    %c0_114 = arith.constant 0 : index
    %125 = vector.load %arg4[%c1_111, %c0_112, %c0_113, %c0_114] : memref<2x5x288x224xbf16, #tpu.memory_space<vmem>>, vector<1x1x288x224xbf16>
    %126 = vector.shape_cast %125 : vector<1x1x288x224xbf16> to vector<288x224xbf16>
    %cst_115 = arith.constant dense<0.000000e+00> : vector<56x224xf32>
    %127 = tpu.matmul %124, %126, %cst_115 {dimension_numbers = #tpu.dot_dimension_numbers<[1], [0], [0], [1], [0, 0, 1, 1], [], []>} : vector<56x288xbf16>, vector<288x224xbf16>, vector<56x224xf32> -> vector<56x224xf32>
    %c1_116 = arith.constant 1 : index
    %c0_117 = arith.constant 0 : index
    %c0_118 = arith.constant 0 : index
    %128 = vector.load %arg9[%c1_116, %c0_117, %c0_118] : memref<2x72x288xbf16, #tpu.memory_space<vmem>>, vector<1x56x288xbf16>
    %129 = vector.shape_cast %128 : vector<1x56x288xbf16> to vector<56x288xbf16>
    %c1_119 = arith.constant 1 : index
    %c1_120 = arith.constant 1 : index
    %c0_121 = arith.constant 0 : index
    %c0_122 = arith.constant 0 : index
    %130 = vector.load %arg4[%c1_119, %c1_120, %c0_121, %c0_122] : memref<2x5x288x224xbf16, #tpu.memory_space<vmem>>, vector<1x1x288x224xbf16>
    %131 = vector.shape_cast %130 : vector<1x1x288x224xbf16> to vector<288x224xbf16>
    %cst_123 = arith.constant dense<0.000000e+00> : vector<56x224xf32>
    %132 = tpu.matmul %129, %131, %cst_123 {dimension_numbers = #tpu.dot_dimension_numbers<[1], [0], [0], [1], [0, 0, 1, 1], [], []>} : vector<56x288xbf16>, vector<288x224xbf16>, vector<56x224xf32> -> vector<56x224xf32>
    %133 = arith.addf %127, %132 : vector<56x224xf32>
    %c0_124 = arith.constant 0 : index
    %c8_125 = arith.constant 8 : index
    %c0_126 = arith.constant 0 : index
    %134 = vector.load %arg9[%c0_124, %c8_125, %c0_126] : memref<2x72x288xbf16, #tpu.memory_space<vmem>>, vector<1x56x288xbf16>
    %135 = vector.shape_cast %134 : vector<1x56x288xbf16> to vector<56x288xbf16>
    %c1_127 = arith.constant 1 : index
    %c2_128 = arith.constant 2 : index
    %c0_129 = arith.constant 0 : index
    %c0_130 = arith.constant 0 : index
    %136 = vector.load %arg4[%c1_127, %c2_128, %c0_129, %c0_130] : memref<2x5x288x224xbf16, #tpu.memory_space<vmem>>, vector<1x1x288x224xbf16>
    %137 = vector.shape_cast %136 : vector<1x1x288x224xbf16> to vector<288x224xbf16>
    %cst_131 = arith.constant dense<0.000000e+00> : vector<56x224xf32>
    %138 = tpu.matmul %135, %137, %cst_131 {dimension_numbers = #tpu.dot_dimension_numbers<[1], [0], [0], [1], [0, 0, 1, 1], [], []>} : vector<56x288xbf16>, vector<288x224xbf16>, vector<56x224xf32> -> vector<56x224xf32>
    %139 = arith.addf %133, %138 : vector<56x224xf32>
    %c1_132 = arith.constant 1 : index
    %c8_133 = arith.constant 8 : index
    %c0_134 = arith.constant 0 : index
    %140 = vector.load %arg9[%c1_132, %c8_133, %c0_134] : memref<2x72x288xbf16, #tpu.memory_space<vmem>>, vector<1x56x288xbf16>
    %141 = vector.shape_cast %140 : vector<1x56x288xbf16> to vector<56x288xbf16>
    %c1_135 = arith.constant 1 : index
    %c3_136 = arith.constant 3 : index
    %c0_137 = arith.constant 0 : index
    %c0_138 = arith.constant 0 : index
    %142 = vector.load %arg4[%c1_135, %c3_136, %c0_137, %c0_138] : memref<2x5x288x224xbf16, #tpu.memory_space<vmem>>, vector<1x1x288x224xbf16>
    %143 = vector.shape_cast %142 : vector<1x1x288x224xbf16> to vector<288x224xbf16>
    %cst_139 = arith.constant dense<0.000000e+00> : vector<56x224xf32>
    %144 = tpu.matmul %141, %143, %cst_139 {dimension_numbers = #tpu.dot_dimension_numbers<[1], [0], [0], [1], [0, 0, 1, 1], [], []>} : vector<56x288xbf16>, vector<288x224xbf16>, vector<56x224xf32> -> vector<56x224xf32>
    %145 = arith.addf %139, %144 : vector<56x224xf32>
    %c0_140 = arith.constant 0 : index
    %c16_141 = arith.constant 16 : index
    %c0_142 = arith.constant 0 : index
    %146 = vector.load %arg9[%c0_140, %c16_141, %c0_142] : memref<2x72x288xbf16, #tpu.memory_space<vmem>>, vector<1x56x288xbf16>
    %147 = vector.shape_cast %146 : vector<1x56x288xbf16> to vector<56x288xbf16>
    %c1_143 = arith.constant 1 : index
    %c4_144 = arith.constant 4 : index
    %c0_145 = arith.constant 0 : index
    %c0_146 = arith.constant 0 : index
    %148 = vector.load %arg4[%c1_143, %c4_144, %c0_145, %c0_146] : memref<2x5x288x224xbf16, #tpu.memory_space<vmem>>, vector<1x1x288x224xbf16>
    %149 = vector.shape_cast %148 : vector<1x1x288x224xbf16> to vector<288x224xbf16>
    %cst_147 = arith.constant dense<0.000000e+00> : vector<56x224xf32>
    %150 = tpu.matmul %147, %149, %cst_147 {dimension_numbers = #tpu.dot_dimension_numbers<[1], [0], [0], [1], [0, 0, 1, 1], [], []>} : vector<56x288xbf16>, vector<288x224xbf16>, vector<56x224xf32> -> vector<56x224xf32>
    %151 = arith.addf %145, %150 : vector<56x224xf32>
    %152 = arith.maximumf %122, %151 : vector<56x224xf32>
    %c1_148 = arith.constant 1 : index
    %c0_149 = arith.constant 0 : index
    %c0_150 = arith.constant 0 : index
    %153 = vector.load %arg9[%c1_148, %c0_149, %c0_150] : memref<2x72x288xbf16, #tpu.memory_space<vmem>>, vector<1x56x288xbf16>
    %154 = vector.shape_cast %153 : vector<1x56x288xbf16> to vector<56x288xbf16>
    %c0_151 = arith.constant 0 : index
    %c0_152 = arith.constant 0 : index
    %c0_153 = arith.constant 0 : index
    %c0_154 = arith.constant 0 : index
    %155 = vector.load %arg4[%c0_151, %c0_152, %c0_153, %c0_154] : memref<2x5x288x224xbf16, #tpu.memory_space<vmem>>, vector<1x1x288x224xbf16>
    %156 = vector.shape_cast %155 : vector<1x1x288x224xbf16> to vector<288x224xbf16>
    %cst_155 = arith.constant dense<0.000000e+00> : vector<56x224xf32>
    %157 = tpu.matmul %154, %156, %cst_155 {dimension_numbers = #tpu.dot_dimension_numbers<[1], [0], [0], [1], [0, 0, 1, 1], [], []>} : vector<56x288xbf16>, vector<288x224xbf16>, vector<56x224xf32> -> vector<56x224xf32>
    %c0_156 = arith.constant 0 : index
    %c8_157 = arith.constant 8 : index
    %c0_158 = arith.constant 0 : index
    %158 = vector.load %arg9[%c0_156, %c8_157, %c0_158] : memref<2x72x288xbf16, #tpu.memory_space<vmem>>, vector<1x56x288xbf16>
    %159 = vector.shape_cast %158 : vector<1x56x288xbf16> to vector<56x288xbf16>
    %c0_159 = arith.constant 0 : index
    %c1_160 = arith.constant 1 : index
    %c0_161 = arith.constant 0 : index
    %c0_162 = arith.constant 0 : index
    %160 = vector.load %arg4[%c0_159, %c1_160, %c0_161, %c0_162] : memref<2x5x288x224xbf16, #tpu.memory_space<vmem>>, vector<1x1x288x224xbf16>
    %161 = vector.shape_cast %160 : vector<1x1x288x224xbf16> to vector<288x224xbf16>
    %cst_163 = arith.constant dense<0.000000e+00> : vector<56x224xf32>
    %162 = tpu.matmul %159, %161, %cst_163 {dimension_numbers = #tpu.dot_dimension_numbers<[1], [0], [0], [1], [0, 0, 1, 1], [], []>} : vector<56x288xbf16>, vector<288x224xbf16>, vector<56x224xf32> -> vector<56x224xf32>
    %163 = arith.addf %157, %162 : vector<56x224xf32>
    %c1_164 = arith.constant 1 : index
    %c8_165 = arith.constant 8 : index
    %c0_166 = arith.constant 0 : index
    %164 = vector.load %arg9[%c1_164, %c8_165, %c0_166] : memref<2x72x288xbf16, #tpu.memory_space<vmem>>, vector<1x56x288xbf16>
    %165 = vector.shape_cast %164 : vector<1x56x288xbf16> to vector<56x288xbf16>
    %c0_167 = arith.constant 0 : index
    %c2_168 = arith.constant 2 : index
    %c0_169 = arith.constant 0 : index
    %c0_170 = arith.constant 0 : index
    %166 = vector.load %arg4[%c0_167, %c2_168, %c0_169, %c0_170] : memref<2x5x288x224xbf16, #tpu.memory_space<vmem>>, vector<1x1x288x224xbf16>
    %167 = vector.shape_cast %166 : vector<1x1x288x224xbf16> to vector<288x224xbf16>
    %cst_171 = arith.constant dense<0.000000e+00> : vector<56x224xf32>
    %168 = tpu.matmul %165, %167, %cst_171 {dimension_numbers = #tpu.dot_dimension_numbers<[1], [0], [0], [1], [0, 0, 1, 1], [], []>} : vector<56x288xbf16>, vector<288x224xbf16>, vector<56x224xf32> -> vector<56x224xf32>
    %169 = arith.addf %163, %168 : vector<56x224xf32>
    %c0_172 = arith.constant 0 : index
    %c16_173 = arith.constant 16 : index
    %c0_174 = arith.constant 0 : index
    %170 = vector.load %arg9[%c0_172, %c16_173, %c0_174] : memref<2x72x288xbf16, #tpu.memory_space<vmem>>, vector<1x56x288xbf16>
    %171 = vector.shape_cast %170 : vector<1x56x288xbf16> to vector<56x288xbf16>
    %c0_175 = arith.constant 0 : index
    %c3_176 = arith.constant 3 : index
    %c0_177 = arith.constant 0 : index
    %c0_178 = arith.constant 0 : index
    %172 = vector.load %arg4[%c0_175, %c3_176, %c0_177, %c0_178] : memref<2x5x288x224xbf16, #tpu.memory_space<vmem>>, vector<1x1x288x224xbf16>
    %173 = vector.shape_cast %172 : vector<1x1x288x224xbf16> to vector<288x224xbf16>
    %cst_179 = arith.constant dense<0.000000e+00> : vector<56x224xf32>
    %174 = tpu.matmul %171, %173, %cst_179 {dimension_numbers = #tpu.dot_dimension_numbers<[1], [0], [0], [1], [0, 0, 1, 1], [], []>} : vector<56x288xbf16>, vector<288x224xbf16>, vector<56x224xf32> -> vector<56x224xf32>
    %175 = arith.addf %169, %174 : vector<56x224xf32>
    %c1_180 = arith.constant 1 : index
    %c16_181 = arith.constant 16 : index
    %c0_182 = arith.constant 0 : index
    %176 = vector.load %arg9[%c1_180, %c16_181, %c0_182] : memref<2x72x288xbf16, #tpu.memory_space<vmem>>, vector<1x56x288xbf16>
    %177 = vector.shape_cast %176 : vector<1x56x288xbf16> to vector<56x288xbf16>
    %c0_183 = arith.constant 0 : index
    %c4_184 = arith.constant 4 : index
    %c0_185 = arith.constant 0 : index
    %c0_186 = arith.constant 0 : index
    %178 = vector.load %arg4[%c0_183, %c4_184, %c0_185, %c0_186] : memref<2x5x288x224xbf16, #tpu.memory_space<vmem>>, vector<1x1x288x224xbf16>
    %179 = vector.shape_cast %178 : vector<1x1x288x224xbf16> to vector<288x224xbf16>
    %cst_187 = arith.constant dense<0.000000e+00> : vector<56x224xf32>
    %180 = tpu.matmul %177, %179, %cst_187 {dimension_numbers = #tpu.dot_dimension_numbers<[1], [0], [0], [1], [0, 0, 1, 1], [], []>} : vector<56x288xbf16>, vector<288x224xbf16>, vector<56x224xf32> -> vector<56x224xf32>
    %181 = arith.addf %175, %180 : vector<56x224xf32>
    %182 = arith.maximumf %152, %181 : vector<56x224xf32>
    %c1_188 = arith.constant 1 : index
    %c0_189 = arith.constant 0 : index
    %c0_190 = arith.constant 0 : index
    %183 = vector.load %arg9[%c1_188, %c0_189, %c0_190] : memref<2x72x288xbf16, #tpu.memory_space<vmem>>, vector<1x56x288xbf16>
    %184 = vector.shape_cast %183 : vector<1x56x288xbf16> to vector<56x288xbf16>
    %c1_191 = arith.constant 1 : index
    %c0_192 = arith.constant 0 : index
    %c0_193 = arith.constant 0 : index
    %c0_194 = arith.constant 0 : index
    %185 = vector.load %arg4[%c1_191, %c0_192, %c0_193, %c0_194] : memref<2x5x288x224xbf16, #tpu.memory_space<vmem>>, vector<1x1x288x224xbf16>
    %186 = vector.shape_cast %185 : vector<1x1x288x224xbf16> to vector<288x224xbf16>
    %cst_195 = arith.constant dense<0.000000e+00> : vector<56x224xf32>
    %187 = tpu.matmul %184, %186, %cst_195 {dimension_numbers = #tpu.dot_dimension_numbers<[1], [0], [0], [1], [0, 0, 1, 1], [], []>} : vector<56x288xbf16>, vector<288x224xbf16>, vector<56x224xf32> -> vector<56x224xf32>
    %c0_196 = arith.constant 0 : index
    %c8_197 = arith.constant 8 : index
    %c0_198 = arith.constant 0 : index
    %188 = vector.load %arg9[%c0_196, %c8_197, %c0_198] : memref<2x72x288xbf16, #tpu.memory_space<vmem>>, vector<1x56x288xbf16>
    %189 = vector.shape_cast %188 : vector<1x56x288xbf16> to vector<56x288xbf16>
    %c1_199 = arith.constant 1 : index
    %c1_200 = arith.constant 1 : index
    %c0_201 = arith.constant 0 : index
    %c0_202 = arith.constant 0 : index
    %190 = vector.load %arg4[%c1_199, %c1_200, %c0_201, %c0_202] : memref<2x5x288x224xbf16, #tpu.memory_space<vmem>>, vector<1x1x288x224xbf16>
    %191 = vector.shape_cast %190 : vector<1x1x288x224xbf16> to vector<288x224xbf16>
    %cst_203 = arith.constant dense<0.000000e+00> : vector<56x224xf32>
    %192 = tpu.matmul %189, %191, %cst_203 {dimension_numbers = #tpu.dot_dimension_numbers<[1], [0], [0], [1], [0, 0, 1, 1], [], []>} : vector<56x288xbf16>, vector<288x224xbf16>, vector<56x224xf32> -> vector<56x224xf32>
    %193 = arith.addf %187, %192 : vector<56x224xf32>
    %c1_204 = arith.constant 1 : index
    %c8_205 = arith.constant 8 : index
    %c0_206 = arith.constant 0 : index
    %194 = vector.load %arg9[%c1_204, %c8_205, %c0_206] : memref<2x72x288xbf16, #tpu.memory_space<vmem>>, vector<1x56x288xbf16>
    %195 = vector.shape_cast %194 : vector<1x56x288xbf16> to vector<56x288xbf16>
    %c1_207 = arith.constant 1 : index
    %c2_208 = arith.constant 2 : index
    %c0_209 = arith.constant 0 : index
    %c0_210 = arith.constant 0 : index
    %196 = vector.load %arg4[%c1_207, %c2_208, %c0_209, %c0_210] : memref<2x5x288x224xbf16, #tpu.memory_space<vmem>>, vector<1x1x288x224xbf16>
    %197 = vector.shape_cast %196 : vector<1x1x288x224xbf16> to vector<288x224xbf16>
    %cst_211 = arith.constant dense<0.000000e+00> : vector<56x224xf32>
    %198 = tpu.matmul %195, %197, %cst_211 {dimension_numbers = #tpu.dot_dimension_numbers<[1], [0], [0], [1], [0, 0, 1, 1], [], []>} : vector<56x288xbf16>, vector<288x224xbf16>, vector<56x224xf32> -> vector<56x224xf32>
    %199 = arith.addf %193, %198 : vector<56x224xf32>
    %c0_212 = arith.constant 0 : index
    %c16_213 = arith.constant 16 : index
    %c0_214 = arith.constant 0 : index
    %200 = vector.load %arg9[%c0_212, %c16_213, %c0_214] : memref<2x72x288xbf16, #tpu.memory_space<vmem>>, vector<1x56x288xbf16>
    %201 = vector.shape_cast %200 : vector<1x56x288xbf16> to vector<56x288xbf16>
    %c1_215 = arith.constant 1 : index
    %c3_216 = arith.constant 3 : index
    %c0_217 = arith.constant 0 : index
    %c0_218 = arith.constant 0 : index
    %202 = vector.load %arg4[%c1_215, %c3_216, %c0_217, %c0_218] : memref<2x5x288x224xbf16, #tpu.memory_space<vmem>>, vector<1x1x288x224xbf16>
    %203 = vector.shape_cast %202 : vector<1x1x288x224xbf16> to vector<288x224xbf16>
    %cst_219 = arith.constant dense<0.000000e+00> : vector<56x224xf32>
    %204 = tpu.matmul %201, %203, %cst_219 {dimension_numbers = #tpu.dot_dimension_numbers<[1], [0], [0], [1], [0, 0, 1, 1], [], []>} : vector<56x288xbf16>, vector<288x224xbf16>, vector<56x224xf32> -> vector<56x224xf32>
    %205 = arith.addf %199, %204 : vector<56x224xf32>
    %c1_220 = arith.constant 1 : index
    %c16_221 = arith.constant 16 : index
    %c0_222 = arith.constant 0 : index
    %206 = vector.load %arg9[%c1_220, %c16_221, %c0_222] : memref<2x72x288xbf16, #tpu.memory_space<vmem>>, vector<1x56x288xbf16>
    %207 = vector.shape_cast %206 : vector<1x56x288xbf16> to vector<56x288xbf16>
    %c1_223 = arith.constant 1 : index
    %c4_224 = arith.constant 4 : index
    %c0_225 = arith.constant 0 : index
    %c0_226 = arith.constant 0 : index
    %208 = vector.load %arg4[%c1_223, %c4_224, %c0_225, %c0_226] : memref<2x5x288x224xbf16, #tpu.memory_space<vmem>>, vector<1x1x288x224xbf16>
    %209 = vector.shape_cast %208 : vector<1x1x288x224xbf16> to vector<288x224xbf16>
    %cst_227 = arith.constant dense<0.000000e+00> : vector<56x224xf32>
    %210 = tpu.matmul %207, %209, %cst_227 {dimension_numbers = #tpu.dot_dimension_numbers<[1], [0], [0], [1], [0, 0, 1, 1], [], []>} : vector<56x288xbf16>, vector<288x224xbf16>, vector<56x224xf32> -> vector<56x224xf32>
    %211 = arith.addf %205, %210 : vector<56x224xf32>
    %212 = arith.maximumf %182, %211 : vector<56x224xf32>
    %c0_228 = arith.constant 0 : index
    %c0_229 = arith.constant 0 : index
    %213 = vector.load %arg5[%c0_228, %c0_229] : memref<1x224xf32, #tpu.memory_space<vmem>>, vector<1x224xf32>
    %214 = vector.broadcast %213 : vector<1x224xf32> to vector<56x224xf32>
    %215 = arith.addf %212, %214 : vector<56x224xf32>
    %cst_230 = arith.constant 0.000000e+00 : f32
    %216 = vector.broadcast %cst_230 : f32 to vector<56x224xf32>
    %217 = arith.maximumf %215, %216 : vector<56x224xf32>
    %218 = arith.truncf %217 : vector<56x224xf32> to vector<56x224xbf16>
    %219 = vector.extract_strided_slice %218 {offsets = [0, 0], sizes = [8, 224], strides = [1, 1]} : vector<56x224xbf16> to vector<8x224xbf16>
    %c0_231 = arith.constant 0 : index
    %c0_232 = arith.constant 0 : index
    %c0_233 = arith.constant 0 : index
    %220 = vector.load %arg6[%c0_231, %c0_232, %c0_233] : memref<7x224x128xbf16, #tpu.memory_space<vmem>>, vector<1x224x128xbf16>
    %221 = vector.shape_cast %220 : vector<1x224x128xbf16> to vector<224x128xbf16>
    %cst_234 = arith.constant dense<0.000000e+00> : vector<8x128xf32>
    %222 = tpu.matmul %219, %221, %cst_234 {dimension_numbers = #tpu.dot_dimension_numbers<[1], [0], [0], [1], [0, 0, 1, 1], [], []>} : vector<8x224xbf16>, vector<224x128xbf16>, vector<8x128xf32> -> vector<8x128xf32>
    %223 = vector.extract_strided_slice %218 {offsets = [8, 0], sizes = [8, 224], strides = [1, 1]} : vector<56x224xbf16> to vector<8x224xbf16>
    %c1_235 = arith.constant 1 : index
    %c0_236 = arith.constant 0 : index
    %c0_237 = arith.constant 0 : index
    %224 = vector.load %arg6[%c1_235, %c0_236, %c0_237] : memref<7x224x128xbf16, #tpu.memory_space<vmem>>, vector<1x224x128xbf16>
    %225 = vector.shape_cast %224 : vector<1x224x128xbf16> to vector<224x128xbf16>
    %cst_238 = arith.constant dense<0.000000e+00> : vector<8x128xf32>
    %226 = tpu.matmul %223, %225, %cst_238 {dimension_numbers = #tpu.dot_dimension_numbers<[1], [0], [0], [1], [0, 0, 1, 1], [], []>} : vector<8x224xbf16>, vector<224x128xbf16>, vector<8x128xf32> -> vector<8x128xf32>
    %227 = arith.addf %222, %226 : vector<8x128xf32>
    %228 = vector.extract_strided_slice %218 {offsets = [16, 0], sizes = [8, 224], strides = [1, 1]} : vector<56x224xbf16> to vector<8x224xbf16>
    %c2_239 = arith.constant 2 : index
    %c0_240 = arith.constant 0 : index
    %c0_241 = arith.constant 0 : index
    %229 = vector.load %arg6[%c2_239, %c0_240, %c0_241] : memref<7x224x128xbf16, #tpu.memory_space<vmem>>, vector<1x224x128xbf16>
    %230 = vector.shape_cast %229 : vector<1x224x128xbf16> to vector<224x128xbf16>
    %cst_242 = arith.constant dense<0.000000e+00> : vector<8x128xf32>
    %231 = tpu.matmul %228, %230, %cst_242 {dimension_numbers = #tpu.dot_dimension_numbers<[1], [0], [0], [1], [0, 0, 1, 1], [], []>} : vector<8x224xbf16>, vector<224x128xbf16>, vector<8x128xf32> -> vector<8x128xf32>
    %232 = arith.addf %227, %231 : vector<8x128xf32>
    %233 = vector.extract_strided_slice %218 {offsets = [24, 0], sizes = [8, 224], strides = [1, 1]} : vector<56x224xbf16> to vector<8x224xbf16>
    %c3_243 = arith.constant 3 : index
    %c0_244 = arith.constant 0 : index
    %c0_245 = arith.constant 0 : index
    %234 = vector.load %arg6[%c3_243, %c0_244, %c0_245] : memref<7x224x128xbf16, #tpu.memory_space<vmem>>, vector<1x224x128xbf16>
    %235 = vector.shape_cast %234 : vector<1x224x128xbf16> to vector<224x128xbf16>
    %cst_246 = arith.constant dense<0.000000e+00> : vector<8x128xf32>
    %236 = tpu.matmul %233, %235, %cst_246 {dimension_numbers = #tpu.dot_dimension_numbers<[1], [0], [0], [1], [0, 0, 1, 1], [], []>} : vector<8x224xbf16>, vector<224x128xbf16>, vector<8x128xf32> -> vector<8x128xf32>
    %237 = arith.addf %232, %236 : vector<8x128xf32>
    %238 = vector.extract_strided_slice %218 {offsets = [32, 0], sizes = [8, 224], strides = [1, 1]} : vector<56x224xbf16> to vector<8x224xbf16>
    %c4_247 = arith.constant 4 : index
    %c0_248 = arith.constant 0 : index
    %c0_249 = arith.constant 0 : index
    %239 = vector.load %arg6[%c4_247, %c0_248, %c0_249] : memref<7x224x128xbf16, #tpu.memory_space<vmem>>, vector<1x224x128xbf16>
    %240 = vector.shape_cast %239 : vector<1x224x128xbf16> to vector<224x128xbf16>
    %cst_250 = arith.constant dense<0.000000e+00> : vector<8x128xf32>
    %241 = tpu.matmul %238, %240, %cst_250 {dimension_numbers = #tpu.dot_dimension_numbers<[1], [0], [0], [1], [0, 0, 1, 1], [], []>} : vector<8x224xbf16>, vector<224x128xbf16>, vector<8x128xf32> -> vector<8x128xf32>
    %242 = arith.addf %237, %241 : vector<8x128xf32>
    %243 = vector.extract_strided_slice %218 {offsets = [40, 0], sizes = [8, 224], strides = [1, 1]} : vector<56x224xbf16> to vector<8x224xbf16>
    %c5 = arith.constant 5 : index
    %c0_251 = arith.constant 0 : index
    %c0_252 = arith.constant 0 : index
    %244 = vector.load %arg6[%c5, %c0_251, %c0_252] : memref<7x224x128xbf16, #tpu.memory_space<vmem>>, vector<1x224x128xbf16>
    %245 = vector.shape_cast %244 : vector<1x224x128xbf16> to vector<224x128xbf16>
    %cst_253 = arith.constant dense<0.000000e+00> : vector<8x128xf32>
    %246 = tpu.matmul %243, %245, %cst_253 {dimension_numbers = #tpu.dot_dimension_numbers<[1], [0], [0], [1], [0, 0, 1, 1], [], []>} : vector<8x224xbf16>, vector<224x128xbf16>, vector<8x128xf32> -> vector<8x128xf32>
    %247 = arith.addf %242, %246 : vector<8x128xf32>
    %248 = vector.extract_strided_slice %218 {offsets = [48, 0], sizes = [8, 224], strides = [1, 1]} : vector<56x224xbf16> to vector<8x224xbf16>
    %c6 = arith.constant 6 : index
    %c0_254 = arith.constant 0 : index
    %c0_255 = arith.constant 0 : index
    %249 = vector.load %arg6[%c6, %c0_254, %c0_255] : memref<7x224x128xbf16, #tpu.memory_space<vmem>>, vector<1x224x128xbf16>
    %250 = vector.shape_cast %249 : vector<1x224x128xbf16> to vector<224x128xbf16>
    %cst_256 = arith.constant dense<0.000000e+00> : vector<8x128xf32>
    %251 = tpu.matmul %248, %250, %cst_256 {dimension_numbers = #tpu.dot_dimension_numbers<[1], [0], [0], [1], [0, 0, 1, 1], [], []>} : vector<8x224xbf16>, vector<224x128xbf16>, vector<8x128xf32> -> vector<8x128xf32>
    %252 = arith.addf %247, %251 : vector<8x128xf32>
    %c0_257 = arith.constant 0 : index
    %c0_258 = arith.constant 0 : index
    %253 = vector.load %arg7[%c0_257, %c0_258] : memref<1x128xf32, #tpu.memory_space<vmem>>, vector<1x128xf32>
    %254 = vector.broadcast %253 : vector<1x128xf32> to vector<8x128xf32>
    %255 = arith.addf %252, %254 : vector<8x128xf32>
    %c0_259 = arith.constant 0 : index
    %c0_260 = arith.constant 0 : index
    %c0_261 = arith.constant 0 : index
    %256 = vector.load %arg8[%c0_259, %c0_260, %c0_261] : memref<1x8x128xf32, #tpu.memory_space<vmem>>, vector<1x8x128xf32>
    %257 = vector.shape_cast %256 : vector<1x8x128xf32> to vector<8x128xf32>
    %258 = vector.shape_cast %255 : vector<8x128xf32> to vector<1x8x128xf32>
    tpu.vector_store %arg8[%c0_259, %c0_260, %c0_261], %258 {strides = array<i32>} : memref<1x8x128xf32, #tpu.memory_space<vmem>>, vector<1x8x128xf32>,
    return
  }
  func.func @transform_0(%arg0: i32) -> (i32, i32, i32, i32) {
    %c0_i32 = arith.constant 0 : i32
    %c0_i32_0 = arith.constant 0 : i32
    %c0_i32_1 = arith.constant 0 : i32
    %c0_i32_2 = arith.constant 0 : i32
    return %arg0, %c0_i32, %c0_i32_0, %c0_i32_1 : i32, i32, i32, i32
  }
  func.func @transform_1(%arg0: i32) -> (i32, i32, i32) {
    %c0_i32 = arith.constant 0 : i32
    %c0_i32_0 = arith.constant 0 : i32
    %c0_i32_1 = arith.constant 0 : i32
    %c0_i32_2 = arith.constant 0 : i32
    return %c0_i32, %c0_i32_0, %c0_i32_1 : i32, i32, i32
  }
  func.func @transform_2(%arg0: i32) -> (i32, i32) {
    %c0_i32 = arith.constant 0 : i32
    %c0_i32_0 = arith.constant 0 : i32
    %c0_i32_1 = arith.constant 0 : i32
    return %c0_i32, %c0_i32_0 : i32, i32
  }
  func.func @transform_3(%arg0: i32) -> (i32, i32, i32, i32) {
    %c0_i32 = arith.constant 0 : i32
    %c0_i32_0 = arith.constant 0 : i32
    %c0_i32_1 = arith.constant 0 : i32
    %c0_i32_2 = arith.constant 0 : i32
    %c0_i32_3 = arith.constant 0 : i32
    return %c0_i32, %c0_i32_0, %c0_i32_1, %c0_i32_2 : i32, i32, i32, i32
  }
  func.func @transform_4(%arg0: i32) -> (i32, i32) {
    %c0_i32 = arith.constant 0 : i32
    %c0_i32_0 = arith.constant 0 : i32
    %c0_i32_1 = arith.constant 0 : i32
    return %c0_i32, %c0_i32_0 : i32, i32
  }
  func.func @transform_5(%arg0: i32) -> (i32, i32, i32) {
    %c0_i32 = arith.constant 0 : i32
    %c0_i32_0 = arith.constant 0 : i32
    %c0_i32_1 = arith.constant 0 : i32
    %c0_i32_2 = arith.constant 0 : i32
    return %c0_i32, %c0_i32_0, %c0_i32_1 : i32, i32, i32
  }
  func.func @transform_6(%arg0: i32) -> (i32, i32) {
    %c0_i32 = arith.constant 0 : i32
    %c0_i32_0 = arith.constant 0 : i32
    %c0_i32_1 = arith.constant 0 : i32
    return %c0_i32, %c0_i32_0 : i32, i32
  }
  func.func @transform_7(%arg0: i32) -> (i32, i32, i32) {
    %c0_i32 = arith.constant 0 : i32
    %c0_i32_0 = arith.constant 0 : i32
    %c0_i32_1 = arith.constant 0 : i32
    return %arg0, %c0_i32, %c0_i32_0 : i32, i32, i32
  }
}

</mosaic_0001>

<llo_original>
// kernel: cnn_forward.1
$region0: #{cnn_forward.1}
  #allocation0 [shape = 'u32[]', space=smem, size = 0x4, offset = 0x4, fixed_abs, tag = 'smem constant byte address 0x4 - core index']
  #allocation1 [shape = 'u32[144,128]{1,0:T(1,128)}', space=vmem, size = 0x12000, scoped, tag = 'internal scratch']
  #allocation2 [shape = 'bf16[2,72,288]{2,1,0:T(8,128)(2,1)}', space=vmem, size = 0x1b000, scoped, tag = 'scratch operand']
  %s0 = inlined_call_operand.vmem [shape: bf16[1,2,112,160], index: 0, kind: input, shape index: {}]
  %s1 = inlined_call_operand.vmem [shape: bf16[2,160,288], index: 1, kind: input, shape index: {}]
  %s2 = inlined_call_operand.vmem [shape: f32[1,288], index: 2, kind: input, shape index: {}]
  %s3 = inlined_call_operand.vmem [shape: bf16[2,5,288,224], index: 3, kind: input, shape index: {}]
  %s4 = inlined_call_operand.vmem [shape: f32[1,224], index: 4, kind: input, shape index: {}]
  %s5 = inlined_call_operand.vmem [shape: bf16[7,224,128], index: 5, kind: input, shape index: {}]
  %s6 = inlined_call_operand.vmem [shape: f32[1,128], index: 6, kind: input, shape index: {}]
  %s7 = inlined_call_operand.vmem [shape: f32[1,8,128], index: 7, kind: output, shape index: {}]
  %s8 = sld [smem:[#allocation0]]
  $region38: #{cnn_forward.1} parent=0
    _
  %s10 = ssub.s32 1, %s8
  %s11 = scalar_select 0, %s10, %s8
  // Predicated region
  $region2: #{cnn_forward.1} parent=0 // pred_check
    _
  $region3: #{cnn_forward.1} parent=0 // pred_check_branch
    %13 = sbr.rel (0) target = $region5
  $region4: #{cnn_forward.1} parent=0 // pred_region
    _
  $region5: #{cnn_forward.1} parent=0 // pred_fallthru
    _
  // Predicated region
  $region6: #{cnn_forward.1} parent=0 // pred_check
    _
  $region7: #{cnn_forward.1} parent=0 // pred_check_branch
    %15 = sbr.rel (0) target = $region9
  $region8: #{cnn_forward.1} parent=0 // pred_region
    _
  $region9: #{cnn_forward.1} parent=0 // pred_fallthru
    _
  // Predicated region
  $region10: #{cnn_forward.1} parent=0 // pred_check
    _
  $region11: #{cnn_forward.1} parent=0 // pred_check_branch
    %17 = sbr.rel (0) target = $region13
  $region12: #{cnn_forward.1} parent=0 // pred_region
    _
  $region13: #{cnn_forward.1} parent=0 // pred_fallthru
    _
  // Predicated region
  $region14: #{cnn_forward.1} parent=0 // pred_check
    _
  $region15: #{cnn_forward.1} parent=0 // pred_check_branch
    %19 = sbr.rel (0) target = $region17
  $region16: #{cnn_forward.1} parent=0 // pred_region
    _
  $region17: #{cnn_forward.1} parent=0 // pred_fallthru
    _
  // Predicated region
  $region18: #{cnn_forward.1} parent=0 // pred_check
    _
  $region19: #{cnn_forward.1} parent=0 // pred_check_branch
    %21 = sbr.rel (0) target = $region21
  $region20: #{cnn_forward.1} parent=0 // pred_region
    _
  $region21: #{cnn_forward.1} parent=0 // pred_fallthru
    _
  // Predicated region
  $region22: #{cnn_forward.1} parent=0 // pred_check
    _
  $region23: #{cnn_forward.1} parent=0 // pred_check_branch
    %23 = sbr.rel (0) target = $region25
  $region24: #{cnn_forward.1} parent=0 // pred_region
    _
  $region25: #{cnn_forward.1} parent=0 // pred_fallthru
    _
  // Predicated region
  $region26: #{cnn_forward.1} parent=0 // pred_check
    _
  $region27: #{cnn_forward.1} parent=0 // pred_check_branch
    %25 = sbr.rel (0) target = $region29
  $region28: #{cnn_forward.1} parent=0 // pred_region
    _
  $region29: #{cnn_forward.1} parent=0 // pred_fallthru
    _
  %27 = vst [vmem:[#allocation2] sm:$0xff] 0
  %vm28 = vcmask 257024
  %29 = vst.msk [vmem:[#allocation2 + $0x8] sm:$0xf] %vm28, 0
  %30 = vst [vmem:[#allocation2 + $0x60] sm:$0xff] 0
  %31 = vst.msk [vmem:[#allocation2 + $0x68] sm:$0xf] %vm28, 0
  %s32 = scalar_lea.vmem [#allocation2], 108
  %33 = vst [vmem:[%s32] sm:$0xff] 0
  %34 = vst.msk [vmem:[%s32 + $0x8] sm:$0xf] %vm28, 0
  %35 = vst [vmem:[%s32 + $0x60] sm:$0xff] 0
  %36 = vst.msk [vmem:[%s32 + $0x68] sm:$0xf] %vm28, 0
  %v37 = vld [vmem:[%s0] sm:$0xff]
  %v38 = vld [vmem:[%s0 + $0x8] sm:$0xff]
  %v39 = vld [vmem:[%s0 + $0x10] sm:$0xff]
  %v40 = vld [vmem:[%s0 + $0x18] sm:$0xff]
  %v41 = vld [vmem:[%s0 + $0x20] sm:$0xff]
  %v42 = vld [vmem:[%s0 + $0x28] sm:$0xff]
  %v43 = vld [vmem:[%s0 + $0x30] sm:$0xff]
  %v44 = vld [vmem:[%s0 + $0x38] sm:$0xff]
  %v45 = vld [vmem:[%s0 + $0x40] sm:$0xff]
  %v46 = vld [vmem:[%s0 + $0x48] sm:$0xff]
  %v47 = vld [vmem:[%s0 + $0x50] sm:$0xff]
  %v48 = vld [vmem:[%s0 + $0x58] sm:$0xff]
  %v49 = vld [vmem:[%s0 + $0x60] sm:$0xff]
  %v50 = vld [vmem:[%s0 + $0x68] sm:$0xff]
  %v51 = vld [vmem:[%s1] sm:$0xff]
  %v52 = vld [vmem:[%s1 + $0x8] sm:$0xf]
  %v53 = vld [vmem:[%s1 + $0xc] sm:$0xff]
  %v54 = vld [vmem:[%s1 + $0x14] sm:$0xf]
  %v55 = vld [vmem:[%s1 + $0x18] sm:$0xff]
  %v56 = vld [vmem:[%s1 + $0x20] sm:$0xf]
  %v57 = vld [vmem:[%s1 + $0x24] sm:$0xff]
  %v58 = vld [vmem:[%s1 + $0x2c] sm:$0xf]
  %v59 = vld [vmem:[%s1 + $0x30] sm:$0xff]
  %v60 = vld [vmem:[%s1 + $0x38] sm:$0xf]
  %v61 = vld [vmem:[%s1 + $0x3c] sm:$0xff]
  %v62 = vld [vmem:[%s1 + $0x44] sm:$0xf]
  %v63 = vld [vmem:[%s1 + $0x48] sm:$0xff]
  %v64 = vld [vmem:[%s1 + $0x50] sm:$0xf]
  %v65 = vld [vmem:[%s1 + $0x54] sm:$0xff]
  %v66 = vld [vmem:[%s1 + $0x5c] sm:$0xf]
  %v67 = vld [vmem:[%s1 + $0x60] sm:$0xff]
  %v68 = vld [vmem:[%s1 + $0x68] sm:$0xf]
  %v69 = vld [vmem:[%s1 + $0x6c] sm:$0xff]
  %v70 = vld [vmem:[%s1 + $0x74] sm:$0xf]
  %v71 = vld [vmem:[%s1 + $0x78] sm:$0xff]
  %v72 = vld [vmem:[%s1 + $0x80] sm:$0xf]
  %v73 = vld [vmem:[%s1 + $0x84] sm:$0xff]
  %v74 = vld [vmem:[%s1 + $0x8c] sm:$0xf]
  %v75 = vld [vmem:[%s1 + $0x90] sm:$0xff]
  %v76 = vld [vmem:[%s1 + $0x98] sm:$0xf]
  %v77 = vld [vmem:[%s1 + $0x9c] sm:$0xff]
  %v78 = vld [vmem:[%s1 + $0xa4] sm:$0xf]
  %v79 = vld [vmem:[%s1 + $0xa8] sm:$0xff]
  %v80 = vld [vmem:[%s1 + $0xb0] sm:$0xf]
  %v81 = vld [vmem:[%s1 + $0xb4] sm:$0xff]
  %v82 = vld [vmem:[%s1 + $0xbc] sm:$0xf]
  %v83 = vld [vmem:[%s1 + $0xc0] sm:$0xff]
  %v84 = vld [vmem:[%s1 + $0xc8] sm:$0xf]
  %v85 = vld [vmem:[%s1 + $0xcc] sm:$0xff]
  %v86 = vld [vmem:[%s1 + $0xd4] sm:$0xf]
  %v87 = vld [vmem:[%s1 + $0xd8] sm:$0xff]
  %v88 = vld [vmem:[%s1 + $0xe0] sm:$0xf]
  %v89 = vld [vmem:[%s1 + $0xe4] sm:$0xff]
  %v90 = vld [vmem:[%s1 + $0xec] sm:$0xf]
  %v105 = vunpack.c.l.b16 %v37
  %v106 = vunpack.c.h.b16 %v37
  %v107 = vunpack.c.l.b16 %v38
  %v108 = vunpack.c.h.b16 %v38
  %v109 = vunpack.c.l.b16 %v39
  %v110 = vunpack.c.h.b16 %v39
  %v111 = vunpack.c.l.b16 %v40
  %v112 = vunpack.c.h.b16 %v40
  %v113 = vunpack.c.l.b16 %v41
  %v114 = vunpack.c.h.b16 %v41
  %v115 = vunpack.c.l.b16 %v42
  %v116 = vunpack.c.h.b16 %v42
  %v117 = vunpack.c.l.b16 %v43
  %v118 = vunpack.c.h.b16 %v43
  %v119 = vunpack.c.l.b16 %v44
  %v120 = vunpack.c.h.b16 %v44
  %v121 = vunpack.c.l.b16 %v45
  %v122 = vunpack.c.h.b16 %v45
  %v123 = vunpack.c.l.b16 %v46
  %v124 = vunpack.c.h.b16 %v46
  %v125 = vunpack.c.l.b16 %v47
  %v126 = vunpack.c.h.b16 %v47
  %v127 = vunpack.c.l.b16 %v48
  %v128 = vunpack.c.h.b16 %v48
  %v129 = vunpack.c.l.b16 %v49
  %v130 = vunpack.c.h.b16 %v49
  %v131 = vunpack.c.l.b16 %v50
  %v132 = vunpack.c.h.b16 %v50
  %v133 = vpack.c.b16 %v107, %v105
  %v134 = vpack.c.b16 %v108, %v106
  %v135 = vpack.c.b16 %v111, %v109
  %v136 = vpack.c.b16 %v112, %v110
  %v137 = vpack.c.b16 %v115, %v113
  %v138 = vpack.c.b16 %v116, %v114
  %v139 = vpack.c.b16 %v119, %v117
  %v140 = vpack.c.b16 %v120, %v118
  %v141 = vpack.c.b16 %v123, %v121
  %v142 = vpack.c.b16 %v124, %v122
  %v143 = vpack.c.b16 %v127, %v125
  %v144 = vpack.c.b16 %v128, %v126
  %v145 = vpack.c.b16 %v131, %v129
  %v146 = vpack.c.b16 %v132, %v130
  %v194 = vunpack.c.l.b16 %v51
  %v195 = vunpack.c.h.b16 %v51
  %v196 = vunpack.c.l.b16 %v52
  %v197 = vunpack.c.l.b16 %v53
  %v198 = vunpack.c.h.b16 %v53
  %v199 = vunpack.c.l.b16 %v54
  %v200 = vunpack.c.l.b16 %v55
  %v201 = vunpack.c.h.b16 %v55
  %v202 = vunpack.c.l.b16 %v56
  %v203 = vunpack.c.l.b16 %v57
  %v204 = vunpack.c.h.b16 %v57
  %v205 = vunpack.c.l.b16 %v58
  %v206 = vunpack.c.l.b16 %v59
  %v207 = vunpack.c.h.b16 %v59
  %v208 = vunpack.c.l.b16 %v60
  %v209 = vunpack.c.l.b16 %v61
  %v210 = vunpack.c.h.b16 %v61
  %v211 = vunpack.c.l.b16 %v62
  %v212 = vunpack.c.l.b16 %v63
  %v213 = vunpack.c.h.b16 %v63
  %v214 = vunpack.c.l.b16 %v64
  %v215 = vunpack.c.l.b16 %v65
  %v216 = vunpack.c.h.b16 %v65
  %v217 = vunpack.c.l.b16 %v66
  %v218 = vunpack.c.l.b16 %v67
  %v219 = vunpack.c.h.b16 %v67
  %v220 = vunpack.c.l.b16 %v68
  %v221 = vunpack.c.l.b16 %v69
  %v222 = vunpack.c.h.b16 %v69
  %v223 = vunpack.c.l.b16 %v70
  %v224 = vunpack.c.l.b16 %v71
  %v225 = vunpack.c.h.b16 %v71
  %v226 = vunpack.c.l.b16 %v72
  %v227 = vunpack.c.l.b16 %v73
  %v228 = vunpack.c.h.b16 %v73
  %v229 = vunpack.c.l.b16 %v74
  %v230 = vunpack.c.l.b16 %v75
  %v231 = vunpack.c.h.b16 %v75
  %v232 = vunpack.c.l.b16 %v76
  %v233 = vunpack.c.l.b16 %v77
  %v234 = vunpack.c.h.b16 %v77
  %v235 = vunpack.c.l.b16 %v78
  %v236 = vunpack.c.l.b16 %v79
  %v237 = vunpack.c.h.b16 %v79
  %v238 = vunpack.c.l.b16 %v80
  %v239 = vunpack.c.l.b16 %v81
  %v240 = vunpack.c.h.b16 %v81
  %v241 = vunpack.c.l.b16 %v82
  %v242 = vunpack.c.l.b16 %v83
  %v243 = vunpack.c.h.b16 %v83
  %v244 = vunpack.c.l.b16 %v84
  %v245 = vunpack.c.l.b16 %v85
  %v246 = vunpack.c.h.b16 %v85
  %v247 = vunpack.c.l.b16 %v86
  %v248 = vunpack.c.l.b16 %v87
  %v249 = vunpack.c.h.b16 %v87
  %v250 = vunpack.c.l.b16 %v88
  %v251 = vunpack.c.l.b16 %v89
  %v252 = vunpack.c.h.b16 %v89
  %v253 = vunpack.c.l.b16 %v90
  %v254 = vpack.c.b16 %v197, %v194
  %v255 = vpack.c.b16 %v198, %v195
  %v256 = vpack.c.b16 %v199, %v196
  %v257 = vpack.c.b16 %v203, %v200
  %v258 = vpack.c.b16 %v204, %v201
  %v259 = vpack.c.b16 %v205, %v202
  %v260 = vpack.c.b16 %v209, %v206
  %v261 = vpack.c.b16 %v210, %v207
  %v262 = vpack.c.b16 %v211, %v208
  %v263 = vpack.c.b16 %v215, %v212
  %v264 = vpack.c.b16 %v216, %v213
  %v265 = vpack.c.b16 %v217, %v214
  %v266 = vpack.c.b16 %v221, %v218
  %v267 = vpack.c.b16 %v222, %v219
  %v268 = vpack.c.b16 %v223, %v220
  %v269 = vpack.c.b16 %v227, %v224
  %v270 = vpack.c.b16 %v228, %v225
  %v271 = vpack.c.b16 %v229, %v226
  %v272 = vpack.c.b16 %v233, %v230
  %v273 = vpack.c.b16 %v234, %v231
  %v274 = vpack.c.b16 %v235, %v232
  %v275 = vpack.c.b16 %v239, %v236
  %v276 = vpack.c.b16 %v240, %v237
  %v277 = vpack.c.b16 %v241, %v238
  %v278 = vpack.c.b16 %v245, %v242
  %v279 = vpack.c.b16 %v246, %v243
  %v280 = vpack.c.b16 %v247, %v244
  %v281 = vpack.c.b16 %v251, %v248
  %v282 = vpack.c.b16 %v252, %v249
  %v283 = vpack.c.b16 %v253, %v250
  %vm314 = vcmask 261120
  %v316 = vsel %vm314, %v134, 0
  %v319 = vsel %vm314, %v136, 0
  %v322 = vsel %vm314, %v138, 0
  %v325 = vsel %vm314, %v140, 0
  %v328 = vsel %vm314, %v142, 0
  %v331 = vsel %vm314, %v144, 0
  %v334 = vsel %vm314, %v146, 0
  %336 = vmatprep.subr.bf16.mxu0 %v276
  %337 = vmatpush1.bf16.msra.mxu0 %v275
  %338 = vmatprep.subr.bf16.mxu0 %v273
  %339 = vmatpush1.bf16.msra.mxu0 %v272
  %340 = vmatprep.subr.bf16.mxu0 %v270
  %341 = vmatpush1.bf16.msra.mxu0 %v269
  %342 = vmatprep.subr.bf16.mxu0 %v267
  %343 = vmatpush1.bf16.msra.mxu0 %v266
  %344 = vmatprep.subr.bf16.mxu0 %v264
  %345 = vmatpush1.bf16.msra.mxu0 %v263
  %346 = vmatprep.subr.bf16.mxu0 %v261
  %347 = vmatpush1.bf16.msra.mxu0 %v260
  %348 = vmatprep.subr.bf16.mxu0 %v258
  %349 = vmatpush1.bf16.msra.mxu0 %v257
  %350 = vmatprep.subr.bf16.mxu0 %v255
  %351 = vmatpush1.bf16.msra.mxu0 %v254
  %352 = vmatprep.subr.bf16.mxu0 0
  %353 = vmatpush2.bf16.msra.mxu0 0
  %354 = vmatprep.subr.bf16.mxu0 0
  %355 = vmatpush2.bf16.msra.mxu0 0
  %356 = vmatprep.subr.bf16.mxu0 0
  %357 = vmatpush2.bf16.msra.mxu0 0
  %358 = vmatprep.subr.bf16.mxu0 0
  %359 = vmatpush2.bf16.msra.mxu0 0
  %360 = vmatprep.subr.bf16.mxu0 0
  %361 = vmatpush2.bf16.msra.mxu0 0
  %362 = vmatprep.subr.bf16.mxu0 0
  %363 = vmatpush2.bf16.msra.mxu0 0
  %364 = vmatprep.subr.bf16.mxu0 %v282
  %365 = vmatpush2.bf16.msra.mxu0 %v281
  %366 = vmatprep.subr.bf16.mxu0 %v279
  %367 = vmatpush2.bf16.msra.mxu0 %v278
  %368 = vmatprep.mubr.bf16.mxu0 %v316
  %369 = vmatmul.mubr.bf16.gmra.mxu0 %v133
  %v370 = vpop.f32.mrf.mxu0
  %v371 = vadd.f32 0.0, %v370
  %v372 = vpop.f32.mrf.mxu0
  %v373 = vadd.f32 0.0, %v372
  %v374 = vpop.f32.mrf.mxu0
  %v375 = vadd.f32 0.0, %v374
  %v376 = vpop.f32.mrf.mxu0
  %v377 = vadd.f32 0.0, %v376
  %378 = vmatprep.mubr.bf16.mxu0 %v319
  %379 = vmatmul.mubr.bf16.gmra.mxu0 %v135
  %v380 = vpop.f32.mrf.mxu0
  %v381 = vadd.f32 0.0, %v380
  %v382 = vpop.f32.mrf.mxu0
  %v383 = vadd.f32 0.0, %v382
  %v384 = vpop.f32.mrf.mxu0
  %v385 = vadd.f32 0.0, %v384
  %v386 = vpop.f32.mrf.mxu0
  %v387 = vadd.f32 0.0, %v386
  %388 = vmatprep.mubr.bf16.mxu0 %v322
  %389 = vmatmul.mubr.bf16.gmra.mxu0 %v137
  %v390 = vpop.f32.mrf.mxu0
  %v391 = vadd.f32 0.0, %v390
  %v392 = vpop.f32.mrf.mxu0
  %v393 = vadd.f32 0.0, %v392
  %v394 = vpop.f32.mrf.mxu0
  %v395 = vadd.f32 0.0, %v394
  %v396 = vpop.f32.mrf.mxu0
  %v397 = vadd.f32 0.0, %v396
  %398 = vmatprep.mubr.bf16.mxu0 %v325
  %399 = vmatmul.mubr.bf16.gmra.mxu0 %v139
  %v400 = vpop.f32.mrf.mxu0
  %v401 = vadd.f32 0.0, %v400
  %v402 = vpop.f32.mrf.mxu0
  %v403 = vadd.f32 0.0, %v402
  %v404 = vpop.f32.mrf.mxu0
  %v405 = vadd.f32 0.0, %v404
  %v406 = vpop.f32.mrf.mxu0
  %v407 = vadd.f32 0.0, %v406
  %408 = vmatprep.mubr.bf16.mxu0 %v328
  %409 = vmatmul.mubr.bf16.gmra.mxu0 %v141
  %v410 = vpop.f32.mrf.mxu0
  %v411 = vadd.f32 0.0, %v410
  %v412 = vpop.f32.mrf.mxu0
  %v413 = vadd.f32 0.0, %v412
  %v414 = vpop.f32.mrf.mxu0
  %v415 = vadd.f32 0.0, %v414
  %v416 = vpop.f32.mrf.mxu0
  %v417 = vadd.f32 0.0, %v416
  %418 = vmatprep.mubr.bf16.mxu0 %v331
  %419 = vmatmul.mubr.bf16.gmra.mxu0 %v143
  %v420 = vpop.f32.mrf.mxu0
  %v421 = vadd.f32 0.0, %v420
  %v422 = vpop.f32.mrf.mxu0
  %v423 = vadd.f32 0.0, %v422
  %v424 = vpop.f32.mrf.mxu0
  %v425 = vadd.f32 0.0, %v424
  %v426 = vpop.f32.mrf.mxu0
  %v427 = vadd.f32 0.0, %v426
  %428 = vmatprep.mubr.bf16.mxu0 %v334
  %429 = vmatmul.mubr.bf16.gmra.mxu0 %v145
  %v430 = vpop.f32.mrf.mxu0
  %v431 = vadd.f32 0.0, %v430
  %v432 = vpop.f32.mrf.mxu0
  %v433 = vadd.f32 0.0, %v432
  %v434 = vpop.f32.mrf.mxu0
  %v435 = vadd.f32 0.0, %v434
  %v436 = vpop.f32.mrf.mxu0
  %v437 = vadd.f32 0.0, %v436
  %438 = vdwg.mxu0
  %439 = vmatprep.subr.bf16.mxu0 0
  %440 = vmatpush1.bf16.msra.mxu0 %v277
  %441 = vmatprep.subr.bf16.mxu0 0
  %442 = vmatpush1.bf16.msra.mxu0 %v274
  %443 = vmatprep.subr.bf16.mxu0 0
  %444 = vmatpush1.bf16.msra.mxu0 %v271
  %445 = vmatprep.subr.bf16.mxu0 0
  %446 = vmatpush1.bf16.msra.mxu0 %v268
  %447 = vmatprep.subr.bf16.mxu0 0
  %448 = vmatpush1.bf16.msra.mxu0 %v265
  %449 = vmatprep.subr.bf16.mxu0 0
  %450 = vmatpush1.bf16.msra.mxu0 %v262
  %451 = vmatprep.subr.bf16.mxu0 0
  %452 = vmatpush1.bf16.msra.mxu0 %v259
  %453 = vmatprep.subr.bf16.mxu0 0
  %454 = vmatpush1.bf16.msra.mxu0 %v256
  %455 = vmatprep.subr.bf16.mxu0 0
  %456 = vmatpush2.bf16.msra.mxu0 0
  %457 = vmatprep.subr.bf16.mxu0 0
  %458 = vmatpush2.bf16.msra.mxu0 0
  %459 = vmatprep.subr.bf16.mxu0 0
  %460 = vmatpush2.bf16.msra.mxu0 0
  %461 = vmatprep.subr.bf16.mxu0 0
  %462 = vmatpush2.bf16.msra.mxu0 0
  %463 = vmatprep.subr.bf16.mxu0 0
  %464 = vmatpush2.bf16.msra.mxu0 0
  %465 = vmatprep.subr.bf16.mxu0 0
  %466 = vmatpush2.bf16.msra.mxu0 0
  %467 = vmatprep.subr.bf16.mxu0 0
  %468 = vmatpush2.bf16.msra.mxu0 %v283
  %469 = vmatprep.subr.bf16.mxu0 0
  %470 = vmatpush2.bf16.msra.mxu0 %v280
  %471 = vmatprep.mubr.bf16.mxu0 %v316
  %472 = vmatmul.mubr.bf16.gmra.mxu0 %v133
  %v473 = vpop.f32.mrf.mxu0
  %v474 = vadd.f32 0.0, %v473
  %v475 = vpop.f32.mrf.mxu0
  %v476 = vpop.f32.mrf.mxu0
  %v477 = vadd.f32 0.0, %v476
  %v478 = vpop.f32.mrf.mxu0
  %479 = vmatprep.mubr.bf16.mxu0 %v319
  %480 = vmatmul.mubr.bf16.gmra.mxu0 %v135
  %v481 = vpop.f32.mrf.mxu0
  %v482 = vadd.f32 0.0, %v481
  %v483 = vpop.f32.mrf.mxu0
  %v484 = vpop.f32.mrf.mxu0
  %v485 = vadd.f32 0.0, %v484
  %v486 = vpop.f32.mrf.mxu0
  %487 = vmatprep.mubr.bf16.mxu0 %v322
  %488 = vmatmul.mubr.bf16.gmra.mxu0 %v137
  %v489 = vpop.f32.mrf.mxu0
  %v490 = vadd.f32 0.0, %v489
  %v491 = vpop.f32.mrf.mxu0
  %v492 = vpop.f32.mrf.mxu0
  %v493 = vadd.f32 0.0, %v492
  %v494 = vpop.f32.mrf.mxu0
  %495 = vmatprep.mubr.bf16.mxu0 %v325
  %496 = vmatmul.mubr.bf16.gmra.mxu0 %v139
  %v497 = vpop.f32.mrf.mxu0
  %v498 = vadd.f32 0.0, %v497
  %v499 = vpop.f32.mrf.mxu0
  %v500 = vpop.f32.mrf.mxu0
  %v501 = vadd.f32 0.0, %v500
  %v502 = vpop.f32.mrf.mxu0
  %503 = vmatprep.mubr.bf16.mxu0 %v328
  %504 = vmatmul.mubr.bf16.gmra.mxu0 %v141
  %v505 = vpop.f32.mrf.mxu0
  %v506 = vadd.f32 0.0, %v505
  %v507 = vpop.f32.mrf.mxu0
  %v508 = vpop.f32.mrf.mxu0
  %v509 = vadd.f32 0.0, %v508
  %v510 = vpop.f32.mrf.mxu0
  %511 = vmatprep.mubr.bf16.mxu0 %v331
  %512 = vmatmul.mubr.bf16.gmra.mxu0 %v143
  %v513 = vpop.f32.mrf.mxu0
  %v514 = vadd.f32 0.0, %v513
  %v515 = vpop.f32.mrf.mxu0
  %v516 = vpop.f32.mrf.mxu0
  %v517 = vadd.f32 0.0, %v516
  %v518 = vpop.f32.mrf.mxu0
  %519 = vmatprep.mubr.bf16.mxu0 %v334
  %520 = vmatmul.mubr.bf16.gmra.mxu0 %v145
  %v521 = vpop.f32.mrf.mxu0
  %v522 = vadd.f32 0.0, %v521
  %v523 = vpop.f32.mrf.mxu0
  %v524 = vpop.f32.mrf.mxu0
  %v525 = vadd.f32 0.0, %v524
  %v526 = vpop.f32.mrf.mxu0
  %527 = vdwg.mxu0
  %s528 = scalar_lea.vmem %s1, 240
  %v529 = vld [vmem:[%s528] sm:$0xff]
  %v530 = vld [vmem:[%s528 + $0x8] sm:$0xf]
  %v531 = vld [vmem:[%s528 + $0xc] sm:$0xff]
  %v532 = vld [vmem:[%s528 + $0x14] sm:$0xf]
  %v533 = vld [vmem:[%s528 + $0x18] sm:$0xff]
  %v534 = vld [vmem:[%s528 + $0x20] sm:$0xf]
  %v535 = vld [vmem:[%s528 + $0x24] sm:$0xff]
  %v536 = vld [vmem:[%s528 + $0x2c] sm:$0xf]
  %v537 = vld [vmem:[%s528 + $0x30] sm:$0xff]
  %v538 = vld [vmem:[%s528 + $0x38] sm:$0xf]
  %v539 = vld [vmem:[%s528 + $0x3c] sm:$0xff]
  %v540 = vld [vmem:[%s528 + $0x44] sm:$0xf]
  %v541 = vld [vmem:[%s528 + $0x48] sm:$0xff]
  %v542 = vld [vmem:[%s528 + $0x50] sm:$0xf]
  %v543 = vld [vmem:[%s528 + $0x54] sm:$0xff]
  %v544 = vld [vmem:[%s528 + $0x5c] sm:$0xf]
  %v545 = vld [vmem:[%s528 + $0x60] sm:$0xff]
  %v546 = vld [vmem:[%s528 + $0x68] sm:$0xf]
  %v547 = vld [vmem:[%s528 + $0x6c] sm:$0xff]
  %v548 = vld [vmem:[%s528 + $0x74] sm:$0xf]
  %v549 = vld [vmem:[%s528 + $0x78] sm:$0xff]
  %v550 = vld [vmem:[%s528 + $0x80] sm:$0xf]
  %v551 = vld [vmem:[%s528 + $0x84] sm:$0xff]
  %v552 = vld [vmem:[%s528 + $0x8c] sm:$0xf]
  %v553 = vld [vmem:[%s528 + $0x90] sm:$0xff]
  %v554 = vld [vmem:[%s528 + $0x98] sm:$0xf]
  %v555 = vld [vmem:[%s528 + $0x9c] sm:$0xff]
  %v556 = vld [vmem:[%s528 + $0xa4] sm:$0xf]
  %v557 = vld [vmem:[%s528 + $0xa8] sm:$0xff]
  %v558 = vld [vmem:[%s528 + $0xb0] sm:$0xf]
  %v559 = vld [vmem:[%s528 + $0xb4] sm:$0xff]
  %v560 = vld [vmem:[%s528 + $0xbc] sm:$0xf]
  %v561 = vld [vmem:[%s528 + $0xc0] sm:$0xff]
  %v562 = vld [vmem:[%s528 + $0xc8] sm:$0xf]
  %v563 = vld [vmem:[%s528 + $0xcc] sm:$0xff]
  %v564 = vld [vmem:[%s528 + $0xd4] sm:$0xf]
  %v565 = vld [vmem:[%s528 + $0xd8] sm:$0xff]
  %v566 = vld [vmem:[%s528 + $0xe0] sm:$0xf]
  %v567 = vld [vmem:[%s528 + $0xe4] sm:$0xff]
  %v568 = vld [vmem:[%s528 + $0xec] sm:$0xf]
  %v609 = vunpack.c.l.b16 %v529
  %v610 = vunpack.c.h.b16 %v529
  %v611 = vunpack.c.l.b16 %v530
  %v612 = vunpack.c.l.b16 %v531
  %v613 = vunpack.c.h.b16 %v531
  %v614 = vunpack.c.l.b16 %v532
  %v615 = vunpack.c.l.b16 %v533
  %v616 = vunpack.c.h.b16 %v533
  %v617 = vunpack.c.l.b16 %v534
  %v618 = vunpack.c.l.b16 %v535
  %v619 = vunpack.c.h.b16 %v535
  %v620 = vunpack.c.l.b16 %v536
  %v621 = vunpack.c.l.b16 %v537
  %v622 = vunpack.c.h.b16 %v537
  %v623 = vunpack.c.l.b16 %v538
  %v624 = vunpack.c.l.b16 %v539
  %v625 = vunpack.c.h.b16 %v539
  %v626 = vunpack.c.l.b16 %v540
  %v627 = vunpack.c.l.b16 %v541
  %v628 = vunpack.c.h.b16 %v541
  %v629 = vunpack.c.l.b16 %v542
  %v630 = vunpack.c.l.b16 %v543
  %v631 = vunpack.c.h.b16 %v543
  %v632 = vunpack.c.l.b16 %v544
  %v633 = vunpack.c.l.b16 %v545
  %v634 = vunpack.c.h.b16 %v545
  %v635 = vunpack.c.l.b16 %v546
  %v636 = vunpack.c.l.b16 %v547
  %v637 = vunpack.c.h.b16 %v547
  %v638 = vunpack.c.l.b16 %v548
  %v639 = vunpack.c.l.b16 %v549
  %v640 = vunpack.c.h.b16 %v549
  %v641 = vunpack.c.l.b16 %v550
  %v642 = vunpack.c.l.b16 %v551
  %v643 = vunpack.c.h.b16 %v551
  %v644 = vunpack.c.l.b16 %v552
  %v645 = vunpack.c.l.b16 %v553
  %v646 = vunpack.c.h.b16 %v553
  %v647 = vunpack.c.l.b16 %v554
  %v648 = vunpack.c.l.b16 %v555
  %v649 = vunpack.c.h.b16 %v555
  %v650 = vunpack.c.l.b16 %v556
  %v651 = vunpack.c.l.b16 %v557
  %v652 = vunpack.c.h.b16 %v557
  %v653 = vunpack.c.l.b16 %v558
  %v654 = vunpack.c.l.b16 %v559
  %v655 = vunpack.c.h.b16 %v559
  %v656 = vunpack.c.l.b16 %v560
  %v657 = vunpack.c.l.b16 %v561
  %v658 = vunpack.c.h.b16 %v561
  %v659 = vunpack.c.l.b16 %v562
  %v660 = vunpack.c.l.b16 %v563
  %v661 = vunpack.c.h.b16 %v563
  %v662 = vunpack.c.l.b16 %v564
  %v663 = vunpack.c.l.b16 %v565
  %v664 = vunpack.c.h.b16 %v565
  %v665 = vunpack.c.l.b16 %v566
  %v666 = vunpack.c.l.b16 %v567
  %v667 = vunpack.c.h.b16 %v567
  %v668 = vunpack.c.l.b16 %v568
  %v669 = vpack.c.b16 %v612, %v609
  %v670 = vpack.c.b16 %v613, %v610
  %v671 = vpack.c.b16 %v614, %v611
  %v672 = vpack.c.b16 %v618, %v615
  %v673 = vpack.c.b16 %v619, %v616
  %v674 = vpack.c.b16 %v620, %v617
  %v675 = vpack.c.b16 %v624, %v621
  %v676 = vpack.c.b16 %v625, %v622
  %v677 = vpack.c.b16 %v626, %v623
  %v678 = vpack.c.b16 %v630, %v627
  %v679 = vpack.c.b16 %v631, %v628
  %v680 = vpack.c.b16 %v632, %v629
  %v681 = vpack.c.b16 %v636, %v633
  %v682 = vpack.c.b16 %v637, %v634
  %v683 = vpack.c.b16 %v638, %v635
  %v684 = vpack.c.b16 %v642, %v639
  %v685 = vpack.c.b16 %v643, %v640
  %v686 = vpack.c.b16 %v644, %v641
  %v687 = vpack.c.b16 %v648, %v645
  %v688 = vpack.c.b16 %v649, %v646
  %v689 = vpack.c.b16 %v650, %v647
  %v690 = vpack.c.b16 %v654, %v651
  %v691 = vpack.c.b16 %v655, %v652
  %v692 = vpack.c.b16 %v656, %v653
  %v693 = vpack.c.b16 %v660, %v657
  %v694 = vpack.c.b16 %v661, %v658
  %v695 = vpack.c.b16 %v662, %v659
  %v696 = vpack.c.b16 %v666, %v663
  %v697 = vpack.c.b16 %v667, %v664
  %v698 = vpack.c.b16 %v668, %v665
  %729 = vmatprep.subr.bf16.mxu0 %v691
  %730 = vmatpush1.bf16.msra.mxu0 %v690
  %731 = vmatprep.subr.bf16.mxu0 %v688
  %732 = vmatpush1.bf16.msra.mxu0 %v687
  %733 = vmatprep.subr.bf16.mxu0 %v685
  %734 = vmatpush1.bf16.msra.mxu0 %v684
  %735 = vmatprep.subr.bf16.mxu0 %v682
  %736 = vmatpush1.bf16.msra.mxu0 %v681
  %737 = vmatprep.subr.bf16.mxu0 %v679
  %738 = vmatpush1.bf16.msra.mxu0 %v678
  %739 = vmatprep.subr.bf16.mxu0 %v676
  %740 = vmatpush1.bf16.msra.mxu0 %v675
  %741 = vmatprep.subr.bf16.mxu0 %v673
  %742 = vmatpush1.bf16.msra.mxu0 %v672
  %743 = vmatprep.subr.bf16.mxu0 %v670
  %744 = vmatpush1.bf16.msra.mxu0 %v669
  %745 = vmatprep.subr.bf16.mxu0 0
  %746 = vmatpush2.bf16.msra.mxu0 0
  %747 = vmatprep.subr.bf16.mxu0 0
  %748 = vmatpush2.bf16.msra.mxu0 0
  %749 = vmatprep.subr.bf16.mxu0 0
  %750 = vmatpush2.bf16.msra.mxu0 0
  %751 = vmatprep.subr.bf16.mxu0 0
  %752 = vmatpush2.bf16.msra.mxu0 0
  %753 = vmatprep.subr.bf16.mxu0 0
  %754 = vmatpush2.bf16.msra.mxu0 0
  %755 = vmatprep.subr.bf16.mxu0 0
  %756 = vmatpush2.bf16.msra.mxu0 0
  %757 = vmatprep.subr.bf16.mxu0 %v697
  %758 = vmatpush2.bf16.msra.mxu0 %v696
  %759 = vmatprep.subr.bf16.mxu0 %v694
  %760 = vmatpush2.bf16.msra.mxu0 %v693
  %761 = vmatprep.mubr.bf16.mxu0 %v316
  %762 = vmatmul.mubr.bf16.gmra.mxu0 %v133
  %v763 = vpop.f32.mrf.mxu0
  %v764 = vadd.f32 0.0, %v763
  %v765 = vpop.f32.mrf.mxu0
  %v766 = vadd.f32 0.0, %v765
  %v767 = vpop.f32.mrf.mxu0
  %v768 = vadd.f32 0.0, %v767
  %v769 = vpop.f32.mrf.mxu0
  %v770 = vadd.f32 0.0, %v769
  %771 = vmatprep.mubr.bf16.mxu0 %v319
  %772 = vmatmul.mubr.bf16.gmra.mxu0 %v135
  %v773 = vpop.f32.mrf.mxu0
  %v774 = vadd.f32 0.0, %v773
  %v775 = vpop.f32.mrf.mxu0
  %v776 = vadd.f32 0.0, %v775
  %v777 = vpop.f32.mrf.mxu0
  %v778 = vadd.f32 0.0, %v777
  %v779 = vpop.f32.mrf.mxu0
  %v780 = vadd.f32 0.0, %v779
  %781 = vmatprep.mubr.bf16.mxu0 %v322
  %782 = vmatmul.mubr.bf16.gmra.mxu0 %v137
  %v783 = vpop.f32.mrf.mxu0
  %v784 = vadd.f32 0.0, %v783
  %v785 = vpop.f32.mrf.mxu0
  %v786 = vadd.f32 0.0, %v785
  %v787 = vpop.f32.mrf.mxu0
  %v788 = vadd.f32 0.0, %v787
  %v789 = vpop.f32.mrf.mxu0
  %v790 = vadd.f32 0.0, %v789
  %791 = vmatprep.mubr.bf16.mxu0 %v325
  %792 = vmatmul.mubr.bf16.gmra.mxu0 %v139
  %v793 = vpop.f32.mrf.mxu0
  %v794 = vadd.f32 0.0, %v793
  %v795 = vpop.f32.mrf.mxu0
  %v796 = vadd.f32 0.0, %v795
  %v797 = vpop.f32.mrf.mxu0
  %v798 = vadd.f32 0.0, %v797
  %v799 = vpop.f32.mrf.mxu0
  %v800 = vadd.f32 0.0, %v799
  %801 = vmatprep.mubr.bf16.mxu0 %v328
  %802 = vmatmul.mubr.bf16.gmra.mxu0 %v141
  %v803 = vpop.f32.mrf.mxu0
  %v804 = vadd.f32 0.0, %v803
  %v805 = vpop.f32.mrf.mxu0
  %v806 = vadd.f32 0.0, %v805
  %v807 = vpop.f32.mrf.mxu0
  %v808 = vadd.f32 0.0, %v807
  %v809 = vpop.f32.mrf.mxu0
  %v810 = vadd.f32 0.0, %v809
  %811 = vmatprep.mubr.bf16.mxu0 %v331
  %812 = vmatmul.mubr.bf16.gmra.mxu0 %v143
  %v813 = vpop.f32.mrf.mxu0
  %v814 = vadd.f32 0.0, %v813
  %v815 = vpop.f32.mrf.mxu0
  %v816 = vadd.f32 0.0, %v815
  %v817 = vpop.f32.mrf.mxu0
  %v818 = vadd.f32 0.0, %v817
  %v819 = vpop.f32.mrf.mxu0
  %v820 = vadd.f32 0.0, %v819
  %821 = vmatprep.mubr.bf16.mxu0 %v334
  %822 = vmatmul.mubr.bf16.gmra.mxu0 %v145
  %v823 = vpop.f32.mrf.mxu0
  %v824 = vadd.f32 0.0, %v823
  %v825 = vpop.f32.mrf.mxu0
  %v826 = vadd.f32 0.0, %v825
  %v827 = vpop.f32.mrf.mxu0
  %v828 = vadd.f32 0.0, %v827
  %v829 = vpop.f32.mrf.mxu0
  %v830 = vadd.f32 0.0, %v829
  %831 = vdwg.mxu0
  %832 = vmatprep.subr.bf16.mxu0 0
  %833 = vmatpush1.bf16.msra.mxu0 %v692
  %834 = vmatprep.subr.bf16.mxu0 0
  %835 = vmatpush1.bf16.msra.mxu0 %v689
  %836 = vmatprep.subr.bf16.mxu0 0
  %837 = vmatpush1.bf16.msra.mxu0 %v686
  %838 = vmatprep.subr.bf16.mxu0 0
  %839 = vmatpush1.bf16.msra.mxu0 %v683
  %840 = vmatprep.subr.bf16.mxu0 0
  %841 = vmatpush1.bf16.msra.mxu0 %v680
  %842 = vmatprep.subr.bf16.mxu0 0
  %843 = vmatpush1.bf16.msra.mxu0 %v677
  %844 = vmatprep.subr.bf16.mxu0 0
  %845 = vmatpush1.bf16.msra.mxu0 %v674
  %846 = vmatprep.subr.bf16.mxu0 0
  %847 = vmatpush1.bf16.msra.mxu0 %v671
  %848 = vmatprep.subr.bf16.mxu0 0
  %849 = vmatpush2.bf16.msra.mxu0 0
  %850 = vmatprep.subr.bf16.mxu0 0
  %851 = vmatpush2.bf16.msra.mxu0 0
  %852 = vmatprep.subr.bf16.mxu0 0
  %853 = vmatpush2.bf16.msra.mxu0 0
  %854 = vmatprep.subr.bf16.mxu0 0
  %855 = vmatpush2.bf16.msra.mxu0 0
  %856 = vmatprep.subr.bf16.mxu0 0
  %857 = vmatpush2.bf16.msra.mxu0 0
  %858 = vmatprep.subr.bf16.mxu0 0
  %859 = vmatpush2.bf16.msra.mxu0 0
  %860 = vmatprep.subr.bf16.mxu0 0
  %861 = vmatpush2.bf16.msra.mxu0 %v698
  %862 = vmatprep.subr.bf16.mxu0 0
  %863 = vmatpush2.bf16.msra.mxu0 %v695
  %864 = vmatprep.mubr.bf16.mxu0 %v316
  %865 = vmatmul.mubr.bf16.gmra.mxu0 %v133
  %v866 = vpop.f32.mrf.mxu0
  %v867 = vadd.f32 0.0, %v866
  %v868 = vpop.f32.mrf.mxu0
  %v869 = vpop.f32.mrf.mxu0
  %v870 = vadd.f32 0.0, %v869
  %v871 = vpop.f32.mrf.mxu0
  %872 = vmatprep.mubr.bf16.mxu0 %v319
  %873 = vmatmul.mubr.bf16.gmra.mxu0 %v135
  %v874 = vpop.f32.mrf.mxu0
  %v875 = vadd.f32 0.0, %v874
  %v876 = vpop.f32.mrf.mxu0
  %v877 = vpop.f32.mrf.mxu0
  %v878 = vadd.f32 0.0, %v877
  %v879 = vpop.f32.mrf.mxu0
  %880 = vmatprep.mubr.bf16.mxu0 %v322
  %881 = vmatmul.mubr.bf16.gmra.mxu0 %v137
  %v882 = vpop.f32.mrf.mxu0
  %v883 = vadd.f32 0.0, %v882
  %v884 = vpop.f32.mrf.mxu0
  %v885 = vpop.f32.mrf.mxu0
  %v886 = vadd.f32 0.0, %v885
  %v887 = vpop.f32.mrf.mxu0
  %888 = vmatprep.mubr.bf16.mxu0 %v325
  %889 = vmatmul.mubr.bf16.gmra.mxu0 %v139
  %v890 = vpop.f32.mrf.mxu0
  %v891 = vadd.f32 0.0, %v890
  %v892 = vpop.f32.mrf.mxu0
  %v893 = vpop.f32.mrf.mxu0
  %v894 = vadd.f32 0.0, %v893
  %v895 = vpop.f32.mrf.mxu0
  %896 = vmatprep.mubr.bf16.mxu0 %v328
  %897 = vmatmul.mubr.bf16.gmra.mxu0 %v141
  %v898 = vpop.f32.mrf.mxu0
  %v899 = vadd.f32 0.0, %v898
  %v900 = vpop.f32.mrf.mxu0
  %v901 = vpop.f32.mrf.mxu0
  %v902 = vadd.f32 0.0, %v901
  %v903 = vpop.f32.mrf.mxu0
  %904 = vmatprep.mubr.bf16.mxu0 %v331
  %905 = vmatmul.mubr.bf16.gmra.mxu0 %v143
  %v906 = vpop.f32.mrf.mxu0
  %v907 = vadd.f32 0.0, %v906
  %v908 = vpop.f32.mrf.mxu0
  %v909 = vpop.f32.mrf.mxu0
  %v910 = vadd.f32 0.0, %v909
  %v911 = vpop.f32.mrf.mxu0
  %912 = vmatprep.mubr.bf16.mxu0 %v334
  %913 = vmatmul.mubr.bf16.gmra.mxu0 %v145
  %v914 = vpop.f32.mrf.mxu0
  %v915 = vadd.f32 0.0, %v914
  %v916 = vpop.f32.mrf.mxu0
  %v917 = vpop.f32.mrf.mxu0
  %v918 = vadd.f32 0.0, %v917
  %v919 = vpop.f32.mrf.mxu0
  %920 = vdwg.mxu0
  %v921 = vmax.f32 %v371, %v764
  %v922 = vmax.f32 %v373, %v766
  %v923 = vmax.f32 %v474, %v867
  %v924 = vmax.f32 %v375, %v768
  %v925 = vmax.f32 %v377, %v770
  %v926 = vmax.f32 %v477, %v870
  %v927 = vmax.f32 %v381, %v774
  %v928 = vmax.f32 %v383, %v776
  %v929 = vmax.f32 %v482, %v875
  %v930 = vmax.f32 %v385, %v778
  %v931 = vmax.f32 %v387, %v780
  %v932 = vmax.f32 %v485, %v878
  %v933 = vmax.f32 %v391, %v784
  %v934 = vmax.f32 %v393, %v786
  %v935 = vmax.f32 %v490, %v883
  %v936 = vmax.f32 %v395, %v788
  %v937 = vmax.f32 %v397, %v790
  %v938 = vmax.f32 %v493, %v886
  %v939 = vmax.f32 %v401, %v794
  %v940 = vmax.f32 %v403, %v796
  %v941 = vmax.f32 %v498, %v891
  %v942 = vmax.f32 %v405, %v798
  %v943 = vmax.f32 %v407, %v800
  %v944 = vmax.f32 %v501, %v894
  %v945 = vmax.f32 %v411, %v804
  %v946 = vmax.f32 %v413, %v806
  %v947 = vmax.f32 %v506, %v899
  %v948 = vmax.f32 %v415, %v808
  %v949 = vmax.f32 %v417, %v810
  %v950 = vmax.f32 %v509, %v902
  %v951 = vmax.f32 %v421, %v814
  %v952 = vmax.f32 %v423, %v816
  %v953 = vmax.f32 %v514, %v907
  %v954 = vmax.f32 %v425, %v818
  %v955 = vmax.f32 %v427, %v820
  %v956 = vmax.f32 %v517, %v910
  %v957 = vmax.f32 %v431, %v824
  %v958 = vmax.f32 %v433, %v826
  %v959 = vmax.f32 %v522, %v915
  %v960 = vmax.f32 %v435, %v828
  %v961 = vmax.f32 %v437, %v830
  %v962 = vmax.f32 %v525, %v918
  %s963 = scalar_lea.vmem %s0, 112
  %v964 = vld [vmem:[%s963] sm:$0xff]
  %v965 = vld [vmem:[%s963 + $0x8] sm:$0xff]
  %v966 = vld [vmem:[%s963 + $0x10] sm:$0xff]
  %v967 = vld [vmem:[%s963 + $0x18] sm:$0xff]
  %v968 = vld [vmem:[%s963 + $0x20] sm:$0xff]
  %v969 = vld [vmem:[%s963 + $0x28] sm:$0xff]
  %v970 = vld [vmem:[%s963 + $0x30] sm:$0xff]
  %v971 = vld [vmem:[%s963 + $0x38] sm:$0xff]
  %v972 = vld [vmem:[%s963 + $0x40] sm:$0xff]
  %v973 = vld [vmem:[%s963 + $0x48] sm:$0xff]
  %v974 = vld [vmem:[%s963 + $0x50] sm:$0xff]
  %v975 = vld [vmem:[%s963 + $0x58] sm:$0xff]
  %v976 = vld [vmem:[%s963 + $0x60] sm:$0xff]
  %v977 = vld [vmem:[%s963 + $0x68] sm:$0xff]
  %v992 = vunpack.c.l.b16 %v964
  %v993 = vunpack.c.h.b16 %v964
  %v994 = vunpack.c.l.b16 %v965
  %v995 = vunpack.c.h.b16 %v965
  %v996 = vunpack.c.l.b16 %v966
  %v997 = vunpack.c.h.b16 %v966
  %v998 = vunpack.c.l.b16 %v967
  %v999 = vunpack.c.h.b16 %v967
  %v1000 = vunpack.c.l.b16 %v968
  %v1001 = vunpack.c.h.b16 %v968
  %v1002 = vunpack.c.l.b16 %v969
  %v1003 = vunpack.c.h.b16 %v969
  %v1004 = vunpack.c.l.b16 %v970
  %v1005 = vunpack.c.h.b16 %v970
  %v1006 = vunpack.c.l.b16 %v971
  %v1007 = vunpack.c.h.b16 %v971
  %v1008 = vunpack.c.l.b16 %v972
  %v1009 = vunpack.c.h.b16 %v972
  %v1010 = vunpack.c.l.b16 %v973
  %v1011 = vunpack.c.h.b16 %v973
  %v1012 = vunpack.c.l.b16 %v974
  %v1013 = vunpack.c.h.b16 %v974
  %v1014 = vunpack.c.l.b16 %v975
  %v1015 = vunpack.c.h.b16 %v975
  %v1016 = vunpack.c.l.b16 %v976
  %v1017 = vunpack.c.h.b16 %v976
  %v1018 = vunpack.c.l.b16 %v977
  %v1019 = vunpack.c.h.b16 %v977
  %v1020 = vpack.c.b16 %v994, %v992
  %v1021 = vpack.c.b16 %v995, %v993
  %v1022 = vpack.c.b16 %v998, %v996
  %v1023 = vpack.c.b16 %v999, %v997
  %v1024 = vpack.c.b16 %v1002, %v1000
  %v1025 = vpack.c.b16 %v1003, %v1001
  %v1026 = vpack.c.b16 %v1006, %v1004
  %v1027 = vpack.c.b16 %v1007, %v1005
  %v1028 = vpack.c.b16 %v1010, %v1008
  %v1029 = vpack.c.b16 %v1011, %v1009
  %v1030 = vpack.c.b16 %v1014, %v1012
  %v1031 = vpack.c.b16 %v1015, %v1013
  %v1032 = vpack.c.b16 %v1018, %v1016
  %v1033 = vpack.c.b16 %v1019, %v1017
  %v1042 = vsel %vm314, %v1021, 0
  %v1045 = vsel %vm314, %v1023, 0
  %v1048 = vsel %vm314, %v1025, 0
  %v1051 = vsel %vm314, %v1027, 0
  %v1054 = vsel %vm314, %v1029, 0
  %v1057 = vsel %vm314, %v1031, 0
  %v1060 = vsel %vm314, %v1033, 0
  %1062 = vmatprep.subr.bf16.mxu0 %v276
  %1063 = vmatpush1.bf16.msra.mxu0 %v275
  %1064 = vmatprep.subr.bf16.mxu0 %v273
  %1065 = vmatpush1.bf16.msra.mxu0 %v272
  %1066 = vmatprep.subr.bf16.mxu0 %v270
  %1067 = vmatpush1.bf16.msra.mxu0 %v269
  %1068 = vmatprep.subr.bf16.mxu0 %v267
  %1069 = vmatpush1.bf16.msra.mxu0 %v266
  %1070 = vmatprep.subr.bf16.mxu0 %v264
  %1071 = vmatpush1.bf16.msra.mxu0 %v263
  %1072 = vmatprep.subr.bf16.mxu0 %v261
  %1073 = vmatpush1.bf16.msra.mxu0 %v260
  %1074 = vmatprep.subr.bf16.mxu0 %v258
  %1075 = vmatpush1.bf16.msra.mxu0 %v257
  %1076 = vmatprep.subr.bf16.mxu0 %v255
  %1077 = vmatpush1.bf16.msra.mxu0 %v254
  %1078 = vmatprep.subr.bf16.mxu0 0
  %1079 = vmatpush2.bf16.msra.mxu0 0
  %1080 = vmatprep.subr.bf16.mxu0 0
  %1081 = vmatpush2.bf16.msra.mxu0 0
  %1082 = vmatprep.subr.bf16.mxu0 0
  %1083 = vmatpush2.bf16.msra.mxu0 0
  %1084 = vmatprep.subr.bf16.mxu0 0
  %1085 = vmatpush2.bf16.msra.mxu0 0
  %1086 = vmatprep.subr.bf16.mxu0 0
  %1087 = vmatpush2.bf16.msra.mxu0 0
  %1088 = vmatprep.subr.bf16.mxu0 0
  %1089 = vmatpush2.bf16.msra.mxu0 0
  %1090 = vmatprep.subr.bf16.mxu0 %v282
  %1091 = vmatpush2.bf16.msra.mxu0 %v281
  %1092 = vmatprep.subr.bf16.mxu0 %v279
  %1093 = vmatpush2.bf16.msra.mxu0 %v278
  %1094 = vmatprep.mubr.bf16.mxu0 %v1042
  %1095 = vmatmul.mubr.bf16.gmra.mxu0 %v1020
  %v1096 = vpop.f32.mrf.mxu0
  %v1097 = vadd.f32 0.0, %v1096
  %v1098 = vpop.f32.mrf.mxu0
  %v1099 = vadd.f32 0.0, %v1098
  %v1100 = vpop.f32.mrf.mxu0
  %v1101 = vadd.f32 0.0, %v1100
  %v1102 = vpop.f32.mrf.mxu0
  %v1103 = vadd.f32 0.0, %v1102
  %1104 = vmatprep.mubr.bf16.mxu0 %v1045
  %1105 = vmatmul.mubr.bf16.gmra.mxu0 %v1022
  %v1106 = vpop.f32.mrf.mxu0
  %v1107 = vadd.f32 0.0, %v1106
  %v1108 = vpop.f32.mrf.mxu0
  %v1109 = vadd.f32 0.0, %v1108
  %v1110 = vpop.f32.mrf.mxu0
  %v1111 = vadd.f32 0.0, %v1110
  %v1112 = vpop.f32.mrf.mxu0
  %v1113 = vadd.f32 0.0, %v1112
  %1114 = vmatprep.mubr.bf16.mxu0 %v1048
  %1115 = vmatmul.mubr.bf16.gmra.mxu0 %v1024
  %v1116 = vpop.f32.mrf.mxu0
  %v1117 = vadd.f32 0.0, %v1116
  %v1118 = vpop.f32.mrf.mxu0
  %v1119 = vadd.f32 0.0, %v1118
  %v1120 = vpop.f32.mrf.mxu0
  %v1121 = vadd.f32 0.0, %v1120
  %v1122 = vpop.f32.mrf.mxu0
  %v1123 = vadd.f32 0.0, %v1122
  %1124 = vmatprep.mubr.bf16.mxu0 %v1051
  %1125 = vmatmul.mubr.bf16.gmra.mxu0 %v1026
  %v1126 = vpop.f32.mrf.mxu0
  %v1127 = vadd.f32 0.0, %v1126
  %v1128 = vpop.f32.mrf.mxu0
  %v1129 = vadd.f32 0.0, %v1128
  %v1130 = vpop.f32.mrf.mxu0
  %v1131 = vadd.f32 0.0, %v1130
  %v1132 = vpop.f32.mrf.mxu0
  %v1133 = vadd.f32 0.0, %v1132
  %1134 = vmatprep.mubr.bf16.mxu0 %v1054
  %1135 = vmatmul.mubr.bf16.gmra.mxu0 %v1028
  %v1136 = vpop.f32.mrf.mxu0
  %v1137 = vadd.f32 0.0, %v1136
  %v1138 = vpop.f32.mrf.mxu0
  %v1139 = vadd.f32 0.0, %v1138
  %v1140 = vpop.f32.mrf.mxu0
  %v1141 = vadd.f32 0.0, %v1140
  %v1142 = vpop.f32.mrf.mxu0
  %v1143 = vadd.f32 0.0, %v1142
  %1144 = vmatprep.mubr.bf16.mxu0 %v1057
  %1145 = vmatmul.mubr.bf16.gmra.mxu0 %v1030
  %v1146 = vpop.f32.mrf.mxu0
  %v1147 = vadd.f32 0.0, %v1146
  %v1148 = vpop.f32.mrf.mxu0
  %v1149 = vadd.f32 0.0, %v1148
  %v1150 = vpop.f32.mrf.mxu0
  %v1151 = vadd.f32 0.0, %v1150
  %v1152 = vpop.f32.mrf.mxu0
  %v1153 = vadd.f32 0.0, %v1152
  %1154 = vmatprep.mubr.bf16.mxu0 %v1060
  %1155 = vmatmul.mubr.bf16.gmra.mxu0 %v1032
  %v1156 = vpop.f32.mrf.mxu0
  %v1157 = vadd.f32 0.0, %v1156
  %v1158 = vpop.f32.mrf.mxu0
  %v1159 = vadd.f32 0.0, %v1158
  %v1160 = vpop.f32.mrf.mxu0
  %v1161 = vadd.f32 0.0, %v1160
  %v1162 = vpop.f32.mrf.mxu0
  %v1163 = vadd.f32 0.0, %v1162
  %1164 = vdwg.mxu0
  %1165 = vmatprep.subr.bf16.mxu0 0
  %1166 = vmatpush1.bf16.msra.mxu0 %v277
  %1167 = vmatprep.subr.bf16.mxu0 0
  %1168 = vmatpush1.bf16.msra.mxu0 %v274
  %1169 = vmatprep.subr.bf16.mxu0 0
  %1170 = vmatpush1.bf16.msra.mxu0 %v271
  %1171 = vmatprep.subr.bf16.mxu0 0
  %1172 = vmatpush1.bf16.msra.mxu0 %v268
  %1173 = vmatprep.subr.bf16.mxu0 0
  %1174 = vmatpush1.bf16.msra.mxu0 %v265
  %1175 = vmatprep.subr.bf16.mxu0 0
  %1176 = vmatpush1.bf16.msra.mxu0 %v262
  %1177 = vmatprep.subr.bf16.mxu0 0
  %1178 = vmatpush1.bf16.msra.mxu0 %v259
  %1179 = vmatprep.subr.bf16.mxu0 0
  %1180 = vmatpush1.bf16.msra.mxu0 %v256
  %1181 = vmatprep.subr.bf16.mxu0 0
  %1182 = vmatpush2.bf16.msra.mxu0 0
  %1183 = vmatprep.subr.bf16.mxu0 0
  %1184 = vmatpush2.bf16.msra.mxu0 0
  %1185 = vmatprep.subr.bf16.mxu0 0
  %1186 = vmatpush2.bf16.msra.mxu0 0
  %1187 = vmatprep.subr.bf16.mxu0 0
  %1188 = vmatpush2.bf16.msra.mxu0 0
  %1189 = vmatprep.subr.bf16.mxu0 0
  %1190 = vmatpush2.bf16.msra.mxu0 0
  %1191 = vmatprep.subr.bf16.mxu0 0
  %1192 = vmatpush2.bf16.msra.mxu0 0
  %1193 = vmatprep.subr.bf16.mxu0 0
  %1194 = vmatpush2.bf16.msra.mxu0 %v283
  %1195 = vmatprep.subr.bf16.mxu0 0
  %1196 = vmatpush2.bf16.msra.mxu0 %v280
  %1197 = vmatprep.mubr.bf16.mxu0 %v1042
  %1198 = vmatmul.mubr.bf16.gmra.mxu0 %v1020
  %v1199 = vpop.f32.mrf.mxu0
  %v1200 = vadd.f32 0.0, %v1199
  %v1201 = vpop.f32.mrf.mxu0
  %v1202 = vpop.f32.mrf.mxu0
  %v1203 = vadd.f32 0.0, %v1202
  %v1204 = vpop.f32.mrf.mxu0
  %1205 = vmatprep.mubr.bf16.mxu0 %v1045
  %1206 = vmatmul.mubr.bf16.gmra.mxu0 %v1022
  %v1207 = vpop.f32.mrf.mxu0
  %v1208 = vadd.f32 0.0, %v1207
  %v1209 = vpop.f32.mrf.mxu0
  %v1210 = vpop.f32.mrf.mxu0
  %v1211 = vadd.f32 0.0, %v1210
  %v1212 = vpop.f32.mrf.mxu0
  %1213 = vmatprep.mubr.bf16.mxu0 %v1048
  %1214 = vmatmul.mubr.bf16.gmra.mxu0 %v1024
  %v1215 = vpop.f32.mrf.mxu0
  %v1216 = vadd.f32 0.0, %v1215
  %v1217 = vpop.f32.mrf.mxu0
  %v1218 = vpop.f32.mrf.mxu0
  %v1219 = vadd.f32 0.0, %v1218
  %v1220 = vpop.f32.mrf.mxu0
  %1221 = vmatprep.mubr.bf16.mxu0 %v1051
  %1222 = vmatmul.mubr.bf16.gmra.mxu0 %v1026
  %v1223 = vpop.f32.mrf.mxu0
  %v1224 = vadd.f32 0.0, %v1223
  %v1225 = vpop.f32.mrf.mxu0
  %v1226 = vpop.f32.mrf.mxu0
  %v1227 = vadd.f32 0.0, %v1226
  %v1228 = vpop.f32.mrf.mxu0
  %1229 = vmatprep.mubr.bf16.mxu0 %v1054
  %1230 = vmatmul.mubr.bf16.gmra.mxu0 %v1028
  %v1231 = vpop.f32.mrf.mxu0
  %v1232 = vadd.f32 0.0, %v1231
  %v1233 = vpop.f32.mrf.mxu0
  %v1234 = vpop.f32.mrf.mxu0
  %v1235 = vadd.f32 0.0, %v1234
  %v1236 = vpop.f32.mrf.mxu0
  %1237 = vmatprep.mubr.bf16.mxu0 %v1057
  %1238 = vmatmul.mubr.bf16.gmra.mxu0 %v1030
  %v1239 = vpop.f32.mrf.mxu0
  %v1240 = vadd.f32 0.0, %v1239
  %v1241 = vpop.f32.mrf.mxu0
  %v1242 = vpop.f32.mrf.mxu0
  %v1243 = vadd.f32 0.0, %v1242
  %v1244 = vpop.f32.mrf.mxu0
  %1245 = vmatprep.mubr.bf16.mxu0 %v1060
  %1246 = vmatmul.mubr.bf16.gmra.mxu0 %v1032
  %v1247 = vpop.f32.mrf.mxu0
  %v1248 = vadd.f32 0.0, %v1247
  %v1249 = vpop.f32.mrf.mxu0
  %v1250 = vpop.f32.mrf.mxu0
  %v1251 = vadd.f32 0.0, %v1250
  %v1252 = vpop.f32.mrf.mxu0
  %1253 = vdwg.mxu0
  %v1254 = vmax.f32 %v921, %v1097
  %v1255 = vmax.f32 %v922, %v1099
  %v1256 = vmax.f32 %v923, %v1200
  %v1257 = vmax.f32 %v924, %v1101
  %v1258 = vmax.f32 %v925, %v1103
  %v1259 = vmax.f32 %v926, %v1203
  %v1260 = vmax.f32 %v927, %v1107
  %v1261 = vmax.f32 %v928, %v1109
  %v1262 = vmax.f32 %v929, %v1208
  %v1263 = vmax.f32 %v930, %v1111
  %v1264 = vmax.f32 %v931, %v1113
  %v1265 = vmax.f32 %v932, %v1211
  %v1266 = vmax.f32 %v933, %v1117
  %v1267 = vmax.f32 %v934, %v1119
  %v1268 = vmax.f32 %v935, %v1216
  %v1269 = vmax.f32 %v936, %v1121
  %v1270 = vmax.f32 %v937, %v1123
  %v1271 = vmax.f32 %v938, %v1219
  %v1272 = vmax.f32 %v939, %v1127
  %v1273 = vmax.f32 %v940, %v1129
  %v1274 = vmax.f32 %v941, %v1224
  %v1275 = vmax.f32 %v942, %v1131
  %v1276 = vmax.f32 %v943, %v1133
  %v1277 = vmax.f32 %v944, %v1227
  %v1278 = vmax.f32 %v945, %v1137
  %v1279 = vmax.f32 %v946, %v1139
  %v1280 = vmax.f32 %v947, %v1232
  %v1281 = vmax.f32 %v948, %v1141
  %v1282 = vmax.f32 %v949, %v1143
  %v1283 = vmax.f32 %v950, %v1235
  %v1284 = vmax.f32 %v951, %v1147
  %v1285 = vmax.f32 %v952, %v1149
  %v1286 = vmax.f32 %v953, %v1240
  %v1287 = vmax.f32 %v954, %v1151
  %v1288 = vmax.f32 %v955, %v1153
  %v1289 = vmax.f32 %v956, %v1243
  %v1290 = vmax.f32 %v957, %v1157
  %v1291 = vmax.f32 %v958, %v1159
  %v1292 = vmax.f32 %v959, %v1248
  %v1293 = vmax.f32 %v960, %v1161
  %v1294 = vmax.f32 %v961, %v1163
  %v1295 = vmax.f32 %v962, %v1251
  %1296 = vmatprep.subr.bf16.mxu0 %v691
  %1297 = vmatpush1.bf16.msra.mxu0 %v690
  %1298 = vmatprep.subr.bf16.mxu0 %v688
  %1299 = vmatpush1.bf16.msra.mxu0 %v687
  %1300 = vmatprep.subr.bf16.mxu0 %v685
  %1301 = vmatpush1.bf16.msra.mxu0 %v684
  %1302 = vmatprep.subr.bf16.mxu0 %v682
  %1303 = vmatpush1.bf16.msra.mxu0 %v681
  %1304 = vmatprep.subr.bf16.mxu0 %v679
  %1305 = vmatpush1.bf16.msra.mxu0 %v678
  %1306 = vmatprep.subr.bf16.mxu0 %v676
  %1307 = vmatpush1.bf16.msra.mxu0 %v675
  %1308 = vmatprep.subr.bf16.mxu0 %v673
  %1309 = vmatpush1.bf16.msra.mxu0 %v672
  %1310 = vmatprep.subr.bf16.mxu0 %v670
  %1311 = vmatpush1.bf16.msra.mxu0 %v669
  %1312 = vmatprep.subr.bf16.mxu0 0
  %1313 = vmatpush2.bf16.msra.mxu0 0
  %1314 = vmatprep.subr.bf16.mxu0 0
  %1315 = vmatpush2.bf16.msra.mxu0 0
  %1316 = vmatprep.subr.bf16.mxu0 0
  %1317 = vmatpush2.bf16.msra.mxu0 0
  %1318 = vmatprep.subr.bf16.mxu0 0
  %1319 = vmatpush2.bf16.msra.mxu0 0
  %1320 = vmatprep.subr.bf16.mxu0 0
  %1321 = vmatpush2.bf16.msra.mxu0 0
  %1322 = vmatprep.subr.bf16.mxu0 0
  %1323 = vmatpush2.bf16.msra.mxu0 0
  %1324 = vmatprep.subr.bf16.mxu0 %v697
  %1325 = vmatpush2.bf16.msra.mxu0 %v696
  %1326 = vmatprep.subr.bf16.mxu0 %v694
  %1327 = vmatpush2.bf16.msra.mxu0 %v693
  %1328 = vmatprep.mubr.bf16.mxu0 %v1042
  %1329 = vmatmul.mubr.bf16.gmra.mxu0 %v1020
  %v1330 = vpop.f32.mrf.mxu0
  %v1331 = vadd.f32 0.0, %v1330
  %v1332 = vpop.f32.mrf.mxu0
  %v1333 = vadd.f32 0.0, %v1332
  %v1334 = vpop.f32.mrf.mxu0
  %v1335 = vadd.f32 0.0, %v1334
  %v1336 = vpop.f32.mrf.mxu0
  %v1337 = vadd.f32 0.0, %v1336
  %1338 = vmatprep.mubr.bf16.mxu0 %v1045
  %1339 = vmatmul.mubr.bf16.gmra.mxu0 %v1022
  %v1340 = vpop.f32.mrf.mxu0
  %v1341 = vadd.f32 0.0, %v1340
  %v1342 = vpop.f32.mrf.mxu0
  %v1343 = vadd.f32 0.0, %v1342
  %v1344 = vpop.f32.mrf.mxu0
  %v1345 = vadd.f32 0.0, %v1344
  %v1346 = vpop.f32.mrf.mxu0
  %v1347 = vadd.f32 0.0, %v1346
  %1348 = vmatprep.mubr.bf16.mxu0 %v1048
  %1349 = vmatmul.mubr.bf16.gmra.mxu0 %v1024
  %v1350 = vpop.f32.mrf.mxu0
  %v1351 = vadd.f32 0.0, %v1350
  %v1352 = vpop.f32.mrf.mxu0
  %v1353 = vadd.f32 0.0, %v1352
  %v1354 = vpop.f32.mrf.mxu0
  %v1355 = vadd.f32 0.0, %v1354
  %v1356 = vpop.f32.mrf.mxu0
  %v1357 = vadd.f32 0.0, %v1356
  %1358 = vmatprep.mubr.bf16.mxu0 %v1051
  %1359 = vmatmul.mubr.bf16.gmra.mxu0 %v1026
  %v1360 = vpop.f32.mrf.mxu0
  %v1361 = vadd.f32 0.0, %v1360
  %v1362 = vpop.f32.mrf.mxu0
  %v1363 = vadd.f32 0.0, %v1362
  %v1364 = vpop.f32.mrf.mxu0
  %v1365 = vadd.f32 0.0, %v1364
  %v1366 = vpop.f32.mrf.mxu0
  %v1367 = vadd.f32 0.0, %v1366
  %1368 = vmatprep.mubr.bf16.mxu0 %v1054
  %1369 = vmatmul.mubr.bf16.gmra.mxu0 %v1028
  %v1370 = vpop.f32.mrf.mxu0
  %v1371 = vadd.f32 0.0, %v1370
  %v1372 = vpop.f32.mrf.mxu0
  %v1373 = vadd.f32 0.0, %v1372
  %v1374 = vpop.f32.mrf.mxu0
  %v1375 = vadd.f32 0.0, %v1374
  %v1376 = vpop.f32.mrf.mxu0
  %v1377 = vadd.f32 0.0, %v1376
  %1378 = vmatprep.mubr.bf16.mxu0 %v1057
  %1379 = vmatmul.mubr.bf16.gmra.mxu0 %v1030
  %v1380 = vpop.f32.mrf.mxu0
  %v1381 = vadd.f32 0.0, %v1380
  %v1382 = vpop.f32.mrf.mxu0
  %v1383 = vadd.f32 0.0, %v1382
  %v1384 = vpop.f32.mrf.mxu0
  %v1385 = vadd.f32 0.0, %v1384
  %v1386 = vpop.f32.mrf.mxu0
  %v1387 = vadd.f32 0.0, %v1386
  %1388 = vmatprep.mubr.bf16.mxu0 %v1060
  %1389 = vmatmul.mubr.bf16.gmra.mxu0 %v1032
  %v1390 = vpop.f32.mrf.mxu0
  %v1391 = vadd.f32 0.0, %v1390
  %v1392 = vpop.f32.mrf.mxu0
  %v1393 = vadd.f32 0.0, %v1392
  %v1394 = vpop.f32.mrf.mxu0
  %v1395 = vadd.f32 0.0, %v1394
  %v1396 = vpop.f32.mrf.mxu0
  %v1397 = vadd.f32 0.0, %v1396
  %1398 = vdwg.mxu0
  %1399 = vmatprep.subr.bf16.mxu0 0
  %1400 = vmatpush1.bf16.msra.mxu0 %v692
  %1401 = vmatprep.subr.bf16.mxu0 0
  %1402 = vmatpush1.bf16.msra.mxu0 %v689
  %1403 = vmatprep.subr.bf16.mxu0 0
  %1404 = vmatpush1.bf16.msra.mxu0 %v686
  %1405 = vmatprep.subr.bf16.mxu0 0
  %1406 = vmatpush1.bf16.msra.mxu0 %v683
  %1407 = vmatprep.subr.bf16.mxu0 0
  %1408 = vmatpush1.bf16.msra.mxu0 %v680
  %1409 = vmatprep.subr.bf16.mxu0 0
  %1410 = vmatpush1.bf16.msra.mxu0 %v677
  %1411 = vmatprep.subr.bf16.mxu0 0
  %1412 = vmatpush1.bf16.msra.mxu0 %v674
  %1413 = vmatprep.subr.bf16.mxu0 0
  %1414 = vmatpush1.bf16.msra.mxu0 %v671
  %1415 = vmatprep.subr.bf16.mxu0 0
  %1416 = vmatpush2.bf16.msra.mxu0 0
  %1417 = vmatprep.subr.bf16.mxu0 0
  %1418 = vmatpush2.bf16.msra.mxu0 0
  %1419 = vmatprep.subr.bf16.mxu0 0
  %1420 = vmatpush2.bf16.msra.mxu0 0
  %1421 = vmatprep.subr.bf16.mxu0 0
  %1422 = vmatpush2.bf16.msra.mxu0 0
  %1423 = vmatprep.subr.bf16.mxu0 0
  %1424 = vmatpush2.bf16.msra.mxu0 0
  %1425 = vmatprep.subr.bf16.mxu0 0
  %1426 = vmatpush2.bf16.msra.mxu0 0
  %1427 = vmatprep.subr.bf16.mxu0 0
  %1428 = vmatpush2.bf16.msra.mxu0 %v698
  %1429 = vmatprep.subr.bf16.mxu0 0
  %1430 = vmatpush2.bf16.msra.mxu0 %v695
  %1431 = vmatprep.mubr.bf16.mxu0 %v1042
  %1432 = vmatmul.mubr.bf16.gmra.mxu0 %v1020
  %v1433 = vpop.f32.mrf.mxu0
  %v1434 = vadd.f32 0.0, %v1433
  %v1435 = vpop.f32.mrf.mxu0
  %v1436 = vpop.f32.mrf.mxu0
  %v1437 = vadd.f32 0.0, %v1436
  %v1438 = vpop.f32.mrf.mxu0
  %1439 = vmatprep.mubr.bf16.mxu0 %v1045
  %1440 = vmatmul.mubr.bf16.gmra.mxu0 %v1022
  %v1441 = vpop.f32.mrf.mxu0
  %v1442 = vadd.f32 0.0, %v1441
  %v1443 = vpop.f32.mrf.mxu0
  %v1444 = vpop.f32.mrf.mxu0
  %v1445 = vadd.f32 0.0, %v1444
  %v1446 = vpop.f32.mrf.mxu0
  %1447 = vmatprep.mubr.bf16.mxu0 %v1048
  %1448 = vmatmul.mubr.bf16.gmra.mxu0 %v1024
  %v1449 = vpop.f32.mrf.mxu0
  %v1450 = vadd.f32 0.0, %v1449
  %v1451 = vpop.f32.mrf.mxu0
  %v1452 = vpop.f32.mrf.mxu0
  %v1453 = vadd.f32 0.0, %v1452
  %v1454 = vpop.f32.mrf.mxu0
  %1455 = vmatprep.mubr.bf16.mxu0 %v1051
  %1456 = vmatmul.mubr.bf16.gmra.mxu0 %v1026
  %v1457 = vpop.f32.mrf.mxu0
  %v1458 = vadd.f32 0.0, %v1457
  %v1459 = vpop.f32.mrf.mxu0
  %v1460 = vpop.f32.mrf.mxu0
  %v1461 = vadd.f32 0.0, %v1460
  %v1462 = vpop.f32.mrf.mxu0
  %1463 = vmatprep.mubr.bf16.mxu0 %v1054
  %1464 = vmatmul.mubr.bf16.gmra.mxu0 %v1028
  %v1465 = vpop.f32.mrf.mxu0
  %v1466 = vadd.f32 0.0, %v1465
  %v1467 = vpop.f32.mrf.mxu0
  %v1468 = vpop.f32.mrf.mxu0
  %v1469 = vadd.f32 0.0, %v1468
  %v1470 = vpop.f32.mrf.mxu0
  %1471 = vmatprep.mubr.bf16.mxu0 %v1057
  %1472 = vmatmul.mubr.bf16.gmra.mxu0 %v1030
  %v1473 = vpop.f32.mrf.mxu0
  %v1474 = vadd.f32 0.0, %v1473
  %v1475 = vpop.f32.mrf.mxu0
  %v1476 = vpop.f32.mrf.mxu0
  %v1477 = vadd.f32 0.0, %v1476
  %v1478 = vpop.f32.mrf.mxu0
  %1479 = vmatprep.mubr.bf16.mxu0 %v1060
  %1480 = vmatmul.mubr.bf16.gmra.mxu0 %v1032
  %v1481 = vpop.f32.mrf.mxu0
  %v1482 = vadd.f32 0.0, %v1481
  %v1483 = vpop.f32.mrf.mxu0
  %v1484 = vpop.f32.mrf.mxu0
  %v1485 = vadd.f32 0.0, %v1484
  %v1486 = vpop.f32.mrf.mxu0
  %1487 = vdwg.mxu0
  %v1488 = vmax.f32 %v1254, %v1331
  %v1489 = vmax.f32 %v1255, %v1333
  %v1490 = vmax.f32 %v1256, %v1434
  %v1491 = vmax.f32 %v1257, %v1335
  %v1492 = vmax.f32 %v1258, %v1337
  %v1493 = vmax.f32 %v1259, %v1437
  %v1494 = vmax.f32 %v1260, %v1341
  %v1495 = vmax.f32 %v1261, %v1343
  %v1496 = vmax.f32 %v1262, %v1442
  %v1497 = vmax.f32 %v1263, %v1345
  %v1498 = vmax.f32 %v1264, %v1347
  %v1499 = vmax.f32 %v1265, %v1445
  %v1500 = vmax.f32 %v1266, %v1351
  %v1501 = vmax.f32 %v1267, %v1353
  %v1502 = vmax.f32 %v1268, %v1450
  %v1503 = vmax.f32 %v1269, %v1355
  %v1504 = vmax.f32 %v1270, %v1357
  %v1505 = vmax.f32 %v1271, %v1453
  %v1506 = vmax.f32 %v1272, %v1361
  %v1507 = vmax.f32 %v1273, %v1363
  %v1508 = vmax.f32 %v1274, %v1458
  %v1509 = vmax.f32 %v1275, %v1365
  %v1510 = vmax.f32 %v1276, %v1367
  %v1511 = vmax.f32 %v1277, %v1461
  %v1512 = vmax.f32 %v1278, %v1371
  %v1513 = vmax.f32 %v1279, %v1373
  %v1514 = vmax.f32 %v1280, %v1466
  %v1515 = vmax.f32 %v1281, %v1375
  %v1516 = vmax.f32 %v1282, %v1377
  %v1517 = vmax.f32 %v1283, %v1469
  %v1518 = vmax.f32 %v1284, %v1381
  %v1519 = vmax.f32 %v1285, %v1383
  %v1520 = vmax.f32 %v1286, %v1474
  %v1521 = vmax.f32 %v1287, %v1385
  %v1522 = vmax.f32 %v1288, %v1387
  %v1523 = vmax.f32 %v1289, %v1477
  %v1524 = vmax.f32 %v1290, %v1391
  %v1525 = vmax.f32 %v1291, %v1393
  %v1526 = vmax.f32 %v1292, %v1482
  %v1527 = vmax.f32 %v1293, %v1395
  %v1528 = vmax.f32 %v1294, %v1397
  %v1529 = vmax.f32 %v1295, %v1485
  %v1530 = vld [vmem:[%s2] sm:$0x7]
  %v1532 = vlaneseq
  %v1533 = vshrl.u32 %v1532, 7
  %v1534 = vsub.s32 0, %v1533
  %v1535 = vrot.slane %v1530, %v1534
  %v1536 = vlaneseq
  %v1537 = vshrl.u32 %v1536, 7
  %v1538 = vsub.s32 1, %v1537
  %v1539 = vrot.slane %v1530, %v1538
  %v1540 = vlaneseq
  %v1541 = vshrl.u32 %v1540, 7
  %v1542 = vsub.s32 2, %v1541
  %v1543 = vrot.slane %v1530, %v1542
  %v1547 = vadd.f32 %v1488, %v1535
  %v1548 = vadd.f32 %v1489, %v1539
  %v1549 = vadd.f32 %v1490, %v1543
  %v1550 = vadd.f32 %v1491, %v1535
  %v1551 = vadd.f32 %v1492, %v1539
  %v1552 = vadd.f32 %v1493, %v1543
  %v1553 = vadd.f32 %v1494, %v1535
  %v1554 = vadd.f32 %v1495, %v1539
  %v1555 = vadd.f32 %v1496, %v1543
  %v1556 = vadd.f32 %v1497, %v1535
  %v1557 = vadd.f32 %v1498, %v1539
  %v1558 = vadd.f32 %v1499, %v1543
  %v1559 = vadd.f32 %v1500, %v1535
  %v1560 = vadd.f32 %v1501, %v1539
  %v1561 = vadd.f32 %v1502, %v1543
  %v1562 = vadd.f32 %v1503, %v1535
  %v1563 = vadd.f32 %v1504, %v1539
  %v1564 = vadd.f32 %v1505, %v1543
  %v1565 = vadd.f32 %v1506, %v1535
  %v1566 = vadd.f32 %v1507, %v1539
  %v1567 = vadd.f32 %v1508, %v1543
  %v1568 = vadd.f32 %v1509, %v1535
  %v1569 = vadd.f32 %v1510, %v1539
  %v1570 = vadd.f32 %v1511, %v1543
  %v1571 = vadd.f32 %v1512, %v1535
  %v1572 = vadd.f32 %v1513, %v1539
  %v1573 = vadd.f32 %v1514, %v1543
  %v1574 = vadd.f32 %v1515, %v1535
  %v1575 = vadd.f32 %v1516, %v1539
  %v1576 = vadd.f32 %v1517, %v1543
  %v1577 = vadd.f32 %v1518, %v1535
  %v1578 = vadd.f32 %v1519, %v1539
  %v1579 = vadd.f32 %v1520, %v1543
  %v1580 = vadd.f32 %v1521, %v1535
  %v1581 = vadd.f32 %v1522, %v1539
  %v1582 = vadd.f32 %v1523, %v1543
  %v1583 = vadd.f32 %v1524, %v1535
  %v1584 = vadd.f32 %v1525, %v1539
  %v1585 = vadd.f32 %v1526, %v1543
  %v1586 = vadd.f32 %v1527, %v1535
  %v1587 = vadd.f32 %v1528, %v1539
  %v1588 = vadd.f32 %v1529, %v1543
  %v1589 = vmax.f32 %v1547, 0.0
  %v1590 = vmax.f32 %v1548, 0.0
  %v1591 = vmax.f32 %v1549, 0.0
  %v1592 = vmax.f32 %v1550, 0.0
  %v1593 = vmax.f32 %v1551, 0.0
  %v1594 = vmax.f32 %v1552, 0.0
  %v1595 = vmax.f32 %v1553, 0.0
  %v1596 = vmax.f32 %v1554, 0.0
  %v1597 = vmax.f32 %v1555, 0.0
  %v1598 = vmax.f32 %v1556, 0.0
  %v1599 = vmax.f32 %v1557, 0.0
  %v1600 = vmax.f32 %v1558, 0.0
  %v1601 = vmax.f32 %v1559, 0.0
  %v1602 = vmax.f32 %v1560, 0.0
  %v1603 = vmax.f32 %v1561, 0.0
  %v1604 = vmax.f32 %v1562, 0.0
  %v1605 = vmax.f32 %v1563, 0.0
  %v1606 = vmax.f32 %v1564, 0.0
  %v1607 = vmax.f32 %v1565, 0.0
  %v1608 = vmax.f32 %v1566, 0.0
  %v1609 = vmax.f32 %v1567, 0.0
  %v1610 = vmax.f32 %v1568, 0.0
  %v1611 = vmax.f32 %v1569, 0.0
  %v1612 = vmax.f32 %v1570, 0.0
  %v1613 = vmax.f32 %v1571, 0.0
  %v1614 = vmax.f32 %v1572, 0.0
  %v1615 = vmax.f32 %v1573, 0.0
  %v1616 = vmax.f32 %v1574, 0.0
  %v1617 = vmax.f32 %v1575, 0.0
  %v1618 = vmax.f32 %v1576, 0.0
  %v1619 = vmax.f32 %v1577, 0.0
  %v1620 = vmax.f32 %v1578, 0.0
  %v1621 = vmax.f32 %v1579, 0.0
  %v1622 = vmax.f32 %v1580, 0.0
  %v1623 = vmax.f32 %v1581, 0.0
  %v1624 = vmax.f32 %v1582, 0.0
  %v1625 = vmax.f32 %v1583, 0.0
  %v1626 = vmax.f32 %v1584, 0.0
  %v1627 = vmax.f32 %v1585, 0.0
  %v1628 = vmax.f32 %v1586, 0.0
  %v1629 = vmax.f32 %v1587, 0.0
  %v1630 = vmax.f32 %v1588, 0.0
  %v1631 = vpack.c.bf16 %v1592, %v1589
  %v1632 = vpack.c.bf16 %v1593, %v1590
  %v1633 = vpack.c.bf16 %v1594, %v1591
  %v1634 = vpack.c.bf16 %v1598, %v1595
  %v1635 = vpack.c.bf16 %v1599, %v1596
  %v1636 = vpack.c.bf16 %v1600, %v1597
  %v1637 = vpack.c.bf16 %v1604, %v1601
  %v1638 = vpack.c.bf16 %v1605, %v1602
  %v1639 = vpack.c.bf16 %v1606, %v1603
  %v1640 = vpack.c.bf16 %v1610, %v1607
  %v1641 = vpack.c.bf16 %v1611, %v1608
  %v1642 = vpack.c.bf16 %v1612, %v1609
  %v1643 = vpack.c.bf16 %v1616, %v1613
  %v1644 = vpack.c.bf16 %v1617, %v1614
  %v1645 = vpack.c.bf16 %v1618, %v1615
  %v1646 = vpack.c.bf16 %v1622, %v1619
  %v1647 = vpack.c.bf16 %v1623, %v1620
  %v1648 = vpack.c.bf16 %v1624, %v1621
  %v1649 = vpack.c.bf16 %v1628, %v1625
  %v1650 = vpack.c.bf16 %v1629, %v1626
  %v1651 = vpack.c.bf16 %v1630, %v1627
  %v1655 = vunpack.c.l.b16 %v1631
  %v1656 = vunpack.c.l.b16 %v1632
  %v1657 = vunpack.c.l.b16 %v1633
  %v1658 = vpack.c.b16 %v1656, %v1655
  %v1659 = vpack.c.b16 %v1657, %v1657
  %1662 = vst [vmem:[#allocation2 + $0xc] sm:$0xff] %v1658
  %1663 = vst.msk [vmem:[#allocation2 + $0x14] sm:$0xf] %vm28, %v1659
  %v1664 = vunpack.c.h.b16 %v1631
  %v1665 = vunpack.c.h.b16 %v1632
  %v1666 = vunpack.c.h.b16 %v1633
  %v1667 = vpack.c.b16 %v1665, %v1664
  %v1668 = vpack.c.b16 %v1666, %v1666
  %1671 = vst [vmem:[%s32 + $0xc] sm:$0xff] %v1667
  %1672 = vst.msk [vmem:[%s32 + $0x14] sm:$0xf] %vm28, %v1668
  %v1676 = vunpack.c.l.b16 %v1634
  %v1677 = vunpack.c.l.b16 %v1635
  %v1678 = vunpack.c.l.b16 %v1636
  %v1679 = vpack.c.b16 %v1677, %v1676
  %v1680 = vpack.c.b16 %v1678, %v1678
  %1683 = vst [vmem:[#allocation2 + $0x18] sm:$0xff] %v1679
  %1684 = vst.msk [vmem:[#allocation2 + $0x20] sm:$0xf] %vm28, %v1680
  %v1685 = vunpack.c.h.b16 %v1634
  %v1686 = vunpack.c.h.b16 %v1635
  %v1687 = vunpack.c.h.b16 %v1636
  %v1688 = vpack.c.b16 %v1686, %v1685
  %v1689 = vpack.c.b16 %v1687, %v1687
  %1692 = vst [vmem:[%s32 + $0x18] sm:$0xff] %v1688
  %1693 = vst.msk [vmem:[%s32 + $0x20] sm:$0xf] %vm28, %v1689
  %v1697 = vunpack.c.l.b16 %v1637
  %v1698 = vunpack.c.l.b16 %v1638
  %v1699 = vunpack.c.l.b16 %v1639
  %v1700 = vpack.c.b16 %v1698, %v1697
  %v1701 = vpack.c.b16 %v1699, %v1699
  %1704 = vst [vmem:[#allocation2 + $0x24] sm:$0xff] %v1700
  %1705 = vst.msk [vmem:[#allocation2 + $0x2c] sm:$0xf] %vm28, %v1701
  %v1706 = vunpack.c.h.b16 %v1637
  %v1707 = vunpack.c.h.b16 %v1638
  %v1708 = vunpack.c.h.b16 %v1639
  %v1709 = vpack.c.b16 %v1707, %v1706
  %v1710 = vpack.c.b16 %v1708, %v1708
  %1713 = vst [vmem:[%s32 + $0x24] sm:$0xff] %v1709
  %1714 = vst.msk [vmem:[%s32 + $0x2c] sm:$0xf] %vm28, %v1710
  %v1718 = vunpack.c.l.b16 %v1640
  %v1719 = vunpack.c.l.b16 %v1641
  %v1720 = vunpack.c.l.b16 %v1642
  %v1721 = vpack.c.b16 %v1719, %v1718
  %v1722 = vpack.c.b16 %v1720, %v1720
  %1725 = vst [vmem:[#allocation2 + $0x30] sm:$0xff] %v1721
  %1726 = vst.msk [vmem:[#allocation2 + $0x38] sm:$0xf] %vm28, %v1722
  %v1727 = vunpack.c.h.b16 %v1640
  %v1728 = vunpack.c.h.b16 %v1641
  %v1729 = vunpack.c.h.b16 %v1642
  %v1730 = vpack.c.b16 %v1728, %v1727
  %v1731 = vpack.c.b16 %v1729, %v1729
  %1734 = vst [vmem:[%s32 + $0x30] sm:$0xff] %v1730
  %1735 = vst.msk [vmem:[%s32 + $0x38] sm:$0xf] %vm28, %v1731
  %v1739 = vunpack.c.l.b16 %v1643
  %v1740 = vunpack.c.l.b16 %v1644
  %v1741 = vunpack.c.l.b16 %v1645
  %v1742 = vpack.c.b16 %v1740, %v1739
  %v1743 = vpack.c.b16 %v1741, %v1741
  %1746 = vst [vmem:[#allocation2 + $0x3c] sm:$0xff] %v1742
  %1747 = vst.msk [vmem:[#allocation2 + $0x44] sm:$0xf] %vm28, %v1743
  %v1748 = vunpack.c.h.b16 %v1643
  %v1749 = vunpack.c.h.b16 %v1644
  %v1750 = vunpack.c.h.b16 %v1645
  %v1751 = vpack.c.b16 %v1749, %v1748
  %v1752 = vpack.c.b16 %v1750, %v1750
  %1755 = vst [vmem:[%s32 + $0x3c] sm:$0xff] %v1751
  %1756 = vst.msk [vmem:[%s32 + $0x44] sm:$0xf] %vm28, %v1752
  %v1760 = vunpack.c.l.b16 %v1646
  %v1761 = vunpack.c.l.b16 %v1647
  %v1762 = vunpack.c.l.b16 %v1648
  %v1763 = vpack.c.b16 %v1761, %v1760
  %v1764 = vpack.c.b16 %v1762, %v1762
  %1767 = vst [vmem:[#allocation2 + $0x48] sm:$0xff] %v1763
  %1768 = vst.msk [vmem:[#allocation2 + $0x50] sm:$0xf] %vm28, %v1764
  %v1769 = vunpack.c.h.b16 %v1646
  %v1770 = vunpack.c.h.b16 %v1647
  %v1771 = vunpack.c.h.b16 %v1648
  %v1772 = vpack.c.b16 %v1770, %v1769
  %v1773 = vpack.c.b16 %v1771, %v1771
  %1776 = vst [vmem:[%s32 + $0x48] sm:$0xff] %v1772
  %1777 = vst.msk [vmem:[%s32 + $0x50] sm:$0xf] %vm28, %v1773
  %v1781 = vunpack.c.l.b16 %v1649
  %v1782 = vunpack.c.l.b16 %v1650
  %v1783 = vunpack.c.l.b16 %v1651
  %v1784 = vpack.c.b16 %v1782, %v1781
  %v1785 = vpack.c.b16 %v1783, %v1783
  %1788 = vst [vmem:[#allocation2 + $0x54] sm:$0xff] %v1784
  %1789 = vst.msk [vmem:[#allocation2 + $0x5c] sm:$0xf] %vm28, %v1785
  %v1790 = vunpack.c.h.b16 %v1649
  %v1791 = vunpack.c.h.b16 %v1650
  %v1792 = vunpack.c.h.b16 %v1651
  %v1793 = vpack.c.b16 %v1791, %v1790
  %v1794 = vpack.c.b16 %v1792, %v1792
  %1797 = vst [vmem:[%s32 + $0x54] sm:$0xff] %v1793
  %1798 = vst.msk [vmem:[%s32 + $0x5c] sm:$0xf] %vm28, %v1794
  %v1799 = vld [vmem:[#allocation2] sm:$0xff]
  %v1800 = vld [vmem:[#allocation2 + $0x8] sm:$0xf]
  %v1801 = vld [vmem:[#allocation2 + $0xc] sm:$0xff]
  %v1802 = vld [vmem:[#allocation2 + $0x14] sm:$0xf]
  %v1803 = vld [vmem:[#allocation2 + $0x18] sm:$0xff]
  %v1804 = vld [vmem:[#allocation2 + $0x20] sm:$0xf]
  %v1805 = vld [vmem:[#allocation2 + $0x24] sm:$0xff]
  %v1806 = vld [vmem:[#allocation2 + $0x2c] sm:$0xf]
  %v1807 = vld [vmem:[#allocation2 + $0x30] sm:$0xff]
  %v1808 = vld [vmem:[#allocation2 + $0x38] sm:$0xf]
  %v1809 = vld [vmem:[#allocation2 + $0x3c] sm:$0xff]
  %v1810 = vld [vmem:[#allocation2 + $0x44] sm:$0xf]
  %v1811 = vld [vmem:[#allocation2 + $0x48] sm:$0xff]
  %v1812 = vld [vmem:[#allocation2 + $0x50] sm:$0xf]
  %v1813 = vld [vmem:[%s3] sm:$0xff]
  %v1814 = vld [vmem:[%s3 + $0x8] sm:$0xff]
  %v1815 = vld [vmem:[%s3 + $0x10] sm:$0xff]
  %v1816 = vld [vmem:[%s3 + $0x18] sm:$0xff]
  %v1817 = vld [vmem:[%s3 + $0x20] sm:$0xff]
  %v1818 = vld [vmem:[%s3 + $0x28] sm:$0xff]
  %v1819 = vld [vmem:[%s3 + $0x30] sm:$0xff]
  %v1820 = vld [vmem:[%s3 + $0x38] sm:$0xff]
  %v1821 = vld [vmem:[%s3 + $0x40] sm:$0xff]
  %v1822 = vld [vmem:[%s3 + $0x48] sm:$0xff]
  %v1823 = vld [vmem:[%s3 + $0x50] sm:$0xff]
  %v1824 = vld [vmem:[%s3 + $0x58] sm:$0xff]
  %v1825 = vld [vmem:[%s3 + $0x60] sm:$0xff]
  %v1826 = vld [vmem:[%s3 + $0x68] sm:$0xff]
  %v1827 = vld [vmem:[%s3 + $0x70] sm:$0xff]
  %v1828 = vld [vmem:[%s3 + $0x78] sm:$0xff]
  %v1829 = vld [vmem:[%s3 + $0x80] sm:$0xff]
  %v1830 = vld [vmem:[%s3 + $0x88] sm:$0xff]
  %v1831 = vld [vmem:[%s3 + $0x90] sm:$0xff]
  %v1832 = vld [vmem:[%s3 + $0x98] sm:$0xff]
  %v1833 = vld [vmem:[%s3 + $0xa0] sm:$0xff]
  %v1834 = vld [vmem:[%s3 + $0xa8] sm:$0xff]
  %v1835 = vld [vmem:[%s3 + $0xb0] sm:$0xff]
  %v1836 = vld [vmem:[%s3 + $0xb8] sm:$0xff]
  %v1837 = vld [vmem:[%s3 + $0xc0] sm:$0xff]
  %v1838 = vld [vmem:[%s3 + $0xc8] sm:$0xff]
  %v1839 = vld [vmem:[%s3 + $0xd0] sm:$0xff]
  %v1840 = vld [vmem:[%s3 + $0xd8] sm:$0xff]
  %v1841 = vld [vmem:[%s3 + $0xe0] sm:$0xff]
  %v1842 = vld [vmem:[%s3 + $0xe8] sm:$0xff]
  %v1843 = vld [vmem:[%s3 + $0xf0] sm:$0xff]
  %v1844 = vld [vmem:[%s3 + $0xf8] sm:$0xff]
  %v1845 = vld [vmem:[%s3 + $0x100] sm:$0xff]
  %v1846 = vld [vmem:[%s3 + $0x108] sm:$0xff]
  %v1847 = vld [vmem:[%s3 + $0x110] sm:$0xff]
  %v1848 = vld [vmem:[%s3 + $0x118] sm:$0xff]
  %v1849 = vld [vmem:[%s32] sm:$0xff]
  %v1850 = vld [vmem:[%s32 + $0x8] sm:$0xf]
  %v1851 = vld [vmem:[%s32 + $0xc] sm:$0xff]
  %v1852 = vld [vmem:[%s32 + $0x14] sm:$0xf]
  %v1853 = vld [vmem:[%s32 + $0x18] sm:$0xff]
  %v1854 = vld [vmem:[%s32 + $0x20] sm:$0xf]
  %v1855 = vld [vmem:[%s32 + $0x24] sm:$0xff]
  %v1856 = vld [vmem:[%s32 + $0x2c] sm:$0xf]
  %v1857 = vld [vmem:[%s32 + $0x30] sm:$0xff]
  %v1858 = vld [vmem:[%s32 + $0x38] sm:$0xf]
  %v1859 = vld [vmem:[%s32 + $0x3c] sm:$0xff]
  %v1860 = vld [vmem:[%s32 + $0x44] sm:$0xf]
  %v1861 = vld [vmem:[%s32 + $0x48] sm:$0xff]
  %v1862 = vld [vmem:[%s32 + $0x50] sm:$0xf]
  %s1863 = scalar_lea.vmem %s3, 288
  %v1864 = vld [vmem:[%s1863] sm:$0xff]
  %v1865 = vld [vmem:[%s1863 + $0x8] sm:$0xff]
  %v1866 = vld [vmem:[%s1863 + $0x10] sm:$0xff]
  %v1867 = vld [vmem:[%s1863 + $0x18] sm:$0xff]
  %v1868 = vld [vmem:[%s1863 + $0x20] sm:$0xff]
  %v1869 = vld [vmem:[%s1863 + $0x28] sm:$0xff]
  %v1870 = vld [vmem:[%s1863 + $0x30] sm:$0xff]
  %v1871 = vld [vmem:[%s1863 + $0x38] sm:$0xff]
  %v1872 = vld [vmem:[%s1863 + $0x40] sm:$0xff]
  %v1873 = vld [vmem:[%s1863 + $0x48] sm:$0xff]
  %v1874 = vld [vmem:[%s1863 + $0x50] sm:$0xff]
  %v1875 = vld [vmem:[%s1863 + $0x58] sm:$0xff]
  %v1876 = vld [vmem:[%s1863 + $0x60] sm:$0xff]
  %v1877 = vld [vmem:[%s1863 + $0x68] sm:$0xff]
  %v1878 = vld [vmem:[%s1863 + $0x70] sm:$0xff]
  %v1879 = vld [vmem:[%s1863 + $0x78] sm:$0xff]
  %v1880 = vld [vmem:[%s1863 + $0x80] sm:$0xff]
  %v1881 = vld [vmem:[%s1863 + $0x88] sm:$0xff]
  %v1882 = vld [vmem:[%s1863 + $0x90] sm:$0xff]
  %v1883 = vld [vmem:[%s1863 + $0x98] sm:$0xff]
  %v1884 = vld [vmem:[%s1863 + $0xa0] sm:$0xff]
  %v1885 = vld [vmem:[%s1863 + $0xa8] sm:$0xff]
  %v1886 = vld [vmem:[%s1863 + $0xb0] sm:$0xff]
  %v1887 = vld [vmem:[%s1863 + $0xb8] sm:$0xff]
  %v1888 = vld [vmem:[%s1863 + $0xc0] sm:$0xff]
  %v1889 = vld [vmem:[%s1863 + $0xc8] sm:$0xff]
  %v1890 = vld [vmem:[%s1863 + $0xd0] sm:$0xff]
  %v1891 = vld [vmem:[%s1863 + $0xd8] sm:$0xff]
  %v1892 = vld [vmem:[%s1863 + $0xe0] sm:$0xff]
  %v1893 = vld [vmem:[%s1863 + $0xe8] sm:$0xff]
  %v1894 = vld [vmem:[%s1863 + $0xf0] sm:$0xff]
  %v1895 = vld [vmem:[%s1863 + $0xf8] sm:$0xff]
  %v1896 = vld [vmem:[%s1863 + $0x100] sm:$0xff]
  %v1897 = vld [vmem:[%s1863 + $0x108] sm:$0xff]
  %v1898 = vld [vmem:[%s1863 + $0x110] sm:$0xff]
  %v1899 = vld [vmem:[%s1863 + $0x118] sm:$0xff]
  %v1914 = vunpack.c.l.b16 %v1849
  %v1915 = vunpack.c.h.b16 %v1849
  %v1916 = vunpack.c.l.b16 %v1850
  %v1917 = vunpack.c.l.b16 %v1851
  %v1918 = vunpack.c.h.b16 %v1851
  %v1919 = vunpack.c.l.b16 %v1852
  %v1920 = vunpack.c.l.b16 %v1853
  %v1921 = vunpack.c.h.b16 %v1853
  %v1922 = vunpack.c.l.b16 %v1854
  %v1923 = vunpack.c.l.b16 %v1855
  %v1924 = vunpack.c.h.b16 %v1855
  %v1925 = vunpack.c.l.b16 %v1856
  %v1926 = vunpack.c.l.b16 %v1857
  %v1927 = vunpack.c.h.b16 %v1857
  %v1928 = vunpack.c.l.b16 %v1858
  %v1929 = vunpack.c.l.b16 %v1859
  %v1930 = vunpack.c.h.b16 %v1859
  %v1931 = vunpack.c.l.b16 %v1860
  %v1932 = vunpack.c.l.b16 %v1861
  %v1933 = vunpack.c.h.b16 %v1861
  %v1934 = vunpack.c.l.b16 %v1862
  %v1935 = vpack.c.b16 %v1917, %v1914
  %v1936 = vpack.c.b16 %v1918, %v1915
  %v1937 = vpack.c.b16 %v1919, %v1916
  %v1938 = vpack.c.b16 %v1923, %v1920
  %v1939 = vpack.c.b16 %v1924, %v1921
  %v1940 = vpack.c.b16 %v1925, %v1922
  %v1941 = vpack.c.b16 %v1929, %v1926
  %v1942 = vpack.c.b16 %v1930, %v1927
  %v1943 = vpack.c.b16 %v1931, %v1928
  %v1944 = vpack.c.b16 %v1932, %v1932
  %v1945 = vpack.c.b16 %v1933, %v1933
  %v1946 = vpack.c.b16 %v1934, %v1934
  %v1991 = vunpack.c.l.b16 %v1864
  %v1992 = vunpack.c.h.b16 %v1864
  %v1993 = vunpack.c.l.b16 %v1865
  %v1994 = vunpack.c.h.b16 %v1865
  %v1995 = vunpack.c.l.b16 %v1866
  %v1996 = vunpack.c.h.b16 %v1866
  %v1997 = vunpack.c.l.b16 %v1867
  %v1998 = vunpack.c.h.b16 %v1867
  %v1999 = vunpack.c.l.b16 %v1868
  %v2000 = vunpack.c.h.b16 %v1868
  %v2001 = vunpack.c.l.b16 %v1869
  %v2002 = vunpack.c.h.b16 %v1869
  %v2003 = vunpack.c.l.b16 %v1870
  %v2004 = vunpack.c.h.b16 %v1870
  %v2005 = vunpack.c.l.b16 %v1871
  %v2006 = vunpack.c.h.b16 %v1871
  %v2007 = vunpack.c.l.b16 %v1872
  %v2008 = vunpack.c.h.b16 %v1872
  %v2009 = vunpack.c.l.b16 %v1873
  %v2010 = vunpack.c.h.b16 %v1873
  %v2011 = vunpack.c.l.b16 %v1874
  %v2012 = vunpack.c.h.b16 %v1874
  %v2013 = vunpack.c.l.b16 %v1875
  %v2014 = vunpack.c.h.b16 %v1875
  %v2015 = vunpack.c.l.b16 %v1876
  %v2016 = vunpack.c.h.b16 %v1876
  %v2017 = vunpack.c.l.b16 %v1877
  %v2018 = vunpack.c.h.b16 %v1877
  %v2019 = vunpack.c.l.b16 %v1878
  %v2020 = vunpack.c.h.b16 %v1878
  %v2021 = vunpack.c.l.b16 %v1879
  %v2022 = vunpack.c.h.b16 %v1879
  %v2023 = vunpack.c.l.b16 %v1880
  %v2024 = vunpack.c.h.b16 %v1880
  %v2025 = vunpack.c.l.b16 %v1881
  %v2026 = vunpack.c.h.b16 %v1881
  %v2027 = vunpack.c.l.b16 %v1882
  %v2028 = vunpack.c.h.b16 %v1882
  %v2029 = vunpack.c.l.b16 %v1883
  %v2030 = vunpack.c.h.b16 %v1883
  %v2031 = vunpack.c.l.b16 %v1884
  %v2032 = vunpack.c.h.b16 %v1884
  %v2033 = vunpack.c.l.b16 %v1885
  %v2034 = vunpack.c.h.b16 %v1885
  %v2035 = vunpack.c.l.b16 %v1886
  %v2036 = vunpack.c.h.b16 %v1886
  %v2037 = vunpack.c.l.b16 %v1887
  %v2038 = vunpack.c.h.b16 %v1887
  %v2039 = vunpack.c.l.b16 %v1888
  %v2040 = vunpack.c.h.b16 %v1888
  %v2041 = vunpack.c.l.b16 %v1889
  %v2042 = vunpack.c.h.b16 %v1889
  %v2043 = vunpack.c.l.b16 %v1890
  %v2044 = vunpack.c.h.b16 %v1890
  %v2045 = vunpack.c.l.b16 %v1891
  %v2046 = vunpack.c.h.b16 %v1891
  %v2047 = vunpack.c.l.b16 %v1892
  %v2048 = vunpack.c.h.b16 %v1892
  %v2049 = vunpack.c.l.b16 %v1893
  %v2050 = vunpack.c.h.b16 %v1893
  %v2051 = vunpack.c.l.b16 %v1894
  %v2052 = vunpack.c.h.b16 %v1894
  %v2053 = vunpack.c.l.b16 %v1895
  %v2054 = vunpack.c.h.b16 %v1895
  %v2055 = vunpack.c.l.b16 %v1896
  %v2056 = vunpack.c.h.b16 %v1896
  %v2057 = vunpack.c.l.b16 %v1897
  %v2058 = vunpack.c.h.b16 %v1897
  %v2059 = vunpack.c.l.b16 %v1898
  %v2060 = vunpack.c.h.b16 %v1898
  %v2061 = vunpack.c.l.b16 %v1899
  %v2062 = vunpack.c.h.b16 %v1899
  %v2063 = vpack.c.b16 %v1993, %v1991
  %v2064 = vpack.c.b16 %v1994, %v1992
  %v2065 = vpack.c.b16 %v1997, %v1995
  %v2066 = vpack.c.b16 %v1998, %v1996
  %v2067 = vpack.c.b16 %v2001, %v1999
  %v2068 = vpack.c.b16 %v2002, %v2000
  %v2069 = vpack.c.b16 %v2005, %v2003
  %v2070 = vpack.c.b16 %v2006, %v2004
  %v2071 = vpack.c.b16 %v2009, %v2007
  %v2072 = vpack.c.b16 %v2010, %v2008
  %v2073 = vpack.c.b16 %v2013, %v2011
  %v2074 = vpack.c.b16 %v2014, %v2012
  %v2075 = vpack.c.b16 %v2017, %v2015
  %v2076 = vpack.c.b16 %v2018, %v2016
  %v2077 = vpack.c.b16 %v2021, %v2019
  %v2078 = vpack.c.b16 %v2022, %v2020
  %v2079 = vpack.c.b16 %v2025, %v2023
  %v2080 = vpack.c.b16 %v2026, %v2024
  %v2081 = vpack.c.b16 %v2029, %v2027
  %v2082 = vpack.c.b16 %v2030, %v2028
  %v2083 = vpack.c.b16 %v2033, %v2031
  %v2084 = vpack.c.b16 %v2034, %v2032
  %v2085 = vpack.c.b16 %v2037, %v2035
  %v2086 = vpack.c.b16 %v2038, %v2036
  %v2087 = vpack.c.b16 %v2041, %v2039
  %v2088 = vpack.c.b16 %v2042, %v2040
  %v2089 = vpack.c.b16 %v2045, %v2043
  %v2090 = vpack.c.b16 %v2046, %v2044
  %v2091 = vpack.c.b16 %v2049, %v2047
  %v2092 = vpack.c.b16 %v2050, %v2048
  %v2093 = vpack.c.b16 %v2053, %v2051
  %v2094 = vpack.c.b16 %v2054, %v2052
  %v2095 = vpack.c.b16 %v2057, %v2055
  %v2096 = vpack.c.b16 %v2058, %v2056
  %v2097 = vpack.c.b16 %v2061, %v2059
  %v2098 = vpack.c.b16 %v2062, %v2060
  %v2136 = vsel %vm314, %v1937, 0
  %v2139 = vsel %vm314, %v1940, 0
  %v2142 = vsel %vm314, %v1943, 0
  %v2145 = vsel %vm314, %v1946, 0
  %2147 = vmatprep.subr.bf16.mxu0 %v2078
  %2148 = vmatpush1.bf16.msra.mxu0 %v2077
  %2149 = vmatprep.subr.bf16.mxu0 %v2076
  %2150 = vmatpush1.bf16.msra.mxu0 %v2075
  %2151 = vmatprep.subr.bf16.mxu0 %v2074
  %2152 = vmatpush1.bf16.msra.mxu0 %v2073
  %2153 = vmatprep.subr.bf16.mxu0 %v2072
  %2154 = vmatpush1.bf16.msra.mxu0 %v2071
  %2155 = vmatprep.subr.bf16.mxu0 %v2070
  %2156 = vmatpush1.bf16.msra.mxu0 %v2069
  %2157 = vmatprep.subr.bf16.mxu0 %v2068
  %2158 = vmatpush1.bf16.msra.mxu0 %v2067
  %2159 = vmatprep.subr.bf16.mxu0 %v2066
  %2160 = vmatpush1.bf16.msra.mxu0 %v2065
  %2161 = vmatprep.subr.bf16.mxu0 %v2064
  %2162 = vmatpush1.bf16.msra.mxu0 %v2063
  %2163 = vmatprep.subr.bf16.mxu0 %v2094
  %2164 = vmatpush2.bf16.msra.mxu0 %v2093
  %2165 = vmatprep.subr.bf16.mxu0 %v2092
  %2166 = vmatpush2.bf16.msra.mxu0 %v2091
  %2167 = vmatprep.subr.bf16.mxu0 %v2090
  %2168 = vmatpush2.bf16.msra.mxu0 %v2089
  %2169 = vmatprep.subr.bf16.mxu0 %v2088
  %2170 = vmatpush2.bf16.msra.mxu0 %v2087
  %2171 = vmatprep.subr.bf16.mxu0 %v2086
  %2172 = vmatpush2.bf16.msra.mxu0 %v2085
  %2173 = vmatprep.subr.bf16.mxu0 %v2084
  %2174 = vmatpush2.bf16.msra.mxu0 %v2083
  %2175 = vmatprep.subr.bf16.mxu0 %v2082
  %2176 = vmatpush2.bf16.msra.mxu0 %v2081
  %2177 = vmatprep.subr.bf16.mxu0 %v2080
  %2178 = vmatpush2.bf16.msra.mxu0 %v2079
  %2179 = vmatprep.mubr.bf16.mxu0 %v1936
  %2180 = vmatmul.mubr.bf16.gmra.mxu0 %v1935
  %v2181 = vpop.f32.mrf.mxu0
  %v2182 = vadd.f32 0.0, %v2181
  %v2183 = vpop.f32.mrf.mxu0
  %v2184 = vadd.f32 0.0, %v2183
  %v2185 = vpop.f32.mrf.mxu0
  %v2186 = vadd.f32 0.0, %v2185
  %v2187 = vpop.f32.mrf.mxu0
  %v2188 = vadd.f32 0.0, %v2187
  %2189 = vmatprep.mubr.bf16.mxu0 %v1939
  %2190 = vmatmul.mubr.bf16.gmra.mxu0 %v1938
  %v2191 = vpop.f32.mrf.mxu0
  %v2192 = vadd.f32 0.0, %v2191
  %v2193 = vpop.f32.mrf.mxu0
  %v2194 = vadd.f32 0.0, %v2193
  %v2195 = vpop.f32.mrf.mxu0
  %v2196 = vadd.f32 0.0, %v2195
  %v2197 = vpop.f32.mrf.mxu0
  %v2198 = vadd.f32 0.0, %v2197
  %2199 = vmatprep.mubr.bf16.mxu0 %v1942
  %2200 = vmatmul.mubr.bf16.gmra.mxu0 %v1941
  %v2201 = vpop.f32.mrf.mxu0
  %v2202 = vadd.f32 0.0, %v2201
  %v2203 = vpop.f32.mrf.mxu0
  %v2204 = vadd.f32 0.0, %v2203
  %v2205 = vpop.f32.mrf.mxu0
  %v2206 = vadd.f32 0.0, %v2205
  %v2207 = vpop.f32.mrf.mxu0
  %v2208 = vadd.f32 0.0, %v2207
  %2209 = vmatprep.mubr.bf16.mxu0 %v1945
  %2210 = vmatmul.mubr.bf16.gmra.mxu0 %v1944
  %v2211 = vpop.f32.mrf.mxu0
  %v2212 = vadd.f32 0.0, %v2211
  %v2213 = vpop.f32.mrf.mxu0
  %v2214 = vadd.f32 0.0, %v2213
  %v2215 = vpop.f32.mrf.mxu0
  %v2216 = vpop.f32.mrf.mxu0
  %2217 = vdwg.mxu0
  %2218 = vmatprep.subr.bf16.mxu0 0
  %2219 = vmatpush1.bf16.msra.mxu0 0
  %2220 = vmatprep.subr.bf16.mxu0 0
  %2221 = vmatpush1.bf16.msra.mxu0 0
  %2222 = vmatprep.subr.bf16.mxu0 0
  %2223 = vmatpush1.bf16.msra.mxu0 0
  %2224 = vmatprep.subr.bf16.mxu0 0
  %2225 = vmatpush1.bf16.msra.mxu0 0
  %2226 = vmatprep.subr.bf16.mxu0 0
  %2227 = vmatpush1.bf16.msra.mxu0 0
  %2228 = vmatprep.subr.bf16.mxu0 0
  %2229 = vmatpush1.bf16.msra.mxu0 0
  %2230 = vmatprep.subr.bf16.mxu0 %v2098
  %2231 = vmatpush1.bf16.msra.mxu0 %v2097
  %2232 = vmatprep.subr.bf16.mxu0 %v2096
  %2233 = vmatpush1.bf16.msra.mxu0 %v2095
  %2234 = vmatprep.subr.bf16.mxu0 0
  %2235 = vmatpush2.bf16.msra.mxu0 0
  %2236 = vmatprep.subr.bf16.mxu0 0
  %2237 = vmatpush2.bf16.msra.mxu0 0
  %2238 = vmatprep.subr.bf16.mxu0 0
  %2239 = vmatpush2.bf16.msra.mxu0 0
  %2240 = vmatprep.subr.bf16.mxu0 0
  %2241 = vmatpush2.bf16.msra.mxu0 0
  %2242 = vmatprep.subr.bf16.mxu0 0
  %2243 = vmatpush2.bf16.msra.mxu0 0
  %2244 = vmatprep.subr.bf16.mxu0 0
  %2245 = vmatpush2.bf16.msra.mxu0 0
  %2246 = vmatprep.subr.bf16.mxu0 0
  %2247 = vmatpush2.bf16.msra.mxu0 0
  %2248 = vmatprep.subr.bf16.mxu0 0
  %2249 = vmatpush2.bf16.msra.mxu0 0
  %2250 = vmatprep.mubr.bf16.mxu0 0
  %2251 = vmatmul.mubr.bf16.gmra.mxu0 %v2136
  %v2252 = vpop.f32.mrf.mxu0
  %v2253 = vadd.f32 %v2182, %v2252
  %v2254 = vpop.f32.mrf.mxu0
  %v2255 = vadd.f32 %v2184, %v2254
  %v2256 = vpop.f32.mrf.mxu0
  %v2257 = vadd.f32 %v2186, %v2256
  %v2258 = vpop.f32.mrf.mxu0
  %v2259 = vadd.f32 %v2188, %v2258
  %2260 = vmatprep.mubr.bf16.mxu0 0
  %2261 = vmatmul.mubr.bf16.gmra.mxu0 %v2139
  %v2262 = vpop.f32.mrf.mxu0
  %v2263 = vadd.f32 %v2192, %v2262
  %v2264 = vpop.f32.mrf.mxu0
  %v2265 = vadd.f32 %v2194, %v2264
  %v2266 = vpop.f32.mrf.mxu0
  %v2267 = vadd.f32 %v2196, %v2266
  %v2268 = vpop.f32.mrf.mxu0
  %v2269 = vadd.f32 %v2198, %v2268
  %2270 = vmatprep.mubr.bf16.mxu0 0
  %2271 = vmatmul.mubr.bf16.gmra.mxu0 %v2142
  %v2272 = vpop.f32.mrf.mxu0
  %v2273 = vadd.f32 %v2202, %v2272
  %v2274 = vpop.f32.mrf.mxu0
  %v2275 = vadd.f32 %v2204, %v2274
  %v2276 = vpop.f32.mrf.mxu0
  %v2277 = vadd.f32 %v2206, %v2276
  %v2278 = vpop.f32.mrf.mxu0
  %v2279 = vadd.f32 %v2208, %v2278
  %2280 = vmatprep.mubr.bf16.mxu0 0
  %2281 = vmatmul.mubr.bf16.gmra.mxu0 %v2145
  %v2282 = vpop.f32.mrf.mxu0
  %v2283 = vadd.f32 %v2212, %v2282
  %v2284 = vpop.f32.mrf.mxu0
  %v2285 = vadd.f32 %v2214, %v2284
  %v2286 = vpop.f32.mrf.mxu0
  %v2287 = vpop.f32.mrf.mxu0
  %2288 = vdwg.mxu0
  %v2303 = vunpack.c.l.b16 %v1799
  %v2304 = vunpack.c.h.b16 %v1799
  %v2305 = vunpack.c.l.b16 %v1800
  %v2306 = vunpack.c.l.b16 %v1801
  %v2307 = vunpack.c.h.b16 %v1801
  %v2308 = vunpack.c.l.b16 %v1802
  %v2309 = vunpack.c.l.b16 %v1803
  %v2310 = vunpack.c.h.b16 %v1803
  %v2311 = vunpack.c.l.b16 %v1804
  %v2312 = vunpack.c.l.b16 %v1805
  %v2313 = vunpack.c.h.b16 %v1805
  %v2314 = vunpack.c.l.b16 %v1806
  %v2315 = vunpack.c.l.b16 %v1807
  %v2316 = vunpack.c.h.b16 %v1807
  %v2317 = vunpack.c.l.b16 %v1808
  %v2318 = vunpack.c.l.b16 %v1809
  %v2319 = vunpack.c.h.b16 %v1809
  %v2320 = vunpack.c.l.b16 %v1810
  %v2321 = vunpack.c.l.b16 %v1811
  %v2322 = vunpack.c.h.b16 %v1811
  %v2323 = vunpack.c.l.b16 %v1812
  %v2324 = vpack.c.b16 %v2306, %v2303
  %v2325 = vpack.c.b16 %v2307, %v2304
  %v2326 = vpack.c.b16 %v2308, %v2305
  %v2327 = vpack.c.b16 %v2312, %v2309
  %v2328 = vpack.c.b16 %v2313, %v2310
  %v2329 = vpack.c.b16 %v2314, %v2311
  %v2330 = vpack.c.b16 %v2318, %v2315
  %v2331 = vpack.c.b16 %v2319, %v2316
  %v2332 = vpack.c.b16 %v2320, %v2317
  %v2333 = vpack.c.b16 %v2321, %v2321
  %v2334 = vpack.c.b16 %v2322, %v2322
  %v2335 = vpack.c.b16 %v2323, %v2323
  %v2380 = vunpack.c.l.b16 %v1813
  %v2381 = vunpack.c.h.b16 %v1813
  %v2382 = vunpack.c.l.b16 %v1814
  %v2383 = vunpack.c.h.b16 %v1814
  %v2384 = vunpack.c.l.b16 %v1815
  %v2385 = vunpack.c.h.b16 %v1815
  %v2386 = vunpack.c.l.b16 %v1816
  %v2387 = vunpack.c.h.b16 %v1816
  %v2388 = vunpack.c.l.b16 %v1817
  %v2389 = vunpack.c.h.b16 %v1817
  %v2390 = vunpack.c.l.b16 %v1818
  %v2391 = vunpack.c.h.b16 %v1818
  %v2392 = vunpack.c.l.b16 %v1819
  %v2393 = vunpack.c.h.b16 %v1819
  %v2394 = vunpack.c.l.b16 %v1820
  %v2395 = vunpack.c.h.b16 %v1820
  %v2396 = vunpack.c.l.b16 %v1821
  %v2397 = vunpack.c.h.b16 %v1821
  %v2398 = vunpack.c.l.b16 %v1822
  %v2399 = vunpack.c.h.b16 %v1822
  %v2400 = vunpack.c.l.b16 %v1823
  %v2401 = vunpack.c.h.b16 %v1823
  %v2402 = vunpack.c.l.b16 %v1824
  %v2403 = vunpack.c.h.b16 %v1824
  %v2404 = vunpack.c.l.b16 %v1825
  %v2405 = vunpack.c.h.b16 %v1825
  %v2406 = vunpack.c.l.b16 %v1826
  %v2407 = vunpack.c.h.b16 %v1826
  %v2408 = vunpack.c.l.b16 %v1827
  %v2409 = vunpack.c.h.b16 %v1827
  %v2410 = vunpack.c.l.b16 %v1828
  %v2411 = vunpack.c.h.b16 %v1828
  %v2412 = vunpack.c.l.b16 %v1829
  %v2413 = vunpack.c.h.b16 %v1829
  %v2414 = vunpack.c.l.b16 %v1830
  %v2415 = vunpack.c.h.b16 %v1830
  %v2416 = vunpack.c.l.b16 %v1831
  %v2417 = vunpack.c.h.b16 %v1831
  %v2418 = vunpack.c.l.b16 %v1832
  %v2419 = vunpack.c.h.b16 %v1832
  %v2420 = vunpack.c.l.b16 %v1833
  %v2421 = vunpack.c.h.b16 %v1833
  %v2422 = vunpack.c.l.b16 %v1834
  %v2423 = vunpack.c.h.b16 %v1834
  %v2424 = vunpack.c.l.b16 %v1835
  %v2425 = vunpack.c.h.b16 %v1835
  %v2426 = vunpack.c.l.b16 %v1836
  %v2427 = vunpack.c.h.b16 %v1836
  %v2428 = vunpack.c.l.b16 %v1837
  %v2429 = vunpack.c.h.b16 %v1837
  %v2430 = vunpack.c.l.b16 %v1838
  %v2431 = vunpack.c.h.b16 %v1838
  %v2432 = vunpack.c.l.b16 %v1839
  %v2433 = vunpack.c.h.b16 %v1839
  %v2434 = vunpack.c.l.b16 %v1840
  %v2435 = vunpack.c.h.b16 %v1840
  %v2436 = vunpack.c.l.b16 %v1841
  %v2437 = vunpack.c.h.b16 %v1841
  %v2438 = vunpack.c.l.b16 %v1842
  %v2439 = vunpack.c.h.b16 %v1842
  %v2440 = vunpack.c.l.b16 %v1843
  %v2441 = vunpack.c.h.b16 %v1843
  %v2442 = vunpack.c.l.b16 %v1844
  %v2443 = vunpack.c.h.b16 %v1844
  %v2444 = vunpack.c.l.b16 %v1845
  %v2445 = vunpack.c.h.b16 %v1845
  %v2446 = vunpack.c.l.b16 %v1846
  %v2447 = vunpack.c.h.b16 %v1846
  %v2448 = vunpack.c.l.b16 %v1847
  %v2449 = vunpack.c.h.b16 %v1847
  %v2450 = vunpack.c.l.b16 %v1848
  %v2451 = vunpack.c.h.b16 %v1848
  %v2452 = vpack.c.b16 %v2382, %v2380
  %v2453 = vpack.c.b16 %v2383, %v2381
  %v2454 = vpack.c.b16 %v2386, %v2384
  %v2455 = vpack.c.b16 %v2387, %v2385
  %v2456 = vpack.c.b16 %v2390, %v2388
  %v2457 = vpack.c.b16 %v2391, %v2389
  %v2458 = vpack.c.b16 %v2394, %v2392
  %v2459 = vpack.c.b16 %v2395, %v2393
  %v2460 = vpack.c.b16 %v2398, %v2396
  %v2461 = vpack.c.b16 %v2399, %v2397
  %v2462 = vpack.c.b16 %v2402, %v2400
  %v2463 = vpack.c.b16 %v2403, %v2401
  %v2464 = vpack.c.b16 %v2406, %v2404
  %v2465 = vpack.c.b16 %v2407, %v2405
  %v2466 = vpack.c.b16 %v2410, %v2408
  %v2467 = vpack.c.b16 %v2411, %v2409
  %v2468 = vpack.c.b16 %v2414, %v2412
  %v2469 = vpack.c.b16 %v2415, %v2413
  %v2470 = vpack.c.b16 %v2418, %v2416
  %v2471 = vpack.c.b16 %v2419, %v2417
  %v2472 = vpack.c.b16 %v2422, %v2420
  %v2473 = vpack.c.b16 %v2423, %v2421
  %v2474 = vpack.c.b16 %v2426, %v2424
  %v2475 = vpack.c.b16 %v2427, %v2425
  %v2476 = vpack.c.b16 %v2430, %v2428
  %v2477 = vpack.c.b16 %v2431, %v2429
  %v2478 = vpack.c.b16 %v2434, %v2432
  %v2479 = vpack.c.b16 %v2435, %v2433
  %v2480 = vpack.c.b16 %v2438, %v2436
  %v2481 = vpack.c.b16 %v2439, %v2437
  %v2482 = vpack.c.b16 %v2442, %v2440
  %v2483 = vpack.c.b16 %v2443, %v2441
  %v2484 = vpack.c.b16 %v2446, %v2444
  %v2485 = vpack.c.b16 %v2447, %v2445
  %v2486 = vpack.c.b16 %v2450, %v2448
  %v2487 = vpack.c.b16 %v2451, %v2449
  %v2525 = vsel %vm314, %v2326, 0
  %v2528 = vsel %vm314, %v2329, 0
  %v2531 = vsel %vm314, %v2332, 0
  %v2534 = vsel %vm314, %v2335, 0
  %2536 = vmatprep.subr.bf16.mxu0 %v2467
  %2537 = vmatpush1.bf16.msra.mxu0 %v2466
  %2538 = vmatprep.subr.bf16.mxu0 %v2465
  %2539 = vmatpush1.bf16.msra.mxu0 %v2464
  %2540 = vmatprep.subr.bf16.mxu0 %v2463
  %2541 = vmatpush1.bf16.msra.mxu0 %v2462
  %2542 = vmatprep.subr.bf16.mxu0 %v2461
  %2543 = vmatpush1.bf16.msra.mxu0 %v2460
  %2544 = vmatprep.subr.bf16.mxu0 %v2459
  %2545 = vmatpush1.bf16.msra.mxu0 %v2458
  %2546 = vmatprep.subr.bf16.mxu0 %v2457
  %2547 = vmatpush1.bf16.msra.mxu0 %v2456
  %2548 = vmatprep.subr.bf16.mxu0 %v2455
  %2549 = vmatpush1.bf16.msra.mxu0 %v2454
  %2550 = vmatprep.subr.bf16.mxu0 %v2453
  %2551 = vmatpush1.bf16.msra.mxu0 %v2452
  %2552 = vmatprep.subr.bf16.mxu0 %v2483
  %2553 = vmatpush2.bf16.msra.mxu0 %v2482
  %2554 = vmatprep.subr.bf16.mxu0 %v2481
  %2555 = vmatpush2.bf16.msra.mxu0 %v2480
  %2556 = vmatprep.subr.bf16.mxu0 %v2479
  %2557 = vmatpush2.bf16.msra.mxu0 %v2478
  %2558 = vmatprep.subr.bf16.mxu0 %v2477
  %2559 = vmatpush2.bf16.msra.mxu0 %v2476
  %2560 = vmatprep.subr.bf16.mxu0 %v2475
  %2561 = vmatpush2.bf16.msra.mxu0 %v2474
  %2562 = vmatprep.subr.bf16.mxu0 %v2473
  %2563 = vmatpush2.bf16.msra.mxu0 %v2472
  %2564 = vmatprep.subr.bf16.mxu0 %v2471
  %2565 = vmatpush2.bf16.msra.mxu0 %v2470
  %2566 = vmatprep.subr.bf16.mxu0 %v2469
  %2567 = vmatpush2.bf16.msra.mxu0 %v2468
  %2568 = vmatprep.mubr.bf16.mxu0 %v2325
  %2569 = vmatmul.mubr.bf16.gmra.mxu0 %v2324
  %v2570 = vpop.f32.mrf.mxu0
  %v2571 = vadd.f32 %v2253, %v2570
  %v2572 = vpop.f32.mrf.mxu0
  %v2573 = vadd.f32 %v2255, %v2572
  %v2574 = vpop.f32.mrf.mxu0
  %v2575 = vadd.f32 %v2257, %v2574
  %v2576 = vpop.f32.mrf.mxu0
  %v2577 = vadd.f32 %v2259, %v2576
  %2578 = vmatprep.mubr.bf16.mxu0 %v2328
  %2579 = vmatmul.mubr.bf16.gmra.mxu0 %v2327
  %v2580 = vpop.f32.mrf.mxu0
  %v2581 = vadd.f32 %v2263, %v2580
  %v2582 = vpop.f32.mrf.mxu0
  %v2583 = vadd.f32 %v2265, %v2582
  %v2584 = vpop.f32.mrf.mxu0
  %v2585 = vadd.f32 %v2267, %v2584
  %v2586 = vpop.f32.mrf.mxu0
  %v2587 = vadd.f32 %v2269, %v2586
  %2588 = vmatprep.mubr.bf16.mxu0 %v2331
  %2589 = vmatmul.mubr.bf16.gmra.mxu0 %v2330
  %v2590 = vpop.f32.mrf.mxu0
  %v2591 = vadd.f32 %v2273, %v2590
  %v2592 = vpop.f32.mrf.mxu0
  %v2593 = vadd.f32 %v2275, %v2592
  %v2594 = vpop.f32.mrf.mxu0
  %v2595 = vadd.f32 %v2277, %v2594
  %v2596 = vpop.f32.mrf.mxu0
  %v2597 = vadd.f32 %v2279, %v2596
  %2598 = vmatprep.mubr.bf16.mxu0 %v2334
  %2599 = vmatmul.mubr.bf16.gmra.mxu0 %v2333
  %v2600 = vpop.f32.mrf.mxu0
  %v2601 = vadd.f32 %v2283, %v2600
  %v2602 = vpop.f32.mrf.mxu0
  %v2603 = vadd.f32 %v2285, %v2602
  %v2604 = vpop.f32.mrf.mxu0
  %v2605 = vpop.f32.mrf.mxu0
  %2606 = vdwg.mxu0
  %2607 = vmatprep.subr.bf16.mxu0 0
  %2608 = vmatpush1.bf16.msra.mxu0 0
  %2609 = vmatprep.subr.bf16.mxu0 0
  %2610 = vmatpush1.bf16.msra.mxu0 0
  %2611 = vmatprep.subr.bf16.mxu0 0
  %2612 = vmatpush1.bf16.msra.mxu0 0
  %2613 = vmatprep.subr.bf16.mxu0 0
  %2614 = vmatpush1.bf16.msra.mxu0 0
  %2615 = vmatprep.subr.bf16.mxu0 0
  %2616 = vmatpush1.bf16.msra.mxu0 0
  %2617 = vmatprep.subr.bf16.mxu0 0
  %2618 = vmatpush1.bf16.msra.mxu0 0
  %2619 = vmatprep.subr.bf16.mxu0 %v2487
  %2620 = vmatpush1.bf16.msra.mxu0 %v2486
  %2621 = vmatprep.subr.bf16.mxu0 %v2485
  %2622 = vmatpush1.bf16.msra.mxu0 %v2484
  %2623 = vmatprep.subr.bf16.mxu0 0
  %2624 = vmatpush2.bf16.msra.mxu0 0
  %2625 = vmatprep.subr.bf16.mxu0 0
  %2626 = vmatpush2.bf16.msra.mxu0 0
  %2627 = vmatprep.subr.bf16.mxu0 0
  %2628 = vmatpush2.bf16.msra.mxu0 0
  %2629 = vmatprep.subr.bf16.mxu0 0
  %2630 = vmatpush2.bf16.msra.mxu0 0
  %2631 = vmatprep.subr.bf16.mxu0 0
  %2632 = vmatpush2.bf16.msra.mxu0 0
  %2633 = vmatprep.subr.bf16.mxu0 0
  %2634 = vmatpush2.bf16.msra.mxu0 0
  %2635 = vmatprep.subr.bf16.mxu0 0
  %2636 = vmatpush2.bf16.msra.mxu0 0
  %2637 = vmatprep.subr.bf16.mxu0 0
  %2638 = vmatpush2.bf16.msra.mxu0 0
  %2639 = vmatprep.mubr.bf16.mxu0 0
  %2640 = vmatmul.mubr.bf16.gmra.mxu0 %v2525
  %v2641 = vpop.f32.mrf.mxu0
  %v2642 = vadd.f32 %v2571, %v2641
  %v2643 = vpop.f32.mrf.mxu0
  %v2644 = vadd.f32 %v2573, %v2643
  %v2645 = vpop.f32.mrf.mxu0
  %v2646 = vadd.f32 %v2575, %v2645
  %v2647 = vpop.f32.mrf.mxu0
  %v2648 = vadd.f32 %v2577, %v2647
  %2649 = vmatprep.mubr.bf16.mxu0 0
  %2650 = vmatmul.mubr.bf16.gmra.mxu0 %v2528
  %v2651 = vpop.f32.mrf.mxu0
  %v2652 = vadd.f32 %v2581, %v2651
  %v2653 = vpop.f32.mrf.mxu0
  %v2654 = vadd.f32 %v2583, %v2653
  %v2655 = vpop.f32.mrf.mxu0
  %v2656 = vadd.f32 %v2585, %v2655
  %v2657 = vpop.f32.mrf.mxu0
  %v2658 = vadd.f32 %v2587, %v2657
  %2659 = vmatprep.mubr.bf16.mxu0 0
  %2660 = vmatmul.mubr.bf16.gmra.mxu0 %v2531
  %v2661 = vpop.f32.mrf.mxu0
  %v2662 = vadd.f32 %v2591, %v2661
  %v2663 = vpop.f32.mrf.mxu0
  %v2664 = vadd.f32 %v2593, %v2663
  %v2665 = vpop.f32.mrf.mxu0
  %v2666 = vadd.f32 %v2595, %v2665
  %v2667 = vpop.f32.mrf.mxu0
  %v2668 = vadd.f32 %v2597, %v2667
  %2669 = vmatprep.mubr.bf16.mxu0 0
  %2670 = vmatmul.mubr.bf16.gmra.mxu0 %v2534
  %v2671 = vpop.f32.mrf.mxu0
  %v2672 = vadd.f32 %v2601, %v2671
  %v2673 = vpop.f32.mrf.mxu0
  %v2674 = vadd.f32 %v2603, %v2673
  %v2675 = vpop.f32.mrf.mxu0
  %v2676 = vpop.f32.mrf.mxu0
  %2677 = vdwg.mxu0
  %v2678 = vld [vmem:[#allocation2 + $0xc] sm:$0xff]
  %v2679 = vld [vmem:[#allocation2 + $0x14] sm:$0xf]
  %v2680 = vld [vmem:[#allocation2 + $0x18] sm:$0xff]
  %v2681 = vld [vmem:[#allocation2 + $0x20] sm:$0xf]
  %v2682 = vld [vmem:[#allocation2 + $0x24] sm:$0xff]
  %v2683 = vld [vmem:[#allocation2 + $0x2c] sm:$0xf]
  %v2684 = vld [vmem:[#allocation2 + $0x30] sm:$0xff]
  %v2685 = vld [vmem:[#allocation2 + $0x38] sm:$0xf]
  %v2686 = vld [vmem:[#allocation2 + $0x3c] sm:$0xff]
  %v2687 = vld [vmem:[#allocation2 + $0x44] sm:$0xf]
  %v2688 = vld [vmem:[#allocation2 + $0x48] sm:$0xff]
  %v2689 = vld [vmem:[#allocation2 + $0x50] sm:$0xf]
  %v2690 = vld [vmem:[#allocation2 + $0x54] sm:$0xff]
  %v2691 = vld [vmem:[#allocation2 + $0x5c] sm:$0xf]
  %s2692 = scalar_lea.vmem %s3, 576
  %v2693 = vld [vmem:[%s2692] sm:$0xff]
  %v2694 = vld [vmem:[%s2692 + $0x8] sm:$0xff]
  %v2695 = vld [vmem:[%s2692 + $0x10] sm:$0xff]
  %v2696 = vld [vmem:[%s2692 + $0x18] sm:$0xff]
  %v2697 = vld [vmem:[%s2692 + $0x20] sm:$0xff]
  %v2698 = vld [vmem:[%s2692 + $0x28] sm:$0xff]
  %v2699 = vld [vmem:[%s2692 + $0x30] sm:$0xff]
  %v2700 = vld [vmem:[%s2692 + $0x38] sm:$0xff]
  %v2701 = vld [vmem:[%s2692 + $0x40] sm:$0xff]
  %v2702 = vld [vmem:[%s2692 + $0x48] sm:$0xff]
  %v2703 = vld [vmem:[%s2692 + $0x50] sm:$0xff]
  %v2704 = vld [vmem:[%s2692 + $0x58] sm:$0xff]
  %v2705 = vld [vmem:[%s2692 + $0x60] sm:$0xff]
  %v2706 = vld [vmem:[%s2692 + $0x68] sm:$0xff]
  %v2707 = vld [vmem:[%s2692 + $0x70] sm:$0xff]
  %v2708 = vld [vmem:[%s2692 + $0x78] sm:$0xff]
  %v2709 = vld [vmem:[%s2692 + $0x80] sm:$0xff]
  %v2710 = vld [vmem:[%s2692 + $0x88] sm:$0xff]
  %v2711 = vld [vmem:[%s2692 + $0x90] sm:$0xff]
  %v2712 = vld [vmem:[%s2692 + $0x98] sm:$0xff]
  %v2713 = vld [vmem:[%s2692 + $0xa0] sm:$0xff]
  %v2714 = vld [vmem:[%s2692 + $0xa8] sm:$0xff]
  %v2715 = vld [vmem:[%s2692 + $0xb0] sm:$0xff]
  %v2716 = vld [vmem:[%s2692 + $0xb8] sm:$0xff]
  %v2717 = vld [vmem:[%s2692 + $0xc0] sm:$0xff]
  %v2718 = vld [vmem:[%s2692 + $0xc8] sm:$0xff]
  %v2719 = vld [vmem:[%s2692 + $0xd0] sm:$0xff]
  %v2720 = vld [vmem:[%s2692 + $0xd8] sm:$0xff]
  %v2721 = vld [vmem:[%s2692 + $0xe0] sm:$0xff]
  %v2722 = vld [vmem:[%s2692 + $0xe8] sm:$0xff]
  %v2723 = vld [vmem:[%s2692 + $0xf0] sm:$0xff]
  %v2724 = vld [vmem:[%s2692 + $0xf8] sm:$0xff]
  %v2725 = vld [vmem:[%s2692 + $0x100] sm:$0xff]
  %v2726 = vld [vmem:[%s2692 + $0x108] sm:$0xff]
  %v2727 = vld [vmem:[%s2692 + $0x110] sm:$0xff]
  %v2728 = vld [vmem:[%s2692 + $0x118] sm:$0xff]
  %v2743 = vunpack.c.l.b16 %v2678
  %v2744 = vunpack.c.h.b16 %v2678
  %v2745 = vunpack.c.l.b16 %v2679
  %v2746 = vunpack.c.l.b16 %v2680
  %v2747 = vunpack.c.h.b16 %v2680
  %v2748 = vunpack.c.l.b16 %v2681
  %v2749 = vunpack.c.l.b16 %v2682
  %v2750 = vunpack.c.h.b16 %v2682
  %v2751 = vunpack.c.l.b16 %v2683
  %v2752 = vunpack.c.l.b16 %v2684
  %v2753 = vunpack.c.h.b16 %v2684
  %v2754 = vunpack.c.l.b16 %v2685
  %v2755 = vunpack.c.l.b16 %v2686
  %v2756 = vunpack.c.h.b16 %v2686
  %v2757 = vunpack.c.l.b16 %v2687
  %v2758 = vunpack.c.l.b16 %v2688
  %v2759 = vunpack.c.h.b16 %v2688
  %v2760 = vunpack.c.l.b16 %v2689
  %v2761 = vunpack.c.l.b16 %v2690
  %v2762 = vunpack.c.h.b16 %v2690
  %v2763 = vunpack.c.l.b16 %v2691
  %v2764 = vpack.c.b16 %v2746, %v2743
  %v2765 = vpack.c.b16 %v2747, %v2744
  %v2766 = vpack.c.b16 %v2748, %v2745
  %v2767 = vpack.c.b16 %v2752, %v2749
  %v2768 = vpack.c.b16 %v2753, %v2750
  %v2769 = vpack.c.b16 %v2754, %v2751
  %v2770 = vpack.c.b16 %v2758, %v2755
  %v2771 = vpack.c.b16 %v2759, %v2756
  %v2772 = vpack.c.b16 %v2760, %v2757
  %v2773 = vpack.c.b16 %v2761, %v2761
  %v2774 = vpack.c.b16 %v2762, %v2762
  %v2775 = vpack.c.b16 %v2763, %v2763
  %v2820 = vunpack.c.l.b16 %v2693
  %v2821 = vunpack.c.h.b16 %v2693
  %v2822 = vunpack.c.l.b16 %v2694
  %v2823 = vunpack.c.h.b16 %v2694
  %v2824 = vunpack.c.l.b16 %v2695
  %v2825 = vunpack.c.h.b16 %v2695
  %v2826 = vunpack.c.l.b16 %v2696
  %v2827 = vunpack.c.h.b16 %v2696
  %v2828 = vunpack.c.l.b16 %v2697
  %v2829 = vunpack.c.h.b16 %v2697
  %v2830 = vunpack.c.l.b16 %v2698
  %v2831 = vunpack.c.h.b16 %v2698
  %v2832 = vunpack.c.l.b16 %v2699
  %v2833 = vunpack.c.h.b16 %v2699
  %v2834 = vunpack.c.l.b16 %v2700
  %v2835 = vunpack.c.h.b16 %v2700
  %v2836 = vunpack.c.l.b16 %v2701
  %v2837 = vunpack.c.h.b16 %v2701
  %v2838 = vunpack.c.l.b16 %v2702
  %v2839 = vunpack.c.h.b16 %v2702
  %v2840 = vunpack.c.l.b16 %v2703
  %v2841 = vunpack.c.h.b16 %v2703
  %v2842 = vunpack.c.l.b16 %v2704
  %v2843 = vunpack.c.h.b16 %v2704
  %v2844 = vunpack.c.l.b16 %v2705
  %v2845 = vunpack.c.h.b16 %v2705
  %v2846 = vunpack.c.l.b16 %v2706
  %v2847 = vunpack.c.h.b16 %v2706
  %v2848 = vunpack.c.l.b16 %v2707
  %v2849 = vunpack.c.h.b16 %v2707
  %v2850 = vunpack.c.l.b16 %v2708
  %v2851 = vunpack.c.h.b16 %v2708
  %v2852 = vunpack.c.l.b16 %v2709
  %v2853 = vunpack.c.h.b16 %v2709
  %v2854 = vunpack.c.l.b16 %v2710
  %v2855 = vunpack.c.h.b16 %v2710
  %v2856 = vunpack.c.l.b16 %v2711
  %v2857 = vunpack.c.h.b16 %v2711
  %v2858 = vunpack.c.l.b16 %v2712
  %v2859 = vunpack.c.h.b16 %v2712
  %v2860 = vunpack.c.l.b16 %v2713
  %v2861 = vunpack.c.h.b16 %v2713
  %v2862 = vunpack.c.l.b16 %v2714
  %v2863 = vunpack.c.h.b16 %v2714
  %v2864 = vunpack.c.l.b16 %v2715
  %v2865 = vunpack.c.h.b16 %v2715
  %v2866 = vunpack.c.l.b16 %v2716
  %v2867 = vunpack.c.h.b16 %v2716
  %v2868 = vunpack.c.l.b16 %v2717
  %v2869 = vunpack.c.h.b16 %v2717
  %v2870 = vunpack.c.l.b16 %v2718
  %v2871 = vunpack.c.h.b16 %v2718
  %v2872 = vunpack.c.l.b16 %v2719
  %v2873 = vunpack.c.h.b16 %v2719
  %v2874 = vunpack.c.l.b16 %v2720
  %v2875 = vunpack.c.h.b16 %v2720
  %v2876 = vunpack.c.l.b16 %v2721
  %v2877 = vunpack.c.h.b16 %v2721
  %v2878 = vunpack.c.l.b16 %v2722
  %v2879 = vunpack.c.h.b16 %v2722
  %v2880 = vunpack.c.l.b16 %v2723
  %v2881 = vunpack.c.h.b16 %v2723
  %v2882 = vunpack.c.l.b16 %v2724
  %v2883 = vunpack.c.h.b16 %v2724
  %v2884 = vunpack.c.l.b16 %v2725
  %v2885 = vunpack.c.h.b16 %v2725
  %v2886 = vunpack.c.l.b16 %v2726
  %v2887 = vunpack.c.h.b16 %v2726
  %v2888 = vunpack.c.l.b16 %v2727
  %v2889 = vunpack.c.h.b16 %v2727
  %v2890 = vunpack.c.l.b16 %v2728
  %v2891 = vunpack.c.h.b16 %v2728
  %v2892 = vpack.c.b16 %v2822, %v2820
  %v2893 = vpack.c.b16 %v2823, %v2821
  %v2894 = vpack.c.b16 %v2826, %v2824
  %v2895 = vpack.c.b16 %v2827, %v2825
  %v2896 = vpack.c.b16 %v2830, %v2828
  %v2897 = vpack.c.b16 %v2831, %v2829
  %v2898 = vpack.c.b16 %v2834, %v2832
  %v2899 = vpack.c.b16 %v2835, %v2833
  %v2900 = vpack.c.b16 %v2838, %v2836
  %v2901 = vpack.c.b16 %v2839, %v2837
  %v2902 = vpack.c.b16 %v2842, %v2840
  %v2903 = vpack.c.b16 %v2843, %v2841
  %v2904 = vpack.c.b16 %v2846, %v2844
  %v2905 = vpack.c.b16 %v2847, %v2845
  %v2906 = vpack.c.b16 %v2850, %v2848
  %v2907 = vpack.c.b16 %v2851, %v2849
  %v2908 = vpack.c.b16 %v2854, %v2852
  %v2909 = vpack.c.b16 %v2855, %v2853
  %v2910 = vpack.c.b16 %v2858, %v2856
  %v2911 = vpack.c.b16 %v2859, %v2857
  %v2912 = vpack.c.b16 %v2862, %v2860
  %v2913 = vpack.c.b16 %v2863, %v2861
  %v2914 = vpack.c.b16 %v2866, %v2864
  %v2915 = vpack.c.b16 %v2867, %v2865
  %v2916 = vpack.c.b16 %v2870, %v2868
  %v2917 = vpack.c.b16 %v2871, %v2869
  %v2918 = vpack.c.b16 %v2874, %v2872
  %v2919 = vpack.c.b16 %v2875, %v2873
  %v2920 = vpack.c.b16 %v2878, %v2876
  %v2921 = vpack.c.b16 %v2879, %v2877
  %v2922 = vpack.c.b16 %v2882, %v2880
  %v2923 = vpack.c.b16 %v2883, %v2881
  %v2924 = vpack.c.b16 %v2886, %v2884
  %v2925 = vpack.c.b16 %v2887, %v2885
  %v2926 = vpack.c.b16 %v2890, %v2888
  %v2927 = vpack.c.b16 %v2891, %v2889
  %v2965 = vsel %vm314, %v2766, 0
  %v2968 = vsel %vm314, %v2769, 0
  %v2971 = vsel %vm314, %v2772, 0
  %v2974 = vsel %vm314, %v2775, 0
  %2976 = vmatprep.subr.bf16.mxu0 %v2907
  %2977 = vmatpush1.bf16.msra.mxu0 %v2906
  %2978 = vmatprep.subr.bf16.mxu0 %v2905
  %2979 = vmatpush1.bf16.msra.mxu0 %v2904
  %2980 = vmatprep.subr.bf16.mxu0 %v2903
  %2981 = vmatpush1.bf16.msra.mxu0 %v2902
  %2982 = vmatprep.subr.bf16.mxu0 %v2901
  %2983 = vmatpush1.bf16.msra.mxu0 %v2900
  %2984 = vmatprep.subr.bf16.mxu0 %v2899
  %2985 = vmatpush1.bf16.msra.mxu0 %v2898
  %2986 = vmatprep.subr.bf16.mxu0 %v2897
  %2987 = vmatpush1.bf16.msra.mxu0 %v2896
  %2988 = vmatprep.subr.bf16.mxu0 %v2895
  %2989 = vmatpush1.bf16.msra.mxu0 %v2894
  %2990 = vmatprep.subr.bf16.mxu0 %v2893
  %2991 = vmatpush1.bf16.msra.mxu0 %v2892
  %2992 = vmatprep.subr.bf16.mxu0 %v2923
  %2993 = vmatpush2.bf16.msra.mxu0 %v2922
  %2994 = vmatprep.subr.bf16.mxu0 %v2921
  %2995 = vmatpush2.bf16.msra.mxu0 %v2920
  %2996 = vmatprep.subr.bf16.mxu0 %v2919
  %2997 = vmatpush2.bf16.msra.mxu0 %v2918
  %2998 = vmatprep.subr.bf16.mxu0 %v2917
  %2999 = vmatpush2.bf16.msra.mxu0 %v2916
  %3000 = vmatprep.subr.bf16.mxu0 %v2915
  %3001 = vmatpush2.bf16.msra.mxu0 %v2914
  %3002 = vmatprep.subr.bf16.mxu0 %v2913
  %3003 = vmatpush2.bf16.msra.mxu0 %v2912
  %3004 = vmatprep.subr.bf16.mxu0 %v2911
  %3005 = vmatpush2.bf16.msra.mxu0 %v2910
  %3006 = vmatprep.subr.bf16.mxu0 %v2909
  %3007 = vmatpush2.bf16.msra.mxu0 %v2908
  %3008 = vmatprep.mubr.bf16.mxu0 %v2765
  %3009 = vmatmul.mubr.bf16.gmra.mxu0 %v2764
  %v3010 = vpop.f32.mrf.mxu0
  %v3011 = vadd.f32 0.0, %v3010
  %v3012 = vpop.f32.mrf.mxu0
  %v3013 = vadd.f32 0.0, %v3012
  %v3014 = vpop.f32.mrf.mxu0
  %v3015 = vadd.f32 0.0, %v3014
  %v3016 = vpop.f32.mrf.mxu0
  %v3017 = vadd.f32 0.0, %v3016
  %3018 = vmatprep.mubr.bf16.mxu0 %v2768
  %3019 = vmatmul.mubr.bf16.gmra.mxu0 %v2767
  %v3020 = vpop.f32.mrf.mxu0
  %v3021 = vadd.f32 0.0, %v3020
  %v3022 = vpop.f32.mrf.mxu0
  %v3023 = vadd.f32 0.0, %v3022
  %v3024 = vpop.f32.mrf.mxu0
  %v3025 = vadd.f32 0.0, %v3024
  %v3026 = vpop.f32.mrf.mxu0
  %v3027 = vadd.f32 0.0, %v3026
  %3028 = vmatprep.mubr.bf16.mxu0 %v2771
  %3029 = vmatmul.mubr.bf16.gmra.mxu0 %v2770
  %v3030 = vpop.f32.mrf.mxu0
  %v3031 = vadd.f32 0.0, %v3030
  %v3032 = vpop.f32.mrf.mxu0
  %v3033 = vadd.f32 0.0, %v3032
  %v3034 = vpop.f32.mrf.mxu0
  %v3035 = vadd.f32 0.0, %v3034
  %v3036 = vpop.f32.mrf.mxu0
  %v3037 = vadd.f32 0.0, %v3036
  %3038 = vmatprep.mubr.bf16.mxu0 %v2774
  %3039 = vmatmul.mubr.bf16.gmra.mxu0 %v2773
  %v3040 = vpop.f32.mrf.mxu0
  %v3041 = vadd.f32 0.0, %v3040
  %v3042 = vpop.f32.mrf.mxu0
  %v3043 = vadd.f32 0.0, %v3042
  %v3044 = vpop.f32.mrf.mxu0
  %v3045 = vpop.f32.mrf.mxu0
  %3046 = vdwg.mxu0
  %3047 = vmatprep.subr.bf16.mxu0 0
  %3048 = vmatpush1.bf16.msra.mxu0 0
  %3049 = vmatprep.subr.bf16.mxu0 0
  %3050 = vmatpush1.bf16.msra.mxu0 0
  %3051 = vmatprep.subr.bf16.mxu0 0
  %3052 = vmatpush1.bf16.msra.mxu0 0
  %3053 = vmatprep.subr.bf16.mxu0 0
  %3054 = vmatpush1.bf16.msra.mxu0 0
  %3055 = vmatprep.subr.bf16.mxu0 0
  %3056 = vmatpush1.bf16.msra.mxu0 0
  %3057 = vmatprep.subr.bf16.mxu0 0
  %3058 = vmatpush1.bf16.msra.mxu0 0
  %3059 = vmatprep.subr.bf16.mxu0 %v2927
  %3060 = vmatpush1.bf16.msra.mxu0 %v2926
  %3061 = vmatprep.subr.bf16.mxu0 %v2925
  %3062 = vmatpush1.bf16.msra.mxu0 %v2924
  %3063 = vmatprep.subr.bf16.mxu0 0
  %3064 = vmatpush2.bf16.msra.mxu0 0
  %3065 = vmatprep.subr.bf16.mxu0 0
  %3066 = vmatpush2.bf16.msra.mxu0 0
  %3067 = vmatprep.subr.bf16.mxu0 0
  %3068 = vmatpush2.bf16.msra.mxu0 0
  %3069 = vmatprep.subr.bf16.mxu0 0
  %3070 = vmatpush2.bf16.msra.mxu0 0
  %3071 = vmatprep.subr.bf16.mxu0 0
  %3072 = vmatpush2.bf16.msra.mxu0 0
  %3073 = vmatprep.subr.bf16.mxu0 0
  %3074 = vmatpush2.bf16.msra.mxu0 0
  %3075 = vmatprep.subr.bf16.mxu0 0
  %3076 = vmatpush2.bf16.msra.mxu0 0
  %3077 = vmatprep.subr.bf16.mxu0 0
  %3078 = vmatpush2.bf16.msra.mxu0 0
  %3079 = vmatprep.mubr.bf16.mxu0 0
  %3080 = vmatmul.mubr.bf16.gmra.mxu0 %v2965
  %v3081 = vpop.f32.mrf.mxu0
  %v3082 = vadd.f32 %v3011, %v3081
  %v3083 = vpop.f32.mrf.mxu0
  %v3084 = vadd.f32 %v3013, %v3083
  %v3085 = vpop.f32.mrf.mxu0
  %v3086 = vadd.f32 %v3015, %v3085
  %v3087 = vpop.f32.mrf.mxu0
  %v3088 = vadd.f32 %v3017, %v3087
  %3089 = vmatprep.mubr.bf16.mxu0 0
  %3090 = vmatmul.mubr.bf16.gmra.mxu0 %v2968
  %v3091 = vpop.f32.mrf.mxu0
  %v3092 = vadd.f32 %v3021, %v3091
  %v3093 = vpop.f32.mrf.mxu0
  %v3094 = vadd.f32 %v3023, %v3093
  %v3095 = vpop.f32.mrf.mxu0
  %v3096 = vadd.f32 %v3025, %v3095
  %v3097 = vpop.f32.mrf.mxu0
  %v3098 = vadd.f32 %v3027, %v3097
  %3099 = vmatprep.mubr.bf16.mxu0 0
  %3100 = vmatmul.mubr.bf16.gmra.mxu0 %v2971
  %v3101 = vpop.f32.mrf.mxu0
  %v3102 = vadd.f32 %v3031, %v3101
  %v3103 = vpop.f32.mrf.mxu0
  %v3104 = vadd.f32 %v3033, %v3103
  %v3105 = vpop.f32.mrf.mxu0
  %v3106 = vadd.f32 %v3035, %v3105
  %v3107 = vpop.f32.mrf.mxu0
  %v3108 = vadd.f32 %v3037, %v3107
  %3109 = vmatprep.mubr.bf16.mxu0 0
  %3110 = vmatmul.mubr.bf16.gmra.mxu0 %v2974
  %v3111 = vpop.f32.mrf.mxu0
  %v3112 = vadd.f32 %v3041, %v3111
  %v3113 = vpop.f32.mrf.mxu0
  %v3114 = vadd.f32 %v3043, %v3113
  %v3115 = vpop.f32.mrf.mxu0
  %v3116 = vpop.f32.mrf.mxu0
  %3117 = vdwg.mxu0
  %v3118 = vadd.f32 %v2642, %v3082
  %v3119 = vadd.f32 %v2644, %v3084
  %v3120 = vadd.f32 %v2646, %v3086
  %v3121 = vadd.f32 %v2648, %v3088
  %v3122 = vadd.f32 %v2652, %v3092
  %v3123 = vadd.f32 %v2654, %v3094
  %v3124 = vadd.f32 %v2656, %v3096
  %v3125 = vadd.f32 %v2658, %v3098
  %v3126 = vadd.f32 %v2662, %v3102
  %v3127 = vadd.f32 %v2664, %v3104
  %v3128 = vadd.f32 %v2666, %v3106
  %v3129 = vadd.f32 %v2668, %v3108
  %v3130 = vadd.f32 %v2672, %v3112
  %v3131 = vadd.f32 %v2674, %v3114
  %v3132 = vld [vmem:[%s32 + $0xc] sm:$0xff]
  %v3133 = vld [vmem:[%s32 + $0x14] sm:$0xf]
  %v3134 = vld [vmem:[%s32 + $0x18] sm:$0xff]
  %v3135 = vld [vmem:[%s32 + $0x20] sm:$0xf]
  %v3136 = vld [vmem:[%s32 + $0x24] sm:$0xff]
  %v3137 = vld [vmem:[%s32 + $0x2c] sm:$0xf]
  %v3138 = vld [vmem:[%s32 + $0x30] sm:$0xff]
  %v3139 = vld [vmem:[%s32 + $0x38] sm:$0xf]
  %v3140 = vld [vmem:[%s32 + $0x3c] sm:$0xff]
  %v3141 = vld [vmem:[%s32 + $0x44] sm:$0xf]
  %v3142 = vld [vmem:[%s32 + $0x48] sm:$0xff]
  %v3143 = vld [vmem:[%s32 + $0x50] sm:$0xf]
  %v3144 = vld [vmem:[%s32 + $0x54] sm:$0xff]
  %v3145 = vld [vmem:[%s32 + $0x5c] sm:$0xf]
  %s3146 = scalar_lea.vmem %s3, 864
  %v3147 = vld [vmem:[%s3146] sm:$0xff]
  %v3148 = vld [vmem:[%s3146 + $0x8] sm:$0xff]
  %v3149 = vld [vmem:[%s3146 + $0x10] sm:$0xff]
  %v3150 = vld [vmem:[%s3146 + $0x18] sm:$0xff]
  %v3151 = vld [vmem:[%s3146 + $0x20] sm:$0xff]
  %v3152 = vld [vmem:[%s3146 + $0x28] sm:$0xff]
  %v3153 = vld [vmem:[%s3146 + $0x30] sm:$0xff]
  %v3154 = vld [vmem:[%s3146 + $0x38] sm:$0xff]
  %v3155 = vld [vmem:[%s3146 + $0x40] sm:$0xff]
  %v3156 = vld [vmem:[%s3146 + $0x48] sm:$0xff]
  %v3157 = vld [vmem:[%s3146 + $0x50] sm:$0xff]
  %v3158 = vld [vmem:[%s3146 + $0x58] sm:$0xff]
  %v3159 = vld [vmem:[%s3146 + $0x60] sm:$0xff]
  %v3160 = vld [vmem:[%s3146 + $0x68] sm:$0xff]
  %v3161 = vld [vmem:[%s3146 + $0x70] sm:$0xff]
  %v3162 = vld [vmem:[%s3146 + $0x78] sm:$0xff]
  %v3163 = vld [vmem:[%s3146 + $0x80] sm:$0xff]
  %v3164 = vld [vmem:[%s3146 + $0x88] sm:$0xff]
  %v3165 = vld [vmem:[%s3146 + $0x90] sm:$0xff]
  %v3166 = vld [vmem:[%s3146 + $0x98] sm:$0xff]
  %v3167 = vld [vmem:[%s3146 + $0xa0] sm:$0xff]
  %v3168 = vld [vmem:[%s3146 + $0xa8] sm:$0xff]
  %v3169 = vld [vmem:[%s3146 + $0xb0] sm:$0xff]
  %v3170 = vld [vmem:[%s3146 + $0xb8] sm:$0xff]
  %v3171 = vld [vmem:[%s3146 + $0xc0] sm:$0xff]
  %v3172 = vld [vmem:[%s3146 + $0xc8] sm:$0xff]
  %v3173 = vld [vmem:[%s3146 + $0xd0] sm:$0xff]
  %v3174 = vld [vmem:[%s3146 + $0xd8] sm:$0xff]
  %v3175 = vld [vmem:[%s3146 + $0xe0] sm:$0xff]
  %v3176 = vld [vmem:[%s3146 + $0xe8] sm:$0xff]
  %v3177 = vld [vmem:[%s3146 + $0xf0] sm:$0xff]
  %v3178 = vld [vmem:[%s3146 + $0xf8] sm:$0xff]
  %v3179 = vld [vmem:[%s3146 + $0x100] sm:$0xff]
  %v3180 = vld [vmem:[%s3146 + $0x108] sm:$0xff]
  %v3181 = vld [vmem:[%s3146 + $0x110] sm:$0xff]
  %v3182 = vld [vmem:[%s3146 + $0x118] sm:$0xff]
  %v3197 = vunpack.c.l.b16 %v3132
  %v3198 = vunpack.c.h.b16 %v3132
  %v3199 = vunpack.c.l.b16 %v3133
  %v3200 = vunpack.c.l.b16 %v3134
  %v3201 = vunpack.c.h.b16 %v3134
  %v3202 = vunpack.c.l.b16 %v3135
  %v3203 = vunpack.c.l.b16 %v3136
  %v3204 = vunpack.c.h.b16 %v3136
  %v3205 = vunpack.c.l.b16 %v3137
  %v3206 = vunpack.c.l.b16 %v3138
  %v3207 = vunpack.c.h.b16 %v3138
  %v3208 = vunpack.c.l.b16 %v3139
  %v3209 = vunpack.c.l.b16 %v3140
  %v3210 = vunpack.c.h.b16 %v3140
  %v3211 = vunpack.c.l.b16 %v3141
  %v3212 = vunpack.c.l.b16 %v3142
  %v3213 = vunpack.c.h.b16 %v3142
  %v3214 = vunpack.c.l.b16 %v3143
  %v3215 = vunpack.c.l.b16 %v3144
  %v3216 = vunpack.c.h.b16 %v3144
  %v3217 = vunpack.c.l.b16 %v3145
  %v3218 = vpack.c.b16 %v3200, %v3197
  %v3219 = vpack.c.b16 %v3201, %v3198
  %v3220 = vpack.c.b16 %v3202, %v3199
  %v3221 = vpack.c.b16 %v3206, %v3203
  %v3222 = vpack.c.b16 %v3207, %v3204
  %v3223 = vpack.c.b16 %v3208, %v3205
  %v3224 = vpack.c.b16 %v3212, %v3209
  %v3225 = vpack.c.b16 %v3213, %v3210
  %v3226 = vpack.c.b16 %v3214, %v3211
  %v3227 = vpack.c.b16 %v3215, %v3215
  %v3228 = vpack.c.b16 %v3216, %v3216
  %v3229 = vpack.c.b16 %v3217, %v3217
  %v3274 = vunpack.c.l.b16 %v3147
  %v3275 = vunpack.c.h.b16 %v3147
  %v3276 = vunpack.c.l.b16 %v3148
  %v3277 = vunpack.c.h.b16 %v3148
  %v3278 = vunpack.c.l.b16 %v3149
  %v3279 = vunpack.c.h.b16 %v3149
  %v3280 = vunpack.c.l.b16 %v3150
  %v3281 = vunpack.c.h.b16 %v3150
  %v3282 = vunpack.c.l.b16 %v3151
  %v3283 = vunpack.c.h.b16 %v3151
  %v3284 = vunpack.c.l.b16 %v3152
  %v3285 = vunpack.c.h.b16 %v3152
  %v3286 = vunpack.c.l.b16 %v3153
  %v3287 = vunpack.c.h.b16 %v3153
  %v3288 = vunpack.c.l.b16 %v3154
  %v3289 = vunpack.c.h.b16 %v3154
  %v3290 = vunpack.c.l.b16 %v3155
  %v3291 = vunpack.c.h.b16 %v3155
  %v3292 = vunpack.c.l.b16 %v3156
  %v3293 = vunpack.c.h.b16 %v3156
  %v3294 = vunpack.c.l.b16 %v3157
  %v3295 = vunpack.c.h.b16 %v3157
  %v3296 = vunpack.c.l.b16 %v3158
  %v3297 = vunpack.c.h.b16 %v3158
  %v3298 = vunpack.c.l.b16 %v3159
  %v3299 = vunpack.c.h.b16 %v3159
  %v3300 = vunpack.c.l.b16 %v3160
  %v3301 = vunpack.c.h.b16 %v3160
  %v3302 = vunpack.c.l.b16 %v3161
  %v3303 = vunpack.c.h.b16 %v3161
  %v3304 = vunpack.c.l.b16 %v3162
  %v3305 = vunpack.c.h.b16 %v3162
  %v3306 = vunpack.c.l.b16 %v3163
  %v3307 = vunpack.c.h.b16 %v3163
  %v3308 = vunpack.c.l.b16 %v3164
  %v3309 = vunpack.c.h.b16 %v3164
  %v3310 = vunpack.c.l.b16 %v3165
  %v3311 = vunpack.c.h.b16 %v3165
  %v3312 = vunpack.c.l.b16 %v3166
  %v3313 = vunpack.c.h.b16 %v3166
  %v3314 = vunpack.c.l.b16 %v3167
  %v3315 = vunpack.c.h.b16 %v3167
  %v3316 = vunpack.c.l.b16 %v3168
  %v3317 = vunpack.c.h.b16 %v3168
  %v3318 = vunpack.c.l.b16 %v3169
  %v3319 = vunpack.c.h.b16 %v3169
  %v3320 = vunpack.c.l.b16 %v3170
  %v3321 = vunpack.c.h.b16 %v3170
  %v3322 = vunpack.c.l.b16 %v3171
  %v3323 = vunpack.c.h.b16 %v3171
  %v3324 = vunpack.c.l.b16 %v3172
  %v3325 = vunpack.c.h.b16 %v3172
  %v3326 = vunpack.c.l.b16 %v3173
  %v3327 = vunpack.c.h.b16 %v3173
  %v3328 = vunpack.c.l.b16 %v3174
  %v3329 = vunpack.c.h.b16 %v3174
  %v3330 = vunpack.c.l.b16 %v3175
  %v3331 = vunpack.c.h.b16 %v3175
  %v3332 = vunpack.c.l.b16 %v3176
  %v3333 = vunpack.c.h.b16 %v3176
  %v3334 = vunpack.c.l.b16 %v3177
  %v3335 = vunpack.c.h.b16 %v3177
  %v3336 = vunpack.c.l.b16 %v3178
  %v3337 = vunpack.c.h.b16 %v3178
  %v3338 = vunpack.c.l.b16 %v3179
  %v3339 = vunpack.c.h.b16 %v3179
  %v3340 = vunpack.c.l.b16 %v3180
  %v3341 = vunpack.c.h.b16 %v3180
  %v3342 = vunpack.c.l.b16 %v3181
  %v3343 = vunpack.c.h.b16 %v3181
  %v3344 = vunpack.c.l.b16 %v3182
  %v3345 = vunpack.c.h.b16 %v3182
  %v3346 = vpack.c.b16 %v3276, %v3274
  %v3347 = vpack.c.b16 %v3277, %v3275
  %v3348 = vpack.c.b16 %v3280, %v3278
  %v3349 = vpack.c.b16 %v3281, %v3279
  %v3350 = vpack.c.b16 %v3284, %v3282
  %v3351 = vpack.c.b16 %v3285, %v3283
  %v3352 = vpack.c.b16 %v3288, %v3286
  %v3353 = vpack.c.b16 %v3289, %v3287
  %v3354 = vpack.c.b16 %v3292, %v3290
  %v3355 = vpack.c.b16 %v3293, %v3291
  %v3356 = vpack.c.b16 %v3296, %v3294
  %v3357 = vpack.c.b16 %v3297, %v3295
  %v3358 = vpack.c.b16 %v3300, %v3298
  %v3359 = vpack.c.b16 %v3301, %v3299
  %v3360 = vpack.c.b16 %v3304, %v3302
  %v3361 = vpack.c.b16 %v3305, %v3303
  %v3362 = vpack.c.b16 %v3308, %v3306
  %v3363 = vpack.c.b16 %v3309, %v3307
  %v3364 = vpack.c.b16 %v3312, %v3310
  %v3365 = vpack.c.b16 %v3313, %v3311
  %v3366 = vpack.c.b16 %v3316, %v3314
  %v3367 = vpack.c.b16 %v3317, %v3315
  %v3368 = vpack.c.b16 %v3320, %v3318
  %v3369 = vpack.c.b16 %v3321, %v3319
  %v3370 = vpack.c.b16 %v3324, %v3322
  %v3371 = vpack.c.b16 %v3325, %v3323
  %v3372 = vpack.c.b16 %v3328, %v3326
  %v3373 = vpack.c.b16 %v3329, %v3327
  %v3374 = vpack.c.b16 %v3332, %v3330
  %v3375 = vpack.c.b16 %v3333, %v3331
  %v3376 = vpack.c.b16 %v3336, %v3334
  %v3377 = vpack.c.b16 %v3337, %v3335
  %v3378 = vpack.c.b16 %v3340, %v3338
  %v3379 = vpack.c.b16 %v3341, %v3339
  %v3380 = vpack.c.b16 %v3344, %v3342
  %v3381 = vpack.c.b16 %v3345, %v3343
  %v3419 = vsel %vm314, %v3220, 0
  %v3422 = vsel %vm314, %v3223, 0
  %v3425 = vsel %vm314, %v3226, 0
  %v3428 = vsel %vm314, %v3229, 0
  %3430 = vmatprep.subr.bf16.mxu0 %v3361
  %3431 = vmatpush1.bf16.msra.mxu0 %v3360
  %3432 = vmatprep.subr.bf16.mxu0 %v3359
  %3433 = vmatpush1.bf16.msra.mxu0 %v3358
  %3434 = vmatprep.subr.bf16.mxu0 %v3357
  %3435 = vmatpush1.bf16.msra.mxu0 %v3356
  %3436 = vmatprep.subr.bf16.mxu0 %v3355
  %3437 = vmatpush1.bf16.msra.mxu0 %v3354
  %3438 = vmatprep.subr.bf16.mxu0 %v3353
  %3439 = vmatpush1.bf16.msra.mxu0 %v3352
  %3440 = vmatprep.subr.bf16.mxu0 %v3351
  %3441 = vmatpush1.bf16.msra.mxu0 %v3350
  %3442 = vmatprep.subr.bf16.mxu0 %v3349
  %3443 = vmatpush1.bf16.msra.mxu0 %v3348
  %3444 = vmatprep.subr.bf16.mxu0 %v3347
  %3445 = vmatpush1.bf16.msra.mxu0 %v3346
  %3446 = vmatprep.subr.bf16.mxu0 %v3377
  %3447 = vmatpush2.bf16.msra.mxu0 %v3376
  %3448 = vmatprep.subr.bf16.mxu0 %v3375
  %3449 = vmatpush2.bf16.msra.mxu0 %v3374
  %3450 = vmatprep.subr.bf16.mxu0 %v3373
  %3451 = vmatpush2.bf16.msra.mxu0 %v3372
  %3452 = vmatprep.subr.bf16.mxu0 %v3371
  %3453 = vmatpush2.bf16.msra.mxu0 %v3370
  %3454 = vmatprep.subr.bf16.mxu0 %v3369
  %3455 = vmatpush2.bf16.msra.mxu0 %v3368
  %3456 = vmatprep.subr.bf16.mxu0 %v3367
  %3457 = vmatpush2.bf16.msra.mxu0 %v3366
  %3458 = vmatprep.subr.bf16.mxu0 %v3365
  %3459 = vmatpush2.bf16.msra.mxu0 %v3364
  %3460 = vmatprep.subr.bf16.mxu0 %v3363
  %3461 = vmatpush2.bf16.msra.mxu0 %v3362
  %3462 = vmatprep.mubr.bf16.mxu0 %v3219
  %3463 = vmatmul.mubr.bf16.gmra.mxu0 %v3218
  %v3464 = vpop.f32.mrf.mxu0
  %v3465 = vadd.f32 0.0, %v3464
  %v3466 = vpop.f32.mrf.mxu0
  %v3467 = vadd.f32 0.0, %v3466
  %v3468 = vpop.f32.mrf.mxu0
  %v3469 = vadd.f32 0.0, %v3468
  %v3470 = vpop.f32.mrf.mxu0
  %v3471 = vadd.f32 0.0, %v3470
  %3472 = vmatprep.mubr.bf16.mxu0 %v3222
  %3473 = vmatmul.mubr.bf16.gmra.mxu0 %v3221
  %v3474 = vpop.f32.mrf.mxu0
  %v3475 = vadd.f32 0.0, %v3474
  %v3476 = vpop.f32.mrf.mxu0
  %v3477 = vadd.f32 0.0, %v3476
  %v3478 = vpop.f32.mrf.mxu0
  %v3479 = vadd.f32 0.0, %v3478
  %v3480 = vpop.f32.mrf.mxu0
  %v3481 = vadd.f32 0.0, %v3480
  %3482 = vmatprep.mubr.bf16.mxu0 %v3225
  %3483 = vmatmul.mubr.bf16.gmra.mxu0 %v3224
  %v3484 = vpop.f32.mrf.mxu0
  %v3485 = vadd.f32 0.0, %v3484
  %v3486 = vpop.f32.mrf.mxu0
  %v3487 = vadd.f32 0.0, %v3486
  %v3488 = vpop.f32.mrf.mxu0
  %v3489 = vadd.f32 0.0, %v3488
  %v3490 = vpop.f32.mrf.mxu0
  %v3491 = vadd.f32 0.0, %v3490
  %3492 = vmatprep.mubr.bf16.mxu0 %v3228
  %3493 = vmatmul.mubr.bf16.gmra.mxu0 %v3227
  %v3494 = vpop.f32.mrf.mxu0
  %v3495 = vadd.f32 0.0, %v3494
  %v3496 = vpop.f32.mrf.mxu0
  %v3497 = vadd.f32 0.0, %v3496
  %v3498 = vpop.f32.mrf.mxu0
  %v3499 = vpop.f32.mrf.mxu0
  %3500 = vdwg.mxu0
  %3501 = vmatprep.subr.bf16.mxu0 0
  %3502 = vmatpush1.bf16.msra.mxu0 0
  %3503 = vmatprep.subr.bf16.mxu0 0
  %3504 = vmatpush1.bf16.msra.mxu0 0
  %3505 = vmatprep.subr.bf16.mxu0 0
  %3506 = vmatpush1.bf16.msra.mxu0 0
  %3507 = vmatprep.subr.bf16.mxu0 0
  %3508 = vmatpush1.bf16.msra.mxu0 0
  %3509 = vmatprep.subr.bf16.mxu0 0
  %3510 = vmatpush1.bf16.msra.mxu0 0
  %3511 = vmatprep.subr.bf16.mxu0 0
  %3512 = vmatpush1.bf16.msra.mxu0 0
  %3513 = vmatprep.subr.bf16.mxu0 %v3381
  %3514 = vmatpush1.bf16.msra.mxu0 %v3380
  %3515 = vmatprep.subr.bf16.mxu0 %v3379
  %3516 = vmatpush1.bf16.msra.mxu0 %v3378
  %3517 = vmatprep.subr.bf16.mxu0 0
  %3518 = vmatpush2.bf16.msra.mxu0 0
  %3519 = vmatprep.subr.bf16.mxu0 0
  %3520 = vmatpush2.bf16.msra.mxu0 0
  %3521 = vmatprep.subr.bf16.mxu0 0
  %3522 = vmatpush2.bf16.msra.mxu0 0
  %3523 = vmatprep.subr.bf16.mxu0 0
  %3524 = vmatpush2.bf16.msra.mxu0 0
  %3525 = vmatprep.subr.bf16.mxu0 0
  %3526 = vmatpush2.bf16.msra.mxu0 0
  %3527 = vmatprep.subr.bf16.mxu0 0
  %3528 = vmatpush2.bf16.msra.mxu0 0
  %3529 = vmatprep.subr.bf16.mxu0 0
  %3530 = vmatpush2.bf16.msra.mxu0 0
  %3531 = vmatprep.subr.bf16.mxu0 0
  %3532 = vmatpush2.bf16.msra.mxu0 0
  %3533 = vmatprep.mubr.bf16.mxu0 0
  %3534 = vmatmul.mubr.bf16.gmra.mxu0 %v3419
  %v3535 = vpop.f32.mrf.mxu0
  %v3536 = vadd.f32 %v3465, %v3535
  %v3537 = vpop.f32.mrf.mxu0
  %v3538 = vadd.f32 %v3467, %v3537
  %v3539 = vpop.f32.mrf.mxu0
  %v3540 = vadd.f32 %v3469, %v3539
  %v3541 = vpop.f32.mrf.mxu0
  %v3542 = vadd.f32 %v3471, %v3541
  %3543 = vmatprep.mubr.bf16.mxu0 0
  %3544 = vmatmul.mubr.bf16.gmra.mxu0 %v3422
  %v3545 = vpop.f32.mrf.mxu0
  %v3546 = vadd.f32 %v3475, %v3545
  %v3547 = vpop.f32.mrf.mxu0
  %v3548 = vadd.f32 %v3477, %v3547
  %v3549 = vpop.f32.mrf.mxu0
  %v3550 = vadd.f32 %v3479, %v3549
  %v3551 = vpop.f32.mrf.mxu0
  %v3552 = vadd.f32 %v3481, %v3551
  %3553 = vmatprep.mubr.bf16.mxu0 0
  %3554 = vmatmul.mubr.bf16.gmra.mxu0 %v3425
  %v3555 = vpop.f32.mrf.mxu0
  %v3556 = vadd.f32 %v3485, %v3555
  %v3557 = vpop.f32.mrf.mxu0
  %v3558 = vadd.f32 %v3487, %v3557
  %v3559 = vpop.f32.mrf.mxu0
  %v3560 = vadd.f32 %v3489, %v3559
  %v3561 = vpop.f32.mrf.mxu0
  %v3562 = vadd.f32 %v3491, %v3561
  %3563 = vmatprep.mubr.bf16.mxu0 0
  %3564 = vmatmul.mubr.bf16.gmra.mxu0 %v3428
  %v3565 = vpop.f32.mrf.mxu0
  %v3566 = vadd.f32 %v3495, %v3565
  %v3567 = vpop.f32.mrf.mxu0
  %v3568 = vadd.f32 %v3497, %v3567
  %v3569 = vpop.f32.mrf.mxu0
  %v3570 = vpop.f32.mrf.mxu0
  %3571 = vdwg.mxu0
  %v3572 = vadd.f32 %v3118, %v3536
  %v3573 = vadd.f32 %v3119, %v3538
  %v3574 = vadd.f32 %v3120, %v3540
  %v3575 = vadd.f32 %v3121, %v3542
  %v3576 = vadd.f32 %v3122, %v3546
  %v3577 = vadd.f32 %v3123, %v3548
  %v3578 = vadd.f32 %v3124, %v3550
  %v3579 = vadd.f32 %v3125, %v3552
  %v3580 = vadd.f32 %v3126, %v3556
  %v3581 = vadd.f32 %v3127, %v3558
  %v3582 = vadd.f32 %v3128, %v3560
  %v3583 = vadd.f32 %v3129, %v3562
  %v3584 = vadd.f32 %v3130, %v3566
  %v3585 = vadd.f32 %v3131, %v3568
  %v3586 = vld [vmem:[#allocation2 + $0x18] sm:$0xff]
  %v3587 = vld [vmem:[#allocation2 + $0x20] sm:$0xf]
  %v3588 = vld [vmem:[#allocation2 + $0x24] sm:$0xff]
  %v3589 = vld [vmem:[#allocation2 + $0x2c] sm:$0xf]
  %v3590 = vld [vmem:[#allocation2 + $0x30] sm:$0xff]
  %v3591 = vld [vmem:[#allocation2 + $0x38] sm:$0xf]
  %v3592 = vld [vmem:[#allocation2 + $0x3c] sm:$0xff]
  %v3593 = vld [vmem:[#allocation2 + $0x44] sm:$0xf]
  %v3594 = vld [vmem:[#allocation2 + $0x48] sm:$0xff]
  %v3595 = vld [vmem:[#allocation2 + $0x50] sm:$0xf]
  %v3596 = vld [vmem:[#allocation2 + $0x54] sm:$0xff]
  %v3597 = vld [vmem:[#allocation2 + $0x5c] sm:$0xf]
  %v3598 = vld [vmem:[#allocation2 + $0x60] sm:$0xff]
  %v3599 = vld [vmem:[#allocation2 + $0x68] sm:$0xf]
  %s3600 = scalar_lea.vmem %s3, 1152
  %v3601 = vld [vmem:[%s3600] sm:$0xff]
  %v3602 = vld [vmem:[%s3600 + $0x8] sm:$0xff]
  %v3603 = vld [vmem:[%s3600 + $0x10] sm:$0xff]
  %v3604 = vld [vmem:[%s3600 + $0x18] sm:$0xff]
  %v3605 = vld [vmem:[%s3600 + $0x20] sm:$0xff]
  %v3606 = vld [vmem:[%s3600 + $0x28] sm:$0xff]
  %v3607 = vld [vmem:[%s3600 + $0x30] sm:$0xff]
  %v3608 = vld [vmem:[%s3600 + $0x38] sm:$0xff]
  %v3609 = vld [vmem:[%s3600 + $0x40] sm:$0xff]
  %v3610 = vld [vmem:[%s3600 + $0x48] sm:$0xff]
  %v3611 = vld [vmem:[%s3600 + $0x50] sm:$0xff]
  %v3612 = vld [vmem:[%s3600 + $0x58] sm:$0xff]
  %v3613 = vld [vmem:[%s3600 + $0x60] sm:$0xff]
  %v3614 = vld [vmem:[%s3600 + $0x68] sm:$0xff]
  %v3615 = vld [vmem:[%s3600 + $0x70] sm:$0xff]
  %v3616 = vld [vmem:[%s3600 + $0x78] sm:$0xff]
  %v3617 = vld [vmem:[%s3600 + $0x80] sm:$0xff]
  %v3618 = vld [vmem:[%s3600 + $0x88] sm:$0xff]
  %v3619 = vld [vmem:[%s3600 + $0x90] sm:$0xff]
  %v3620 = vld [vmem:[%s3600 + $0x98] sm:$0xff]
  %v3621 = vld [vmem:[%s3600 + $0xa0] sm:$0xff]
  %v3622 = vld [vmem:[%s3600 + $0xa8] sm:$0xff]
  %v3623 = vld [vmem:[%s3600 + $0xb0] sm:$0xff]
  %v3624 = vld [vmem:[%s3600 + $0xb8] sm:$0xff]
  %v3625 = vld [vmem:[%s3600 + $0xc0] sm:$0xff]
  %v3626 = vld [vmem:[%s3600 + $0xc8] sm:$0xff]
  %v3627 = vld [vmem:[%s3600 + $0xd0] sm:$0xff]
  %v3628 = vld [vmem:[%s3600 + $0xd8] sm:$0xff]
  %v3629 = vld [vmem:[%s3600 + $0xe0] sm:$0xff]
  %v3630 = vld [vmem:[%s3600 + $0xe8] sm:$0xff]
  %v3631 = vld [vmem:[%s3600 + $0xf0] sm:$0xff]
  %v3632 = vld [vmem:[%s3600 + $0xf8] sm:$0xff]
  %v3633 = vld [vmem:[%s3600 + $0x100] sm:$0xff]
  %v3634 = vld [vmem:[%s3600 + $0x108] sm:$0xff]
  %v3635 = vld [vmem:[%s3600 + $0x110] sm:$0xff]
  %v3636 = vld [vmem:[%s3600 + $0x118] sm:$0xff]
  %v3651 = vunpack.c.l.b16 %v3586
  %v3652 = vunpack.c.h.b16 %v3586
  %v3653 = vunpack.c.l.b16 %v3587
  %v3654 = vunpack.c.l.b16 %v3588
  %v3655 = vunpack.c.h.b16 %v3588
  %v3656 = vunpack.c.l.b16 %v3589
  %v3657 = vunpack.c.l.b16 %v3590
  %v3658 = vunpack.c.h.b16 %v3590
  %v3659 = vunpack.c.l.b16 %v3591
  %v3660 = vunpack.c.l.b16 %v3592
  %v3661 = vunpack.c.h.b16 %v3592
  %v3662 = vunpack.c.l.b16 %v3593
  %v3663 = vunpack.c.l.b16 %v3594
  %v3664 = vunpack.c.h.b16 %v3594
  %v3665 = vunpack.c.l.b16 %v3595
  %v3666 = vunpack.c.l.b16 %v3596
  %v3667 = vunpack.c.h.b16 %v3596
  %v3668 = vunpack.c.l.b16 %v3597
  %v3669 = vunpack.c.l.b16 %v3598
  %v3670 = vunpack.c.h.b16 %v3598
  %v3671 = vunpack.c.l.b16 %v3599
  %v3672 = vpack.c.b16 %v3654, %v3651
  %v3673 = vpack.c.b16 %v3655, %v3652
  %v3674 = vpack.c.b16 %v3656, %v3653
  %v3675 = vpack.c.b16 %v3660, %v3657
  %v3676 = vpack.c.b16 %v3661, %v3658
  %v3677 = vpack.c.b16 %v3662, %v3659
  %v3678 = vpack.c.b16 %v3666, %v3663
  %v3679 = vpack.c.b16 %v3667, %v3664
  %v3680 = vpack.c.b16 %v3668, %v3665
  %v3681 = vpack.c.b16 %v3669, %v3669
  %v3682 = vpack.c.b16 %v3670, %v3670
  %v3683 = vpack.c.b16 %v3671, %v3671
  %v3728 = vunpack.c.l.b16 %v3601
  %v3729 = vunpack.c.h.b16 %v3601
  %v3730 = vunpack.c.l.b16 %v3602
  %v3731 = vunpack.c.h.b16 %v3602
  %v3732 = vunpack.c.l.b16 %v3603
  %v3733 = vunpack.c.h.b16 %v3603
  %v3734 = vunpack.c.l.b16 %v3604
  %v3735 = vunpack.c.h.b16 %v3604
  %v3736 = vunpack.c.l.b16 %v3605
  %v3737 = vunpack.c.h.b16 %v3605
  %v3738 = vunpack.c.l.b16 %v3606
  %v3739 = vunpack.c.h.b16 %v3606
  %v3740 = vunpack.c.l.b16 %v3607
  %v3741 = vunpack.c.h.b16 %v3607
  %v3742 = vunpack.c.l.b16 %v3608
  %v3743 = vunpack.c.h.b16 %v3608
  %v3744 = vunpack.c.l.b16 %v3609
  %v3745 = vunpack.c.h.b16 %v3609
  %v3746 = vunpack.c.l.b16 %v3610
  %v3747 = vunpack.c.h.b16 %v3610
  %v3748 = vunpack.c.l.b16 %v3611
  %v3749 = vunpack.c.h.b16 %v3611
  %v3750 = vunpack.c.l.b16 %v3612
  %v3751 = vunpack.c.h.b16 %v3612
  %v3752 = vunpack.c.l.b16 %v3613
  %v3753 = vunpack.c.h.b16 %v3613
  %v3754 = vunpack.c.l.b16 %v3614
  %v3755 = vunpack.c.h.b16 %v3614
  %v3756 = vunpack.c.l.b16 %v3615
  %v3757 = vunpack.c.h.b16 %v3615
  %v3758 = vunpack.c.l.b16 %v3616
  %v3759 = vunpack.c.h.b16 %v3616
  %v3760 = vunpack.c.l.b16 %v3617
  %v3761 = vunpack.c.h.b16 %v3617
  %v3762 = vunpack.c.l.b16 %v3618
  %v3763 = vunpack.c.h.b16 %v3618
  %v3764 = vunpack.c.l.b16 %v3619
  %v3765 = vunpack.c.h.b16 %v3619
  %v3766 = vunpack.c.l.b16 %v3620
  %v3767 = vunpack.c.h.b16 %v3620
  %v3768 = vunpack.c.l.b16 %v3621
  %v3769 = vunpack.c.h.b16 %v3621
  %v3770 = vunpack.c.l.b16 %v3622
  %v3771 = vunpack.c.h.b16 %v3622
  %v3772 = vunpack.c.l.b16 %v3623
  %v3773 = vunpack.c.h.b16 %v3623
  %v3774 = vunpack.c.l.b16 %v3624
  %v3775 = vunpack.c.h.b16 %v3624
  %v3776 = vunpack.c.l.b16 %v3625
  %v3777 = vunpack.c.h.b16 %v3625
  %v3778 = vunpack.c.l.b16 %v3626
  %v3779 = vunpack.c.h.b16 %v3626
  %v3780 = vunpack.c.l.b16 %v3627
  %v3781 = vunpack.c.h.b16 %v3627
  %v3782 = vunpack.c.l.b16 %v3628
  %v3783 = vunpack.c.h.b16 %v3628
  %v3784 = vunpack.c.l.b16 %v3629
  %v3785 = vunpack.c.h.b16 %v3629
  %v3786 = vunpack.c.l.b16 %v3630
  %v3787 = vunpack.c.h.b16 %v3630
  %v3788 = vunpack.c.l.b16 %v3631
  %v3789 = vunpack.c.h.b16 %v3631
  %v3790 = vunpack.c.l.b16 %v3632
  %v3791 = vunpack.c.h.b16 %v3632
  %v3792 = vunpack.c.l.b16 %v3633
  %v3793 = vunpack.c.h.b16 %v3633
  %v3794 = vunpack.c.l.b16 %v3634
  %v3795 = vunpack.c.h.b16 %v3634
  %v3796 = vunpack.c.l.b16 %v3635
  %v3797 = vunpack.c.h.b16 %v3635
  %v3798 = vunpack.c.l.b16 %v3636
  %v3799 = vunpack.c.h.b16 %v3636
  %v3800 = vpack.c.b16 %v3730, %v3728
  %v3801 = vpack.c.b16 %v3731, %v3729
  %v3802 = vpack.c.b16 %v3734, %v3732
  %v3803 = vpack.c.b16 %v3735, %v3733
  %v3804 = vpack.c.b16 %v3738, %v3736
  %v3805 = vpack.c.b16 %v3739, %v3737
  %v3806 = vpack.c.b16 %v3742, %v3740
  %v3807 = vpack.c.b16 %v3743, %v3741
  %v3808 = vpack.c.b16 %v3746, %v3744
  %v3809 = vpack.c.b16 %v3747, %v3745
  %v3810 = vpack.c.b16 %v3750, %v3748
  %v3811 = vpack.c.b16 %v3751, %v3749
  %v3812 = vpack.c.b16 %v3754, %v3752
  %v3813 = vpack.c.b16 %v3755, %v3753
  %v3814 = vpack.c.b16 %v3758, %v3756
  %v3815 = vpack.c.b16 %v3759, %v3757
  %v3816 = vpack.c.b16 %v3762, %v3760
  %v3817 = vpack.c.b16 %v3763, %v3761
  %v3818 = vpack.c.b16 %v3766, %v3764
  %v3819 = vpack.c.b16 %v3767, %v3765
  %v3820 = vpack.c.b16 %v3770, %v3768
  %v3821 = vpack.c.b16 %v3771, %v3769
  %v3822 = vpack.c.b16 %v3774, %v3772
  %v3823 = vpack.c.b16 %v3775, %v3773
  %v3824 = vpack.c.b16 %v3778, %v3776
  %v3825 = vpack.c.b16 %v3779, %v3777
  %v3826 = vpack.c.b16 %v3782, %v3780
  %v3827 = vpack.c.b16 %v3783, %v3781
  %v3828 = vpack.c.b16 %v3786, %v3784
  %v3829 = vpack.c.b16 %v3787, %v3785
  %v3830 = vpack.c.b16 %v3790, %v3788
  %v3831 = vpack.c.b16 %v3791, %v3789
  %v3832 = vpack.c.b16 %v3794, %v3792
  %v3833 = vpack.c.b16 %v3795, %v3793
  %v3834 = vpack.c.b16 %v3798, %v3796
  %v3835 = vpack.c.b16 %v3799, %v3797
  %v3873 = vsel %vm314, %v3674, 0
  %v3876 = vsel %vm314, %v3677, 0
  %v3879 = vsel %vm314, %v3680, 0
  %v3882 = vsel %vm314, %v3683, 0
  %3884 = vmatprep.subr.bf16.mxu0 %v3815
  %3885 = vmatpush1.bf16.msra.mxu0 %v3814
  %3886 = vmatprep.subr.bf16.mxu0 %v3813
  %3887 = vmatpush1.bf16.msra.mxu0 %v3812
  %3888 = vmatprep.subr.bf16.mxu0 %v3811
  %3889 = vmatpush1.bf16.msra.mxu0 %v3810
  %3890 = vmatprep.subr.bf16.mxu0 %v3809
  %3891 = vmatpush1.bf16.msra.mxu0 %v3808
  %3892 = vmatprep.subr.bf16.mxu0 %v3807
  %3893 = vmatpush1.bf16.msra.mxu0 %v3806
  %3894 = vmatprep.subr.bf16.mxu0 %v3805
  %3895 = vmatpush1.bf16.msra.mxu0 %v3804
  %3896 = vmatprep.subr.bf16.mxu0 %v3803
  %3897 = vmatpush1.bf16.msra.mxu0 %v3802
  %3898 = vmatprep.subr.bf16.mxu0 %v3801
  %3899 = vmatpush1.bf16.msra.mxu0 %v3800
  %3900 = vmatprep.subr.bf16.mxu0 %v3831
  %3901 = vmatpush2.bf16.msra.mxu0 %v3830
  %3902 = vmatprep.subr.bf16.mxu0 %v3829
  %3903 = vmatpush2.bf16.msra.mxu0 %v3828
  %3904 = vmatprep.subr.bf16.mxu0 %v3827
  %3905 = vmatpush2.bf16.msra.mxu0 %v3826
  %3906 = vmatprep.subr.bf16.mxu0 %v3825
  %3907 = vmatpush2.bf16.msra.mxu0 %v3824
  %3908 = vmatprep.subr.bf16.mxu0 %v3823
  %3909 = vmatpush2.bf16.msra.mxu0 %v3822
  %3910 = vmatprep.subr.bf16.mxu0 %v3821
  %3911 = vmatpush2.bf16.msra.mxu0 %v3820
  %3912 = vmatprep.subr.bf16.mxu0 %v3819
  %3913 = vmatpush2.bf16.msra.mxu0 %v3818
  %3914 = vmatprep.subr.bf16.mxu0 %v3817
  %3915 = vmatpush2.bf16.msra.mxu0 %v3816
  %3916 = vmatprep.mubr.bf16.mxu0 %v3673
  %3917 = vmatmul.mubr.bf16.gmra.mxu0 %v3672
  %v3918 = vpop.f32.mrf.mxu0
  %v3919 = vadd.f32 0.0, %v3918
  %v3920 = vpop.f32.mrf.mxu0
  %v3921 = vadd.f32 0.0, %v3920
  %v3922 = vpop.f32.mrf.mxu0
  %v3923 = vadd.f32 0.0, %v3922
  %v3924 = vpop.f32.mrf.mxu0
  %v3925 = vadd.f32 0.0, %v3924
  %3926 = vmatprep.mubr.bf16.mxu0 %v3676
  %3927 = vmatmul.mubr.bf16.gmra.mxu0 %v3675
  %v3928 = vpop.f32.mrf.mxu0
  %v3929 = vadd.f32 0.0, %v3928
  %v3930 = vpop.f32.mrf.mxu0
  %v3931 = vadd.f32 0.0, %v3930
  %v3932 = vpop.f32.mrf.mxu0
  %v3933 = vadd.f32 0.0, %v3932
  %v3934 = vpop.f32.mrf.mxu0
  %v3935 = vadd.f32 0.0, %v3934
  %3936 = vmatprep.mubr.bf16.mxu0 %v3679
  %3937 = vmatmul.mubr.bf16.gmra.mxu0 %v3678
  %v3938 = vpop.f32.mrf.mxu0
  %v3939 = vadd.f32 0.0, %v3938
  %v3940 = vpop.f32.mrf.mxu0
  %v3941 = vadd.f32 0.0, %v3940
  %v3942 = vpop.f32.mrf.mxu0
  %v3943 = vadd.f32 0.0, %v3942
  %v3944 = vpop.f32.mrf.mxu0
  %v3945 = vadd.f32 0.0, %v3944
  %3946 = vmatprep.mubr.bf16.mxu0 %v3682
  %3947 = vmatmul.mubr.bf16.gmra.mxu0 %v3681
  %v3948 = vpop.f32.mrf.mxu0
  %v3949 = vadd.f32 0.0, %v3948
  %v3950 = vpop.f32.mrf.mxu0
  %v3951 = vadd.f32 0.0, %v3950
  %v3952 = vpop.f32.mrf.mxu0
  %v3953 = vpop.f32.mrf.mxu0
  %3954 = vdwg.mxu0
  %3955 = vmatprep.subr.bf16.mxu0 0
  %3956 = vmatpush1.bf16.msra.mxu0 0
  %3957 = vmatprep.subr.bf16.mxu0 0
  %3958 = vmatpush1.bf16.msra.mxu0 0
  %3959 = vmatprep.subr.bf16.mxu0 0
  %3960 = vmatpush1.bf16.msra.mxu0 0
  %3961 = vmatprep.subr.bf16.mxu0 0
  %3962 = vmatpush1.bf16.msra.mxu0 0
  %3963 = vmatprep.subr.bf16.mxu0 0
  %3964 = vmatpush1.bf16.msra.mxu0 0
  %3965 = vmatprep.subr.bf16.mxu0 0
  %3966 = vmatpush1.bf16.msra.mxu0 0
  %3967 = vmatprep.subr.bf16.mxu0 %v3835
  %3968 = vmatpush1.bf16.msra.mxu0 %v3834
  %3969 = vmatprep.subr.bf16.mxu0 %v3833
  %3970 = vmatpush1.bf16.msra.mxu0 %v3832
  %3971 = vmatprep.subr.bf16.mxu0 0
  %3972 = vmatpush2.bf16.msra.mxu0 0
  %3973 = vmatprep.subr.bf16.mxu0 0
  %3974 = vmatpush2.bf16.msra.mxu0 0
  %3975 = vmatprep.subr.bf16.mxu0 0
  %3976 = vmatpush2.bf16.msra.mxu0 0
  %3977 = vmatprep.subr.bf16.mxu0 0
  %3978 = vmatpush2.bf16.msra.mxu0 0
  %3979 = vmatprep.subr.bf16.mxu0 0
  %3980 = vmatpush2.bf16.msra.mxu0 0
  %3981 = vmatprep.subr.bf16.mxu0 0
  %3982 = vmatpush2.bf16.msra.mxu0 0
  %3983 = vmatprep.subr.bf16.mxu0 0
  %3984 = vmatpush2.bf16.msra.mxu0 0
  %3985 = vmatprep.subr.bf16.mxu0 0
  %3986 = vmatpush2.bf16.msra.mxu0 0
  %3987 = vmatprep.mubr.bf16.mxu0 0
  %3988 = vmatmul.mubr.bf16.gmra.mxu0 %v3873
  %v3989 = vpop.f32.mrf.mxu0
  %v3990 = vadd.f32 %v3919, %v3989
  %v3991 = vpop.f32.mrf.mxu0
  %v3992 = vadd.f32 %v3921, %v3991
  %v3993 = vpop.f32.mrf.mxu0
  %v3994 = vadd.f32 %v3923, %v3993
  %v3995 = vpop.f32.mrf.mxu0
  %v3996 = vadd.f32 %v3925, %v3995
  %3997 = vmatprep.mubr.bf16.mxu0 0
  %3998 = vmatmul.mubr.bf16.gmra.mxu0 %v3876
  %v3999 = vpop.f32.mrf.mxu0
  %v4000 = vadd.f32 %v3929, %v3999
  %v4001 = vpop.f32.mrf.mxu0
  %v4002 = vadd.f32 %v3931, %v4001
  %v4003 = vpop.f32.mrf.mxu0
  %v4004 = vadd.f32 %v3933, %v4003
  %v4005 = vpop.f32.mrf.mxu0
  %v4006 = vadd.f32 %v3935, %v4005
  %4007 = vmatprep.mubr.bf16.mxu0 0
  %4008 = vmatmul.mubr.bf16.gmra.mxu0 %v3879
  %v4009 = vpop.f32.mrf.mxu0
  %v4010 = vadd.f32 %v3939, %v4009
  %v4011 = vpop.f32.mrf.mxu0
  %v4012 = vadd.f32 %v3941, %v4011
  %v4013 = vpop.f32.mrf.mxu0
  %v4014 = vadd.f32 %v3943, %v4013
  %v4015 = vpop.f32.mrf.mxu0
  %v4016 = vadd.f32 %v3945, %v4015
  %4017 = vmatprep.mubr.bf16.mxu0 0
  %4018 = vmatmul.mubr.bf16.gmra.mxu0 %v3882
  %v4019 = vpop.f32.mrf.mxu0
  %v4020 = vadd.f32 %v3949, %v4019
  %v4021 = vpop.f32.mrf.mxu0
  %v4022 = vadd.f32 %v3951, %v4021
  %v4023 = vpop.f32.mrf.mxu0
  %v4024 = vpop.f32.mrf.mxu0
  %4025 = vdwg.mxu0
  %v4026 = vadd.f32 %v3572, %v3990
  %v4027 = vadd.f32 %v3573, %v3992
  %v4028 = vadd.f32 %v3574, %v3994
  %v4029 = vadd.f32 %v3575, %v3996
  %v4030 = vadd.f32 %v3576, %v4000
  %v4031 = vadd.f32 %v3577, %v4002
  %v4032 = vadd.f32 %v3578, %v4004
  %v4033 = vadd.f32 %v3579, %v4006
  %v4034 = vadd.f32 %v3580, %v4010
  %v4035 = vadd.f32 %v3581, %v4012
  %v4036 = vadd.f32 %v3582, %v4014
  %v4037 = vadd.f32 %v3583, %v4016
  %v4038 = vadd.f32 %v3584, %v4020
  %v4039 = vadd.f32 %v3585, %v4022
  %s4040 = scalar_lea.vmem %s3, 1440
  %v4041 = vld [vmem:[%s4040] sm:$0xff]
  %v4042 = vld [vmem:[%s4040 + $0x8] sm:$0xff]
  %v4043 = vld [vmem:[%s4040 + $0x10] sm:$0xff]
  %v4044 = vld [vmem:[%s4040 + $0x18] sm:$0xff]
  %v4045 = vld [vmem:[%s4040 + $0x20] sm:$0xff]
  %v4046 = vld [vmem:[%s4040 + $0x28] sm:$0xff]
  %v4047 = vld [vmem:[%s4040 + $0x30] sm:$0xff]
  %v4048 = vld [vmem:[%s4040 + $0x38] sm:$0xff]
  %v4049 = vld [vmem:[%s4040 + $0x40] sm:$0xff]
  %v4050 = vld [vmem:[%s4040 + $0x48] sm:$0xff]
  %v4051 = vld [vmem:[%s4040 + $0x50] sm:$0xff]
  %v4052 = vld [vmem:[%s4040 + $0x58] sm:$0xff]
  %v4053 = vld [vmem:[%s4040 + $0x60] sm:$0xff]
  %v4054 = vld [vmem:[%s4040 + $0x68] sm:$0xff]
  %v4055 = vld [vmem:[%s4040 + $0x70] sm:$0xff]
  %v4056 = vld [vmem:[%s4040 + $0x78] sm:$0xff]
  %v4057 = vld [vmem:[%s4040 + $0x80] sm:$0xff]
  %v4058 = vld [vmem:[%s4040 + $0x88] sm:$0xff]
  %v4059 = vld [vmem:[%s4040 + $0x90] sm:$0xff]
  %v4060 = vld [vmem:[%s4040 + $0x98] sm:$0xff]
  %v4061 = vld [vmem:[%s4040 + $0xa0] sm:$0xff]
  %v4062 = vld [vmem:[%s4040 + $0xa8] sm:$0xff]
  %v4063 = vld [vmem:[%s4040 + $0xb0] sm:$0xff]
  %v4064 = vld [vmem:[%s4040 + $0xb8] sm:$0xff]
  %v4065 = vld [vmem:[%s4040 + $0xc0] sm:$0xff]
  %v4066 = vld [vmem:[%s4040 + $0xc8] sm:$0xff]
  %v4067 = vld [vmem:[%s4040 + $0xd0] sm:$0xff]
  %v4068 = vld [vmem:[%s4040 + $0xd8] sm:$0xff]
  %v4069 = vld [vmem:[%s4040 + $0xe0] sm:$0xff]
  %v4070 = vld [vmem:[%s4040 + $0xe8] sm:$0xff]
  %v4071 = vld [vmem:[%s4040 + $0xf0] sm:$0xff]
  %v4072 = vld [vmem:[%s4040 + $0xf8] sm:$0xff]
  %v4073 = vld [vmem:[%s4040 + $0x100] sm:$0xff]
  %v4074 = vld [vmem:[%s4040 + $0x108] sm:$0xff]
  %v4075 = vld [vmem:[%s4040 + $0x110] sm:$0xff]
  %v4076 = vld [vmem:[%s4040 + $0x118] sm:$0xff]
  %s4077 = scalar_lea.vmem %s3, 1728
  %v4078 = vld [vmem:[%s4077] sm:$0xff]
  %v4079 = vld [vmem:[%s4077 + $0x8] sm:$0xff]
  %v4080 = vld [vmem:[%s4077 + $0x10] sm:$0xff]
  %v4081 = vld [vmem:[%s4077 + $0x18] sm:$0xff]
  %v4082 = vld [vmem:[%s4077 + $0x20] sm:$0xff]
  %v4083 = vld [vmem:[%s4077 + $0x28] sm:$0xff]
  %v4084 = vld [vmem:[%s4077 + $0x30] sm:$0xff]
  %v4085 = vld [vmem:[%s4077 + $0x38] sm:$0xff]
  %v4086 = vld [vmem:[%s4077 + $0x40] sm:$0xff]
  %v4087 = vld [vmem:[%s4077 + $0x48] sm:$0xff]
  %v4088 = vld [vmem:[%s4077 + $0x50] sm:$0xff]
  %v4089 = vld [vmem:[%s4077 + $0x58] sm:$0xff]
  %v4090 = vld [vmem:[%s4077 + $0x60] sm:$0xff]
  %v4091 = vld [vmem:[%s4077 + $0x68] sm:$0xff]
  %v4092 = vld [vmem:[%s4077 + $0x70] sm:$0xff]
  %v4093 = vld [vmem:[%s4077 + $0x78] sm:$0xff]
  %v4094 = vld [vmem:[%s4077 + $0x80] sm:$0xff]
  %v4095 = vld [vmem:[%s4077 + $0x88] sm:$0xff]
  %v4096 = vld [vmem:[%s4077 + $0x90] sm:$0xff]
  %v4097 = vld [vmem:[%s4077 + $0x98] sm:$0xff]
  %v4098 = vld [vmem:[%s4077 + $0xa0] sm:$0xff]
  %v4099 = vld [vmem:[%s4077 + $0xa8] sm:$0xff]
  %v4100 = vld [vmem:[%s4077 + $0xb0] sm:$0xff]
  %v4101 = vld [vmem:[%s4077 + $0xb8] sm:$0xff]
  %v4102 = vld [vmem:[%s4077 + $0xc0] sm:$0xff]
  %v4103 = vld [vmem:[%s4077 + $0xc8] sm:$0xff]
  %v4104 = vld [vmem:[%s4077 + $0xd0] sm:$0xff]
  %v4105 = vld [vmem:[%s4077 + $0xd8] sm:$0xff]
  %v4106 = vld [vmem:[%s4077 + $0xe0] sm:$0xff]
  %v4107 = vld [vmem:[%s4077 + $0xe8] sm:$0xff]
  %v4108 = vld [vmem:[%s4077 + $0xf0] sm:$0xff]
  %v4109 = vld [vmem:[%s4077 + $0xf8] sm:$0xff]
  %v4110 = vld [vmem:[%s4077 + $0x100] sm:$0xff]
  %v4111 = vld [vmem:[%s4077 + $0x108] sm:$0xff]
  %v4112 = vld [vmem:[%s4077 + $0x110] sm:$0xff]
  %v4113 = vld [vmem:[%s4077 + $0x118] sm:$0xff]
  %v4150 = vunpack.c.l.b16 %v4078
  %v4151 = vunpack.c.h.b16 %v4078
  %v4152 = vunpack.c.l.b16 %v4079
  %v4153 = vunpack.c.h.b16 %v4079
  %v4154 = vunpack.c.l.b16 %v4080
  %v4155 = vunpack.c.h.b16 %v4080
  %v4156 = vunpack.c.l.b16 %v4081
  %v4157 = vunpack.c.h.b16 %v4081
  %v4158 = vunpack.c.l.b16 %v4082
  %v4159 = vunpack.c.h.b16 %v4082
  %v4160 = vunpack.c.l.b16 %v4083
  %v4161 = vunpack.c.h.b16 %v4083
  %v4162 = vunpack.c.l.b16 %v4084
  %v4163 = vunpack.c.h.b16 %v4084
  %v4164 = vunpack.c.l.b16 %v4085
  %v4165 = vunpack.c.h.b16 %v4085
  %v4166 = vunpack.c.l.b16 %v4086
  %v4167 = vunpack.c.h.b16 %v4086
  %v4168 = vunpack.c.l.b16 %v4087
  %v4169 = vunpack.c.h.b16 %v4087
  %v4170 = vunpack.c.l.b16 %v4088
  %v4171 = vunpack.c.h.b16 %v4088
  %v4172 = vunpack.c.l.b16 %v4089
  %v4173 = vunpack.c.h.b16 %v4089
  %v4174 = vunpack.c.l.b16 %v4090
  %v4175 = vunpack.c.h.b16 %v4090
  %v4176 = vunpack.c.l.b16 %v4091
  %v4177 = vunpack.c.h.b16 %v4091
  %v4178 = vunpack.c.l.b16 %v4092
  %v4179 = vunpack.c.h.b16 %v4092
  %v4180 = vunpack.c.l.b16 %v4093
  %v4181 = vunpack.c.h.b16 %v4093
  %v4182 = vunpack.c.l.b16 %v4094
  %v4183 = vunpack.c.h.b16 %v4094
  %v4184 = vunpack.c.l.b16 %v4095
  %v4185 = vunpack.c.h.b16 %v4095
  %v4186 = vunpack.c.l.b16 %v4096
  %v4187 = vunpack.c.h.b16 %v4096
  %v4188 = vunpack.c.l.b16 %v4097
  %v4189 = vunpack.c.h.b16 %v4097
  %v4190 = vunpack.c.l.b16 %v4098
  %v4191 = vunpack.c.h.b16 %v4098
  %v4192 = vunpack.c.l.b16 %v4099
  %v4193 = vunpack.c.h.b16 %v4099
  %v4194 = vunpack.c.l.b16 %v4100
  %v4195 = vunpack.c.h.b16 %v4100
  %v4196 = vunpack.c.l.b16 %v4101
  %v4197 = vunpack.c.h.b16 %v4101
  %v4198 = vunpack.c.l.b16 %v4102
  %v4199 = vunpack.c.h.b16 %v4102
  %v4200 = vunpack.c.l.b16 %v4103
  %v4201 = vunpack.c.h.b16 %v4103
  %v4202 = vunpack.c.l.b16 %v4104
  %v4203 = vunpack.c.h.b16 %v4104
  %v4204 = vunpack.c.l.b16 %v4105
  %v4205 = vunpack.c.h.b16 %v4105
  %v4206 = vunpack.c.l.b16 %v4106
  %v4207 = vunpack.c.h.b16 %v4106
  %v4208 = vunpack.c.l.b16 %v4107
  %v4209 = vunpack.c.h.b16 %v4107
  %v4210 = vunpack.c.l.b16 %v4108
  %v4211 = vunpack.c.h.b16 %v4108
  %v4212 = vunpack.c.l.b16 %v4109
  %v4213 = vunpack.c.h.b16 %v4109
  %v4214 = vunpack.c.l.b16 %v4110
  %v4215 = vunpack.c.h.b16 %v4110
  %v4216 = vunpack.c.l.b16 %v4111
  %v4217 = vunpack.c.h.b16 %v4111
  %v4218 = vunpack.c.l.b16 %v4112
  %v4219 = vunpack.c.h.b16 %v4112
  %v4220 = vunpack.c.l.b16 %v4113
  %v4221 = vunpack.c.h.b16 %v4113
  %v4222 = vpack.c.b16 %v4152, %v4150
  %v4223 = vpack.c.b16 %v4153, %v4151
  %v4224 = vpack.c.b16 %v4156, %v4154
  %v4225 = vpack.c.b16 %v4157, %v4155
  %v4226 = vpack.c.b16 %v4160, %v4158
  %v4227 = vpack.c.b16 %v4161, %v4159
  %v4228 = vpack.c.b16 %v4164, %v4162
  %v4229 = vpack.c.b16 %v4165, %v4163
  %v4230 = vpack.c.b16 %v4168, %v4166
  %v4231 = vpack.c.b16 %v4169, %v4167
  %v4232 = vpack.c.b16 %v4172, %v4170
  %v4233 = vpack.c.b16 %v4173, %v4171
  %v4234 = vpack.c.b16 %v4176, %v4174
  %v4235 = vpack.c.b16 %v4177, %v4175
  %v4236 = vpack.c.b16 %v4180, %v4178
  %v4237 = vpack.c.b16 %v4181, %v4179
  %v4238 = vpack.c.b16 %v4184, %v4182
  %v4239 = vpack.c.b16 %v4185, %v4183
  %v4240 = vpack.c.b16 %v4188, %v4186
  %v4241 = vpack.c.b16 %v4189, %v4187
  %v4242 = vpack.c.b16 %v4192, %v4190
  %v4243 = vpack.c.b16 %v4193, %v4191
  %v4244 = vpack.c.b16 %v4196, %v4194
  %v4245 = vpack.c.b16 %v4197, %v4195
  %v4246 = vpack.c.b16 %v4200, %v4198
  %v4247 = vpack.c.b16 %v4201, %v4199
  %v4248 = vpack.c.b16 %v4204, %v4202
  %v4249 = vpack.c.b16 %v4205, %v4203
  %v4250 = vpack.c.b16 %v4208, %v4206
  %v4251 = vpack.c.b16 %v4209, %v4207
  %v4252 = vpack.c.b16 %v4212, %v4210
  %v4253 = vpack.c.b16 %v4213, %v4211
  %v4254 = vpack.c.b16 %v4216, %v4214
  %v4255 = vpack.c.b16 %v4217, %v4215
  %v4256 = vpack.c.b16 %v4220, %v4218
  %v4257 = vpack.c.b16 %v4221, %v4219
  %4294 = vmatprep.subr.bf16.mxu0 %v4237
  %4295 = vmatpush1.bf16.msra.mxu0 %v4236
  %4296 = vmatprep.subr.bf16.mxu0 %v4235
  %4297 = vmatpush1.bf16.msra.mxu0 %v4234
  %4298 = vmatprep.subr.bf16.mxu0 %v4233
  %4299 = vmatpush1.bf16.msra.mxu0 %v4232
  %4300 = vmatprep.subr.bf16.mxu0 %v4231
  %4301 = vmatpush1.bf16.msra.mxu0 %v4230
  %4302 = vmatprep.subr.bf16.mxu0 %v4229
  %4303 = vmatpush1.bf16.msra.mxu0 %v4228
  %4304 = vmatprep.subr.bf16.mxu0 %v4227
  %4305 = vmatpush1.bf16.msra.mxu0 %v4226
  %4306 = vmatprep.subr.bf16.mxu0 %v4225
  %4307 = vmatpush1.bf16.msra.mxu0 %v4224
  %4308 = vmatprep.subr.bf16.mxu0 %v4223
  %4309 = vmatpush1.bf16.msra.mxu0 %v4222
  %4310 = vmatprep.subr.bf16.mxu0 %v4253
  %4311 = vmatpush2.bf16.msra.mxu0 %v4252
  %4312 = vmatprep.subr.bf16.mxu0 %v4251
  %4313 = vmatpush2.bf16.msra.mxu0 %v4250
  %4314 = vmatprep.subr.bf16.mxu0 %v4249
  %4315 = vmatpush2.bf16.msra.mxu0 %v4248
  %4316 = vmatprep.subr.bf16.mxu0 %v4247
  %4317 = vmatpush2.bf16.msra.mxu0 %v4246
  %4318 = vmatprep.subr.bf16.mxu0 %v4245
  %4319 = vmatpush2.bf16.msra.mxu0 %v4244
  %4320 = vmatprep.subr.bf16.mxu0 %v4243
  %4321 = vmatpush2.bf16.msra.mxu0 %v4242
  %4322 = vmatprep.subr.bf16.mxu0 %v4241
  %4323 = vmatpush2.bf16.msra.mxu0 %v4240
  %4324 = vmatprep.subr.bf16.mxu0 %v4239
  %4325 = vmatpush2.bf16.msra.mxu0 %v4238
  %4326 = vmatprep.mubr.bf16.mxu0 %v1936
  %4327 = vmatmul.mubr.bf16.gmra.mxu0 %v1935
  %v4328 = vpop.f32.mrf.mxu0
  %v4329 = vadd.f32 0.0, %v4328
  %v4330 = vpop.f32.mrf.mxu0
  %v4331 = vadd.f32 0.0, %v4330
  %v4332 = vpop.f32.mrf.mxu0
  %v4333 = vadd.f32 0.0, %v4332
  %v4334 = vpop.f32.mrf.mxu0
  %v4335 = vadd.f32 0.0, %v4334
  %4336 = vmatprep.mubr.bf16.mxu0 %v1939
  %4337 = vmatmul.mubr.bf16.gmra.mxu0 %v1938
  %v4338 = vpop.f32.mrf.mxu0
  %v4339 = vadd.f32 0.0, %v4338
  %v4340 = vpop.f32.mrf.mxu0
  %v4341 = vadd.f32 0.0, %v4340
  %v4342 = vpop.f32.mrf.mxu0
  %v4343 = vadd.f32 0.0, %v4342
  %v4344 = vpop.f32.mrf.mxu0
  %v4345 = vadd.f32 0.0, %v4344
  %4346 = vmatprep.mubr.bf16.mxu0 %v1942
  %4347 = vmatmul.mubr.bf16.gmra.mxu0 %v1941
  %v4348 = vpop.f32.mrf.mxu0
  %v4349 = vadd.f32 0.0, %v4348
  %v4350 = vpop.f32.mrf.mxu0
  %v4351 = vadd.f32 0.0, %v4350
  %v4352 = vpop.f32.mrf.mxu0
  %v4353 = vadd.f32 0.0, %v4352
  %v4354 = vpop.f32.mrf.mxu0
  %v4355 = vadd.f32 0.0, %v4354
  %4356 = vmatprep.mubr.bf16.mxu0 %v1945
  %4357 = vmatmul.mubr.bf16.gmra.mxu0 %v1944
  %v4358 = vpop.f32.mrf.mxu0
  %v4359 = vadd.f32 0.0, %v4358
  %v4360 = vpop.f32.mrf.mxu0
  %v4361 = vadd.f32 0.0, %v4360
  %v4362 = vpop.f32.mrf.mxu0
  %v4363 = vpop.f32.mrf.mxu0
  %4364 = vdwg.mxu0
  %4365 = vmatprep.subr.bf16.mxu0 0
  %4366 = vmatpush1.bf16.msra.mxu0 0
  %4367 = vmatprep.subr.bf16.mxu0 0
  %4368 = vmatpush1.bf16.msra.mxu0 0
  %4369 = vmatprep.subr.bf16.mxu0 0
  %4370 = vmatpush1.bf16.msra.mxu0 0
  %4371 = vmatprep.subr.bf16.mxu0 0
  %4372 = vmatpush1.bf16.msra.mxu0 0
  %4373 = vmatprep.subr.bf16.mxu0 0
  %4374 = vmatpush1.bf16.msra.mxu0 0
  %4375 = vmatprep.subr.bf16.mxu0 0
  %4376 = vmatpush1.bf16.msra.mxu0 0
  %4377 = vmatprep.subr.bf16.mxu0 %v4257
  %4378 = vmatpush1.bf16.msra.mxu0 %v4256
  %4379 = vmatprep.subr.bf16.mxu0 %v4255
  %4380 = vmatpush1.bf16.msra.mxu0 %v4254
  %4381 = vmatprep.subr.bf16.mxu0 0
  %4382 = vmatpush2.bf16.msra.mxu0 0
  %4383 = vmatprep.subr.bf16.mxu0 0
  %4384 = vmatpush2.bf16.msra.mxu0 0
  %4385 = vmatprep.subr.bf16.mxu0 0
  %4386 = vmatpush2.bf16.msra.mxu0 0
  %4387 = vmatprep.subr.bf16.mxu0 0
  %4388 = vmatpush2.bf16.msra.mxu0 0
  %4389 = vmatprep.subr.bf16.mxu0 0
  %4390 = vmatpush2.bf16.msra.mxu0 0
  %4391 = vmatprep.subr.bf16.mxu0 0
  %4392 = vmatpush2.bf16.msra.mxu0 0
  %4393 = vmatprep.subr.bf16.mxu0 0
  %4394 = vmatpush2.bf16.msra.mxu0 0
  %4395 = vmatprep.subr.bf16.mxu0 0
  %4396 = vmatpush2.bf16.msra.mxu0 0
  %4397 = vmatprep.mubr.bf16.mxu0 0
  %4398 = vmatmul.mubr.bf16.gmra.mxu0 %v2136
  %v4399 = vpop.f32.mrf.mxu0
  %v4400 = vadd.f32 %v4329, %v4399
  %v4401 = vpop.f32.mrf.mxu0
  %v4402 = vadd.f32 %v4331, %v4401
  %v4403 = vpop.f32.mrf.mxu0
  %v4404 = vadd.f32 %v4333, %v4403
  %v4405 = vpop.f32.mrf.mxu0
  %v4406 = vadd.f32 %v4335, %v4405
  %4407 = vmatprep.mubr.bf16.mxu0 0
  %4408 = vmatmul.mubr.bf16.gmra.mxu0 %v2139
  %v4409 = vpop.f32.mrf.mxu0
  %v4410 = vadd.f32 %v4339, %v4409
  %v4411 = vpop.f32.mrf.mxu0
  %v4412 = vadd.f32 %v4341, %v4411
  %v4413 = vpop.f32.mrf.mxu0
  %v4414 = vadd.f32 %v4343, %v4413
  %v4415 = vpop.f32.mrf.mxu0
  %v4416 = vadd.f32 %v4345, %v4415
  %4417 = vmatprep.mubr.bf16.mxu0 0
  %4418 = vmatmul.mubr.bf16.gmra.mxu0 %v2142
  %v4419 = vpop.f32.mrf.mxu0
  %v4420 = vadd.f32 %v4349, %v4419
  %v4421 = vpop.f32.mrf.mxu0
  %v4422 = vadd.f32 %v4351, %v4421
  %v4423 = vpop.f32.mrf.mxu0
  %v4424 = vadd.f32 %v4353, %v4423
  %v4425 = vpop.f32.mrf.mxu0
  %v4426 = vadd.f32 %v4355, %v4425
  %4427 = vmatprep.mubr.bf16.mxu0 0
  %4428 = vmatmul.mubr.bf16.gmra.mxu0 %v2145
  %v4429 = vpop.f32.mrf.mxu0
  %v4430 = vadd.f32 %v4359, %v4429
  %v4431 = vpop.f32.mrf.mxu0
  %v4432 = vadd.f32 %v4361, %v4431
  %v4433 = vpop.f32.mrf.mxu0
  %v4434 = vpop.f32.mrf.mxu0
  %4435 = vdwg.mxu0
  %v4472 = vunpack.c.l.b16 %v4041
  %v4473 = vunpack.c.h.b16 %v4041
  %v4474 = vunpack.c.l.b16 %v4042
  %v4475 = vunpack.c.h.b16 %v4042
  %v4476 = vunpack.c.l.b16 %v4043
  %v4477 = vunpack.c.h.b16 %v4043
  %v4478 = vunpack.c.l.b16 %v4044
  %v4479 = vunpack.c.h.b16 %v4044
  %v4480 = vunpack.c.l.b16 %v4045
  %v4481 = vunpack.c.h.b16 %v4045
  %v4482 = vunpack.c.l.b16 %v4046
  %v4483 = vunpack.c.h.b16 %v4046
  %v4484 = vunpack.c.l.b16 %v4047
  %v4485 = vunpack.c.h.b16 %v4047
  %v4486 = vunpack.c.l.b16 %v4048
  %v4487 = vunpack.c.h.b16 %v4048
  %v4488 = vunpack.c.l.b16 %v4049
  %v4489 = vunpack.c.h.b16 %v4049
  %v4490 = vunpack.c.l.b16 %v4050
  %v4491 = vunpack.c.h.b16 %v4050
  %v4492 = vunpack.c.l.b16 %v4051
  %v4493 = vunpack.c.h.b16 %v4051
  %v4494 = vunpack.c.l.b16 %v4052
  %v4495 = vunpack.c.h.b16 %v4052
  %v4496 = vunpack.c.l.b16 %v4053
  %v4497 = vunpack.c.h.b16 %v4053
  %v4498 = vunpack.c.l.b16 %v4054
  %v4499 = vunpack.c.h.b16 %v4054
  %v4500 = vunpack.c.l.b16 %v4055
  %v4501 = vunpack.c.h.b16 %v4055
  %v4502 = vunpack.c.l.b16 %v4056
  %v4503 = vunpack.c.h.b16 %v4056
  %v4504 = vunpack.c.l.b16 %v4057
  %v4505 = vunpack.c.h.b16 %v4057
  %v4506 = vunpack.c.l.b16 %v4058
  %v4507 = vunpack.c.h.b16 %v4058
  %v4508 = vunpack.c.l.b16 %v4059
  %v4509 = vunpack.c.h.b16 %v4059
  %v4510 = vunpack.c.l.b16 %v4060
  %v4511 = vunpack.c.h.b16 %v4060
  %v4512 = vunpack.c.l.b16 %v4061
  %v4513 = vunpack.c.h.b16 %v4061
  %v4514 = vunpack.c.l.b16 %v4062
  %v4515 = vunpack.c.h.b16 %v4062
  %v4516 = vunpack.c.l.b16 %v4063
  %v4517 = vunpack.c.h.b16 %v4063
  %v4518 = vunpack.c.l.b16 %v4064
  %v4519 = vunpack.c.h.b16 %v4064
  %v4520 = vunpack.c.l.b16 %v4065
  %v4521 = vunpack.c.h.b16 %v4065
  %v4522 = vunpack.c.l.b16 %v4066
  %v4523 = vunpack.c.h.b16 %v4066
  %v4524 = vunpack.c.l.b16 %v4067
  %v4525 = vunpack.c.h.b16 %v4067
  %v4526 = vunpack.c.l.b16 %v4068
  %v4527 = vunpack.c.h.b16 %v4068
  %v4528 = vunpack.c.l.b16 %v4069
  %v4529 = vunpack.c.h.b16 %v4069
  %v4530 = vunpack.c.l.b16 %v4070
  %v4531 = vunpack.c.h.b16 %v4070
  %v4532 = vunpack.c.l.b16 %v4071
  %v4533 = vunpack.c.h.b16 %v4071
  %v4534 = vunpack.c.l.b16 %v4072
  %v4535 = vunpack.c.h.b16 %v4072
  %v4536 = vunpack.c.l.b16 %v4073
  %v4537 = vunpack.c.h.b16 %v4073
  %v4538 = vunpack.c.l.b16 %v4074
  %v4539 = vunpack.c.h.b16 %v4074
  %v4540 = vunpack.c.l.b16 %v4075
  %v4541 = vunpack.c.h.b16 %v4075
  %v4542 = vunpack.c.l.b16 %v4076
  %v4543 = vunpack.c.h.b16 %v4076
  %v4544 = vpack.c.b16 %v4474, %v4472
  %v4545 = vpack.c.b16 %v4475, %v4473
  %v4546 = vpack.c.b16 %v4478, %v4476
  %v4547 = vpack.c.b16 %v4479, %v4477
  %v4548 = vpack.c.b16 %v4482, %v4480
  %v4549 = vpack.c.b16 %v4483, %v4481
  %v4550 = vpack.c.b16 %v4486, %v4484
  %v4551 = vpack.c.b16 %v4487, %v4485
  %v4552 = vpack.c.b16 %v4490, %v4488
  %v4553 = vpack.c.b16 %v4491, %v4489
  %v4554 = vpack.c.b16 %v4494, %v4492
  %v4555 = vpack.c.b16 %v4495, %v4493
  %v4556 = vpack.c.b16 %v4498, %v4496
  %v4557 = vpack.c.b16 %v4499, %v4497
  %v4558 = vpack.c.b16 %v4502, %v4500
  %v4559 = vpack.c.b16 %v4503, %v4501
  %v4560 = vpack.c.b16 %v4506, %v4504
  %v4561 = vpack.c.b16 %v4507, %v4505
  %v4562 = vpack.c.b16 %v4510, %v4508
  %v4563 = vpack.c.b16 %v4511, %v4509
  %v4564 = vpack.c.b16 %v4514, %v4512
  %v4565 = vpack.c.b16 %v4515, %v4513
  %v4566 = vpack.c.b16 %v4518, %v4516
  %v4567 = vpack.c.b16 %v4519, %v4517
  %v4568 = vpack.c.b16 %v4522, %v4520
  %v4569 = vpack.c.b16 %v4523, %v4521
  %v4570 = vpack.c.b16 %v4526, %v4524
  %v4571 = vpack.c.b16 %v4527, %v4525
  %v4572 = vpack.c.b16 %v4530, %v4528
  %v4573 = vpack.c.b16 %v4531, %v4529
  %v4574 = vpack.c.b16 %v4534, %v4532
  %v4575 = vpack.c.b16 %v4535, %v4533
  %v4576 = vpack.c.b16 %v4538, %v4536
  %v4577 = vpack.c.b16 %v4539, %v4537
  %v4578 = vpack.c.b16 %v4542, %v4540
  %v4579 = vpack.c.b16 %v4543, %v4541
  %4616 = vmatprep.subr.bf16.mxu0 %v4559
  %4617 = vmatpush1.bf16.msra.mxu0 %v4558
  %4618 = vmatprep.subr.bf16.mxu0 %v4557
  %4619 = vmatpush1.bf16.msra.mxu0 %v4556
  %4620 = vmatprep.subr.bf16.mxu0 %v4555
  %4621 = vmatpush1.bf16.msra.mxu0 %v4554
  %4622 = vmatprep.subr.bf16.mxu0 %v4553
  %4623 = vmatpush1.bf16.msra.mxu0 %v4552
  %4624 = vmatprep.subr.bf16.mxu0 %v4551
  %4625 = vmatpush1.bf16.msra.mxu0 %v4550
  %4626 = vmatprep.subr.bf16.mxu0 %v4549
  %4627 = vmatpush1.bf16.msra.mxu0 %v4548
  %4628 = vmatprep.subr.bf16.mxu0 %v4547
  %4629 = vmatpush1.bf16.msra.mxu0 %v4546
  %4630 = vmatprep.subr.bf16.mxu0 %v4545
  %4631 = vmatpush1.bf16.msra.mxu0 %v4544
  %4632 = vmatprep.subr.bf16.mxu0 %v4575
  %4633 = vmatpush2.bf16.msra.mxu0 %v4574
  %4634 = vmatprep.subr.bf16.mxu0 %v4573
  %4635 = vmatpush2.bf16.msra.mxu0 %v4572
  %4636 = vmatprep.subr.bf16.mxu0 %v4571
  %4637 = vmatpush2.bf16.msra.mxu0 %v4570
  %4638 = vmatprep.subr.bf16.mxu0 %v4569
  %4639 = vmatpush2.bf16.msra.mxu0 %v4568
  %4640 = vmatprep.subr.bf16.mxu0 %v4567
  %4641 = vmatpush2.bf16.msra.mxu0 %v4566
  %4642 = vmatprep.subr.bf16.mxu0 %v4565
  %4643 = vmatpush2.bf16.msra.mxu0 %v4564
  %4644 = vmatprep.subr.bf16.mxu0 %v4563
  %4645 = vmatpush2.bf16.msra.mxu0 %v4562
  %4646 = vmatprep.subr.bf16.mxu0 %v4561
  %4647 = vmatpush2.bf16.msra.mxu0 %v4560
  %4648 = vmatprep.mubr.bf16.mxu0 %v2325
  %4649 = vmatmul.mubr.bf16.gmra.mxu0 %v2324
  %v4650 = vpop.f32.mrf.mxu0
  %v4651 = vadd.f32 %v4400, %v4650
  %v4652 = vpop.f32.mrf.mxu0
  %v4653 = vadd.f32 %v4402, %v4652
  %v4654 = vpop.f32.mrf.mxu0
  %v4655 = vadd.f32 %v4404, %v4654
  %v4656 = vpop.f32.mrf.mxu0
  %v4657 = vadd.f32 %v4406, %v4656
  %4658 = vmatprep.mubr.bf16.mxu0 %v2328
  %4659 = vmatmul.mubr.bf16.gmra.mxu0 %v2327
  %v4660 = vpop.f32.mrf.mxu0
  %v4661 = vadd.f32 %v4410, %v4660
  %v4662 = vpop.f32.mrf.mxu0
  %v4663 = vadd.f32 %v4412, %v4662
  %v4664 = vpop.f32.mrf.mxu0
  %v4665 = vadd.f32 %v4414, %v4664
  %v4666 = vpop.f32.mrf.mxu0
  %v4667 = vadd.f32 %v4416, %v4666
  %4668 = vmatprep.mubr.bf16.mxu0 %v2331
  %4669 = vmatmul.mubr.bf16.gmra.mxu0 %v2330
  %v4670 = vpop.f32.mrf.mxu0
  %v4671 = vadd.f32 %v4420, %v4670
  %v4672 = vpop.f32.mrf.mxu0
  %v4673 = vadd.f32 %v4422, %v4672
  %v4674 = vpop.f32.mrf.mxu0
  %v4675 = vadd.f32 %v4424, %v4674
  %v4676 = vpop.f32.mrf.mxu0
  %v4677 = vadd.f32 %v4426, %v4676
  %4678 = vmatprep.mubr.bf16.mxu0 %v2334
  %4679 = vmatmul.mubr.bf16.gmra.mxu0 %v2333
  %v4680 = vpop.f32.mrf.mxu0
  %v4681 = vadd.f32 %v4430, %v4680
  %v4682 = vpop.f32.mrf.mxu0
  %v4683 = vadd.f32 %v4432, %v4682
  %v4684 = vpop.f32.mrf.mxu0
  %v4685 = vpop.f32.mrf.mxu0
  %4686 = vdwg.mxu0
  %4687 = vmatprep.subr.bf16.mxu0 0
  %4688 = vmatpush1.bf16.msra.mxu0 0
  %4689 = vmatprep.subr.bf16.mxu0 0
  %4690 = vmatpush1.bf16.msra.mxu0 0
  %4691 = vmatprep.subr.bf16.mxu0 0
  %4692 = vmatpush1.bf16.msra.mxu0 0
  %4693 = vmatprep.subr.bf16.mxu0 0
  %4694 = vmatpush1.bf16.msra.mxu0 0
  %4695 = vmatprep.subr.bf16.mxu0 0
  %4696 = vmatpush1.bf16.msra.mxu0 0
  %4697 = vmatprep.subr.bf16.mxu0 0
  %4698 = vmatpush1.bf16.msra.mxu0 0
  %4699 = vmatprep.subr.bf16.mxu0 %v4579
  %4700 = vmatpush1.bf16.msra.mxu0 %v4578
  %4701 = vmatprep.subr.bf16.mxu0 %v4577
  %4702 = vmatpush1.bf16.msra.mxu0 %v4576
  %4703 = vmatprep.subr.bf16.mxu0 0
  %4704 = vmatpush2.bf16.msra.mxu0 0
  %4705 = vmatprep.subr.bf16.mxu0 0
  %4706 = vmatpush2.bf16.msra.mxu0 0
  %4707 = vmatprep.subr.bf16.mxu0 0
  %4708 = vmatpush2.bf16.msra.mxu0 0
  %4709 = vmatprep.subr.bf16.mxu0 0
  %4710 = vmatpush2.bf16.msra.mxu0 0
  %4711 = vmatprep.subr.bf16.mxu0 0
  %4712 = vmatpush2.bf16.msra.mxu0 0
  %4713 = vmatprep.subr.bf16.mxu0 0
  %4714 = vmatpush2.bf16.msra.mxu0 0
  %4715 = vmatprep.subr.bf16.mxu0 0
  %4716 = vmatpush2.bf16.msra.mxu0 0
  %4717 = vmatprep.subr.bf16.mxu0 0
  %4718 = vmatpush2.bf16.msra.mxu0 0
  %4719 = vmatprep.mubr.bf16.mxu0 0
  %4720 = vmatmul.mubr.bf16.gmra.mxu0 %v2525
  %v4721 = vpop.f32.mrf.mxu0
  %v4722 = vadd.f32 %v4651, %v4721
  %v4723 = vpop.f32.mrf.mxu0
  %v4724 = vadd.f32 %v4653, %v4723
  %v4725 = vpop.f32.mrf.mxu0
  %v4726 = vadd.f32 %v4655, %v4725
  %v4727 = vpop.f32.mrf.mxu0
  %v4728 = vadd.f32 %v4657, %v4727
  %4729 = vmatprep.mubr.bf16.mxu0 0
  %4730 = vmatmul.mubr.bf16.gmra.mxu0 %v2528
  %v4731 = vpop.f32.mrf.mxu0
  %v4732 = vadd.f32 %v4661, %v4731
  %v4733 = vpop.f32.mrf.mxu0
  %v4734 = vadd.f32 %v4663, %v4733
  %v4735 = vpop.f32.mrf.mxu0
  %v4736 = vadd.f32 %v4665, %v4735
  %v4737 = vpop.f32.mrf.mxu0
  %v4738 = vadd.f32 %v4667, %v4737
  %4739 = vmatprep.mubr.bf16.mxu0 0
  %4740 = vmatmul.mubr.bf16.gmra.mxu0 %v2531
  %v4741 = vpop.f32.mrf.mxu0
  %v4742 = vadd.f32 %v4671, %v4741
  %v4743 = vpop.f32.mrf.mxu0
  %v4744 = vadd.f32 %v4673, %v4743
  %v4745 = vpop.f32.mrf.mxu0
  %v4746 = vadd.f32 %v4675, %v4745
  %v4747 = vpop.f32.mrf.mxu0
  %v4748 = vadd.f32 %v4677, %v4747
  %4749 = vmatprep.mubr.bf16.mxu0 0
  %4750 = vmatmul.mubr.bf16.gmra.mxu0 %v2534
  %v4751 = vpop.f32.mrf.mxu0
  %v4752 = vadd.f32 %v4681, %v4751
  %v4753 = vpop.f32.mrf.mxu0
  %v4754 = vadd.f32 %v4683, %v4753
  %v4755 = vpop.f32.mrf.mxu0
  %v4756 = vpop.f32.mrf.mxu0
  %4757 = vdwg.mxu0
  %s4758 = scalar_lea.vmem %s3, 2016
  %v4759 = vld [vmem:[%s4758] sm:$0xff]
  %v4760 = vld [vmem:[%s4758 + $0x8] sm:$0xff]
  %v4761 = vld [vmem:[%s4758 + $0x10] sm:$0xff]
  %v4762 = vld [vmem:[%s4758 + $0x18] sm:$0xff]
  %v4763 = vld [vmem:[%s4758 + $0x20] sm:$0xff]
  %v4764 = vld [vmem:[%s4758 + $0x28] sm:$0xff]
  %v4765 = vld [vmem:[%s4758 + $0x30] sm:$0xff]
  %v4766 = vld [vmem:[%s4758 + $0x38] sm:$0xff]
  %v4767 = vld [vmem:[%s4758 + $0x40] sm:$0xff]
  %v4768 = vld [vmem:[%s4758 + $0x48] sm:$0xff]
  %v4769 = vld [vmem:[%s4758 + $0x50] sm:$0xff]
  %v4770 = vld [vmem:[%s4758 + $0x58] sm:$0xff]
  %v4771 = vld [vmem:[%s4758 + $0x60] sm:$0xff]
  %v4772 = vld [vmem:[%s4758 + $0x68] sm:$0xff]
  %v4773 = vld [vmem:[%s4758 + $0x70] sm:$0xff]
  %v4774 = vld [vmem:[%s4758 + $0x78] sm:$0xff]
  %v4775 = vld [vmem:[%s4758 + $0x80] sm:$0xff]
  %v4776 = vld [vmem:[%s4758 + $0x88] sm:$0xff]
  %v4777 = vld [vmem:[%s4758 + $0x90] sm:$0xff]
  %v4778 = vld [vmem:[%s4758 + $0x98] sm:$0xff]
  %v4779 = vld [vmem:[%s4758 + $0xa0] sm:$0xff]
  %v4780 = vld [vmem:[%s4758 + $0xa8] sm:$0xff]
  %v4781 = vld [vmem:[%s4758 + $0xb0] sm:$0xff]
  %v4782 = vld [vmem:[%s4758 + $0xb8] sm:$0xff]
  %v4783 = vld [vmem:[%s4758 + $0xc0] sm:$0xff]
  %v4784 = vld [vmem:[%s4758 + $0xc8] sm:$0xff]
  %v4785 = vld [vmem:[%s4758 + $0xd0] sm:$0xff]
  %v4786 = vld [vmem:[%s4758 + $0xd8] sm:$0xff]
  %v4787 = vld [vmem:[%s4758 + $0xe0] sm:$0xff]
  %v4788 = vld [vmem:[%s4758 + $0xe8] sm:$0xff]
  %v4789 = vld [vmem:[%s4758 + $0xf0] sm:$0xff]
  %v4790 = vld [vmem:[%s4758 + $0xf8] sm:$0xff]
  %v4791 = vld [vmem:[%s4758 + $0x100] sm:$0xff]
  %v4792 = vld [vmem:[%s4758 + $0x108] sm:$0xff]
  %v4793 = vld [vmem:[%s4758 + $0x110] sm:$0xff]
  %v4794 = vld [vmem:[%s4758 + $0x118] sm:$0xff]
  %v4831 = vunpack.c.l.b16 %v4759
  %v4832 = vunpack.c.h.b16 %v4759
  %v4833 = vunpack.c.l.b16 %v4760
  %v4834 = vunpack.c.h.b16 %v4760
  %v4835 = vunpack.c.l.b16 %v4761
  %v4836 = vunpack.c.h.b16 %v4761
  %v4837 = vunpack.c.l.b16 %v4762
  %v4838 = vunpack.c.h.b16 %v4762
  %v4839 = vunpack.c.l.b16 %v4763
  %v4840 = vunpack.c.h.b16 %v4763
  %v4841 = vunpack.c.l.b16 %v4764
  %v4842 = vunpack.c.h.b16 %v4764
  %v4843 = vunpack.c.l.b16 %v4765
  %v4844 = vunpack.c.h.b16 %v4765
  %v4845 = vunpack.c.l.b16 %v4766
  %v4846 = vunpack.c.h.b16 %v4766
  %v4847 = vunpack.c.l.b16 %v4767
  %v4848 = vunpack.c.h.b16 %v4767
  %v4849 = vunpack.c.l.b16 %v4768
  %v4850 = vunpack.c.h.b16 %v4768
  %v4851 = vunpack.c.l.b16 %v4769
  %v4852 = vunpack.c.h.b16 %v4769
  %v4853 = vunpack.c.l.b16 %v4770
  %v4854 = vunpack.c.h.b16 %v4770
  %v4855 = vunpack.c.l.b16 %v4771
  %v4856 = vunpack.c.h.b16 %v4771
  %v4857 = vunpack.c.l.b16 %v4772
  %v4858 = vunpack.c.h.b16 %v4772
  %v4859 = vunpack.c.l.b16 %v4773
  %v4860 = vunpack.c.h.b16 %v4773
  %v4861 = vunpack.c.l.b16 %v4774
  %v4862 = vunpack.c.h.b16 %v4774
  %v4863 = vunpack.c.l.b16 %v4775
  %v4864 = vunpack.c.h.b16 %v4775
  %v4865 = vunpack.c.l.b16 %v4776
  %v4866 = vunpack.c.h.b16 %v4776
  %v4867 = vunpack.c.l.b16 %v4777
  %v4868 = vunpack.c.h.b16 %v4777
  %v4869 = vunpack.c.l.b16 %v4778
  %v4870 = vunpack.c.h.b16 %v4778
  %v4871 = vunpack.c.l.b16 %v4779
  %v4872 = vunpack.c.h.b16 %v4779
  %v4873 = vunpack.c.l.b16 %v4780
  %v4874 = vunpack.c.h.b16 %v4780
  %v4875 = vunpack.c.l.b16 %v4781
  %v4876 = vunpack.c.h.b16 %v4781
  %v4877 = vunpack.c.l.b16 %v4782
  %v4878 = vunpack.c.h.b16 %v4782
  %v4879 = vunpack.c.l.b16 %v4783
  %v4880 = vunpack.c.h.b16 %v4783
  %v4881 = vunpack.c.l.b16 %v4784
  %v4882 = vunpack.c.h.b16 %v4784
  %v4883 = vunpack.c.l.b16 %v4785
  %v4884 = vunpack.c.h.b16 %v4785
  %v4885 = vunpack.c.l.b16 %v4786
  %v4886 = vunpack.c.h.b16 %v4786
  %v4887 = vunpack.c.l.b16 %v4787
  %v4888 = vunpack.c.h.b16 %v4787
  %v4889 = vunpack.c.l.b16 %v4788
  %v4890 = vunpack.c.h.b16 %v4788
  %v4891 = vunpack.c.l.b16 %v4789
  %v4892 = vunpack.c.h.b16 %v4789
  %v4893 = vunpack.c.l.b16 %v4790
  %v4894 = vunpack.c.h.b16 %v4790
  %v4895 = vunpack.c.l.b16 %v4791
  %v4896 = vunpack.c.h.b16 %v4791
  %v4897 = vunpack.c.l.b16 %v4792
  %v4898 = vunpack.c.h.b16 %v4792
  %v4899 = vunpack.c.l.b16 %v4793
  %v4900 = vunpack.c.h.b16 %v4793
  %v4901 = vunpack.c.l.b16 %v4794
  %v4902 = vunpack.c.h.b16 %v4794
  %v4903 = vpack.c.b16 %v4833, %v4831
  %v4904 = vpack.c.b16 %v4834, %v4832
  %v4905 = vpack.c.b16 %v4837, %v4835
  %v4906 = vpack.c.b16 %v4838, %v4836
  %v4907 = vpack.c.b16 %v4841, %v4839
  %v4908 = vpack.c.b16 %v4842, %v4840
  %v4909 = vpack.c.b16 %v4845, %v4843
  %v4910 = vpack.c.b16 %v4846, %v4844
  %v4911 = vpack.c.b16 %v4849, %v4847
  %v4912 = vpack.c.b16 %v4850, %v4848
  %v4913 = vpack.c.b16 %v4853, %v4851
  %v4914 = vpack.c.b16 %v4854, %v4852
  %v4915 = vpack.c.b16 %v4857, %v4855
  %v4916 = vpack.c.b16 %v4858, %v4856
  %v4917 = vpack.c.b16 %v4861, %v4859
  %v4918 = vpack.c.b16 %v4862, %v4860
  %v4919 = vpack.c.b16 %v4865, %v4863
  %v4920 = vpack.c.b16 %v4866, %v4864
  %v4921 = vpack.c.b16 %v4869, %v4867
  %v4922 = vpack.c.b16 %v4870, %v4868
  %v4923 = vpack.c.b16 %v4873, %v4871
  %v4924 = vpack.c.b16 %v4874, %v4872
  %v4925 = vpack.c.b16 %v4877, %v4875
  %v4926 = vpack.c.b16 %v4878, %v4876
  %v4927 = vpack.c.b16 %v4881, %v4879
  %v4928 = vpack.c.b16 %v4882, %v4880
  %v4929 = vpack.c.b16 %v4885, %v4883
  %v4930 = vpack.c.b16 %v4886, %v4884
  %v4931 = vpack.c.b16 %v4889, %v4887
  %v4932 = vpack.c.b16 %v4890, %v4888
  %v4933 = vpack.c.b16 %v4893, %v4891
  %v4934 = vpack.c.b16 %v4894, %v4892
  %v4935 = vpack.c.b16 %v4897, %v4895
  %v4936 = vpack.c.b16 %v4898, %v4896
  %v4937 = vpack.c.b16 %v4901, %v4899
  %v4938 = vpack.c.b16 %v4902, %v4900
  %4975 = vmatprep.subr.bf16.mxu0 %v4918
  %4976 = vmatpush1.bf16.msra.mxu0 %v4917
  %4977 = vmatprep.subr.bf16.mxu0 %v4916
  %4978 = vmatpush1.bf16.msra.mxu0 %v4915
  %4979 = vmatprep.subr.bf16.mxu0 %v4914
  %4980 = vmatpush1.bf16.msra.mxu0 %v4913
  %4981 = vmatprep.subr.bf16.mxu0 %v4912
  %4982 = vmatpush1.bf16.msra.mxu0 %v4911
  %4983 = vmatprep.subr.bf16.mxu0 %v4910
  %4984 = vmatpush1.bf16.msra.mxu0 %v4909
  %4985 = vmatprep.subr.bf16.mxu0 %v4908
  %4986 = vmatpush1.bf16.msra.mxu0 %v4907
  %4987 = vmatprep.subr.bf16.mxu0 %v4906
  %4988 = vmatpush1.bf16.msra.mxu0 %v4905
  %4989 = vmatprep.subr.bf16.mxu0 %v4904
  %4990 = vmatpush1.bf16.msra.mxu0 %v4903
  %4991 = vmatprep.subr.bf16.mxu0 %v4934
  %4992 = vmatpush2.bf16.msra.mxu0 %v4933
  %4993 = vmatprep.subr.bf16.mxu0 %v4932
  %4994 = vmatpush2.bf16.msra.mxu0 %v4931
  %4995 = vmatprep.subr.bf16.mxu0 %v4930
  %4996 = vmatpush2.bf16.msra.mxu0 %v4929
  %4997 = vmatprep.subr.bf16.mxu0 %v4928
  %4998 = vmatpush2.bf16.msra.mxu0 %v4927
  %4999 = vmatprep.subr.bf16.mxu0 %v4926
  %5000 = vmatpush2.bf16.msra.mxu0 %v4925
  %5001 = vmatprep.subr.bf16.mxu0 %v4924
  %5002 = vmatpush2.bf16.msra.mxu0 %v4923
  %5003 = vmatprep.subr.bf16.mxu0 %v4922
  %5004 = vmatpush2.bf16.msra.mxu0 %v4921
  %5005 = vmatprep.subr.bf16.mxu0 %v4920
  %5006 = vmatpush2.bf16.msra.mxu0 %v4919
  %5007 = vmatprep.mubr.bf16.mxu0 %v2765
  %5008 = vmatmul.mubr.bf16.gmra.mxu0 %v2764
  %v5009 = vpop.f32.mrf.mxu0
  %v5010 = vadd.f32 0.0, %v5009
  %v5011 = vpop.f32.mrf.mxu0
  %v5012 = vadd.f32 0.0, %v5011
  %v5013 = vpop.f32.mrf.mxu0
  %v5014 = vadd.f32 0.0, %v5013
  %v5015 = vpop.f32.mrf.mxu0
  %v5016 = vadd.f32 0.0, %v5015
  %5017 = vmatprep.mubr.bf16.mxu0 %v2768
  %5018 = vmatmul.mubr.bf16.gmra.mxu0 %v2767
  %v5019 = vpop.f32.mrf.mxu0
  %v5020 = vadd.f32 0.0, %v5019
  %v5021 = vpop.f32.mrf.mxu0
  %v5022 = vadd.f32 0.0, %v5021
  %v5023 = vpop.f32.mrf.mxu0
  %v5024 = vadd.f32 0.0, %v5023
  %v5025 = vpop.f32.mrf.mxu0
  %v5026 = vadd.f32 0.0, %v5025
  %5027 = vmatprep.mubr.bf16.mxu0 %v2771
  %5028 = vmatmul.mubr.bf16.gmra.mxu0 %v2770
  %v5029 = vpop.f32.mrf.mxu0
  %v5030 = vadd.f32 0.0, %v5029
  %v5031 = vpop.f32.mrf.mxu0
  %v5032 = vadd.f32 0.0, %v5031
  %v5033 = vpop.f32.mrf.mxu0
  %v5034 = vadd.f32 0.0, %v5033
  %v5035 = vpop.f32.mrf.mxu0
  %v5036 = vadd.f32 0.0, %v5035
  %5037 = vmatprep.mubr.bf16.mxu0 %v2774
  %5038 = vmatmul.mubr.bf16.gmra.mxu0 %v2773
  %v5039 = vpop.f32.mrf.mxu0
  %v5040 = vadd.f32 0.0, %v5039
  %v5041 = vpop.f32.mrf.mxu0
  %v5042 = vadd.f32 0.0, %v5041
  %v5043 = vpop.f32.mrf.mxu0
  %v5044 = vpop.f32.mrf.mxu0
  %5045 = vdwg.mxu0
  %5046 = vmatprep.subr.bf16.mxu0 0
  %5047 = vmatpush1.bf16.msra.mxu0 0
  %5048 = vmatprep.subr.bf16.mxu0 0
  %5049 = vmatpush1.bf16.msra.mxu0 0
  %5050 = vmatprep.subr.bf16.mxu0 0
  %5051 = vmatpush1.bf16.msra.mxu0 0
  %5052 = vmatprep.subr.bf16.mxu0 0
  %5053 = vmatpush1.bf16.msra.mxu0 0
  %5054 = vmatprep.subr.bf16.mxu0 0
  %5055 = vmatpush1.bf16.msra.mxu0 0
  %5056 = vmatprep.subr.bf16.mxu0 0
  %5057 = vmatpush1.bf16.msra.mxu0 0
  %5058 = vmatprep.subr.bf16.mxu0 %v4938
  %5059 = vmatpush1.bf16.msra.mxu0 %v4937
  %5060 = vmatprep.subr.bf16.mxu0 %v4936
  %5061 = vmatpush1.bf16.msra.mxu0 %v4935
  %5062 = vmatprep.subr.bf16.mxu0 0
  %5063 = vmatpush2.bf16.msra.mxu0 0
  %5064 = vmatprep.subr.bf16.mxu0 0
  %5065 = vmatpush2.bf16.msra.mxu0 0
  %5066 = vmatprep.subr.bf16.mxu0 0
  %5067 = vmatpush2.bf16.msra.mxu0 0
  %5068 = vmatprep.subr.bf16.mxu0 0
  %5069 = vmatpush2.bf16.msra.mxu0 0
  %5070 = vmatprep.subr.bf16.mxu0 0
  %5071 = vmatpush2.bf16.msra.mxu0 0
  %5072 = vmatprep.subr.bf16.mxu0 0
  %5073 = vmatpush2.bf16.msra.mxu0 0
  %5074 = vmatprep.subr.bf16.mxu0 0
  %5075 = vmatpush2.bf16.msra.mxu0 0
  %5076 = vmatprep.subr.bf16.mxu0 0
  %5077 = vmatpush2.bf16.msra.mxu0 0
  %5078 = vmatprep.mubr.bf16.mxu0 0
  %5079 = vmatmul.mubr.bf16.gmra.mxu0 %v2965
  %v5080 = vpop.f32.mrf.mxu0
  %v5081 = vadd.f32 %v5010, %v5080
  %v5082 = vpop.f32.mrf.mxu0
  %v5083 = vadd.f32 %v5012, %v5082
  %v5084 = vpop.f32.mrf.mxu0
  %v5085 = vadd.f32 %v5014, %v5084
  %v5086 = vpop.f32.mrf.mxu0
  %v5087 = vadd.f32 %v5016, %v5086
  %5088 = vmatprep.mubr.bf16.mxu0 0
  %5089 = vmatmul.mubr.bf16.gmra.mxu0 %v2968
  %v5090 = vpop.f32.mrf.mxu0
  %v5091 = vadd.f32 %v5020, %v5090
  %v5092 = vpop.f32.mrf.mxu0
  %v5093 = vadd.f32 %v5022, %v5092
  %v5094 = vpop.f32.mrf.mxu0
  %v5095 = vadd.f32 %v5024, %v5094
  %v5096 = vpop.f32.mrf.mxu0
  %v5097 = vadd.f32 %v5026, %v5096
  %5098 = vmatprep.mubr.bf16.mxu0 0
  %5099 = vmatmul.mubr.bf16.gmra.mxu0 %v2971
  %v5100 = vpop.f32.mrf.mxu0
  %v5101 = vadd.f32 %v5030, %v5100
  %v5102 = vpop.f32.mrf.mxu0
  %v5103 = vadd.f32 %v5032, %v5102
  %v5104 = vpop.f32.mrf.mxu0
  %v5105 = vadd.f32 %v5034, %v5104
  %v5106 = vpop.f32.mrf.mxu0
  %v5107 = vadd.f32 %v5036, %v5106
  %5108 = vmatprep.mubr.bf16.mxu0 0
  %5109 = vmatmul.mubr.bf16.gmra.mxu0 %v2974
  %v5110 = vpop.f32.mrf.mxu0
  %v5111 = vadd.f32 %v5040, %v5110
  %v5112 = vpop.f32.mrf.mxu0
  %v5113 = vadd.f32 %v5042, %v5112
  %v5114 = vpop.f32.mrf.mxu0
  %v5115 = vpop.f32.mrf.mxu0
  %5116 = vdwg.mxu0
  %v5117 = vadd.f32 %v4722, %v5081
  %v5118 = vadd.f32 %v4724, %v5083
  %v5119 = vadd.f32 %v4726, %v5085
  %v5120 = vadd.f32 %v4728, %v5087
  %v5121 = vadd.f32 %v4732, %v5091
  %v5122 = vadd.f32 %v4734, %v5093
  %v5123 = vadd.f32 %v4736, %v5095
  %v5124 = vadd.f32 %v4738, %v5097
  %v5125 = vadd.f32 %v4742, %v5101
  %v5126 = vadd.f32 %v4744, %v5103
  %v5127 = vadd.f32 %v4746, %v5105
  %v5128 = vadd.f32 %v4748, %v5107
  %v5129 = vadd.f32 %v4752, %v5111
  %v5130 = vadd.f32 %v4754, %v5113
  %s5131 = scalar_lea.vmem %s3, 2304
  %v5132 = vld [vmem:[%s5131] sm:$0xff]
  %v5133 = vld [vmem:[%s5131 + $0x8] sm:$0xff]
  %v5134 = vld [vmem:[%s5131 + $0x10] sm:$0xff]
  %v5135 = vld [vmem:[%s5131 + $0x18] sm:$0xff]
  %v5136 = vld [vmem:[%s5131 + $0x20] sm:$0xff]
  %v5137 = vld [vmem:[%s5131 + $0x28] sm:$0xff]
  %v5138 = vld [vmem:[%s5131 + $0x30] sm:$0xff]
  %v5139 = vld [vmem:[%s5131 + $0x38] sm:$0xff]
  %v5140 = vld [vmem:[%s5131 + $0x40] sm:$0xff]
  %v5141 = vld [vmem:[%s5131 + $0x48] sm:$0xff]
  %v5142 = vld [vmem:[%s5131 + $0x50] sm:$0xff]
  %v5143 = vld [vmem:[%s5131 + $0x58] sm:$0xff]
  %v5144 = vld [vmem:[%s5131 + $0x60] sm:$0xff]
  %v5145 = vld [vmem:[%s5131 + $0x68] sm:$0xff]
  %v5146 = vld [vmem:[%s5131 + $0x70] sm:$0xff]
  %v5147 = vld [vmem:[%s5131 + $0x78] sm:$0xff]
  %v5148 = vld [vmem:[%s5131 + $0x80] sm:$0xff]
  %v5149 = vld [vmem:[%s5131 + $0x88] sm:$0xff]
  %v5150 = vld [vmem:[%s5131 + $0x90] sm:$0xff]
  %v5151 = vld [vmem:[%s5131 + $0x98] sm:$0xff]
  %v5152 = vld [vmem:[%s5131 + $0xa0] sm:$0xff]
  %v5153 = vld [vmem:[%s5131 + $0xa8] sm:$0xff]
  %v5154 = vld [vmem:[%s5131 + $0xb0] sm:$0xff]
  %v5155 = vld [vmem:[%s5131 + $0xb8] sm:$0xff]
  %v5156 = vld [vmem:[%s5131 + $0xc0] sm:$0xff]
  %v5157 = vld [vmem:[%s5131 + $0xc8] sm:$0xff]
  %v5158 = vld [vmem:[%s5131 + $0xd0] sm:$0xff]
  %v5159 = vld [vmem:[%s5131 + $0xd8] sm:$0xff]
  %v5160 = vld [vmem:[%s5131 + $0xe0] sm:$0xff]
  %v5161 = vld [vmem:[%s5131 + $0xe8] sm:$0xff]
  %v5162 = vld [vmem:[%s5131 + $0xf0] sm:$0xff]
  %v5163 = vld [vmem:[%s5131 + $0xf8] sm:$0xff]
  %v5164 = vld [vmem:[%s5131 + $0x100] sm:$0xff]
  %v5165 = vld [vmem:[%s5131 + $0x108] sm:$0xff]
  %v5166 = vld [vmem:[%s5131 + $0x110] sm:$0xff]
  %v5167 = vld [vmem:[%s5131 + $0x118] sm:$0xff]
  %v5204 = vunpack.c.l.b16 %v5132
  %v5205 = vunpack.c.h.b16 %v5132
  %v5206 = vunpack.c.l.b16 %v5133
  %v5207 = vunpack.c.h.b16 %v5133
  %v5208 = vunpack.c.l.b16 %v5134
  %v5209 = vunpack.c.h.b16 %v5134
  %v5210 = vunpack.c.l.b16 %v5135
  %v5211 = vunpack.c.h.b16 %v5135
  %v5212 = vunpack.c.l.b16 %v5136
  %v5213 = vunpack.c.h.b16 %v5136
  %v5214 = vunpack.c.l.b16 %v5137
  %v5215 = vunpack.c.h.b16 %v5137
  %v5216 = vunpack.c.l.b16 %v5138
  %v5217 = vunpack.c.h.b16 %v5138
  %v5218 = vunpack.c.l.b16 %v5139
  %v5219 = vunpack.c.h.b16 %v5139
  %v5220 = vunpack.c.l.b16 %v5140
  %v5221 = vunpack.c.h.b16 %v5140
  %v5222 = vunpack.c.l.b16 %v5141
  %v5223 = vunpack.c.h.b16 %v5141
  %v5224 = vunpack.c.l.b16 %v5142
  %v5225 = vunpack.c.h.b16 %v5142
  %v5226 = vunpack.c.l.b16 %v5143
  %v5227 = vunpack.c.h.b16 %v5143
  %v5228 = vunpack.c.l.b16 %v5144
  %v5229 = vunpack.c.h.b16 %v5144
  %v5230 = vunpack.c.l.b16 %v5145
  %v5231 = vunpack.c.h.b16 %v5145
  %v5232 = vunpack.c.l.b16 %v5146
  %v5233 = vunpack.c.h.b16 %v5146
  %v5234 = vunpack.c.l.b16 %v5147
  %v5235 = vunpack.c.h.b16 %v5147
  %v5236 = vunpack.c.l.b16 %v5148
  %v5237 = vunpack.c.h.b16 %v5148
  %v5238 = vunpack.c.l.b16 %v5149
  %v5239 = vunpack.c.h.b16 %v5149
  %v5240 = vunpack.c.l.b16 %v5150
  %v5241 = vunpack.c.h.b16 %v5150
  %v5242 = vunpack.c.l.b16 %v5151
  %v5243 = vunpack.c.h.b16 %v5151
  %v5244 = vunpack.c.l.b16 %v5152
  %v5245 = vunpack.c.h.b16 %v5152
  %v5246 = vunpack.c.l.b16 %v5153
  %v5247 = vunpack.c.h.b16 %v5153
  %v5248 = vunpack.c.l.b16 %v5154
  %v5249 = vunpack.c.h.b16 %v5154
  %v5250 = vunpack.c.l.b16 %v5155
  %v5251 = vunpack.c.h.b16 %v5155
  %v5252 = vunpack.c.l.b16 %v5156
  %v5253 = vunpack.c.h.b16 %v5156
  %v5254 = vunpack.c.l.b16 %v5157
  %v5255 = vunpack.c.h.b16 %v5157
  %v5256 = vunpack.c.l.b16 %v5158
  %v5257 = vunpack.c.h.b16 %v5158
  %v5258 = vunpack.c.l.b16 %v5159
  %v5259 = vunpack.c.h.b16 %v5159
  %v5260 = vunpack.c.l.b16 %v5160
  %v5261 = vunpack.c.h.b16 %v5160
  %v5262 = vunpack.c.l.b16 %v5161
  %v5263 = vunpack.c.h.b16 %v5161
  %v5264 = vunpack.c.l.b16 %v5162
  %v5265 = vunpack.c.h.b16 %v5162
  %v5266 = vunpack.c.l.b16 %v5163
  %v5267 = vunpack.c.h.b16 %v5163
  %v5268 = vunpack.c.l.b16 %v5164
  %v5269 = vunpack.c.h.b16 %v5164
  %v5270 = vunpack.c.l.b16 %v5165
  %v5271 = vunpack.c.h.b16 %v5165
  %v5272 = vunpack.c.l.b16 %v5166
  %v5273 = vunpack.c.h.b16 %v5166
  %v5274 = vunpack.c.l.b16 %v5167
  %v5275 = vunpack.c.h.b16 %v5167
  %v5276 = vpack.c.b16 %v5206, %v5204
  %v5277 = vpack.c.b16 %v5207, %v5205
  %v5278 = vpack.c.b16 %v5210, %v5208
  %v5279 = vpack.c.b16 %v5211, %v5209
  %v5280 = vpack.c.b16 %v5214, %v5212
  %v5281 = vpack.c.b16 %v5215, %v5213
  %v5282 = vpack.c.b16 %v5218, %v5216
  %v5283 = vpack.c.b16 %v5219, %v5217
  %v5284 = vpack.c.b16 %v5222, %v5220
  %v5285 = vpack.c.b16 %v5223, %v5221
  %v5286 = vpack.c.b16 %v5226, %v5224
  %v5287 = vpack.c.b16 %v5227, %v5225
  %v5288 = vpack.c.b16 %v5230, %v5228
  %v5289 = vpack.c.b16 %v5231, %v5229
  %v5290 = vpack.c.b16 %v5234, %v5232
  %v5291 = vpack.c.b16 %v5235, %v5233
  %v5292 = vpack.c.b16 %v5238, %v5236
  %v5293 = vpack.c.b16 %v5239, %v5237
  %v5294 = vpack.c.b16 %v5242, %v5240
  %v5295 = vpack.c.b16 %v5243, %v5241
  %v5296 = vpack.c.b16 %v5246, %v5244
  %v5297 = vpack.c.b16 %v5247, %v5245
  %v5298 = vpack.c.b16 %v5250, %v5248
  %v5299 = vpack.c.b16 %v5251, %v5249
  %v5300 = vpack.c.b16 %v5254, %v5252
  %v5301 = vpack.c.b16 %v5255, %v5253
  %v5302 = vpack.c.b16 %v5258, %v5256
  %v5303 = vpack.c.b16 %v5259, %v5257
  %v5304 = vpack.c.b16 %v5262, %v5260
  %v5305 = vpack.c.b16 %v5263, %v5261
  %v5306 = vpack.c.b16 %v5266, %v5264
  %v5307 = vpack.c.b16 %v5267, %v5265
  %v5308 = vpack.c.b16 %v5270, %v5268
  %v5309 = vpack.c.b16 %v5271, %v5269
  %v5310 = vpack.c.b16 %v5274, %v5272
  %v5311 = vpack.c.b16 %v5275, %v5273
  %5348 = vmatprep.subr.bf16.mxu0 %v5291
  %5349 = vmatpush1.bf16.msra.mxu0 %v5290
  %5350 = vmatprep.subr.bf16.mxu0 %v5289
  %5351 = vmatpush1.bf16.msra.mxu0 %v5288
  %5352 = vmatprep.subr.bf16.mxu0 %v5287
  %5353 = vmatpush1.bf16.msra.mxu0 %v5286
  %5354 = vmatprep.subr.bf16.mxu0 %v5285
  %5355 = vmatpush1.bf16.msra.mxu0 %v5284
  %5356 = vmatprep.subr.bf16.mxu0 %v5283
  %5357 = vmatpush1.bf16.msra.mxu0 %v5282
  %5358 = vmatprep.subr.bf16.mxu0 %v5281
  %5359 = vmatpush1.bf16.msra.mxu0 %v5280
  %5360 = vmatprep.subr.bf16.mxu0 %v5279
  %5361 = vmatpush1.bf16.msra.mxu0 %v5278
  %5362 = vmatprep.subr.bf16.mxu0 %v5277
  %5363 = vmatpush1.bf16.msra.mxu0 %v5276
  %5364 = vmatprep.subr.bf16.mxu0 %v5307
  %5365 = vmatpush2.bf16.msra.mxu0 %v5306
  %5366 = vmatprep.subr.bf16.mxu0 %v5305
  %5367 = vmatpush2.bf16.msra.mxu0 %v5304
  %5368 = vmatprep.subr.bf16.mxu0 %v5303
  %5369 = vmatpush2.bf16.msra.mxu0 %v5302
  %5370 = vmatprep.subr.bf16.mxu0 %v5301
  %5371 = vmatpush2.bf16.msra.mxu0 %v5300
  %5372 = vmatprep.subr.bf16.mxu0 %v5299
  %5373 = vmatpush2.bf16.msra.mxu0 %v5298
  %5374 = vmatprep.subr.bf16.mxu0 %v5297
  %5375 = vmatpush2.bf16.msra.mxu0 %v5296
  %5376 = vmatprep.subr.bf16.mxu0 %v5295
  %5377 = vmatpush2.bf16.msra.mxu0 %v5294
  %5378 = vmatprep.subr.bf16.mxu0 %v5293
  %5379 = vmatpush2.bf16.msra.mxu0 %v5292
  %5380 = vmatprep.mubr.bf16.mxu0 %v3219
  %5381 = vmatmul.mubr.bf16.gmra.mxu0 %v3218
  %v5382 = vpop.f32.mrf.mxu0
  %v5383 = vadd.f32 0.0, %v5382
  %v5384 = vpop.f32.mrf.mxu0
  %v5385 = vadd.f32 0.0, %v5384
  %v5386 = vpop.f32.mrf.mxu0
  %v5387 = vadd.f32 0.0, %v5386
  %v5388 = vpop.f32.mrf.mxu0
  %v5389 = vadd.f32 0.0, %v5388
  %5390 = vmatprep.mubr.bf16.mxu0 %v3222
  %5391 = vmatmul.mubr.bf16.gmra.mxu0 %v3221
  %v5392 = vpop.f32.mrf.mxu0
  %v5393 = vadd.f32 0.0, %v5392
  %v5394 = vpop.f32.mrf.mxu0
  %v5395 = vadd.f32 0.0, %v5394
  %v5396 = vpop.f32.mrf.mxu0
  %v5397 = vadd.f32 0.0, %v5396
  %v5398 = vpop.f32.mrf.mxu0
  %v5399 = vadd.f32 0.0, %v5398
  %5400 = vmatprep.mubr.bf16.mxu0 %v3225
  %5401 = vmatmul.mubr.bf16.gmra.mxu0 %v3224
  %v5402 = vpop.f32.mrf.mxu0
  %v5403 = vadd.f32 0.0, %v5402
  %v5404 = vpop.f32.mrf.mxu0
  %v5405 = vadd.f32 0.0, %v5404
  %v5406 = vpop.f32.mrf.mxu0
  %v5407 = vadd.f32 0.0, %v5406
  %v5408 = vpop.f32.mrf.mxu0
  %v5409 = vadd.f32 0.0, %v5408
  %5410 = vmatprep.mubr.bf16.mxu0 %v3228
  %5411 = vmatmul.mubr.bf16.gmra.mxu0 %v3227
  %v5412 = vpop.f32.mrf.mxu0
  %v5413 = vadd.f32 0.0, %v5412
  %v5414 = vpop.f32.mrf.mxu0
  %v5415 = vadd.f32 0.0, %v5414
  %v5416 = vpop.f32.mrf.mxu0
  %v5417 = vpop.f32.mrf.mxu0
  %5418 = vdwg.mxu0
  %5419 = vmatprep.subr.bf16.mxu0 0
  %5420 = vmatpush1.bf16.msra.mxu0 0
  %5421 = vmatprep.subr.bf16.mxu0 0
  %5422 = vmatpush1.bf16.msra.mxu0 0
  %5423 = vmatprep.subr.bf16.mxu0 0
  %5424 = vmatpush1.bf16.msra.mxu0 0
  %5425 = vmatprep.subr.bf16.mxu0 0
  %5426 = vmatpush1.bf16.msra.mxu0 0
  %5427 = vmatprep.subr.bf16.mxu0 0
  %5428 = vmatpush1.bf16.msra.mxu0 0
  %5429 = vmatprep.subr.bf16.mxu0 0
  %5430 = vmatpush1.bf16.msra.mxu0 0
  %5431 = vmatprep.subr.bf16.mxu0 %v5311
  %5432 = vmatpush1.bf16.msra.mxu0 %v5310
  %5433 = vmatprep.subr.bf16.mxu0 %v5309
  %5434 = vmatpush1.bf16.msra.mxu0 %v5308
  %5435 = vmatprep.subr.bf16.mxu0 0
  %5436 = vmatpush2.bf16.msra.mxu0 0
  %5437 = vmatprep.subr.bf16.mxu0 0
  %5438 = vmatpush2.bf16.msra.mxu0 0
  %5439 = vmatprep.subr.bf16.mxu0 0
  %5440 = vmatpush2.bf16.msra.mxu0 0
  %5441 = vmatprep.subr.bf16.mxu0 0
  %5442 = vmatpush2.bf16.msra.mxu0 0
  %5443 = vmatprep.subr.bf16.mxu0 0
  %5444 = vmatpush2.bf16.msra.mxu0 0
  %5445 = vmatprep.subr.bf16.mxu0 0
  %5446 = vmatpush2.bf16.msra.mxu0 0
  %5447 = vmatprep.subr.bf16.mxu0 0
  %5448 = vmatpush2.bf16.msra.mxu0 0
  %5449 = vmatprep.subr.bf16.mxu0 0
  %5450 = vmatpush2.bf16.msra.mxu0 0
  %5451 = vmatprep.mubr.bf16.mxu0 0
  %5452 = vmatmul.mubr.bf16.gmra.mxu0 %v3419
  %v5453 = vpop.f32.mrf.mxu0
  %v5454 = vadd.f32 %v5383, %v5453
  %v5455 = vpop.f32.mrf.mxu0
  %v5456 = vadd.f32 %v5385, %v5455
  %v5457 = vpop.f32.mrf.mxu0
  %v5458 = vadd.f32 %v5387, %v5457
  %v5459 = vpop.f32.mrf.mxu0
  %v5460 = vadd.f32 %v5389, %v5459
  %5461 = vmatprep.mubr.bf16.mxu0 0
  %5462 = vmatmul.mubr.bf16.gmra.mxu0 %v3422
  %v5463 = vpop.f32.mrf.mxu0
  %v5464 = vadd.f32 %v5393, %v5463
  %v5465 = vpop.f32.mrf.mxu0
  %v5466 = vadd.f32 %v5395, %v5465
  %v5467 = vpop.f32.mrf.mxu0
  %v5468 = vadd.f32 %v5397, %v5467
  %v5469 = vpop.f32.mrf.mxu0
  %v5470 = vadd.f32 %v5399, %v5469
  %5471 = vmatprep.mubr.bf16.mxu0 0
  %5472 = vmatmul.mubr.bf16.gmra.mxu0 %v3425
  %v5473 = vpop.f32.mrf.mxu0
  %v5474 = vadd.f32 %v5403, %v5473
  %v5475 = vpop.f32.mrf.mxu0
  %v5476 = vadd.f32 %v5405, %v5475
  %v5477 = vpop.f32.mrf.mxu0
  %v5478 = vadd.f32 %v5407, %v5477
  %v5479 = vpop.f32.mrf.mxu0
  %v5480 = vadd.f32 %v5409, %v5479
  %5481 = vmatprep.mubr.bf16.mxu0 0
  %5482 = vmatmul.mubr.bf16.gmra.mxu0 %v3428
  %v5483 = vpop.f32.mrf.mxu0
  %v5484 = vadd.f32 %v5413, %v5483
  %v5485 = vpop.f32.mrf.mxu0
  %v5486 = vadd.f32 %v5415, %v5485
  %v5487 = vpop.f32.mrf.mxu0
  %v5488 = vpop.f32.mrf.mxu0
  %5489 = vdwg.mxu0
  %v5490 = vadd.f32 %v5117, %v5454
  %v5491 = vadd.f32 %v5118, %v5456
  %v5492 = vadd.f32 %v5119, %v5458
  %v5493 = vadd.f32 %v5120, %v5460
  %v5494 = vadd.f32 %v5121, %v5464
  %v5495 = vadd.f32 %v5122, %v5466
  %v5496 = vadd.f32 %v5123, %v5468
  %v5497 = vadd.f32 %v5124, %v5470
  %v5498 = vadd.f32 %v5125, %v5474
  %v5499 = vadd.f32 %v5126, %v5476
  %v5500 = vadd.f32 %v5127, %v5478
  %v5501 = vadd.f32 %v5128, %v5480
  %v5502 = vadd.f32 %v5129, %v5484
  %v5503 = vadd.f32 %v5130, %v5486
  %s5504 = scalar_lea.vmem %s3, 2592
  %v5505 = vld [vmem:[%s5504] sm:$0xff]
  %v5506 = vld [vmem:[%s5504 + $0x8] sm:$0xff]
  %v5507 = vld [vmem:[%s5504 + $0x10] sm:$0xff]
  %v5508 = vld [vmem:[%s5504 + $0x18] sm:$0xff]
  %v5509 = vld [vmem:[%s5504 + $0x20] sm:$0xff]
  %v5510 = vld [vmem:[%s5504 + $0x28] sm:$0xff]
  %v5511 = vld [vmem:[%s5504 + $0x30] sm:$0xff]
  %v5512 = vld [vmem:[%s5504 + $0x38] sm:$0xff]
  %v5513 = vld [vmem:[%s5504 + $0x40] sm:$0xff]
  %v5514 = vld [vmem:[%s5504 + $0x48] sm:$0xff]
  %v5515 = vld [vmem:[%s5504 + $0x50] sm:$0xff]
  %v5516 = vld [vmem:[%s5504 + $0x58] sm:$0xff]
  %v5517 = vld [vmem:[%s5504 + $0x60] sm:$0xff]
  %v5518 = vld [vmem:[%s5504 + $0x68] sm:$0xff]
  %v5519 = vld [vmem:[%s5504 + $0x70] sm:$0xff]
  %v5520 = vld [vmem:[%s5504 + $0x78] sm:$0xff]
  %v5521 = vld [vmem:[%s5504 + $0x80] sm:$0xff]
  %v5522 = vld [vmem:[%s5504 + $0x88] sm:$0xff]
  %v5523 = vld [vmem:[%s5504 + $0x90] sm:$0xff]
  %v5524 = vld [vmem:[%s5504 + $0x98] sm:$0xff]
  %v5525 = vld [vmem:[%s5504 + $0xa0] sm:$0xff]
  %v5526 = vld [vmem:[%s5504 + $0xa8] sm:$0xff]
  %v5527 = vld [vmem:[%s5504 + $0xb0] sm:$0xff]
  %v5528 = vld [vmem:[%s5504 + $0xb8] sm:$0xff]
  %v5529 = vld [vmem:[%s5504 + $0xc0] sm:$0xff]
  %v5530 = vld [vmem:[%s5504 + $0xc8] sm:$0xff]
  %v5531 = vld [vmem:[%s5504 + $0xd0] sm:$0xff]
  %v5532 = vld [vmem:[%s5504 + $0xd8] sm:$0xff]
  %v5533 = vld [vmem:[%s5504 + $0xe0] sm:$0xff]
  %v5534 = vld [vmem:[%s5504 + $0xe8] sm:$0xff]
  %v5535 = vld [vmem:[%s5504 + $0xf0] sm:$0xff]
  %v5536 = vld [vmem:[%s5504 + $0xf8] sm:$0xff]
  %v5537 = vld [vmem:[%s5504 + $0x100] sm:$0xff]
  %v5538 = vld [vmem:[%s5504 + $0x108] sm:$0xff]
  %v5539 = vld [vmem:[%s5504 + $0x110] sm:$0xff]
  %v5540 = vld [vmem:[%s5504 + $0x118] sm:$0xff]
  %v5577 = vunpack.c.l.b16 %v5505
  %v5578 = vunpack.c.h.b16 %v5505
  %v5579 = vunpack.c.l.b16 %v5506
  %v5580 = vunpack.c.h.b16 %v5506
  %v5581 = vunpack.c.l.b16 %v5507
  %v5582 = vunpack.c.h.b16 %v5507
  %v5583 = vunpack.c.l.b16 %v5508
  %v5584 = vunpack.c.h.b16 %v5508
  %v5585 = vunpack.c.l.b16 %v5509
  %v5586 = vunpack.c.h.b16 %v5509
  %v5587 = vunpack.c.l.b16 %v5510
  %v5588 = vunpack.c.h.b16 %v5510
  %v5589 = vunpack.c.l.b16 %v5511
  %v5590 = vunpack.c.h.b16 %v5511
  %v5591 = vunpack.c.l.b16 %v5512
  %v5592 = vunpack.c.h.b16 %v5512
  %v5593 = vunpack.c.l.b16 %v5513
  %v5594 = vunpack.c.h.b16 %v5513
  %v5595 = vunpack.c.l.b16 %v5514
  %v5596 = vunpack.c.h.b16 %v5514
  %v5597 = vunpack.c.l.b16 %v5515
  %v5598 = vunpack.c.h.b16 %v5515
  %v5599 = vunpack.c.l.b16 %v5516
  %v5600 = vunpack.c.h.b16 %v5516
  %v5601 = vunpack.c.l.b16 %v5517
  %v5602 = vunpack.c.h.b16 %v5517
  %v5603 = vunpack.c.l.b16 %v5518
  %v5604 = vunpack.c.h.b16 %v5518
  %v5605 = vunpack.c.l.b16 %v5519
  %v5606 = vunpack.c.h.b16 %v5519
  %v5607 = vunpack.c.l.b16 %v5520
  %v5608 = vunpack.c.h.b16 %v5520
  %v5609 = vunpack.c.l.b16 %v5521
  %v5610 = vunpack.c.h.b16 %v5521
  %v5611 = vunpack.c.l.b16 %v5522
  %v5612 = vunpack.c.h.b16 %v5522
  %v5613 = vunpack.c.l.b16 %v5523
  %v5614 = vunpack.c.h.b16 %v5523
  %v5615 = vunpack.c.l.b16 %v5524
  %v5616 = vunpack.c.h.b16 %v5524
  %v5617 = vunpack.c.l.b16 %v5525
  %v5618 = vunpack.c.h.b16 %v5525
  %v5619 = vunpack.c.l.b16 %v5526
  %v5620 = vunpack.c.h.b16 %v5526
  %v5621 = vunpack.c.l.b16 %v5527
  %v5622 = vunpack.c.h.b16 %v5527
  %v5623 = vunpack.c.l.b16 %v5528
  %v5624 = vunpack.c.h.b16 %v5528
  %v5625 = vunpack.c.l.b16 %v5529
  %v5626 = vunpack.c.h.b16 %v5529
  %v5627 = vunpack.c.l.b16 %v5530
  %v5628 = vunpack.c.h.b16 %v5530
  %v5629 = vunpack.c.l.b16 %v5531
  %v5630 = vunpack.c.h.b16 %v5531
  %v5631 = vunpack.c.l.b16 %v5532
  %v5632 = vunpack.c.h.b16 %v5532
  %v5633 = vunpack.c.l.b16 %v5533
  %v5634 = vunpack.c.h.b16 %v5533
  %v5635 = vunpack.c.l.b16 %v5534
  %v5636 = vunpack.c.h.b16 %v5534
  %v5637 = vunpack.c.l.b16 %v5535
  %v5638 = vunpack.c.h.b16 %v5535
  %v5639 = vunpack.c.l.b16 %v5536
  %v5640 = vunpack.c.h.b16 %v5536
  %v5641 = vunpack.c.l.b16 %v5537
  %v5642 = vunpack.c.h.b16 %v5537
  %v5643 = vunpack.c.l.b16 %v5538
  %v5644 = vunpack.c.h.b16 %v5538
  %v5645 = vunpack.c.l.b16 %v5539
  %v5646 = vunpack.c.h.b16 %v5539
  %v5647 = vunpack.c.l.b16 %v5540
  %v5648 = vunpack.c.h.b16 %v5540
  %v5649 = vpack.c.b16 %v5579, %v5577
  %v5650 = vpack.c.b16 %v5580, %v5578
  %v5651 = vpack.c.b16 %v5583, %v5581
  %v5652 = vpack.c.b16 %v5584, %v5582
  %v5653 = vpack.c.b16 %v5587, %v5585
  %v5654 = vpack.c.b16 %v5588, %v5586
  %v5655 = vpack.c.b16 %v5591, %v5589
  %v5656 = vpack.c.b16 %v5592, %v5590
  %v5657 = vpack.c.b16 %v5595, %v5593
  %v5658 = vpack.c.b16 %v5596, %v5594
  %v5659 = vpack.c.b16 %v5599, %v5597
  %v5660 = vpack.c.b16 %v5600, %v5598
  %v5661 = vpack.c.b16 %v5603, %v5601
  %v5662 = vpack.c.b16 %v5604, %v5602
  %v5663 = vpack.c.b16 %v5607, %v5605
  %v5664 = vpack.c.b16 %v5608, %v5606
  %v5665 = vpack.c.b16 %v5611, %v5609
  %v5666 = vpack.c.b16 %v5612, %v5610
  %v5667 = vpack.c.b16 %v5615, %v5613
  %v5668 = vpack.c.b16 %v5616, %v5614
  %v5669 = vpack.c.b16 %v5619, %v5617
  %v5670 = vpack.c.b16 %v5620, %v5618
  %v5671 = vpack.c.b16 %v5623, %v5621
  %v5672 = vpack.c.b16 %v5624, %v5622
  %v5673 = vpack.c.b16 %v5627, %v5625
  %v5674 = vpack.c.b16 %v5628, %v5626
  %v5675 = vpack.c.b16 %v5631, %v5629
  %v5676 = vpack.c.b16 %v5632, %v5630
  %v5677 = vpack.c.b16 %v5635, %v5633
  %v5678 = vpack.c.b16 %v5636, %v5634
  %v5679 = vpack.c.b16 %v5639, %v5637
  %v5680 = vpack.c.b16 %v5640, %v5638
  %v5681 = vpack.c.b16 %v5643, %v5641
  %v5682 = vpack.c.b16 %v5644, %v5642
  %v5683 = vpack.c.b16 %v5647, %v5645
  %v5684 = vpack.c.b16 %v5648, %v5646
  %5721 = vmatprep.subr.bf16.mxu0 %v5664
  %5722 = vmatpush1.bf16.msra.mxu0 %v5663
  %5723 = vmatprep.subr.bf16.mxu0 %v5662
  %5724 = vmatpush1.bf16.msra.mxu0 %v5661
  %5725 = vmatprep.subr.bf16.mxu0 %v5660
  %5726 = vmatpush1.bf16.msra.mxu0 %v5659
  %5727 = vmatprep.subr.bf16.mxu0 %v5658
  %5728 = vmatpush1.bf16.msra.mxu0 %v5657
  %5729 = vmatprep.subr.bf16.mxu0 %v5656
  %5730 = vmatpush1.bf16.msra.mxu0 %v5655
  %5731 = vmatprep.subr.bf16.mxu0 %v5654
  %5732 = vmatpush1.bf16.msra.mxu0 %v5653
  %5733 = vmatprep.subr.bf16.mxu0 %v5652
  %5734 = vmatpush1.bf16.msra.mxu0 %v5651
  %5735 = vmatprep.subr.bf16.mxu0 %v5650
  %5736 = vmatpush1.bf16.msra.mxu0 %v5649
  %5737 = vmatprep.subr.bf16.mxu0 %v5680
  %5738 = vmatpush2.bf16.msra.mxu0 %v5679
  %5739 = vmatprep.subr.bf16.mxu0 %v5678
  %5740 = vmatpush2.bf16.msra.mxu0 %v5677
  %5741 = vmatprep.subr.bf16.mxu0 %v5676
  %5742 = vmatpush2.bf16.msra.mxu0 %v5675
  %5743 = vmatprep.subr.bf16.mxu0 %v5674
  %5744 = vmatpush2.bf16.msra.mxu0 %v5673
  %5745 = vmatprep.subr.bf16.mxu0 %v5672
  %5746 = vmatpush2.bf16.msra.mxu0 %v5671
  %5747 = vmatprep.subr.bf16.mxu0 %v5670
  %5748 = vmatpush2.bf16.msra.mxu0 %v5669
  %5749 = vmatprep.subr.bf16.mxu0 %v5668
  %5750 = vmatpush2.bf16.msra.mxu0 %v5667
  %5751 = vmatprep.subr.bf16.mxu0 %v5666
  %5752 = vmatpush2.bf16.msra.mxu0 %v5665
  %5753 = vmatprep.mubr.bf16.mxu0 %v3673
  %5754 = vmatmul.mubr.bf16.gmra.mxu0 %v3672
  %v5755 = vpop.f32.mrf.mxu0
  %v5756 = vadd.f32 0.0, %v5755
  %v5757 = vpop.f32.mrf.mxu0
  %v5758 = vadd.f32 0.0, %v5757
  %v5759 = vpop.f32.mrf.mxu0
  %v5760 = vadd.f32 0.0, %v5759
  %v5761 = vpop.f32.mrf.mxu0
  %v5762 = vadd.f32 0.0, %v5761
  %5763 = vmatprep.mubr.bf16.mxu0 %v3676
  %5764 = vmatmul.mubr.bf16.gmra.mxu0 %v3675
  %v5765 = vpop.f32.mrf.mxu0
  %v5766 = vadd.f32 0.0, %v5765
  %v5767 = vpop.f32.mrf.mxu0
  %v5768 = vadd.f32 0.0, %v5767
  %v5769 = vpop.f32.mrf.mxu0
  %v5770 = vadd.f32 0.0, %v5769
  %v5771 = vpop.f32.mrf.mxu0
  %v5772 = vadd.f32 0.0, %v5771
  %5773 = vmatprep.mubr.bf16.mxu0 %v3679
  %5774 = vmatmul.mubr.bf16.gmra.mxu0 %v3678
  %v5775 = vpop.f32.mrf.mxu0
  %v5776 = vadd.f32 0.0, %v5775
  %v5777 = vpop.f32.mrf.mxu0
  %v5778 = vadd.f32 0.0, %v5777
  %v5779 = vpop.f32.mrf.mxu0
  %v5780 = vadd.f32 0.0, %v5779
  %v5781 = vpop.f32.mrf.mxu0
  %v5782 = vadd.f32 0.0, %v5781
  %5783 = vmatprep.mubr.bf16.mxu0 %v3682
  %5784 = vmatmul.mubr.bf16.gmra.mxu0 %v3681
  %v5785 = vpop.f32.mrf.mxu0
  %v5786 = vadd.f32 0.0, %v5785
  %v5787 = vpop.f32.mrf.mxu0
  %v5788 = vadd.f32 0.0, %v5787
  %v5789 = vpop.f32.mrf.mxu0
  %v5790 = vpop.f32.mrf.mxu0
  %5791 = vdwg.mxu0
  %5792 = vmatprep.subr.bf16.mxu0 0
  %5793 = vmatpush1.bf16.msra.mxu0 0
  %5794 = vmatprep.subr.bf16.mxu0 0
  %5795 = vmatpush1.bf16.msra.mxu0 0
  %5796 = vmatprep.subr.bf16.mxu0 0
  %5797 = vmatpush1.bf16.msra.mxu0 0
  %5798 = vmatprep.subr.bf16.mxu0 0
  %5799 = vmatpush1.bf16.msra.mxu0 0
  %5800 = vmatprep.subr.bf16.mxu0 0
  %5801 = vmatpush1.bf16.msra.mxu0 0
  %5802 = vmatprep.subr.bf16.mxu0 0
  %5803 = vmatpush1.bf16.msra.mxu0 0
  %5804 = vmatprep.subr.bf16.mxu0 %v5684
  %5805 = vmatpush1.bf16.msra.mxu0 %v5683
  %5806 = vmatprep.subr.bf16.mxu0 %v5682
  %5807 = vmatpush1.bf16.msra.mxu0 %v5681
  %5808 = vmatprep.subr.bf16.mxu0 0
  %5809 = vmatpush2.bf16.msra.mxu0 0
  %5810 = vmatprep.subr.bf16.mxu0 0
  %5811 = vmatpush2.bf16.msra.mxu0 0
  %5812 = vmatprep.subr.bf16.mxu0 0
  %5813 = vmatpush2.bf16.msra.mxu0 0
  %5814 = vmatprep.subr.bf16.mxu0 0
  %5815 = vmatpush2.bf16.msra.mxu0 0
  %5816 = vmatprep.subr.bf16.mxu0 0
  %5817 = vmatpush2.bf16.msra.mxu0 0
  %5818 = vmatprep.subr.bf16.mxu0 0
  %5819 = vmatpush2.bf16.msra.mxu0 0
  %5820 = vmatprep.subr.bf16.mxu0 0
  %5821 = vmatpush2.bf16.msra.mxu0 0
  %5822 = vmatprep.subr.bf16.mxu0 0
  %5823 = vmatpush2.bf16.msra.mxu0 0
  %5824 = vmatprep.mubr.bf16.mxu0 0
  %5825 = vmatmul.mubr.bf16.gmra.mxu0 %v3873
  %v5826 = vpop.f32.mrf.mxu0
  %v5827 = vadd.f32 %v5756, %v5826
  %v5828 = vpop.f32.mrf.mxu0
  %v5829 = vadd.f32 %v5758, %v5828
  %v5830 = vpop.f32.mrf.mxu0
  %v5831 = vadd.f32 %v5760, %v5830
  %v5832 = vpop.f32.mrf.mxu0
  %v5833 = vadd.f32 %v5762, %v5832
  %5834 = vmatprep.mubr.bf16.mxu0 0
  %5835 = vmatmul.mubr.bf16.gmra.mxu0 %v3876
  %v5836 = vpop.f32.mrf.mxu0
  %v5837 = vadd.f32 %v5766, %v5836
  %v5838 = vpop.f32.mrf.mxu0
  %v5839 = vadd.f32 %v5768, %v5838
  %v5840 = vpop.f32.mrf.mxu0
  %v5841 = vadd.f32 %v5770, %v5840
  %v5842 = vpop.f32.mrf.mxu0
  %v5843 = vadd.f32 %v5772, %v5842
  %5844 = vmatprep.mubr.bf16.mxu0 0
  %5845 = vmatmul.mubr.bf16.gmra.mxu0 %v3879
  %v5846 = vpop.f32.mrf.mxu0
  %v5847 = vadd.f32 %v5776, %v5846
  %v5848 = vpop.f32.mrf.mxu0
  %v5849 = vadd.f32 %v5778, %v5848
  %v5850 = vpop.f32.mrf.mxu0
  %v5851 = vadd.f32 %v5780, %v5850
  %v5852 = vpop.f32.mrf.mxu0
  %v5853 = vadd.f32 %v5782, %v5852
  %5854 = vmatprep.mubr.bf16.mxu0 0
  %5855 = vmatmul.mubr.bf16.gmra.mxu0 %v3882
  %v5856 = vpop.f32.mrf.mxu0
  %v5857 = vadd.f32 %v5786, %v5856
  %v5858 = vpop.f32.mrf.mxu0
  %v5859 = vadd.f32 %v5788, %v5858
  %v5860 = vpop.f32.mrf.mxu0
  %v5861 = vpop.f32.mrf.mxu0
  %5862 = vdwg.mxu0
  %v5863 = vadd.f32 %v5490, %v5827
  %v5864 = vadd.f32 %v5491, %v5829
  %v5865 = vadd.f32 %v5492, %v5831
  %v5866 = vadd.f32 %v5493, %v5833
  %v5867 = vadd.f32 %v5494, %v5837
  %v5868 = vadd.f32 %v5495, %v5839
  %v5869 = vadd.f32 %v5496, %v5841
  %v5870 = vadd.f32 %v5497, %v5843
  %v5871 = vadd.f32 %v5498, %v5847
  %v5872 = vadd.f32 %v5499, %v5849
  %v5873 = vadd.f32 %v5500, %v5851
  %v5874 = vadd.f32 %v5501, %v5853
  %v5875 = vadd.f32 %v5502, %v5857
  %v5876 = vadd.f32 %v5503, %v5859
  %v5877 = vmax.f32 %v4026, %v5863
  %v5878 = vmax.f32 %v4027, %v5864
  %v5879 = vmax.f32 %v4028, %v5865
  %v5880 = vmax.f32 %v4029, %v5866
  %v5881 = vmax.f32 %v4030, %v5867
  %v5882 = vmax.f32 %v4031, %v5868
  %v5883 = vmax.f32 %v4032, %v5869
  %v5884 = vmax.f32 %v4033, %v5870
  %v5885 = vmax.f32 %v4034, %v5871
  %v5886 = vmax.f32 %v4035, %v5872
  %v5887 = vmax.f32 %v4036, %v5873
  %v5888 = vmax.f32 %v4037, %v5874
  %v5889 = vmax.f32 %v4038, %v5875
  %v5890 = vmax.f32 %v4039, %v5876
  %5891 = vmatprep.subr.bf16.mxu0 %v2078
  %5892 = vmatpush1.bf16.msra.mxu0 %v2077
  %5893 = vmatprep.subr.bf16.mxu0 %v2076
  %5894 = vmatpush1.bf16.msra.mxu0 %v2075
  %5895 = vmatprep.subr.bf16.mxu0 %v2074
  %5896 = vmatpush1.bf16.msra.mxu0 %v2073
  %5897 = vmatprep.subr.bf16.mxu0 %v2072
  %5898 = vmatpush1.bf16.msra.mxu0 %v2071
  %5899 = vmatprep.subr.bf16.mxu0 %v2070
  %5900 = vmatpush1.bf16.msra.mxu0 %v2069
  %5901 = vmatprep.subr.bf16.mxu0 %v2068
  %5902 = vmatpush1.bf16.msra.mxu0 %v2067
  %5903 = vmatprep.subr.bf16.mxu0 %v2066
  %5904 = vmatpush1.bf16.msra.mxu0 %v2065
  %5905 = vmatprep.subr.bf16.mxu0 %v2064
  %5906 = vmatpush1.bf16.msra.mxu0 %v2063
  %5907 = vmatprep.subr.bf16.mxu0 %v2094
  %5908 = vmatpush2.bf16.msra.mxu0 %v2093
  %5909 = vmatprep.subr.bf16.mxu0 %v2092
  %5910 = vmatpush2.bf16.msra.mxu0 %v2091
  %5911 = vmatprep.subr.bf16.mxu0 %v2090
  %5912 = vmatpush2.bf16.msra.mxu0 %v2089
  %5913 = vmatprep.subr.bf16.mxu0 %v2088
  %5914 = vmatpush2.bf16.msra.mxu0 %v2087
  %5915 = vmatprep.subr.bf16.mxu0 %v2086
  %5916 = vmatpush2.bf16.msra.mxu0 %v2085
  %5917 = vmatprep.subr.bf16.mxu0 %v2084
  %5918 = vmatpush2.bf16.msra.mxu0 %v2083
  %5919 = vmatprep.subr.bf16.mxu0 %v2082
  %5920 = vmatpush2.bf16.msra.mxu0 %v2081
  %5921 = vmatprep.subr.bf16.mxu0 %v2080
  %5922 = vmatpush2.bf16.msra.mxu0 %v2079
  %5923 = vmatprep.mubr.bf16.mxu0 %v2765
  %5924 = vmatmul.mubr.bf16.gmra.mxu0 %v2764
  %v5925 = vpop.f32.mrf.mxu0
  %v5926 = vadd.f32 0.0, %v5925
  %v5927 = vpop.f32.mrf.mxu0
  %v5928 = vadd.f32 0.0, %v5927
  %v5929 = vpop.f32.mrf.mxu0
  %v5930 = vadd.f32 0.0, %v5929
  %v5931 = vpop.f32.mrf.mxu0
  %v5932 = vadd.f32 0.0, %v5931
  %5933 = vmatprep.mubr.bf16.mxu0 %v2768
  %5934 = vmatmul.mubr.bf16.gmra.mxu0 %v2767
  %v5935 = vpop.f32.mrf.mxu0
  %v5936 = vadd.f32 0.0, %v5935
  %v5937 = vpop.f32.mrf.mxu0
  %v5938 = vadd.f32 0.0, %v5937
  %v5939 = vpop.f32.mrf.mxu0
  %v5940 = vadd.f32 0.0, %v5939
  %v5941 = vpop.f32.mrf.mxu0
  %v5942 = vadd.f32 0.0, %v5941
  %5943 = vmatprep.mubr.bf16.mxu0 %v2771
  %5944 = vmatmul.mubr.bf16.gmra.mxu0 %v2770
  %v5945 = vpop.f32.mrf.mxu0
  %v5946 = vadd.f32 0.0, %v5945
  %v5947 = vpop.f32.mrf.mxu0
  %v5948 = vadd.f32 0.0, %v5947
  %v5949 = vpop.f32.mrf.mxu0
  %v5950 = vadd.f32 0.0, %v5949
  %v5951 = vpop.f32.mrf.mxu0
  %v5952 = vadd.f32 0.0, %v5951
  %5953 = vmatprep.mubr.bf16.mxu0 %v2774
  %5954 = vmatmul.mubr.bf16.gmra.mxu0 %v2773
  %v5955 = vpop.f32.mrf.mxu0
  %v5956 = vadd.f32 0.0, %v5955
  %v5957 = vpop.f32.mrf.mxu0
  %v5958 = vadd.f32 0.0, %v5957
  %v5959 = vpop.f32.mrf.mxu0
  %v5960 = vpop.f32.mrf.mxu0
  %5961 = vdwg.mxu0
  %5962 = vmatprep.subr.bf16.mxu0 0
  %5963 = vmatpush1.bf16.msra.mxu0 0
  %5964 = vmatprep.subr.bf16.mxu0 0
  %5965 = vmatpush1.bf16.msra.mxu0 0
  %5966 = vmatprep.subr.bf16.mxu0 0
  %5967 = vmatpush1.bf16.msra.mxu0 0
  %5968 = vmatprep.subr.bf16.mxu0 0
  %5969 = vmatpush1.bf16.msra.mxu0 0
  %5970 = vmatprep.subr.bf16.mxu0 0
  %5971 = vmatpush1.bf16.msra.mxu0 0
  %5972 = vmatprep.subr.bf16.mxu0 0
  %5973 = vmatpush1.bf16.msra.mxu0 0
  %5974 = vmatprep.subr.bf16.mxu0 %v2098
  %5975 = vmatpush1.bf16.msra.mxu0 %v2097
  %5976 = vmatprep.subr.bf16.mxu0 %v2096
  %5977 = vmatpush1.bf16.msra.mxu0 %v2095
  %5978 = vmatprep.subr.bf16.mxu0 0
  %5979 = vmatpush2.bf16.msra.mxu0 0
  %5980 = vmatprep.subr.bf16.mxu0 0
  %5981 = vmatpush2.bf16.msra.mxu0 0
  %5982 = vmatprep.subr.bf16.mxu0 0
  %5983 = vmatpush2.bf16.msra.mxu0 0
  %5984 = vmatprep.subr.bf16.mxu0 0
  %5985 = vmatpush2.bf16.msra.mxu0 0
  %5986 = vmatprep.subr.bf16.mxu0 0
  %5987 = vmatpush2.bf16.msra.mxu0 0
  %5988 = vmatprep.subr.bf16.mxu0 0
  %5989 = vmatpush2.bf16.msra.mxu0 0
  %5990 = vmatprep.subr.bf16.mxu0 0
  %5991 = vmatpush2.bf16.msra.mxu0 0
  %5992 = vmatprep.subr.bf16.mxu0 0
  %5993 = vmatpush2.bf16.msra.mxu0 0
  %5994 = vmatprep.mubr.bf16.mxu0 0
  %5995 = vmatmul.mubr.bf16.gmra.mxu0 %v2965
  %v5996 = vpop.f32.mrf.mxu0
  %v5997 = vadd.f32 %v5926, %v5996
  %v5998 = vpop.f32.mrf.mxu0
  %v5999 = vadd.f32 %v5928, %v5998
  %v6000 = vpop.f32.mrf.mxu0
  %v6001 = vadd.f32 %v5930, %v6000
  %v6002 = vpop.f32.mrf.mxu0
  %v6003 = vadd.f32 %v5932, %v6002
  %6004 = vmatprep.mubr.bf16.mxu0 0
  %6005 = vmatmul.mubr.bf16.gmra.mxu0 %v2968
  %v6006 = vpop.f32.mrf.mxu0
  %v6007 = vadd.f32 %v5936, %v6006
  %v6008 = vpop.f32.mrf.mxu0
  %v6009 = vadd.f32 %v5938, %v6008
  %v6010 = vpop.f32.mrf.mxu0
  %v6011 = vadd.f32 %v5940, %v6010
  %v6012 = vpop.f32.mrf.mxu0
  %v6013 = vadd.f32 %v5942, %v6012
  %6014 = vmatprep.mubr.bf16.mxu0 0
  %6015 = vmatmul.mubr.bf16.gmra.mxu0 %v2971
  %v6016 = vpop.f32.mrf.mxu0
  %v6017 = vadd.f32 %v5946, %v6016
  %v6018 = vpop.f32.mrf.mxu0
  %v6019 = vadd.f32 %v5948, %v6018
  %v6020 = vpop.f32.mrf.mxu0
  %v6021 = vadd.f32 %v5950, %v6020
  %v6022 = vpop.f32.mrf.mxu0
  %v6023 = vadd.f32 %v5952, %v6022
  %6024 = vmatprep.mubr.bf16.mxu0 0
  %6025 = vmatmul.mubr.bf16.gmra.mxu0 %v2974
  %v6026 = vpop.f32.mrf.mxu0
  %v6027 = vadd.f32 %v5956, %v6026
  %v6028 = vpop.f32.mrf.mxu0
  %v6029 = vadd.f32 %v5958, %v6028
  %v6030 = vpop.f32.mrf.mxu0
  %v6031 = vpop.f32.mrf.mxu0
  %6032 = vdwg.mxu0
  %6033 = vmatprep.subr.bf16.mxu0 %v2467
  %6034 = vmatpush1.bf16.msra.mxu0 %v2466
  %6035 = vmatprep.subr.bf16.mxu0 %v2465
  %6036 = vmatpush1.bf16.msra.mxu0 %v2464
  %6037 = vmatprep.subr.bf16.mxu0 %v2463
  %6038 = vmatpush1.bf16.msra.mxu0 %v2462
  %6039 = vmatprep.subr.bf16.mxu0 %v2461
  %6040 = vmatpush1.bf16.msra.mxu0 %v2460
  %6041 = vmatprep.subr.bf16.mxu0 %v2459
  %6042 = vmatpush1.bf16.msra.mxu0 %v2458
  %6043 = vmatprep.subr.bf16.mxu0 %v2457
  %6044 = vmatpush1.bf16.msra.mxu0 %v2456
  %6045 = vmatprep.subr.bf16.mxu0 %v2455
  %6046 = vmatpush1.bf16.msra.mxu0 %v2454
  %6047 = vmatprep.subr.bf16.mxu0 %v2453
  %6048 = vmatpush1.bf16.msra.mxu0 %v2452
  %6049 = vmatprep.subr.bf16.mxu0 %v2483
  %6050 = vmatpush2.bf16.msra.mxu0 %v2482
  %6051 = vmatprep.subr.bf16.mxu0 %v2481
  %6052 = vmatpush2.bf16.msra.mxu0 %v2480
  %6053 = vmatprep.subr.bf16.mxu0 %v2479
  %6054 = vmatpush2.bf16.msra.mxu0 %v2478
  %6055 = vmatprep.subr.bf16.mxu0 %v2477
  %6056 = vmatpush2.bf16.msra.mxu0 %v2476
  %6057 = vmatprep.subr.bf16.mxu0 %v2475
  %6058 = vmatpush2.bf16.msra.mxu0 %v2474
  %6059 = vmatprep.subr.bf16.mxu0 %v2473
  %6060 = vmatpush2.bf16.msra.mxu0 %v2472
  %6061 = vmatprep.subr.bf16.mxu0 %v2471
  %6062 = vmatpush2.bf16.msra.mxu0 %v2470
  %6063 = vmatprep.subr.bf16.mxu0 %v2469
  %6064 = vmatpush2.bf16.msra.mxu0 %v2468
  %6065 = vmatprep.mubr.bf16.mxu0 %v1936
  %6066 = vmatmul.mubr.bf16.gmra.mxu0 %v1935
  %v6067 = vpop.f32.mrf.mxu0
  %v6068 = vadd.f32 %v5997, %v6067
  %v6069 = vpop.f32.mrf.mxu0
  %v6070 = vadd.f32 %v5999, %v6069
  %v6071 = vpop.f32.mrf.mxu0
  %v6072 = vadd.f32 %v6001, %v6071
  %v6073 = vpop.f32.mrf.mxu0
  %v6074 = vadd.f32 %v6003, %v6073
  %6075 = vmatprep.mubr.bf16.mxu0 %v1939
  %6076 = vmatmul.mubr.bf16.gmra.mxu0 %v1938
  %v6077 = vpop.f32.mrf.mxu0
  %v6078 = vadd.f32 %v6007, %v6077
  %v6079 = vpop.f32.mrf.mxu0
  %v6080 = vadd.f32 %v6009, %v6079
  %v6081 = vpop.f32.mrf.mxu0
  %v6082 = vadd.f32 %v6011, %v6081
  %v6083 = vpop.f32.mrf.mxu0
  %v6084 = vadd.f32 %v6013, %v6083
  %6085 = vmatprep.mubr.bf16.mxu0 %v1942
  %6086 = vmatmul.mubr.bf16.gmra.mxu0 %v1941
  %v6087 = vpop.f32.mrf.mxu0
  %v6088 = vadd.f32 %v6017, %v6087
  %v6089 = vpop.f32.mrf.mxu0
  %v6090 = vadd.f32 %v6019, %v6089
  %v6091 = vpop.f32.mrf.mxu0
  %v6092 = vadd.f32 %v6021, %v6091
  %v6093 = vpop.f32.mrf.mxu0
  %v6094 = vadd.f32 %v6023, %v6093
  %6095 = vmatprep.mubr.bf16.mxu0 %v1945
  %6096 = vmatmul.mubr.bf16.gmra.mxu0 %v1944
  %v6097 = vpop.f32.mrf.mxu0
  %v6098 = vadd.f32 %v6027, %v6097
  %v6099 = vpop.f32.mrf.mxu0
  %v6100 = vadd.f32 %v6029, %v6099
  %v6101 = vpop.f32.mrf.mxu0
  %v6102 = vpop.f32.mrf.mxu0
  %6103 = vdwg.mxu0
  %6104 = vmatprep.subr.bf16.mxu0 0
  %6105 = vmatpush1.bf16.msra.mxu0 0
  %6106 = vmatprep.subr.bf16.mxu0 0
  %6107 = vmatpush1.bf16.msra.mxu0 0
  %6108 = vmatprep.subr.bf16.mxu0 0
  %6109 = vmatpush1.bf16.msra.mxu0 0
  %6110 = vmatprep.subr.bf16.mxu0 0
  %6111 = vmatpush1.bf16.msra.mxu0 0
  %6112 = vmatprep.subr.bf16.mxu0 0
  %6113 = vmatpush1.bf16.msra.mxu0 0
  %6114 = vmatprep.subr.bf16.mxu0 0
  %6115 = vmatpush1.bf16.msra.mxu0 0
  %6116 = vmatprep.subr.bf16.mxu0 %v2487
  %6117 = vmatpush1.bf16.msra.mxu0 %v2486
  %6118 = vmatprep.subr.bf16.mxu0 %v2485
  %6119 = vmatpush1.bf16.msra.mxu0 %v2484
  %6120 = vmatprep.subr.bf16.mxu0 0
  %6121 = vmatpush2.bf16.msra.mxu0 0
  %6122 = vmatprep.subr.bf16.mxu0 0
  %6123 = vmatpush2.bf16.msra.mxu0 0
  %6124 = vmatprep.subr.bf16.mxu0 0
  %6125 = vmatpush2.bf16.msra.mxu0 0
  %6126 = vmatprep.subr.bf16.mxu0 0
  %6127 = vmatpush2.bf16.msra.mxu0 0
  %6128 = vmatprep.subr.bf16.mxu0 0
  %6129 = vmatpush2.bf16.msra.mxu0 0
  %6130 = vmatprep.subr.bf16.mxu0 0
  %6131 = vmatpush2.bf16.msra.mxu0 0
  %6132 = vmatprep.subr.bf16.mxu0 0
  %6133 = vmatpush2.bf16.msra.mxu0 0
  %6134 = vmatprep.subr.bf16.mxu0 0
  %6135 = vmatpush2.bf16.msra.mxu0 0
  %6136 = vmatprep.mubr.bf16.mxu0 0
  %6137 = vmatmul.mubr.bf16.gmra.mxu0 %v2136
  %v6138 = vpop.f32.mrf.mxu0
  %v6139 = vadd.f32 %v6068, %v6138
  %v6140 = vpop.f32.mrf.mxu0
  %v6141 = vadd.f32 %v6070, %v6140
  %v6142 = vpop.f32.mrf.mxu0
  %v6143 = vadd.f32 %v6072, %v6142
  %v6144 = vpop.f32.mrf.mxu0
  %v6145 = vadd.f32 %v6074, %v6144
  %6146 = vmatprep.mubr.bf16.mxu0 0
  %6147 = vmatmul.mubr.bf16.gmra.mxu0 %v2139
  %v6148 = vpop.f32.mrf.mxu0
  %v6149 = vadd.f32 %v6078, %v6148
  %v6150 = vpop.f32.mrf.mxu0
  %v6151 = vadd.f32 %v6080, %v6150
  %v6152 = vpop.f32.mrf.mxu0
  %v6153 = vadd.f32 %v6082, %v6152
  %v6154 = vpop.f32.mrf.mxu0
  %v6155 = vadd.f32 %v6084, %v6154
  %6156 = vmatprep.mubr.bf16.mxu0 0
  %6157 = vmatmul.mubr.bf16.gmra.mxu0 %v2142
  %v6158 = vpop.f32.mrf.mxu0
  %v6159 = vadd.f32 %v6088, %v6158
  %v6160 = vpop.f32.mrf.mxu0
  %v6161 = vadd.f32 %v6090, %v6160
  %v6162 = vpop.f32.mrf.mxu0
  %v6163 = vadd.f32 %v6092, %v6162
  %v6164 = vpop.f32.mrf.mxu0
  %v6165 = vadd.f32 %v6094, %v6164
  %6166 = vmatprep.mubr.bf16.mxu0 0
  %6167 = vmatmul.mubr.bf16.gmra.mxu0 %v2145
  %v6168 = vpop.f32.mrf.mxu0
  %v6169 = vadd.f32 %v6098, %v6168
  %v6170 = vpop.f32.mrf.mxu0
  %v6171 = vadd.f32 %v6100, %v6170
  %v6172 = vpop.f32.mrf.mxu0
  %v6173 = vpop.f32.mrf.mxu0
  %6174 = vdwg.mxu0
  %6175 = vmatprep.subr.bf16.mxu0 %v2907
  %6176 = vmatpush1.bf16.msra.mxu0 %v2906
  %6177 = vmatprep.subr.bf16.mxu0 %v2905
  %6178 = vmatpush1.bf16.msra.mxu0 %v2904
  %6179 = vmatprep.subr.bf16.mxu0 %v2903
  %6180 = vmatpush1.bf16.msra.mxu0 %v2902
  %6181 = vmatprep.subr.bf16.mxu0 %v2901
  %6182 = vmatpush1.bf16.msra.mxu0 %v2900
  %6183 = vmatprep.subr.bf16.mxu0 %v2899
  %6184 = vmatpush1.bf16.msra.mxu0 %v2898
  %6185 = vmatprep.subr.bf16.mxu0 %v2897
  %6186 = vmatpush1.bf16.msra.mxu0 %v2896
  %6187 = vmatprep.subr.bf16.mxu0 %v2895
  %6188 = vmatpush1.bf16.msra.mxu0 %v2894
  %6189 = vmatprep.subr.bf16.mxu0 %v2893
  %6190 = vmatpush1.bf16.msra.mxu0 %v2892
  %6191 = vmatprep.subr.bf16.mxu0 %v2923
  %6192 = vmatpush2.bf16.msra.mxu0 %v2922
  %6193 = vmatprep.subr.bf16.mxu0 %v2921
  %6194 = vmatpush2.bf16.msra.mxu0 %v2920
  %6195 = vmatprep.subr.bf16.mxu0 %v2919
  %6196 = vmatpush2.bf16.msra.mxu0 %v2918
  %6197 = vmatprep.subr.bf16.mxu0 %v2917
  %6198 = vmatpush2.bf16.msra.mxu0 %v2916
  %6199 = vmatprep.subr.bf16.mxu0 %v2915
  %6200 = vmatpush2.bf16.msra.mxu0 %v2914
  %6201 = vmatprep.subr.bf16.mxu0 %v2913
  %6202 = vmatpush2.bf16.msra.mxu0 %v2912
  %6203 = vmatprep.subr.bf16.mxu0 %v2911
  %6204 = vmatpush2.bf16.msra.mxu0 %v2910
  %6205 = vmatprep.subr.bf16.mxu0 %v2909
  %6206 = vmatpush2.bf16.msra.mxu0 %v2908
  %6207 = vmatprep.mubr.bf16.mxu0 %v3219
  %6208 = vmatmul.mubr.bf16.gmra.mxu0 %v3218
  %v6209 = vpop.f32.mrf.mxu0
  %v6210 = vadd.f32 0.0, %v6209
  %v6211 = vpop.f32.mrf.mxu0
  %v6212 = vadd.f32 0.0, %v6211
  %v6213 = vpop.f32.mrf.mxu0
  %v6214 = vadd.f32 0.0, %v6213
  %v6215 = vpop.f32.mrf.mxu0
  %v6216 = vadd.f32 0.0, %v6215
  %6217 = vmatprep.mubr.bf16.mxu0 %v3222
  %6218 = vmatmul.mubr.bf16.gmra.mxu0 %v3221
  %v6219 = vpop.f32.mrf.mxu0
  %v6220 = vadd.f32 0.0, %v6219
  %v6221 = vpop.f32.mrf.mxu0
  %v6222 = vadd.f32 0.0, %v6221
  %v6223 = vpop.f32.mrf.mxu0
  %v6224 = vadd.f32 0.0, %v6223
  %v6225 = vpop.f32.mrf.mxu0
  %v6226 = vadd.f32 0.0, %v6225
  %6227 = vmatprep.mubr.bf16.mxu0 %v3225
  %6228 = vmatmul.mubr.bf16.gmra.mxu0 %v3224
  %v6229 = vpop.f32.mrf.mxu0
  %v6230 = vadd.f32 0.0, %v6229
  %v6231 = vpop.f32.mrf.mxu0
  %v6232 = vadd.f32 0.0, %v6231
  %v6233 = vpop.f32.mrf.mxu0
  %v6234 = vadd.f32 0.0, %v6233
  %v6235 = vpop.f32.mrf.mxu0
  %v6236 = vadd.f32 0.0, %v6235
  %6237 = vmatprep.mubr.bf16.mxu0 %v3228
  %6238 = vmatmul.mubr.bf16.gmra.mxu0 %v3227
  %v6239 = vpop.f32.mrf.mxu0
  %v6240 = vadd.f32 0.0, %v6239
  %v6241 = vpop.f32.mrf.mxu0
  %v6242 = vadd.f32 0.0, %v6241
  %v6243 = vpop.f32.mrf.mxu0
  %v6244 = vpop.f32.mrf.mxu0
  %6245 = vdwg.mxu0
  %6246 = vmatprep.subr.bf16.mxu0 0
  %6247 = vmatpush1.bf16.msra.mxu0 0
  %6248 = vmatprep.subr.bf16.mxu0 0
  %6249 = vmatpush1.bf16.msra.mxu0 0
  %6250 = vmatprep.subr.bf16.mxu0 0
  %6251 = vmatpush1.bf16.msra.mxu0 0
  %6252 = vmatprep.subr.bf16.mxu0 0
  %6253 = vmatpush1.bf16.msra.mxu0 0
  %6254 = vmatprep.subr.bf16.mxu0 0
  %6255 = vmatpush1.bf16.msra.mxu0 0
  %6256 = vmatprep.subr.bf16.mxu0 0
  %6257 = vmatpush1.bf16.msra.mxu0 0
  %6258 = vmatprep.subr.bf16.mxu0 %v2927
  %6259 = vmatpush1.bf16.msra.mxu0 %v2926
  %6260 = vmatprep.subr.bf16.mxu0 %v2925
  %6261 = vmatpush1.bf16.msra.mxu0 %v2924
  %6262 = vmatprep.subr.bf16.mxu0 0
  %6263 = vmatpush2.bf16.msra.mxu0 0
  %6264 = vmatprep.subr.bf16.mxu0 0
  %6265 = vmatpush2.bf16.msra.mxu0 0
  %6266 = vmatprep.subr.bf16.mxu0 0
  %6267 = vmatpush2.bf16.msra.mxu0 0
  %6268 = vmatprep.subr.bf16.mxu0 0
  %6269 = vmatpush2.bf16.msra.mxu0 0
  %6270 = vmatprep.subr.bf16.mxu0 0
  %6271 = vmatpush2.bf16.msra.mxu0 0
  %6272 = vmatprep.subr.bf16.mxu0 0
  %6273 = vmatpush2.bf16.msra.mxu0 0
  %6274 = vmatprep.subr.bf16.mxu0 0
  %6275 = vmatpush2.bf16.msra.mxu0 0
  %6276 = vmatprep.subr.bf16.mxu0 0
  %6277 = vmatpush2.bf16.msra.mxu0 0
  %6278 = vmatprep.mubr.bf16.mxu0 0
  %6279 = vmatmul.mubr.bf16.gmra.mxu0 %v3419
  %v6280 = vpop.f32.mrf.mxu0
  %v6281 = vadd.f32 %v6210, %v6280
  %v6282 = vpop.f32.mrf.mxu0
  %v6283 = vadd.f32 %v6212, %v6282
  %v6284 = vpop.f32.mrf.mxu0
  %v6285 = vadd.f32 %v6214, %v6284
  %v6286 = vpop.f32.mrf.mxu0
  %v6287 = vadd.f32 %v6216, %v6286
  %6288 = vmatprep.mubr.bf16.mxu0 0
  %6289 = vmatmul.mubr.bf16.gmra.mxu0 %v3422
  %v6290 = vpop.f32.mrf.mxu0
  %v6291 = vadd.f32 %v6220, %v6290
  %v6292 = vpop.f32.mrf.mxu0
  %v6293 = vadd.f32 %v6222, %v6292
  %v6294 = vpop.f32.mrf.mxu0
  %v6295 = vadd.f32 %v6224, %v6294
  %v6296 = vpop.f32.mrf.mxu0
  %v6297 = vadd.f32 %v6226, %v6296
  %6298 = vmatprep.mubr.bf16.mxu0 0
  %6299 = vmatmul.mubr.bf16.gmra.mxu0 %v3425
  %v6300 = vpop.f32.mrf.mxu0
  %v6301 = vadd.f32 %v6230, %v6300
  %v6302 = vpop.f32.mrf.mxu0
  %v6303 = vadd.f32 %v6232, %v6302
  %v6304 = vpop.f32.mrf.mxu0
  %v6305 = vadd.f32 %v6234, %v6304
  %v6306 = vpop.f32.mrf.mxu0
  %v6307 = vadd.f32 %v6236, %v6306
  %6308 = vmatprep.mubr.bf16.mxu0 0
  %6309 = vmatmul.mubr.bf16.gmra.mxu0 %v3428
  %v6310 = vpop.f32.mrf.mxu0
  %v6311 = vadd.f32 %v6240, %v6310
  %v6312 = vpop.f32.mrf.mxu0
  %v6313 = vadd.f32 %v6242, %v6312
  %v6314 = vpop.f32.mrf.mxu0
  %v6315 = vpop.f32.mrf.mxu0
  %6316 = vdwg.mxu0
  %v6317 = vadd.f32 %v6139, %v6281
  %v6318 = vadd.f32 %v6141, %v6283
  %v6319 = vadd.f32 %v6143, %v6285
  %v6320 = vadd.f32 %v6145, %v6287
  %v6321 = vadd.f32 %v6149, %v6291
  %v6322 = vadd.f32 %v6151, %v6293
  %v6323 = vadd.f32 %v6153, %v6295
  %v6324 = vadd.f32 %v6155, %v6297
  %v6325 = vadd.f32 %v6159, %v6301
  %v6326 = vadd.f32 %v6161, %v6303
  %v6327 = vadd.f32 %v6163, %v6305
  %v6328 = vadd.f32 %v6165, %v6307
  %v6329 = vadd.f32 %v6169, %v6311
  %v6330 = vadd.f32 %v6171, %v6313
  %6331 = vmatprep.subr.bf16.mxu0 %v3361
  %6332 = vmatpush1.bf16.msra.mxu0 %v3360
  %6333 = vmatprep.subr.bf16.mxu0 %v3359
  %6334 = vmatpush1.bf16.msra.mxu0 %v3358
  %6335 = vmatprep.subr.bf16.mxu0 %v3357
  %6336 = vmatpush1.bf16.msra.mxu0 %v3356
  %6337 = vmatprep.subr.bf16.mxu0 %v3355
  %6338 = vmatpush1.bf16.msra.mxu0 %v3354
  %6339 = vmatprep.subr.bf16.mxu0 %v3353
  %6340 = vmatpush1.bf16.msra.mxu0 %v3352
  %6341 = vmatprep.subr.bf16.mxu0 %v3351
  %6342 = vmatpush1.bf16.msra.mxu0 %v3350
  %6343 = vmatprep.subr.bf16.mxu0 %v3349
  %6344 = vmatpush1.bf16.msra.mxu0 %v3348
  %6345 = vmatprep.subr.bf16.mxu0 %v3347
  %6346 = vmatpush1.bf16.msra.mxu0 %v3346
  %6347 = vmatprep.subr.bf16.mxu0 %v3377
  %6348 = vmatpush2.bf16.msra.mxu0 %v3376
  %6349 = vmatprep.subr.bf16.mxu0 %v3375
  %6350 = vmatpush2.bf16.msra.mxu0 %v3374
  %6351 = vmatprep.subr.bf16.mxu0 %v3373
  %6352 = vmatpush2.bf16.msra.mxu0 %v3372
  %6353 = vmatprep.subr.bf16.mxu0 %v3371
  %6354 = vmatpush2.bf16.msra.mxu0 %v3370
  %6355 = vmatprep.subr.bf16.mxu0 %v3369
  %6356 = vmatpush2.bf16.msra.mxu0 %v3368
  %6357 = vmatprep.subr.bf16.mxu0 %v3367
  %6358 = vmatpush2.bf16.msra.mxu0 %v3366
  %6359 = vmatprep.subr.bf16.mxu0 %v3365
  %6360 = vmatpush2.bf16.msra.mxu0 %v3364
  %6361 = vmatprep.subr.bf16.mxu0 %v3363
  %6362 = vmatpush2.bf16.msra.mxu0 %v3362
  %6363 = vmatprep.mubr.bf16.mxu0 %v3673
  %6364 = vmatmul.mubr.bf16.gmra.mxu0 %v3672
  %v6365 = vpop.f32.mrf.mxu0
  %v6366 = vadd.f32 0.0, %v6365
  %v6367 = vpop.f32.mrf.mxu0
  %v6368 = vadd.f32 0.0, %v6367
  %v6369 = vpop.f32.mrf.mxu0
  %v6370 = vadd.f32 0.0, %v6369
  %v6371 = vpop.f32.mrf.mxu0
  %v6372 = vadd.f32 0.0, %v6371
  %6373 = vmatprep.mubr.bf16.mxu0 %v3676
  %6374 = vmatmul.mubr.bf16.gmra.mxu0 %v3675
  %v6375 = vpop.f32.mrf.mxu0
  %v6376 = vadd.f32 0.0, %v6375
  %v6377 = vpop.f32.mrf.mxu0
  %v6378 = vadd.f32 0.0, %v6377
  %v6379 = vpop.f32.mrf.mxu0
  %v6380 = vadd.f32 0.0, %v6379
  %v6381 = vpop.f32.mrf.mxu0
  %v6382 = vadd.f32 0.0, %v6381
  %6383 = vmatprep.mubr.bf16.mxu0 %v3679
  %6384 = vmatmul.mubr.bf16.gmra.mxu0 %v3678
  %v6385 = vpop.f32.mrf.mxu0
  %v6386 = vadd.f32 0.0, %v6385
  %v6387 = vpop.f32.mrf.mxu0
  %v6388 = vadd.f32 0.0, %v6387
  %v6389 = vpop.f32.mrf.mxu0
  %v6390 = vadd.f32 0.0, %v6389
  %v6391 = vpop.f32.mrf.mxu0
  %v6392 = vadd.f32 0.0, %v6391
  %6393 = vmatprep.mubr.bf16.mxu0 %v3682
  %6394 = vmatmul.mubr.bf16.gmra.mxu0 %v3681
  %v6395 = vpop.f32.mrf.mxu0
  %v6396 = vadd.f32 0.0, %v6395
  %v6397 = vpop.f32.mrf.mxu0
  %v6398 = vadd.f32 0.0, %v6397
  %v6399 = vpop.f32.mrf.mxu0
  %v6400 = vpop.f32.mrf.mxu0
  %6401 = vdwg.mxu0
  %6402 = vmatprep.subr.bf16.mxu0 0
  %6403 = vmatpush1.bf16.msra.mxu0 0
  %6404 = vmatprep.subr.bf16.mxu0 0
  %6405 = vmatpush1.bf16.msra.mxu0 0
  %6406 = vmatprep.subr.bf16.mxu0 0
  %6407 = vmatpush1.bf16.msra.mxu0 0
  %6408 = vmatprep.subr.bf16.mxu0 0
  %6409 = vmatpush1.bf16.msra.mxu0 0
  %6410 = vmatprep.subr.bf16.mxu0 0
  %6411 = vmatpush1.bf16.msra.mxu0 0
  %6412 = vmatprep.subr.bf16.mxu0 0
  %6413 = vmatpush1.bf16.msra.mxu0 0
  %6414 = vmatprep.subr.bf16.mxu0 %v3381
  %6415 = vmatpush1.bf16.msra.mxu0 %v3380
  %6416 = vmatprep.subr.bf16.mxu0 %v3379
  %6417 = vmatpush1.bf16.msra.mxu0 %v3378
  %6418 = vmatprep.subr.bf16.mxu0 0
  %6419 = vmatpush2.bf16.msra.mxu0 0
  %6420 = vmatprep.subr.bf16.mxu0 0
  %6421 = vmatpush2.bf16.msra.mxu0 0
  %6422 = vmatprep.subr.bf16.mxu0 0
  %6423 = vmatpush2.bf16.msra.mxu0 0
  %6424 = vmatprep.subr.bf16.mxu0 0
  %6425 = vmatpush2.bf16.msra.mxu0 0
  %6426 = vmatprep.subr.bf16.mxu0 0
  %6427 = vmatpush2.bf16.msra.mxu0 0
  %6428 = vmatprep.subr.bf16.mxu0 0
  %6429 = vmatpush2.bf16.msra.mxu0 0
  %6430 = vmatprep.subr.bf16.mxu0 0
  %6431 = vmatpush2.bf16.msra.mxu0 0
  %6432 = vmatprep.subr.bf16.mxu0 0
  %6433 = vmatpush2.bf16.msra.mxu0 0
  %6434 = vmatprep.mubr.bf16.mxu0 0
  %6435 = vmatmul.mubr.bf16.gmra.mxu0 %v3873
  %v6436 = vpop.f32.mrf.mxu0
  %v6437 = vadd.f32 %v6366, %v6436
  %v6438 = vpop.f32.mrf.mxu0
  %v6439 = vadd.f32 %v6368, %v6438
  %v6440 = vpop.f32.mrf.mxu0
  %v6441 = vadd.f32 %v6370, %v6440
  %v6442 = vpop.f32.mrf.mxu0
  %v6443 = vadd.f32 %v6372, %v6442
  %6444 = vmatprep.mubr.bf16.mxu0 0
  %6445 = vmatmul.mubr.bf16.gmra.mxu0 %v3876
  %v6446 = vpop.f32.mrf.mxu0
  %v6447 = vadd.f32 %v6376, %v6446
  %v6448 = vpop.f32.mrf.mxu0
  %v6449 = vadd.f32 %v6378, %v6448
  %v6450 = vpop.f32.mrf.mxu0
  %v6451 = vadd.f32 %v6380, %v6450
  %v6452 = vpop.f32.mrf.mxu0
  %v6453 = vadd.f32 %v6382, %v6452
  %6454 = vmatprep.mubr.bf16.mxu0 0
  %6455 = vmatmul.mubr.bf16.gmra.mxu0 %v3879
  %v6456 = vpop.f32.mrf.mxu0
  %v6457 = vadd.f32 %v6386, %v6456
  %v6458 = vpop.f32.mrf.mxu0
  %v6459 = vadd.f32 %v6388, %v6458
  %v6460 = vpop.f32.mrf.mxu0
  %v6461 = vadd.f32 %v6390, %v6460
  %v6462 = vpop.f32.mrf.mxu0
  %v6463 = vadd.f32 %v6392, %v6462
  %6464 = vmatprep.mubr.bf16.mxu0 0
  %6465 = vmatmul.mubr.bf16.gmra.mxu0 %v3882
  %v6466 = vpop.f32.mrf.mxu0
  %v6467 = vadd.f32 %v6396, %v6466
  %v6468 = vpop.f32.mrf.mxu0
  %v6469 = vadd.f32 %v6398, %v6468
  %v6470 = vpop.f32.mrf.mxu0
  %v6471 = vpop.f32.mrf.mxu0
  %6472 = vdwg.mxu0
  %v6473 = vadd.f32 %v6317, %v6437
  %v6474 = vadd.f32 %v6318, %v6439
  %v6475 = vadd.f32 %v6319, %v6441
  %v6476 = vadd.f32 %v6320, %v6443
  %v6477 = vadd.f32 %v6321, %v6447
  %v6478 = vadd.f32 %v6322, %v6449
  %v6479 = vadd.f32 %v6323, %v6451
  %v6480 = vadd.f32 %v6324, %v6453
  %v6481 = vadd.f32 %v6325, %v6457
  %v6482 = vadd.f32 %v6326, %v6459
  %v6483 = vadd.f32 %v6327, %v6461
  %v6484 = vadd.f32 %v6328, %v6463
  %v6485 = vadd.f32 %v6329, %v6467
  %v6486 = vadd.f32 %v6330, %v6469
  %v6487 = vld [vmem:[%s32 + $0x18] sm:$0xff]
  %v6488 = vld [vmem:[%s32 + $0x20] sm:$0xf]
  %v6489 = vld [vmem:[%s32 + $0x24] sm:$0xff]
  %v6490 = vld [vmem:[%s32 + $0x2c] sm:$0xf]
  %v6491 = vld [vmem:[%s32 + $0x30] sm:$0xff]
  %v6492 = vld [vmem:[%s32 + $0x38] sm:$0xf]
  %v6493 = vld [vmem:[%s32 + $0x3c] sm:$0xff]
  %v6494 = vld [vmem:[%s32 + $0x44] sm:$0xf]
  %v6495 = vld [vmem:[%s32 + $0x48] sm:$0xff]
  %v6496 = vld [vmem:[%s32 + $0x50] sm:$0xf]
  %v6497 = vld [vmem:[%s32 + $0x54] sm:$0xff]
  %v6498 = vld [vmem:[%s32 + $0x5c] sm:$0xf]
  %v6499 = vld [vmem:[%s32 + $0x60] sm:$0xff]
  %v6500 = vld [vmem:[%s32 + $0x68] sm:$0xf]
  %v6515 = vunpack.c.l.b16 %v6487
  %v6516 = vunpack.c.h.b16 %v6487
  %v6517 = vunpack.c.l.b16 %v6488
  %v6518 = vunpack.c.l.b16 %v6489
  %v6519 = vunpack.c.h.b16 %v6489
  %v6520 = vunpack.c.l.b16 %v6490
  %v6521 = vunpack.c.l.b16 %v6491
  %v6522 = vunpack.c.h.b16 %v6491
  %v6523 = vunpack.c.l.b16 %v6492
  %v6524 = vunpack.c.l.b16 %v6493
  %v6525 = vunpack.c.h.b16 %v6493
  %v6526 = vunpack.c.l.b16 %v6494
  %v6527 = vunpack.c.l.b16 %v6495
  %v6528 = vunpack.c.h.b16 %v6495
  %v6529 = vunpack.c.l.b16 %v6496
  %v6530 = vunpack.c.l.b16 %v6497
  %v6531 = vunpack.c.h.b16 %v6497
  %v6532 = vunpack.c.l.b16 %v6498
  %v6533 = vunpack.c.l.b16 %v6499
  %v6534 = vunpack.c.h.b16 %v6499
  %v6535 = vunpack.c.l.b16 %v6500
  %v6536 = vpack.c.b16 %v6518, %v6515
  %v6537 = vpack.c.b16 %v6519, %v6516
  %v6538 = vpack.c.b16 %v6520, %v6517
  %v6539 = vpack.c.b16 %v6524, %v6521
  %v6540 = vpack.c.b16 %v6525, %v6522
  %v6541 = vpack.c.b16 %v6526, %v6523
  %v6542 = vpack.c.b16 %v6530, %v6527
  %v6543 = vpack.c.b16 %v6531, %v6528
  %v6544 = vpack.c.b16 %v6532, %v6529
  %v6545 = vpack.c.b16 %v6533, %v6533
  %v6546 = vpack.c.b16 %v6534, %v6534
  %v6547 = vpack.c.b16 %v6535, %v6535
  %v6557 = vsel %vm314, %v6538, 0
  %v6560 = vsel %vm314, %v6541, 0
  %v6563 = vsel %vm314, %v6544, 0
  %v6566 = vsel %vm314, %v6547, 0
  %6568 = vmatprep.subr.bf16.mxu0 %v3815
  %6569 = vmatpush1.bf16.msra.mxu0 %v3814
  %6570 = vmatprep.subr.bf16.mxu0 %v3813
  %6571 = vmatpush1.bf16.msra.mxu0 %v3812
  %6572 = vmatprep.subr.bf16.mxu0 %v3811
  %6573 = vmatpush1.bf16.msra.mxu0 %v3810
  %6574 = vmatprep.subr.bf16.mxu0 %v3809
  %6575 = vmatpush1.bf16.msra.mxu0 %v3808
  %6576 = vmatprep.subr.bf16.mxu0 %v3807
  %6577 = vmatpush1.bf16.msra.mxu0 %v3806
  %6578 = vmatprep.subr.bf16.mxu0 %v3805
  %6579 = vmatpush1.bf16.msra.mxu0 %v3804
  %6580 = vmatprep.subr.bf16.mxu0 %v3803
  %6581 = vmatpush1.bf16.msra.mxu0 %v3802
  %6582 = vmatprep.subr.bf16.mxu0 %v3801
  %6583 = vmatpush1.bf16.msra.mxu0 %v3800
  %6584 = vmatprep.subr.bf16.mxu0 %v3831
  %6585 = vmatpush2.bf16.msra.mxu0 %v3830
  %6586 = vmatprep.subr.bf16.mxu0 %v3829
  %6587 = vmatpush2.bf16.msra.mxu0 %v3828
  %6588 = vmatprep.subr.bf16.mxu0 %v3827
  %6589 = vmatpush2.bf16.msra.mxu0 %v3826
  %6590 = vmatprep.subr.bf16.mxu0 %v3825
  %6591 = vmatpush2.bf16.msra.mxu0 %v3824
  %6592 = vmatprep.subr.bf16.mxu0 %v3823
  %6593 = vmatpush2.bf16.msra.mxu0 %v3822
  %6594 = vmatprep.subr.bf16.mxu0 %v3821
  %6595 = vmatpush2.bf16.msra.mxu0 %v3820
  %6596 = vmatprep.subr.bf16.mxu0 %v3819
  %6597 = vmatpush2.bf16.msra.mxu0 %v3818
  %6598 = vmatprep.subr.bf16.mxu0 %v3817
  %6599 = vmatpush2.bf16.msra.mxu0 %v3816
  %6600 = vmatprep.mubr.bf16.mxu0 %v6537
  %6601 = vmatmul.mubr.bf16.gmra.mxu0 %v6536
  %v6602 = vpop.f32.mrf.mxu0
  %v6603 = vadd.f32 0.0, %v6602
  %v6604 = vpop.f32.mrf.mxu0
  %v6605 = vadd.f32 0.0, %v6604
  %v6606 = vpop.f32.mrf.mxu0
  %v6607 = vadd.f32 0.0, %v6606
  %v6608 = vpop.f32.mrf.mxu0
  %v6609 = vadd.f32 0.0, %v6608
  %6610 = vmatprep.mubr.bf16.mxu0 %v6540
  %6611 = vmatmul.mubr.bf16.gmra.mxu0 %v6539
  %v6612 = vpop.f32.mrf.mxu0
  %v6613 = vadd.f32 0.0, %v6612
  %v6614 = vpop.f32.mrf.mxu0
  %v6615 = vadd.f32 0.0, %v6614
  %v6616 = vpop.f32.mrf.mxu0
  %v6617 = vadd.f32 0.0, %v6616
  %v6618 = vpop.f32.mrf.mxu0
  %v6619 = vadd.f32 0.0, %v6618
  %6620 = vmatprep.mubr.bf16.mxu0 %v6543
  %6621 = vmatmul.mubr.bf16.gmra.mxu0 %v6542
  %v6622 = vpop.f32.mrf.mxu0
  %v6623 = vadd.f32 0.0, %v6622
  %v6624 = vpop.f32.mrf.mxu0
  %v6625 = vadd.f32 0.0, %v6624
  %v6626 = vpop.f32.mrf.mxu0
  %v6627 = vadd.f32 0.0, %v6626
  %v6628 = vpop.f32.mrf.mxu0
  %v6629 = vadd.f32 0.0, %v6628
  %6630 = vmatprep.mubr.bf16.mxu0 %v6546
  %6631 = vmatmul.mubr.bf16.gmra.mxu0 %v6545
  %v6632 = vpop.f32.mrf.mxu0
  %v6633 = vadd.f32 0.0, %v6632
  %v6634 = vpop.f32.mrf.mxu0
  %v6635 = vadd.f32 0.0, %v6634
  %v6636 = vpop.f32.mrf.mxu0
  %v6637 = vpop.f32.mrf.mxu0
  %6638 = vdwg.mxu0
  %6639 = vmatprep.subr.bf16.mxu0 0
  %6640 = vmatpush1.bf16.msra.mxu0 0
  %6641 = vmatprep.subr.bf16.mxu0 0
  %6642 = vmatpush1.bf16.msra.mxu0 0
  %6643 = vmatprep.subr.bf16.mxu0 0
  %6644 = vmatpush1.bf16.msra.mxu0 0
  %6645 = vmatprep.subr.bf16.mxu0 0
  %6646 = vmatpush1.bf16.msra.mxu0 0
  %6647 = vmatprep.subr.bf16.mxu0 0
  %6648 = vmatpush1.bf16.msra.mxu0 0
  %6649 = vmatprep.subr.bf16.mxu0 0
  %6650 = vmatpush1.bf16.msra.mxu0 0
  %6651 = vmatprep.subr.bf16.mxu0 %v3835
  %6652 = vmatpush1.bf16.msra.mxu0 %v3834
  %6653 = vmatprep.subr.bf16.mxu0 %v3833
  %6654 = vmatpush1.bf16.msra.mxu0 %v3832
  %6655 = vmatprep.subr.bf16.mxu0 0
  %6656 = vmatpush2.bf16.msra.mxu0 0
  %6657 = vmatprep.subr.bf16.mxu0 0
  %6658 = vmatpush2.bf16.msra.mxu0 0
  %6659 = vmatprep.subr.bf16.mxu0 0
  %6660 = vmatpush2.bf16.msra.mxu0 0
  %6661 = vmatprep.subr.bf16.mxu0 0
  %6662 = vmatpush2.bf16.msra.mxu0 0
  %6663 = vmatprep.subr.bf16.mxu0 0
  %6664 = vmatpush2.bf16.msra.mxu0 0
  %6665 = vmatprep.subr.bf16.mxu0 0
  %6666 = vmatpush2.bf16.msra.mxu0 0
  %6667 = vmatprep.subr.bf16.mxu0 0
  %6668 = vmatpush2.bf16.msra.mxu0 0
  %6669 = vmatprep.subr.bf16.mxu0 0
  %6670 = vmatpush2.bf16.msra.mxu0 0
  %6671 = vmatprep.mubr.bf16.mxu0 0
  %6672 = vmatmul.mubr.bf16.gmra.mxu0 %v6557
  %v6673 = vpop.f32.mrf.mxu0
  %v6674 = vadd.f32 %v6603, %v6673
  %v6675 = vpop.f32.mrf.mxu0
  %v6676 = vadd.f32 %v6605, %v6675
  %v6677 = vpop.f32.mrf.mxu0
  %v6678 = vadd.f32 %v6607, %v6677
  %v6679 = vpop.f32.mrf.mxu0
  %v6680 = vadd.f32 %v6609, %v6679
  %6681 = vmatprep.mubr.bf16.mxu0 0
  %6682 = vmatmul.mubr.bf16.gmra.mxu0 %v6560
  %v6683 = vpop.f32.mrf.mxu0
  %v6684 = vadd.f32 %v6613, %v6683
  %v6685 = vpop.f32.mrf.mxu0
  %v6686 = vadd.f32 %v6615, %v6685
  %v6687 = vpop.f32.mrf.mxu0
  %v6688 = vadd.f32 %v6617, %v6687
  %v6689 = vpop.f32.mrf.mxu0
  %v6690 = vadd.f32 %v6619, %v6689
  %6691 = vmatprep.mubr.bf16.mxu0 0
  %6692 = vmatmul.mubr.bf16.gmra.mxu0 %v6563
  %v6693 = vpop.f32.mrf.mxu0
  %v6694 = vadd.f32 %v6623, %v6693
  %v6695 = vpop.f32.mrf.mxu0
  %v6696 = vadd.f32 %v6625, %v6695
  %v6697 = vpop.f32.mrf.mxu0
  %v6698 = vadd.f32 %v6627, %v6697
  %v6699 = vpop.f32.mrf.mxu0
  %v6700 = vadd.f32 %v6629, %v6699
  %6701 = vmatprep.mubr.bf16.mxu0 0
  %6702 = vmatmul.mubr.bf16.gmra.mxu0 %v6566
  %v6703 = vpop.f32.mrf.mxu0
  %v6704 = vadd.f32 %v6633, %v6703
  %v6705 = vpop.f32.mrf.mxu0
  %v6706 = vadd.f32 %v6635, %v6705
  %v6707 = vpop.f32.mrf.mxu0
  %v6708 = vpop.f32.mrf.mxu0
  %6709 = vdwg.mxu0
  %v6710 = vadd.f32 %v6473, %v6674
  %v6711 = vadd.f32 %v6474, %v6676
  %v6712 = vadd.f32 %v6475, %v6678
  %v6713 = vadd.f32 %v6476, %v6680
  %v6714 = vadd.f32 %v6477, %v6684
  %v6715 = vadd.f32 %v6478, %v6686
  %v6716 = vadd.f32 %v6479, %v6688
  %v6717 = vadd.f32 %v6480, %v6690
  %v6718 = vadd.f32 %v6481, %v6694
  %v6719 = vadd.f32 %v6482, %v6696
  %v6720 = vadd.f32 %v6483, %v6698
  %v6721 = vadd.f32 %v6484, %v6700
  %v6722 = vadd.f32 %v6485, %v6704
  %v6723 = vadd.f32 %v6486, %v6706
  %v6724 = vmax.f32 %v5877, %v6710
  %v6725 = vmax.f32 %v5878, %v6711
  %v6726 = vmax.f32 %v5879, %v6712
  %v6727 = vmax.f32 %v5880, %v6713
  %v6728 = vmax.f32 %v5881, %v6714
  %v6729 = vmax.f32 %v5882, %v6715
  %v6730 = vmax.f32 %v5883, %v6716
  %v6731 = vmax.f32 %v5884, %v6717
  %v6732 = vmax.f32 %v5885, %v6718
  %v6733 = vmax.f32 %v5886, %v6719
  %v6734 = vmax.f32 %v5887, %v6720
  %v6735 = vmax.f32 %v5888, %v6721
  %v6736 = vmax.f32 %v5889, %v6722
  %v6737 = vmax.f32 %v5890, %v6723
  %6738 = vmatprep.subr.bf16.mxu0 %v4237
  %6739 = vmatpush1.bf16.msra.mxu0 %v4236
  %6740 = vmatprep.subr.bf16.mxu0 %v4235
  %6741 = vmatpush1.bf16.msra.mxu0 %v4234
  %6742 = vmatprep.subr.bf16.mxu0 %v4233
  %6743 = vmatpush1.bf16.msra.mxu0 %v4232
  %6744 = vmatprep.subr.bf16.mxu0 %v4231
  %6745 = vmatpush1.bf16.msra.mxu0 %v4230
  %6746 = vmatprep.subr.bf16.mxu0 %v4229
  %6747 = vmatpush1.bf16.msra.mxu0 %v4228
  %6748 = vmatprep.subr.bf16.mxu0 %v4227
  %6749 = vmatpush1.bf16.msra.mxu0 %v4226
  %6750 = vmatprep.subr.bf16.mxu0 %v4225
  %6751 = vmatpush1.bf16.msra.mxu0 %v4224
  %6752 = vmatprep.subr.bf16.mxu0 %v4223
  %6753 = vmatpush1.bf16.msra.mxu0 %v4222
  %6754 = vmatprep.subr.bf16.mxu0 %v4253
  %6755 = vmatpush2.bf16.msra.mxu0 %v4252
  %6756 = vmatprep.subr.bf16.mxu0 %v4251
  %6757 = vmatpush2.bf16.msra.mxu0 %v4250
  %6758 = vmatprep.subr.bf16.mxu0 %v4249
  %6759 = vmatpush2.bf16.msra.mxu0 %v4248
  %6760 = vmatprep.subr.bf16.mxu0 %v4247
  %6761 = vmatpush2.bf16.msra.mxu0 %v4246
  %6762 = vmatprep.subr.bf16.mxu0 %v4245
  %6763 = vmatpush2.bf16.msra.mxu0 %v4244
  %6764 = vmatprep.subr.bf16.mxu0 %v4243
  %6765 = vmatpush2.bf16.msra.mxu0 %v4242
  %6766 = vmatprep.subr.bf16.mxu0 %v4241
  %6767 = vmatpush2.bf16.msra.mxu0 %v4240
  %6768 = vmatprep.subr.bf16.mxu0 %v4239
  %6769 = vmatpush2.bf16.msra.mxu0 %v4238
  %6770 = vmatprep.mubr.bf16.mxu0 %v2765
  %6771 = vmatmul.mubr.bf16.gmra.mxu0 %v2764
  %v6772 = vpop.f32.mrf.mxu0
  %v6773 = vadd.f32 0.0, %v6772
  %v6774 = vpop.f32.mrf.mxu0
  %v6775 = vadd.f32 0.0, %v6774
  %v6776 = vpop.f32.mrf.mxu0
  %v6777 = vadd.f32 0.0, %v6776
  %v6778 = vpop.f32.mrf.mxu0
  %v6779 = vadd.f32 0.0, %v6778
  %6780 = vmatprep.mubr.bf16.mxu0 %v2768
  %6781 = vmatmul.mubr.bf16.gmra.mxu0 %v2767
  %v6782 = vpop.f32.mrf.mxu0
  %v6783 = vadd.f32 0.0, %v6782
  %v6784 = vpop.f32.mrf.mxu0
  %v6785 = vadd.f32 0.0, %v6784
  %v6786 = vpop.f32.mrf.mxu0
  %v6787 = vadd.f32 0.0, %v6786
  %v6788 = vpop.f32.mrf.mxu0
  %v6789 = vadd.f32 0.0, %v6788
  %6790 = vmatprep.mubr.bf16.mxu0 %v2771
  %6791 = vmatmul.mubr.bf16.gmra.mxu0 %v2770
  %v6792 = vpop.f32.mrf.mxu0
  %v6793 = vadd.f32 0.0, %v6792
  %v6794 = vpop.f32.mrf.mxu0
  %v6795 = vadd.f32 0.0, %v6794
  %v6796 = vpop.f32.mrf.mxu0
  %v6797 = vadd.f32 0.0, %v6796
  %v6798 = vpop.f32.mrf.mxu0
  %v6799 = vadd.f32 0.0, %v6798
  %6800 = vmatprep.mubr.bf16.mxu0 %v2774
  %6801 = vmatmul.mubr.bf16.gmra.mxu0 %v2773
  %v6802 = vpop.f32.mrf.mxu0
  %v6803 = vadd.f32 0.0, %v6802
  %v6804 = vpop.f32.mrf.mxu0
  %v6805 = vadd.f32 0.0, %v6804
  %v6806 = vpop.f32.mrf.mxu0
  %v6807 = vpop.f32.mrf.mxu0
  %6808 = vdwg.mxu0
  %6809 = vmatprep.subr.bf16.mxu0 0
  %6810 = vmatpush1.bf16.msra.mxu0 0
  %6811 = vmatprep.subr.bf16.mxu0 0
  %6812 = vmatpush1.bf16.msra.mxu0 0
  %6813 = vmatprep.subr.bf16.mxu0 0
  %6814 = vmatpush1.bf16.msra.mxu0 0
  %6815 = vmatprep.subr.bf16.mxu0 0
  %6816 = vmatpush1.bf16.msra.mxu0 0
  %6817 = vmatprep.subr.bf16.mxu0 0
  %6818 = vmatpush1.bf16.msra.mxu0 0
  %6819 = vmatprep.subr.bf16.mxu0 0
  %6820 = vmatpush1.bf16.msra.mxu0 0
  %6821 = vmatprep.subr.bf16.mxu0 %v4257
  %6822 = vmatpush1.bf16.msra.mxu0 %v4256
  %6823 = vmatprep.subr.bf16.mxu0 %v4255
  %6824 = vmatpush1.bf16.msra.mxu0 %v4254
  %6825 = vmatprep.subr.bf16.mxu0 0
  %6826 = vmatpush2.bf16.msra.mxu0 0
  %6827 = vmatprep.subr.bf16.mxu0 0
  %6828 = vmatpush2.bf16.msra.mxu0 0
  %6829 = vmatprep.subr.bf16.mxu0 0
  %6830 = vmatpush2.bf16.msra.mxu0 0
  %6831 = vmatprep.subr.bf16.mxu0 0
  %6832 = vmatpush2.bf16.msra.mxu0 0
  %6833 = vmatprep.subr.bf16.mxu0 0
  %6834 = vmatpush2.bf16.msra.mxu0 0
  %6835 = vmatprep.subr.bf16.mxu0 0
  %6836 = vmatpush2.bf16.msra.mxu0 0
  %6837 = vmatprep.subr.bf16.mxu0 0
  %6838 = vmatpush2.bf16.msra.mxu0 0
  %6839 = vmatprep.subr.bf16.mxu0 0
  %6840 = vmatpush2.bf16.msra.mxu0 0
  %6841 = vmatprep.mubr.bf16.mxu0 0
  %6842 = vmatmul.mubr.bf16.gmra.mxu0 %v2965
  %v6843 = vpop.f32.mrf.mxu0
  %v6844 = vadd.f32 %v6773, %v6843
  %v6845 = vpop.f32.mrf.mxu0
  %v6846 = vadd.f32 %v6775, %v6845
  %v6847 = vpop.f32.mrf.mxu0
  %v6848 = vadd.f32 %v6777, %v6847
  %v6849 = vpop.f32.mrf.mxu0
  %v6850 = vadd.f32 %v6779, %v6849
  %6851 = vmatprep.mubr.bf16.mxu0 0
  %6852 = vmatmul.mubr.bf16.gmra.mxu0 %v2968
  %v6853 = vpop.f32.mrf.mxu0
  %v6854 = vadd.f32 %v6783, %v6853
  %v6855 = vpop.f32.mrf.mxu0
  %v6856 = vadd.f32 %v6785, %v6855
  %v6857 = vpop.f32.mrf.mxu0
  %v6858 = vadd.f32 %v6787, %v6857
  %v6859 = vpop.f32.mrf.mxu0
  %v6860 = vadd.f32 %v6789, %v6859
  %6861 = vmatprep.mubr.bf16.mxu0 0
  %6862 = vmatmul.mubr.bf16.gmra.mxu0 %v2971
  %v6863 = vpop.f32.mrf.mxu0
  %v6864 = vadd.f32 %v6793, %v6863
  %v6865 = vpop.f32.mrf.mxu0
  %v6866 = vadd.f32 %v6795, %v6865
  %v6867 = vpop.f32.mrf.mxu0
  %v6868 = vadd.f32 %v6797, %v6867
  %v6869 = vpop.f32.mrf.mxu0
  %v6870 = vadd.f32 %v6799, %v6869
  %6871 = vmatprep.mubr.bf16.mxu0 0
  %6872 = vmatmul.mubr.bf16.gmra.mxu0 %v2974
  %v6873 = vpop.f32.mrf.mxu0
  %v6874 = vadd.f32 %v6803, %v6873
  %v6875 = vpop.f32.mrf.mxu0
  %v6876 = vadd.f32 %v6805, %v6875
  %v6877 = vpop.f32.mrf.mxu0
  %v6878 = vpop.f32.mrf.mxu0
  %6879 = vdwg.mxu0
  %6880 = vmatprep.subr.bf16.mxu0 %v4559
  %6881 = vmatpush1.bf16.msra.mxu0 %v4558
  %6882 = vmatprep.subr.bf16.mxu0 %v4557
  %6883 = vmatpush1.bf16.msra.mxu0 %v4556
  %6884 = vmatprep.subr.bf16.mxu0 %v4555
  %6885 = vmatpush1.bf16.msra.mxu0 %v4554
  %6886 = vmatprep.subr.bf16.mxu0 %v4553
  %6887 = vmatpush1.bf16.msra.mxu0 %v4552
  %6888 = vmatprep.subr.bf16.mxu0 %v4551
  %6889 = vmatpush1.bf16.msra.mxu0 %v4550
  %6890 = vmatprep.subr.bf16.mxu0 %v4549
  %6891 = vmatpush1.bf16.msra.mxu0 %v4548
  %6892 = vmatprep.subr.bf16.mxu0 %v4547
  %6893 = vmatpush1.bf16.msra.mxu0 %v4546
  %6894 = vmatprep.subr.bf16.mxu0 %v4545
  %6895 = vmatpush1.bf16.msra.mxu0 %v4544
  %6896 = vmatprep.subr.bf16.mxu0 %v4575
  %6897 = vmatpush2.bf16.msra.mxu0 %v4574
  %6898 = vmatprep.subr.bf16.mxu0 %v4573
  %6899 = vmatpush2.bf16.msra.mxu0 %v4572
  %6900 = vmatprep.subr.bf16.mxu0 %v4571
  %6901 = vmatpush2.bf16.msra.mxu0 %v4570
  %6902 = vmatprep.subr.bf16.mxu0 %v4569
  %6903 = vmatpush2.bf16.msra.mxu0 %v4568
  %6904 = vmatprep.subr.bf16.mxu0 %v4567
  %6905 = vmatpush2.bf16.msra.mxu0 %v4566
  %6906 = vmatprep.subr.bf16.mxu0 %v4565
  %6907 = vmatpush2.bf16.msra.mxu0 %v4564
  %6908 = vmatprep.subr.bf16.mxu0 %v4563
  %6909 = vmatpush2.bf16.msra.mxu0 %v4562
  %6910 = vmatprep.subr.bf16.mxu0 %v4561
  %6911 = vmatpush2.bf16.msra.mxu0 %v4560
  %6912 = vmatprep.mubr.bf16.mxu0 %v1936
  %6913 = vmatmul.mubr.bf16.gmra.mxu0 %v1935
  %v6914 = vpop.f32.mrf.mxu0
  %v6915 = vadd.f32 %v6844, %v6914
  %v6916 = vpop.f32.mrf.mxu0
  %v6917 = vadd.f32 %v6846, %v6916
  %v6918 = vpop.f32.mrf.mxu0
  %v6919 = vadd.f32 %v6848, %v6918
  %v6920 = vpop.f32.mrf.mxu0
  %v6921 = vadd.f32 %v6850, %v6920
  %6922 = vmatprep.mubr.bf16.mxu0 %v1939
  %6923 = vmatmul.mubr.bf16.gmra.mxu0 %v1938
  %v6924 = vpop.f32.mrf.mxu0
  %v6925 = vadd.f32 %v6854, %v6924
  %v6926 = vpop.f32.mrf.mxu0
  %v6927 = vadd.f32 %v6856, %v6926
  %v6928 = vpop.f32.mrf.mxu0
  %v6929 = vadd.f32 %v6858, %v6928
  %v6930 = vpop.f32.mrf.mxu0
  %v6931 = vadd.f32 %v6860, %v6930
  %6932 = vmatprep.mubr.bf16.mxu0 %v1942
  %6933 = vmatmul.mubr.bf16.gmra.mxu0 %v1941
  %v6934 = vpop.f32.mrf.mxu0
  %v6935 = vadd.f32 %v6864, %v6934
  %v6936 = vpop.f32.mrf.mxu0
  %v6937 = vadd.f32 %v6866, %v6936
  %v6938 = vpop.f32.mrf.mxu0
  %v6939 = vadd.f32 %v6868, %v6938
  %v6940 = vpop.f32.mrf.mxu0
  %v6941 = vadd.f32 %v6870, %v6940
  %6942 = vmatprep.mubr.bf16.mxu0 %v1945
  %6943 = vmatmul.mubr.bf16.gmra.mxu0 %v1944
  %v6944 = vpop.f32.mrf.mxu0
  %v6945 = vadd.f32 %v6874, %v6944
  %v6946 = vpop.f32.mrf.mxu0
  %v6947 = vadd.f32 %v6876, %v6946
  %v6948 = vpop.f32.mrf.mxu0
  %v6949 = vpop.f32.mrf.mxu0
  %6950 = vdwg.mxu0
  %6951 = vmatprep.subr.bf16.mxu0 0
  %6952 = vmatpush1.bf16.msra.mxu0 0
  %6953 = vmatprep.subr.bf16.mxu0 0
  %6954 = vmatpush1.bf16.msra.mxu0 0
  %6955 = vmatprep.subr.bf16.mxu0 0
  %6956 = vmatpush1.bf16.msra.mxu0 0
  %6957 = vmatprep.subr.bf16.mxu0 0
  %6958 = vmatpush1.bf16.msra.mxu0 0
  %6959 = vmatprep.subr.bf16.mxu0 0
  %6960 = vmatpush1.bf16.msra.mxu0 0
  %6961 = vmatprep.subr.bf16.mxu0 0
  %6962 = vmatpush1.bf16.msra.mxu0 0
  %6963 = vmatprep.subr.bf16.mxu0 %v4579
  %6964 = vmatpush1.bf16.msra.mxu0 %v4578
  %6965 = vmatprep.subr.bf16.mxu0 %v4577
  %6966 = vmatpush1.bf16.msra.mxu0 %v4576
  %6967 = vmatprep.subr.bf16.mxu0 0
  %6968 = vmatpush2.bf16.msra.mxu0 0
  %6969 = vmatprep.subr.bf16.mxu0 0
  %6970 = vmatpush2.bf16.msra.mxu0 0
  %6971 = vmatprep.subr.bf16.mxu0 0
  %6972 = vmatpush2.bf16.msra.mxu0 0
  %6973 = vmatprep.subr.bf16.mxu0 0
  %6974 = vmatpush2.bf16.msra.mxu0 0
  %6975 = vmatprep.subr.bf16.mxu0 0
  %6976 = vmatpush2.bf16.msra.mxu0 0
  %6977 = vmatprep.subr.bf16.mxu0 0
  %6978 = vmatpush2.bf16.msra.mxu0 0
  %6979 = vmatprep.subr.bf16.mxu0 0
  %6980 = vmatpush2.bf16.msra.mxu0 0
  %6981 = vmatprep.subr.bf16.mxu0 0
  %6982 = vmatpush2.bf16.msra.mxu0 0
  %6983 = vmatprep.mubr.bf16.mxu0 0
  %6984 = vmatmul.mubr.bf16.gmra.mxu0 %v2136
  %v6985 = vpop.f32.mrf.mxu0
  %v6986 = vadd.f32 %v6915, %v6985
  %v6987 = vpop.f32.mrf.mxu0
  %v6988 = vadd.f32 %v6917, %v6987
  %v6989 = vpop.f32.mrf.mxu0
  %v6990 = vadd.f32 %v6919, %v6989
  %v6991 = vpop.f32.mrf.mxu0
  %v6992 = vadd.f32 %v6921, %v6991
  %6993 = vmatprep.mubr.bf16.mxu0 0
  %6994 = vmatmul.mubr.bf16.gmra.mxu0 %v2139
  %v6995 = vpop.f32.mrf.mxu0
  %v6996 = vadd.f32 %v6925, %v6995
  %v6997 = vpop.f32.mrf.mxu0
  %v6998 = vadd.f32 %v6927, %v6997
  %v6999 = vpop.f32.mrf.mxu0
  %v7000 = vadd.f32 %v6929, %v6999
  %v7001 = vpop.f32.mrf.mxu0
  %v7002 = vadd.f32 %v6931, %v7001
  %7003 = vmatprep.mubr.bf16.mxu0 0
  %7004 = vmatmul.mubr.bf16.gmra.mxu0 %v2142
  %v7005 = vpop.f32.mrf.mxu0
  %v7006 = vadd.f32 %v6935, %v7005
  %v7007 = vpop.f32.mrf.mxu0
  %v7008 = vadd.f32 %v6937, %v7007
  %v7009 = vpop.f32.mrf.mxu0
  %v7010 = vadd.f32 %v6939, %v7009
  %v7011 = vpop.f32.mrf.mxu0
  %v7012 = vadd.f32 %v6941, %v7011
  %7013 = vmatprep.mubr.bf16.mxu0 0
  %7014 = vmatmul.mubr.bf16.gmra.mxu0 %v2145
  %v7015 = vpop.f32.mrf.mxu0
  %v7016 = vadd.f32 %v6945, %v7015
  %v7017 = vpop.f32.mrf.mxu0
  %v7018 = vadd.f32 %v6947, %v7017
  %v7019 = vpop.f32.mrf.mxu0
  %v7020 = vpop.f32.mrf.mxu0
  %7021 = vdwg.mxu0
  %7022 = vmatprep.subr.bf16.mxu0 %v4918
  %7023 = vmatpush1.bf16.msra.mxu0 %v4917
  %7024 = vmatprep.subr.bf16.mxu0 %v4916
  %7025 = vmatpush1.bf16.msra.mxu0 %v4915
  %7026 = vmatprep.subr.bf16.mxu0 %v4914
  %7027 = vmatpush1.bf16.msra.mxu0 %v4913
  %7028 = vmatprep.subr.bf16.mxu0 %v4912
  %7029 = vmatpush1.bf16.msra.mxu0 %v4911
  %7030 = vmatprep.subr.bf16.mxu0 %v4910
  %7031 = vmatpush1.bf16.msra.mxu0 %v4909
  %7032 = vmatprep.subr.bf16.mxu0 %v4908
  %7033 = vmatpush1.bf16.msra.mxu0 %v4907
  %7034 = vmatprep.subr.bf16.mxu0 %v4906
  %7035 = vmatpush1.bf16.msra.mxu0 %v4905
  %7036 = vmatprep.subr.bf16.mxu0 %v4904
  %7037 = vmatpush1.bf16.msra.mxu0 %v4903
  %7038 = vmatprep.subr.bf16.mxu0 %v4934
  %7039 = vmatpush2.bf16.msra.mxu0 %v4933
  %7040 = vmatprep.subr.bf16.mxu0 %v4932
  %7041 = vmatpush2.bf16.msra.mxu0 %v4931
  %7042 = vmatprep.subr.bf16.mxu0 %v4930
  %7043 = vmatpush2.bf16.msra.mxu0 %v4929
  %7044 = vmatprep.subr.bf16.mxu0 %v4928
  %7045 = vmatpush2.bf16.msra.mxu0 %v4927
  %7046 = vmatprep.subr.bf16.mxu0 %v4926
  %7047 = vmatpush2.bf16.msra.mxu0 %v4925
  %7048 = vmatprep.subr.bf16.mxu0 %v4924
  %7049 = vmatpush2.bf16.msra.mxu0 %v4923
  %7050 = vmatprep.subr.bf16.mxu0 %v4922
  %7051 = vmatpush2.bf16.msra.mxu0 %v4921
  %7052 = vmatprep.subr.bf16.mxu0 %v4920
  %7053 = vmatpush2.bf16.msra.mxu0 %v4919
  %7054 = vmatprep.mubr.bf16.mxu0 %v3219
  %7055 = vmatmul.mubr.bf16.gmra.mxu0 %v3218
  %v7056 = vpop.f32.mrf.mxu0
  %v7057 = vadd.f32 0.0, %v7056
  %v7058 = vpop.f32.mrf.mxu0
  %v7059 = vadd.f32 0.0, %v7058
  %v7060 = vpop.f32.mrf.mxu0
  %v7061 = vadd.f32 0.0, %v7060
  %v7062 = vpop.f32.mrf.mxu0
  %v7063 = vadd.f32 0.0, %v7062
  %7064 = vmatprep.mubr.bf16.mxu0 %v3222
  %7065 = vmatmul.mubr.bf16.gmra.mxu0 %v3221
  %v7066 = vpop.f32.mrf.mxu0
  %v7067 = vadd.f32 0.0, %v7066
  %v7068 = vpop.f32.mrf.mxu0
  %v7069 = vadd.f32 0.0, %v7068
  %v7070 = vpop.f32.mrf.mxu0
  %v7071 = vadd.f32 0.0, %v7070
  %v7072 = vpop.f32.mrf.mxu0
  %v7073 = vadd.f32 0.0, %v7072
  %7074 = vmatprep.mubr.bf16.mxu0 %v3225
  %7075 = vmatmul.mubr.bf16.gmra.mxu0 %v3224
  %v7076 = vpop.f32.mrf.mxu0
  %v7077 = vadd.f32 0.0, %v7076
  %v7078 = vpop.f32.mrf.mxu0
  %v7079 = vadd.f32 0.0, %v7078
  %v7080 = vpop.f32.mrf.mxu0
  %v7081 = vadd.f32 0.0, %v7080
  %v7082 = vpop.f32.mrf.mxu0
  %v7083 = vadd.f32 0.0, %v7082
  %7084 = vmatprep.mubr.bf16.mxu0 %v3228
  %7085 = vmatmul.mubr.bf16.gmra.mxu0 %v3227
  %v7086 = vpop.f32.mrf.mxu0
  %v7087 = vadd.f32 0.0, %v7086
  %v7088 = vpop.f32.mrf.mxu0
  %v7089 = vadd.f32 0.0, %v7088
  %v7090 = vpop.f32.mrf.mxu0
  %v7091 = vpop.f32.mrf.mxu0
  %7092 = vdwg.mxu0
  %7093 = vmatprep.subr.bf16.mxu0 0
  %7094 = vmatpush1.bf16.msra.mxu0 0
  %7095 = vmatprep.subr.bf16.mxu0 0
  %7096 = vmatpush1.bf16.msra.mxu0 0
  %7097 = vmatprep.subr.bf16.mxu0 0
  %7098 = vmatpush1.bf16.msra.mxu0 0
  %7099 = vmatprep.subr.bf16.mxu0 0
  %7100 = vmatpush1.bf16.msra.mxu0 0
  %7101 = vmatprep.subr.bf16.mxu0 0
  %7102 = vmatpush1.bf16.msra.mxu0 0
  %7103 = vmatprep.subr.bf16.mxu0 0
  %7104 = vmatpush1.bf16.msra.mxu0 0
  %7105 = vmatprep.subr.bf16.mxu0 %v4938
  %7106 = vmatpush1.bf16.msra.mxu0 %v4937
  %7107 = vmatprep.subr.bf16.mxu0 %v4936
  %7108 = vmatpush1.bf16.msra.mxu0 %v4935
  %7109 = vmatprep.subr.bf16.mxu0 0
  %7110 = vmatpush2.bf16.msra.mxu0 0
  %7111 = vmatprep.subr.bf16.mxu0 0
  %7112 = vmatpush2.bf16.msra.mxu0 0
  %7113 = vmatprep.subr.bf16.mxu0 0
  %7114 = vmatpush2.bf16.msra.mxu0 0
  %7115 = vmatprep.subr.bf16.mxu0 0
  %7116 = vmatpush2.bf16.msra.mxu0 0
  %7117 = vmatprep.subr.bf16.mxu0 0
  %7118 = vmatpush2.bf16.msra.mxu0 0
  %7119 = vmatprep.subr.bf16.mxu0 0
  %7120 = vmatpush2.bf16.msra.mxu0 0
  %7121 = vmatprep.subr.bf16.mxu0 0
  %7122 = vmatpush2.bf16.msra.mxu0 0
  %7123 = vmatprep.subr.bf16.mxu0 0
  %7124 = vmatpush2.bf16.msra.mxu0 0
  %7125 = vmatprep.mubr.bf16.mxu0 0
  %7126 = vmatmul.mubr.bf16.gmra.mxu0 %v3419
  %v7127 = vpop.f32.mrf.mxu0
  %v7128 = vadd.f32 %v7057, %v7127
  %v7129 = vpop.f32.mrf.mxu0
  %v7130 = vadd.f32 %v7059, %v7129
  %v7131 = vpop.f32.mrf.mxu0
  %v7132 = vadd.f32 %v7061, %v7131
  %v7133 = vpop.f32.mrf.mxu0
  %v7134 = vadd.f32 %v7063, %v7133
  %7135 = vmatprep.mubr.bf16.mxu0 0
  %7136 = vmatmul.mubr.bf16.gmra.mxu0 %v3422
  %v7137 = vpop.f32.mrf.mxu0
  %v7138 = vadd.f32 %v7067, %v7137
  %v7139 = vpop.f32.mrf.mxu0
  %v7140 = vadd.f32 %v7069, %v7139
  %v7141 = vpop.f32.mrf.mxu0
  %v7142 = vadd.f32 %v7071, %v7141
  %v7143 = vpop.f32.mrf.mxu0
  %v7144 = vadd.f32 %v7073, %v7143
  %7145 = vmatprep.mubr.bf16.mxu0 0
  %7146 = vmatmul.mubr.bf16.gmra.mxu0 %v3425
  %v7147 = vpop.f32.mrf.mxu0
  %v7148 = vadd.f32 %v7077, %v7147
  %v7149 = vpop.f32.mrf.mxu0
  %v7150 = vadd.f32 %v7079, %v7149
  %v7151 = vpop.f32.mrf.mxu0
  %v7152 = vadd.f32 %v7081, %v7151
  %v7153 = vpop.f32.mrf.mxu0
  %v7154 = vadd.f32 %v7083, %v7153
  %7155 = vmatprep.mubr.bf16.mxu0 0
  %7156 = vmatmul.mubr.bf16.gmra.mxu0 %v3428
  %v7157 = vpop.f32.mrf.mxu0
  %v7158 = vadd.f32 %v7087, %v7157
  %v7159 = vpop.f32.mrf.mxu0
  %v7160 = vadd.f32 %v7089, %v7159
  %v7161 = vpop.f32.mrf.mxu0
  %v7162 = vpop.f32.mrf.mxu0
  %7163 = vdwg.mxu0
  %v7164 = vadd.f32 %v6986, %v7128
  %v7165 = vadd.f32 %v6988, %v7130
  %v7166 = vadd.f32 %v6990, %v7132
  %v7167 = vadd.f32 %v6992, %v7134
  %v7168 = vadd.f32 %v6996, %v7138
  %v7169 = vadd.f32 %v6998, %v7140
  %v7170 = vadd.f32 %v7000, %v7142
  %v7171 = vadd.f32 %v7002, %v7144
  %v7172 = vadd.f32 %v7006, %v7148
  %v7173 = vadd.f32 %v7008, %v7150
  %v7174 = vadd.f32 %v7010, %v7152
  %v7175 = vadd.f32 %v7012, %v7154
  %v7176 = vadd.f32 %v7016, %v7158
  %v7177 = vadd.f32 %v7018, %v7160
  %7178 = vmatprep.subr.bf16.mxu0 %v5291
  %7179 = vmatpush1.bf16.msra.mxu0 %v5290
  %7180 = vmatprep.subr.bf16.mxu0 %v5289
  %7181 = vmatpush1.bf16.msra.mxu0 %v5288
  %7182 = vmatprep.subr.bf16.mxu0 %v5287
  %7183 = vmatpush1.bf16.msra.mxu0 %v5286
  %7184 = vmatprep.subr.bf16.mxu0 %v5285
  %7185 = vmatpush1.bf16.msra.mxu0 %v5284
  %7186 = vmatprep.subr.bf16.mxu0 %v5283
  %7187 = vmatpush1.bf16.msra.mxu0 %v5282
  %7188 = vmatprep.subr.bf16.mxu0 %v5281
  %7189 = vmatpush1.bf16.msra.mxu0 %v5280
  %7190 = vmatprep.subr.bf16.mxu0 %v5279
  %7191 = vmatpush1.bf16.msra.mxu0 %v5278
  %7192 = vmatprep.subr.bf16.mxu0 %v5277
  %7193 = vmatpush1.bf16.msra.mxu0 %v5276
  %7194 = vmatprep.subr.bf16.mxu0 %v5307
  %7195 = vmatpush2.bf16.msra.mxu0 %v5306
  %7196 = vmatprep.subr.bf16.mxu0 %v5305
  %7197 = vmatpush2.bf16.msra.mxu0 %v5304
  %7198 = vmatprep.subr.bf16.mxu0 %v5303
  %7199 = vmatpush2.bf16.msra.mxu0 %v5302
  %7200 = vmatprep.subr.bf16.mxu0 %v5301
  %7201 = vmatpush2.bf16.msra.mxu0 %v5300
  %7202 = vmatprep.subr.bf16.mxu0 %v5299
  %7203 = vmatpush2.bf16.msra.mxu0 %v5298
  %7204 = vmatprep.subr.bf16.mxu0 %v5297
  %7205 = vmatpush2.bf16.msra.mxu0 %v5296
  %7206 = vmatprep.subr.bf16.mxu0 %v5295
  %7207 = vmatpush2.bf16.msra.mxu0 %v5294
  %7208 = vmatprep.subr.bf16.mxu0 %v5293
  %7209 = vmatpush2.bf16.msra.mxu0 %v5292
  %7210 = vmatprep.mubr.bf16.mxu0 %v3673
  %7211 = vmatmul.mubr.bf16.gmra.mxu0 %v3672
  %v7212 = vpop.f32.mrf.mxu0
  %v7213 = vadd.f32 0.0, %v7212
  %v7214 = vpop.f32.mrf.mxu0
  %v7215 = vadd.f32 0.0, %v7214
  %v7216 = vpop.f32.mrf.mxu0
  %v7217 = vadd.f32 0.0, %v7216
  %v7218 = vpop.f32.mrf.mxu0
  %v7219 = vadd.f32 0.0, %v7218
  %7220 = vmatprep.mubr.bf16.mxu0 %v3676
  %7221 = vmatmul.mubr.bf16.gmra.mxu0 %v3675
  %v7222 = vpop.f32.mrf.mxu0
  %v7223 = vadd.f32 0.0, %v7222
  %v7224 = vpop.f32.mrf.mxu0
  %v7225 = vadd.f32 0.0, %v7224
  %v7226 = vpop.f32.mrf.mxu0
  %v7227 = vadd.f32 0.0, %v7226
  %v7228 = vpop.f32.mrf.mxu0
  %v7229 = vadd.f32 0.0, %v7228
  %7230 = vmatprep.mubr.bf16.mxu0 %v3679
  %7231 = vmatmul.mubr.bf16.gmra.mxu0 %v3678
  %v7232 = vpop.f32.mrf.mxu0
  %v7233 = vadd.f32 0.0, %v7232
  %v7234 = vpop.f32.mrf.mxu0
  %v7235 = vadd.f32 0.0, %v7234
  %v7236 = vpop.f32.mrf.mxu0
  %v7237 = vadd.f32 0.0, %v7236
  %v7238 = vpop.f32.mrf.mxu0
  %v7239 = vadd.f32 0.0, %v7238
  %7240 = vmatprep.mubr.bf16.mxu0 %v3682
  %7241 = vmatmul.mubr.bf16.gmra.mxu0 %v3681
  %v7242 = vpop.f32.mrf.mxu0
  %v7243 = vadd.f32 0.0, %v7242
  %v7244 = vpop.f32.mrf.mxu0
  %v7245 = vadd.f32 0.0, %v7244
  %v7246 = vpop.f32.mrf.mxu0
  %v7247 = vpop.f32.mrf.mxu0
  %7248 = vdwg.mxu0
  %7249 = vmatprep.subr.bf16.mxu0 0
  %7250 = vmatpush1.bf16.msra.mxu0 0
  %7251 = vmatprep.subr.bf16.mxu0 0
  %7252 = vmatpush1.bf16.msra.mxu0 0
  %7253 = vmatprep.subr.bf16.mxu0 0
  %7254 = vmatpush1.bf16.msra.mxu0 0
  %7255 = vmatprep.subr.bf16.mxu0 0
  %7256 = vmatpush1.bf16.msra.mxu0 0
  %7257 = vmatprep.subr.bf16.mxu0 0
  %7258 = vmatpush1.bf16.msra.mxu0 0
  %7259 = vmatprep.subr.bf16.mxu0 0
  %7260 = vmatpush1.bf16.msra.mxu0 0
  %7261 = vmatprep.subr.bf16.mxu0 %v5311
  %7262 = vmatpush1.bf16.msra.mxu0 %v5310
  %7263 = vmatprep.subr.bf16.mxu0 %v5309
  %7264 = vmatpush1.bf16.msra.mxu0 %v5308
  %7265 = vmatprep.subr.bf16.mxu0 0
  %7266 = vmatpush2.bf16.msra.mxu0 0
  %7267 = vmatprep.subr.bf16.mxu0 0
  %7268 = vmatpush2.bf16.msra.mxu0 0
  %7269 = vmatprep.subr.bf16.mxu0 0
  %7270 = vmatpush2.bf16.msra.mxu0 0
  %7271 = vmatprep.subr.bf16.mxu0 0
  %7272 = vmatpush2.bf16.msra.mxu0 0
  %7273 = vmatprep.subr.bf16.mxu0 0
  %7274 = vmatpush2.bf16.msra.mxu0 0
  %7275 = vmatprep.subr.bf16.mxu0 0
  %7276 = vmatpush2.bf16.msra.mxu0 0
  %7277 = vmatprep.subr.bf16.mxu0 0
  %7278 = vmatpush2.bf16.msra.mxu0 0
  %7279 = vmatprep.subr.bf16.mxu0 0
  %7280 = vmatpush2.bf16.msra.mxu0 0
  %7281 = vmatprep.mubr.bf16.mxu0 0
  %7282 = vmatmul.mubr.bf16.gmra.mxu0 %v3873
  %v7283 = vpop.f32.mrf.mxu0
  %v7284 = vadd.f32 %v7213, %v7283
  %v7285 = vpop.f32.mrf.mxu0
  %v7286 = vadd.f32 %v7215, %v7285
  %v7287 = vpop.f32.mrf.mxu0
  %v7288 = vadd.f32 %v7217, %v7287
  %v7289 = vpop.f32.mrf.mxu0
  %v7290 = vadd.f32 %v7219, %v7289
  %7291 = vmatprep.mubr.bf16.mxu0 0
  %7292 = vmatmul.mubr.bf16.gmra.mxu0 %v3876
  %v7293 = vpop.f32.mrf.mxu0
  %v7294 = vadd.f32 %v7223, %v7293
  %v7295 = vpop.f32.mrf.mxu0
  %v7296 = vadd.f32 %v7225, %v7295
  %v7297 = vpop.f32.mrf.mxu0
  %v7298 = vadd.f32 %v7227, %v7297
  %v7299 = vpop.f32.mrf.mxu0
  %v7300 = vadd.f32 %v7229, %v7299
  %7301 = vmatprep.mubr.bf16.mxu0 0
  %7302 = vmatmul.mubr.bf16.gmra.mxu0 %v3879
  %v7303 = vpop.f32.mrf.mxu0
  %v7304 = vadd.f32 %v7233, %v7303
  %v7305 = vpop.f32.mrf.mxu0
  %v7306 = vadd.f32 %v7235, %v7305
  %v7307 = vpop.f32.mrf.mxu0
  %v7308 = vadd.f32 %v7237, %v7307
  %v7309 = vpop.f32.mrf.mxu0
  %v7310 = vadd.f32 %v7239, %v7309
  %7311 = vmatprep.mubr.bf16.mxu0 0
  %7312 = vmatmul.mubr.bf16.gmra.mxu0 %v3882
  %v7313 = vpop.f32.mrf.mxu0
  %v7314 = vadd.f32 %v7243, %v7313
  %v7315 = vpop.f32.mrf.mxu0
  %v7316 = vadd.f32 %v7245, %v7315
  %v7317 = vpop.f32.mrf.mxu0
  %v7318 = vpop.f32.mrf.mxu0
  %7319 = vdwg.mxu0
  %v7320 = vadd.f32 %v7164, %v7284
  %v7321 = vadd.f32 %v7165, %v7286
  %v7322 = vadd.f32 %v7166, %v7288
  %v7323 = vadd.f32 %v7167, %v7290
  %v7324 = vadd.f32 %v7168, %v7294
  %v7325 = vadd.f32 %v7169, %v7296
  %v7326 = vadd.f32 %v7170, %v7298
  %v7327 = vadd.f32 %v7171, %v7300
  %v7328 = vadd.f32 %v7172, %v7304
  %v7329 = vadd.f32 %v7173, %v7306
  %v7330 = vadd.f32 %v7174, %v7308
  %v7331 = vadd.f32 %v7175, %v7310
  %v7332 = vadd.f32 %v7176, %v7314
  %v7333 = vadd.f32 %v7177, %v7316
  %7334 = vmatprep.subr.bf16.mxu0 %v5664
  %7335 = vmatpush1.bf16.msra.mxu0 %v5663
  %7336 = vmatprep.subr.bf16.mxu0 %v5662
  %7337 = vmatpush1.bf16.msra.mxu0 %v5661
  %7338 = vmatprep.subr.bf16.mxu0 %v5660
  %7339 = vmatpush1.bf16.msra.mxu0 %v5659
  %7340 = vmatprep.subr.bf16.mxu0 %v5658
  %7341 = vmatpush1.bf16.msra.mxu0 %v5657
  %7342 = vmatprep.subr.bf16.mxu0 %v5656
  %7343 = vmatpush1.bf16.msra.mxu0 %v5655
  %7344 = vmatprep.subr.bf16.mxu0 %v5654
  %7345 = vmatpush1.bf16.msra.mxu0 %v5653
  %7346 = vmatprep.subr.bf16.mxu0 %v5652
  %7347 = vmatpush1.bf16.msra.mxu0 %v5651
  %7348 = vmatprep.subr.bf16.mxu0 %v5650
  %7349 = vmatpush1.bf16.msra.mxu0 %v5649
  %7350 = vmatprep.subr.bf16.mxu0 %v5680
  %7351 = vmatpush2.bf16.msra.mxu0 %v5679
  %7352 = vmatprep.subr.bf16.mxu0 %v5678
  %7353 = vmatpush2.bf16.msra.mxu0 %v5677
  %7354 = vmatprep.subr.bf16.mxu0 %v5676
  %7355 = vmatpush2.bf16.msra.mxu0 %v5675
  %7356 = vmatprep.subr.bf16.mxu0 %v5674
  %7357 = vmatpush2.bf16.msra.mxu0 %v5673
  %7358 = vmatprep.subr.bf16.mxu0 %v5672
  %7359 = vmatpush2.bf16.msra.mxu0 %v5671
  %7360 = vmatprep.subr.bf16.mxu0 %v5670
  %7361 = vmatpush2.bf16.msra.mxu0 %v5669
  %7362 = vmatprep.subr.bf16.mxu0 %v5668
  %7363 = vmatpush2.bf16.msra.mxu0 %v5667
  %7364 = vmatprep.subr.bf16.mxu0 %v5666
  %7365 = vmatpush2.bf16.msra.mxu0 %v5665
  %7366 = vmatprep.mubr.bf16.mxu0 %v6537
  %7367 = vmatmul.mubr.bf16.gmra.mxu0 %v6536
  %v7368 = vpop.f32.mrf.mxu0
  %v7369 = vadd.f32 0.0, %v7368
  %v7370 = vpop.f32.mrf.mxu0
  %v7371 = vadd.f32 0.0, %v7370
  %v7372 = vpop.f32.mrf.mxu0
  %v7373 = vadd.f32 0.0, %v7372
  %v7374 = vpop.f32.mrf.mxu0
  %v7375 = vadd.f32 0.0, %v7374
  %7376 = vmatprep.mubr.bf16.mxu0 %v6540
  %7377 = vmatmul.mubr.bf16.gmra.mxu0 %v6539
  %v7378 = vpop.f32.mrf.mxu0
  %v7379 = vadd.f32 0.0, %v7378
  %v7380 = vpop.f32.mrf.mxu0
  %v7381 = vadd.f32 0.0, %v7380
  %v7382 = vpop.f32.mrf.mxu0
  %v7383 = vadd.f32 0.0, %v7382
  %v7384 = vpop.f32.mrf.mxu0
  %v7385 = vadd.f32 0.0, %v7384
  %7386 = vmatprep.mubr.bf16.mxu0 %v6543
  %7387 = vmatmul.mubr.bf16.gmra.mxu0 %v6542
  %v7388 = vpop.f32.mrf.mxu0
  %v7389 = vadd.f32 0.0, %v7388
  %v7390 = vpop.f32.mrf.mxu0
  %v7391 = vadd.f32 0.0, %v7390
  %v7392 = vpop.f32.mrf.mxu0
  %v7393 = vadd.f32 0.0, %v7392
  %v7394 = vpop.f32.mrf.mxu0
  %v7395 = vadd.f32 0.0, %v7394
  %7396 = vmatprep.mubr.bf16.mxu0 %v6546
  %7397 = vmatmul.mubr.bf16.gmra.mxu0 %v6545
  %v7398 = vpop.f32.mrf.mxu0
  %v7399 = vadd.f32 0.0, %v7398
  %v7400 = vpop.f32.mrf.mxu0
  %v7401 = vadd.f32 0.0, %v7400
  %v7402 = vpop.f32.mrf.mxu0
  %v7403 = vpop.f32.mrf.mxu0
  %7404 = vdwg.mxu0
  %7405 = vmatprep.subr.bf16.mxu0 0
  %7406 = vmatpush1.bf16.msra.mxu0 0
  %7407 = vmatprep.subr.bf16.mxu0 0
  %7408 = vmatpush1.bf16.msra.mxu0 0
  %7409 = vmatprep.subr.bf16.mxu0 0
  %7410 = vmatpush1.bf16.msra.mxu0 0
  %7411 = vmatprep.subr.bf16.mxu0 0
  %7412 = vmatpush1.bf16.msra.mxu0 0
  %7413 = vmatprep.subr.bf16.mxu0 0
  %7414 = vmatpush1.bf16.msra.mxu0 0
  %7415 = vmatprep.subr.bf16.mxu0 0
  %7416 = vmatpush1.bf16.msra.mxu0 0
  %7417 = vmatprep.subr.bf16.mxu0 %v5684
  %7418 = vmatpush1.bf16.msra.mxu0 %v5683
  %7419 = vmatprep.subr.bf16.mxu0 %v5682
  %7420 = vmatpush1.bf16.msra.mxu0 %v5681
  %7421 = vmatprep.subr.bf16.mxu0 0
  %7422 = vmatpush2.bf16.msra.mxu0 0
  %7423 = vmatprep.subr.bf16.mxu0 0
  %7424 = vmatpush2.bf16.msra.mxu0 0
  %7425 = vmatprep.subr.bf16.mxu0 0
  %7426 = vmatpush2.bf16.msra.mxu0 0
  %7427 = vmatprep.subr.bf16.mxu0 0
  %7428 = vmatpush2.bf16.msra.mxu0 0
  %7429 = vmatprep.subr.bf16.mxu0 0
  %7430 = vmatpush2.bf16.msra.mxu0 0
  %7431 = vmatprep.subr.bf16.mxu0 0
  %7432 = vmatpush2.bf16.msra.mxu0 0
  %7433 = vmatprep.subr.bf16.mxu0 0
  %7434 = vmatpush2.bf16.msra.mxu0 0
  %7435 = vmatprep.subr.bf16.mxu0 0
  %7436 = vmatpush2.bf16.msra.mxu0 0
  %7437 = vmatprep.mubr.bf16.mxu0 0
  %7438 = vmatmul.mubr.bf16.gmra.mxu0 %v6557
  %v7439 = vpop.f32.mrf.mxu0
  %v7440 = vadd.f32 %v7369, %v7439
  %v7441 = vpop.f32.mrf.mxu0
  %v7442 = vadd.f32 %v7371, %v7441
  %v7443 = vpop.f32.mrf.mxu0
  %v7444 = vadd.f32 %v7373, %v7443
  %v7445 = vpop.f32.mrf.mxu0
  %v7446 = vadd.f32 %v7375, %v7445
  %7447 = vmatprep.mubr.bf16.mxu0 0
  %7448 = vmatmul.mubr.bf16.gmra.mxu0 %v6560
  %v7449 = vpop.f32.mrf.mxu0
  %v7450 = vadd.f32 %v7379, %v7449
  %v7451 = vpop.f32.mrf.mxu0
  %v7452 = vadd.f32 %v7381, %v7451
  %v7453 = vpop.f32.mrf.mxu0
  %v7454 = vadd.f32 %v7383, %v7453
  %v7455 = vpop.f32.mrf.mxu0
  %v7456 = vadd.f32 %v7385, %v7455
  %7457 = vmatprep.mubr.bf16.mxu0 0
  %7458 = vmatmul.mubr.bf16.gmra.mxu0 %v6563
  %v7459 = vpop.f32.mrf.mxu0
  %v7460 = vadd.f32 %v7389, %v7459
  %v7461 = vpop.f32.mrf.mxu0
  %v7462 = vadd.f32 %v7391, %v7461
  %v7463 = vpop.f32.mrf.mxu0
  %v7464 = vadd.f32 %v7393, %v7463
  %v7465 = vpop.f32.mrf.mxu0
  %v7466 = vadd.f32 %v7395, %v7465
  %7467 = vmatprep.mubr.bf16.mxu0 0
  %7468 = vmatmul.mubr.bf16.gmra.mxu0 %v6566
  %v7469 = vpop.f32.mrf.mxu0
  %v7470 = vadd.f32 %v7399, %v7469
  %v7471 = vpop.f32.mrf.mxu0
  %v7472 = vadd.f32 %v7401, %v7471
  %v7473 = vpop.f32.mrf.mxu0
  %v7474 = vpop.f32.mrf.mxu0
  %7475 = vdwg.mxu0
  %v7476 = vadd.f32 %v7320, %v7440
  %v7477 = vadd.f32 %v7321, %v7442
  %v7478 = vadd.f32 %v7322, %v7444
  %v7479 = vadd.f32 %v7323, %v7446
  %v7480 = vadd.f32 %v7324, %v7450
  %v7481 = vadd.f32 %v7325, %v7452
  %v7482 = vadd.f32 %v7326, %v7454
  %v7483 = vadd.f32 %v7327, %v7456
  %v7484 = vadd.f32 %v7328, %v7460
  %v7485 = vadd.f32 %v7329, %v7462
  %v7486 = vadd.f32 %v7330, %v7464
  %v7487 = vadd.f32 %v7331, %v7466
  %v7488 = vadd.f32 %v7332, %v7470
  %v7489 = vadd.f32 %v7333, %v7472
  %v7490 = vmax.f32 %v6724, %v7476
  %v7491 = vmax.f32 %v6725, %v7477
  %v7492 = vmax.f32 %v6726, %v7478
  %v7493 = vmax.f32 %v6727, %v7479
  %v7494 = vmax.f32 %v6728, %v7480
  %v7495 = vmax.f32 %v6729, %v7481
  %v7496 = vmax.f32 %v6730, %v7482
  %v7497 = vmax.f32 %v6731, %v7483
  %v7498 = vmax.f32 %v6732, %v7484
  %v7499 = vmax.f32 %v6733, %v7485
  %v7500 = vmax.f32 %v6734, %v7486
  %v7501 = vmax.f32 %v6735, %v7487
  %v7502 = vmax.f32 %v6736, %v7488
  %v7503 = vmax.f32 %v6737, %v7489
  %v7504 = vld [vmem:[%s4] sm:$0x3]
  %v7506 = vlaneseq
  %v7507 = vshrl.u32 %v7506, 7
  %v7508 = vsub.s32 0, %v7507
  %v7509 = vrot.slane %v7504, %v7508
  %v7510 = vlaneseq
  %v7511 = vshrl.u32 %v7510, 7
  %v7512 = vsub.s32 1, %v7511
  %v7513 = vrot.slane %v7504, %v7512
  %v7516 = vadd.f32 %v7490, %v7509
  %v7517 = vadd.f32 %v7491, %v7513
  %v7518 = vadd.f32 %v7492, %v7509
  %v7519 = vadd.f32 %v7493, %v7513
  %v7520 = vadd.f32 %v7494, %v7509
  %v7521 = vadd.f32 %v7495, %v7513
  %v7522 = vadd.f32 %v7496, %v7509
  %v7523 = vadd.f32 %v7497, %v7513
  %v7524 = vadd.f32 %v7498, %v7509
  %v7525 = vadd.f32 %v7499, %v7513
  %v7526 = vadd.f32 %v7500, %v7509
  %v7527 = vadd.f32 %v7501, %v7513
  %v7528 = vadd.f32 %v7502, %v7509
  %v7529 = vadd.f32 %v7503, %v7513
  %v7530 = vmax.f32 %v7516, 0.0
  %v7531 = vmax.f32 %v7517, 0.0
  %v7532 = vmax.f32 %v7518, 0.0
  %v7533 = vmax.f32 %v7519, 0.0
  %v7534 = vmax.f32 %v7520, 0.0
  %v7535 = vmax.f32 %v7521, 0.0
  %v7536 = vmax.f32 %v7522, 0.0
  %v7537 = vmax.f32 %v7523, 0.0
  %v7538 = vmax.f32 %v7524, 0.0
  %v7539 = vmax.f32 %v7525, 0.0
  %v7540 = vmax.f32 %v7526, 0.0
  %v7541 = vmax.f32 %v7527, 0.0
  %v7542 = vmax.f32 %v7528, 0.0
  %v7543 = vmax.f32 %v7529, 0.0
  %v7544 = vpack.c.bf16 %v7532, %v7530
  %v7545 = vpack.c.bf16 %v7533, %v7531
  %v7546 = vpack.c.bf16 %v7536, %v7534
  %v7547 = vpack.c.bf16 %v7537, %v7535
  %v7548 = vpack.c.bf16 %v7540, %v7538
  %v7549 = vpack.c.bf16 %v7541, %v7539
  %v7550 = vpack.c.bf16 %v7542, %v7542
  %v7551 = vpack.c.bf16 %v7543, %v7543
  %v7552 = vld [vmem:[%s5] sm:$0xf]
  %v7553 = vld [vmem:[%s5 + $0x4] sm:$0xf]
  %v7554 = vld [vmem:[%s5 + $0x8] sm:$0xf]
  %v7555 = vld [vmem:[%s5 + $0xc] sm:$0xf]
  %v7556 = vld [vmem:[%s5 + $0x10] sm:$0xf]
  %v7557 = vld [vmem:[%s5 + $0x14] sm:$0xf]
  %v7558 = vld [vmem:[%s5 + $0x18] sm:$0xf]
  %v7559 = vld [vmem:[%s5 + $0x1c] sm:$0xf]
  %v7560 = vld [vmem:[%s5 + $0x20] sm:$0xf]
  %v7561 = vld [vmem:[%s5 + $0x24] sm:$0xf]
  %v7562 = vld [vmem:[%s5 + $0x28] sm:$0xf]
  %v7563 = vld [vmem:[%s5 + $0x2c] sm:$0xf]
  %v7564 = vld [vmem:[%s5 + $0x30] sm:$0xf]
  %v7565 = vld [vmem:[%s5 + $0x34] sm:$0xf]
  %v7566 = vld [vmem:[%s5 + $0x38] sm:$0xf]
  %v7567 = vld [vmem:[%s5 + $0x3c] sm:$0xf]
  %v7568 = vld [vmem:[%s5 + $0x40] sm:$0xf]
  %v7569 = vld [vmem:[%s5 + $0x44] sm:$0xf]
  %v7570 = vld [vmem:[%s5 + $0x48] sm:$0xf]
  %v7571 = vld [vmem:[%s5 + $0x4c] sm:$0xf]
  %v7572 = vld [vmem:[%s5 + $0x50] sm:$0xf]
  %v7573 = vld [vmem:[%s5 + $0x54] sm:$0xf]
  %v7574 = vld [vmem:[%s5 + $0x58] sm:$0xf]
  %v7575 = vld [vmem:[%s5 + $0x5c] sm:$0xf]
  %v7576 = vld [vmem:[%s5 + $0x60] sm:$0xf]
  %v7577 = vld [vmem:[%s5 + $0x64] sm:$0xf]
  %v7578 = vld [vmem:[%s5 + $0x68] sm:$0xf]
  %v7579 = vld [vmem:[%s5 + $0x6c] sm:$0xf]
  %s7580 = scalar_lea.vmem %s5, 112
  %v7581 = vld [vmem:[%s7580] sm:$0xf]
  %v7582 = vld [vmem:[%s7580 + $0x4] sm:$0xf]
  %v7583 = vld [vmem:[%s7580 + $0x8] sm:$0xf]
  %v7584 = vld [vmem:[%s7580 + $0xc] sm:$0xf]
  %v7585 = vld [vmem:[%s7580 + $0x10] sm:$0xf]
  %v7586 = vld [vmem:[%s7580 + $0x14] sm:$0xf]
  %v7587 = vld [vmem:[%s7580 + $0x18] sm:$0xf]
  %v7588 = vld [vmem:[%s7580 + $0x1c] sm:$0xf]
  %v7589 = vld [vmem:[%s7580 + $0x20] sm:$0xf]
  %v7590 = vld [vmem:[%s7580 + $0x24] sm:$0xf]
  %v7591 = vld [vmem:[%s7580 + $0x28] sm:$0xf]
  %v7592 = vld [vmem:[%s7580 + $0x2c] sm:$0xf]
  %v7593 = vld [vmem:[%s7580 + $0x30] sm:$0xf]
  %v7594 = vld [vmem:[%s7580 + $0x34] sm:$0xf]
  %v7595 = vld [vmem:[%s7580 + $0x38] sm:$0xf]
  %v7596 = vld [vmem:[%s7580 + $0x3c] sm:$0xf]
  %v7597 = vld [vmem:[%s7580 + $0x40] sm:$0xf]
  %v7598 = vld [vmem:[%s7580 + $0x44] sm:$0xf]
  %v7599 = vld [vmem:[%s7580 + $0x48] sm:$0xf]
  %v7600 = vld [vmem:[%s7580 + $0x4c] sm:$0xf]
  %v7601 = vld [vmem:[%s7580 + $0x50] sm:$0xf]
  %v7602 = vld [vmem:[%s7580 + $0x54] sm:$0xf]
  %v7603 = vld [vmem:[%s7580 + $0x58] sm:$0xf]
  %v7604 = vld [vmem:[%s7580 + $0x5c] sm:$0xf]
  %v7605 = vld [vmem:[%s7580 + $0x60] sm:$0xf]
  %v7606 = vld [vmem:[%s7580 + $0x64] sm:$0xf]
  %v7607 = vld [vmem:[%s7580 + $0x68] sm:$0xf]
  %v7608 = vld [vmem:[%s7580 + $0x6c] sm:$0xf]
  %v7611 = vrot.slane %v7544, 4
  %v7612 = vrot.slane %v7545, 4
  %v7642 = vunpack.c.l.b16 %v7581
  %v7643 = vunpack.c.l.b16 %v7582
  %v7644 = vunpack.c.l.b16 %v7583
  %v7645 = vunpack.c.l.b16 %v7584
  %v7646 = vunpack.c.l.b16 %v7585
  %v7647 = vunpack.c.l.b16 %v7586
  %v7648 = vunpack.c.l.b16 %v7587
  %v7649 = vunpack.c.l.b16 %v7588
  %v7650 = vunpack.c.l.b16 %v7589
  %v7651 = vunpack.c.l.b16 %v7590
  %v7652 = vunpack.c.l.b16 %v7591
  %v7653 = vunpack.c.l.b16 %v7592
  %v7654 = vunpack.c.l.b16 %v7593
  %v7655 = vunpack.c.l.b16 %v7594
  %v7656 = vunpack.c.l.b16 %v7595
  %v7657 = vunpack.c.l.b16 %v7596
  %v7658 = vunpack.c.l.b16 %v7597
  %v7659 = vunpack.c.l.b16 %v7598
  %v7660 = vunpack.c.l.b16 %v7599
  %v7661 = vunpack.c.l.b16 %v7600
  %v7662 = vunpack.c.l.b16 %v7601
  %v7663 = vunpack.c.l.b16 %v7602
  %v7664 = vunpack.c.l.b16 %v7603
  %v7665 = vunpack.c.l.b16 %v7604
  %v7666 = vunpack.c.l.b16 %v7605
  %v7667 = vunpack.c.l.b16 %v7606
  %v7668 = vunpack.c.l.b16 %v7607
  %v7669 = vunpack.c.l.b16 %v7608
  %v7670 = vpack.c.b16 %v7643, %v7642
  %v7671 = vpack.c.b16 %v7645, %v7644
  %v7672 = vpack.c.b16 %v7647, %v7646
  %v7673 = vpack.c.b16 %v7649, %v7648
  %v7674 = vpack.c.b16 %v7651, %v7650
  %v7675 = vpack.c.b16 %v7653, %v7652
  %v7676 = vpack.c.b16 %v7655, %v7654
  %v7677 = vpack.c.b16 %v7657, %v7656
  %v7678 = vpack.c.b16 %v7659, %v7658
  %v7679 = vpack.c.b16 %v7661, %v7660
  %v7680 = vpack.c.b16 %v7663, %v7662
  %v7681 = vpack.c.b16 %v7665, %v7664
  %v7682 = vpack.c.b16 %v7667, %v7666
  %v7683 = vpack.c.b16 %v7669, %v7668
  %vm7698 = vcmask 785408
  %v7700 = vsel %vm7698, %v7612, 0
  %7702 = vmatprep.subr.bf16.mxu0 0
  %7703 = vmatpush1.bf16.msra.mxu0 %v7677
  %7704 = vmatprep.subr.bf16.mxu0 0
  %7705 = vmatpush1.bf16.msra.mxu0 %v7676
  %7706 = vmatprep.subr.bf16.mxu0 0
  %7707 = vmatpush1.bf16.msra.mxu0 %v7675
  %7708 = vmatprep.subr.bf16.mxu0 0
  %7709 = vmatpush1.bf16.msra.mxu0 %v7674
  %7710 = vmatprep.subr.bf16.mxu0 0
  %7711 = vmatpush1.bf16.msra.mxu0 %v7673
  %7712 = vmatprep.subr.bf16.mxu0 0
  %7713 = vmatpush1.bf16.msra.mxu0 %v7672
  %7714 = vmatprep.subr.bf16.mxu0 0
  %7715 = vmatpush1.bf16.msra.mxu0 %v7671
  %7716 = vmatprep.subr.bf16.mxu0 0
  %7717 = vmatpush1.bf16.msra.mxu0 %v7670
  %7718 = vmatprep.subr.bf16.mxu0 0
  %7719 = vmatpush2.bf16.msra.mxu0 0
  %7720 = vmatprep.subr.bf16.mxu0 0
  %7721 = vmatpush2.bf16.msra.mxu0 0
  %7722 = vmatprep.subr.bf16.mxu0 0
  %7723 = vmatpush2.bf16.msra.mxu0 %v7683
  %7724 = vmatprep.subr.bf16.mxu0 0
  %7725 = vmatpush2.bf16.msra.mxu0 %v7682
  %7726 = vmatprep.subr.bf16.mxu0 0
  %7727 = vmatpush2.bf16.msra.mxu0 %v7681
  %7728 = vmatprep.subr.bf16.mxu0 0
  %7729 = vmatpush2.bf16.msra.mxu0 %v7680
  %7730 = vmatprep.subr.bf16.mxu0 0
  %7731 = vmatpush2.bf16.msra.mxu0 %v7679
  %7732 = vmatprep.subr.bf16.mxu0 0
  %7733 = vmatpush2.bf16.msra.mxu0 %v7678
  %7734 = vmatprep.mubr.bf16.mxu0 %v7700
  %7735 = vmatmul.mubr.bf16.gmra.mxu0 %v7611
  %v7736 = vpop.f32.mrf.mxu0
  %v7737 = vadd.f32 0.0, %v7736
  %v7738 = vpop.f32.mrf.mxu0
  %v7739 = vpop.f32.mrf.mxu0
  %v7740 = vpop.f32.mrf.mxu0
  %7741 = vdwg.mxu0
  %v7770 = vunpack.c.l.b16 %v7552
  %v7771 = vunpack.c.l.b16 %v7553
  %v7772 = vunpack.c.l.b16 %v7554
  %v7773 = vunpack.c.l.b16 %v7555
  %v7774 = vunpack.c.l.b16 %v7556
  %v7775 = vunpack.c.l.b16 %v7557
  %v7776 = vunpack.c.l.b16 %v7558
  %v7777 = vunpack.c.l.b16 %v7559
  %v7778 = vunpack.c.l.b16 %v7560
  %v7779 = vunpack.c.l.b16 %v7561
  %v7780 = vunpack.c.l.b16 %v7562
  %v7781 = vunpack.c.l.b16 %v7563
  %v7782 = vunpack.c.l.b16 %v7564
  %v7783 = vunpack.c.l.b16 %v7565
  %v7784 = vunpack.c.l.b16 %v7566
  %v7785 = vunpack.c.l.b16 %v7567
  %v7786 = vunpack.c.l.b16 %v7568
  %v7787 = vunpack.c.l.b16 %v7569
  %v7788 = vunpack.c.l.b16 %v7570
  %v7789 = vunpack.c.l.b16 %v7571
  %v7790 = vunpack.c.l.b16 %v7572
  %v7791 = vunpack.c.l.b16 %v7573
  %v7792 = vunpack.c.l.b16 %v7574
  %v7793 = vunpack.c.l.b16 %v7575
  %v7794 = vunpack.c.l.b16 %v7576
  %v7795 = vunpack.c.l.b16 %v7577
  %v7796 = vunpack.c.l.b16 %v7578
  %v7797 = vunpack.c.l.b16 %v7579
  %v7798 = vpack.c.b16 %v7771, %v7770
  %v7799 = vpack.c.b16 %v7773, %v7772
  %v7800 = vpack.c.b16 %v7775, %v7774
  %v7801 = vpack.c.b16 %v7777, %v7776
  %v7802 = vpack.c.b16 %v7779, %v7778
  %v7803 = vpack.c.b16 %v7781, %v7780
  %v7804 = vpack.c.b16 %v7783, %v7782
  %v7805 = vpack.c.b16 %v7785, %v7784
  %v7806 = vpack.c.b16 %v7787, %v7786
  %v7807 = vpack.c.b16 %v7789, %v7788
  %v7808 = vpack.c.b16 %v7791, %v7790
  %v7809 = vpack.c.b16 %v7793, %v7792
  %v7810 = vpack.c.b16 %v7795, %v7794
  %v7811 = vpack.c.b16 %v7797, %v7796
  %v7827 = vsel %vm7698, %v7545, 0
  %7829 = vmatprep.subr.bf16.mxu0 0
  %7830 = vmatpush1.bf16.msra.mxu0 %v7805
  %7831 = vmatprep.subr.bf16.mxu0 0
  %7832 = vmatpush1.bf16.msra.mxu0 %v7804
  %7833 = vmatprep.subr.bf16.mxu0 0
  %7834 = vmatpush1.bf16.msra.mxu0 %v7803
  %7835 = vmatprep.subr.bf16.mxu0 0
  %7836 = vmatpush1.bf16.msra.mxu0 %v7802
  %7837 = vmatprep.subr.bf16.mxu0 0
  %7838 = vmatpush1.bf16.msra.mxu0 %v7801
  %7839 = vmatprep.subr.bf16.mxu0 0
  %7840 = vmatpush1.bf16.msra.mxu0 %v7800
  %7841 = vmatprep.subr.bf16.mxu0 0
  %7842 = vmatpush1.bf16.msra.mxu0 %v7799
  %7843 = vmatprep.subr.bf16.mxu0 0
  %7844 = vmatpush1.bf16.msra.mxu0 %v7798
  %7845 = vmatprep.subr.bf16.mxu0 0
  %7846 = vmatpush2.bf16.msra.mxu0 0
  %7847 = vmatprep.subr.bf16.mxu0 0
  %7848 = vmatpush2.bf16.msra.mxu0 0
  %7849 = vmatprep.subr.bf16.mxu0 0
  %7850 = vmatpush2.bf16.msra.mxu0 %v7811
  %7851 = vmatprep.subr.bf16.mxu0 0
  %7852 = vmatpush2.bf16.msra.mxu0 %v7810
  %7853 = vmatprep.subr.bf16.mxu0 0
  %7854 = vmatpush2.bf16.msra.mxu0 %v7809
  %7855 = vmatprep.subr.bf16.mxu0 0
  %7856 = vmatpush2.bf16.msra.mxu0 %v7808
  %7857 = vmatprep.subr.bf16.mxu0 0
  %7858 = vmatpush2.bf16.msra.mxu0 %v7807
  %7859 = vmatprep.subr.bf16.mxu0 0
  %7860 = vmatpush2.bf16.msra.mxu0 %v7806
  %7861 = vmatprep.mubr.bf16.mxu0 %v7827
  %7862 = vmatmul.mubr.bf16.gmra.mxu0 %v7544
  %v7863 = vpop.f32.mrf.mxu0
  %v7864 = vadd.f32 %v7737, %v7863
  %v7865 = vpop.f32.mrf.mxu0
  %v7866 = vpop.f32.mrf.mxu0
  %v7867 = vpop.f32.mrf.mxu0
  %7868 = vdwg.mxu0
  %s7869 = scalar_lea.vmem %s5, 224
  %v7870 = vld [vmem:[%s7869] sm:$0xf]
  %v7871 = vld [vmem:[%s7869 + $0x4] sm:$0xf]
  %v7872 = vld [vmem:[%s7869 + $0x8] sm:$0xf]
  %v7873 = vld [vmem:[%s7869 + $0xc] sm:$0xf]
  %v7874 = vld [vmem:[%s7869 + $0x10] sm:$0xf]
  %v7875 = vld [vmem:[%s7869 + $0x14] sm:$0xf]
  %v7876 = vld [vmem:[%s7869 + $0x18] sm:$0xf]
  %v7877 = vld [vmem:[%s7869 + $0x1c] sm:$0xf]
  %v7878 = vld [vmem:[%s7869 + $0x20] sm:$0xf]
  %v7879 = vld [vmem:[%s7869 + $0x24] sm:$0xf]
  %v7880 = vld [vmem:[%s7869 + $0x28] sm:$0xf]
  %v7881 = vld [vmem:[%s7869 + $0x2c] sm:$0xf]
  %v7882 = vld [vmem:[%s7869 + $0x30] sm:$0xf]
  %v7883 = vld [vmem:[%s7869 + $0x34] sm:$0xf]
  %v7884 = vld [vmem:[%s7869 + $0x38] sm:$0xf]
  %v7885 = vld [vmem:[%s7869 + $0x3c] sm:$0xf]
  %v7886 = vld [vmem:[%s7869 + $0x40] sm:$0xf]
  %v7887 = vld [vmem:[%s7869 + $0x44] sm:$0xf]
  %v7888 = vld [vmem:[%s7869 + $0x48] sm:$0xf]
  %v7889 = vld [vmem:[%s7869 + $0x4c] sm:$0xf]
  %v7890 = vld [vmem:[%s7869 + $0x50] sm:$0xf]
  %v7891 = vld [vmem:[%s7869 + $0x54] sm:$0xf]
  %v7892 = vld [vmem:[%s7869 + $0x58] sm:$0xf]
  %v7893 = vld [vmem:[%s7869 + $0x5c] sm:$0xf]
  %v7894 = vld [vmem:[%s7869 + $0x60] sm:$0xf]
  %v7895 = vld [vmem:[%s7869 + $0x64] sm:$0xf]
  %v7896 = vld [vmem:[%s7869 + $0x68] sm:$0xf]
  %v7897 = vld [vmem:[%s7869 + $0x6c] sm:$0xf]
  %v7926 = vunpack.c.l.b16 %v7870
  %v7927 = vunpack.c.l.b16 %v7871
  %v7928 = vunpack.c.l.b16 %v7872
  %v7929 = vunpack.c.l.b16 %v7873
  %v7930 = vunpack.c.l.b16 %v7874
  %v7931 = vunpack.c.l.b16 %v7875
  %v7932 = vunpack.c.l.b16 %v7876
  %v7933 = vunpack.c.l.b16 %v7877
  %v7934 = vunpack.c.l.b16 %v7878
  %v7935 = vunpack.c.l.b16 %v7879
  %v7936 = vunpack.c.l.b16 %v7880
  %v7937 = vunpack.c.l.b16 %v7881
  %v7938 = vunpack.c.l.b16 %v7882
  %v7939 = vunpack.c.l.b16 %v7883
  %v7940 = vunpack.c.l.b16 %v7884
  %v7941 = vunpack.c.l.b16 %v7885
  %v7942 = vunpack.c.l.b16 %v7886
  %v7943 = vunpack.c.l.b16 %v7887
  %v7944 = vunpack.c.l.b16 %v7888
  %v7945 = vunpack.c.l.b16 %v7889
  %v7946 = vunpack.c.l.b16 %v7890
  %v7947 = vunpack.c.l.b16 %v7891
  %v7948 = vunpack.c.l.b16 %v7892
  %v7949 = vunpack.c.l.b16 %v7893
  %v7950 = vunpack.c.l.b16 %v7894
  %v7951 = vunpack.c.l.b16 %v7895
  %v7952 = vunpack.c.l.b16 %v7896
  %v7953 = vunpack.c.l.b16 %v7897
  %v7954 = vpack.c.b16 %v7927, %v7926
  %v7955 = vpack.c.b16 %v7929, %v7928
  %v7956 = vpack.c.b16 %v7931, %v7930
  %v7957 = vpack.c.b16 %v7933, %v7932
  %v7958 = vpack.c.b16 %v7935, %v7934
  %v7959 = vpack.c.b16 %v7937, %v7936
  %v7960 = vpack.c.b16 %v7939, %v7938
  %v7961 = vpack.c.b16 %v7941, %v7940
  %v7962 = vpack.c.b16 %v7943, %v7942
  %v7963 = vpack.c.b16 %v7945, %v7944
  %v7964 = vpack.c.b16 %v7947, %v7946
  %v7965 = vpack.c.b16 %v7949, %v7948
  %v7966 = vpack.c.b16 %v7951, %v7950
  %v7967 = vpack.c.b16 %v7953, %v7952
  %v7983 = vsel %vm7698, %v7547, 0
  %7985 = vmatprep.subr.bf16.mxu0 0
  %7986 = vmatpush1.bf16.msra.mxu0 %v7961
  %7987 = vmatprep.subr.bf16.mxu0 0
  %7988 = vmatpush1.bf16.msra.mxu0 %v7960
  %7989 = vmatprep.subr.bf16.mxu0 0
  %7990 = vmatpush1.bf16.msra.mxu0 %v7959
  %7991 = vmatprep.subr.bf16.mxu0 0
  %7992 = vmatpush1.bf16.msra.mxu0 %v7958
  %7993 = vmatprep.subr.bf16.mxu0 0
  %7994 = vmatpush1.bf16.msra.mxu0 %v7957
  %7995 = vmatprep.subr.bf16.mxu0 0
  %7996 = vmatpush1.bf16.msra.mxu0 %v7956
  %7997 = vmatprep.subr.bf16.mxu0 0
  %7998 = vmatpush1.bf16.msra.mxu0 %v7955
  %7999 = vmatprep.subr.bf16.mxu0 0
  %8000 = vmatpush1.bf16.msra.mxu0 %v7954
  %8001 = vmatprep.subr.bf16.mxu0 0
  %8002 = vmatpush2.bf16.msra.mxu0 0
  %8003 = vmatprep.subr.bf16.mxu0 0
  %8004 = vmatpush2.bf16.msra.mxu0 0
  %8005 = vmatprep.subr.bf16.mxu0 0
  %8006 = vmatpush2.bf16.msra.mxu0 %v7967
  %8007 = vmatprep.subr.bf16.mxu0 0
  %8008 = vmatpush2.bf16.msra.mxu0 %v7966
  %8009 = vmatprep.subr.bf16.mxu0 0
  %8010 = vmatpush2.bf16.msra.mxu0 %v7965
  %8011 = vmatprep.subr.bf16.mxu0 0
  %8012 = vmatpush2.bf16.msra.mxu0 %v7964
  %8013 = vmatprep.subr.bf16.mxu0 0
  %8014 = vmatpush2.bf16.msra.mxu0 %v7963
  %8015 = vmatprep.subr.bf16.mxu0 0
  %8016 = vmatpush2.bf16.msra.mxu0 %v7962
  %8017 = vmatprep.mubr.bf16.mxu0 %v7983
  %8018 = vmatmul.mubr.bf16.gmra.mxu0 %v7546
  %v8019 = vpop.f32.mrf.mxu0
  %v8020 = vadd.f32 0.0, %v8019
  %v8021 = vpop.f32.mrf.mxu0
  %v8022 = vpop.f32.mrf.mxu0
  %v8023 = vpop.f32.mrf.mxu0
  %8024 = vdwg.mxu0
  %v8025 = vadd.f32 %v7864, %v8020
  %s8026 = scalar_lea.vmem %s5, 336
  %v8027 = vld [vmem:[%s8026] sm:$0xf]
  %v8028 = vld [vmem:[%s8026 + $0x4] sm:$0xf]
  %v8029 = vld [vmem:[%s8026 + $0x8] sm:$0xf]
  %v8030 = vld [vmem:[%s8026 + $0xc] sm:$0xf]
  %v8031 = vld [vmem:[%s8026 + $0x10] sm:$0xf]
  %v8032 = vld [vmem:[%s8026 + $0x14] sm:$0xf]
  %v8033 = vld [vmem:[%s8026 + $0x18] sm:$0xf]
  %v8034 = vld [vmem:[%s8026 + $0x1c] sm:$0xf]
  %v8035 = vld [vmem:[%s8026 + $0x20] sm:$0xf]
  %v8036 = vld [vmem:[%s8026 + $0x24] sm:$0xf]
  %v8037 = vld [vmem:[%s8026 + $0x28] sm:$0xf]
  %v8038 = vld [vmem:[%s8026 + $0x2c] sm:$0xf]
  %v8039 = vld [vmem:[%s8026 + $0x30] sm:$0xf]
  %v8040 = vld [vmem:[%s8026 + $0x34] sm:$0xf]
  %v8041 = vld [vmem:[%s8026 + $0x38] sm:$0xf]
  %v8042 = vld [vmem:[%s8026 + $0x3c] sm:$0xf]
  %v8043 = vld [vmem:[%s8026 + $0x40] sm:$0xf]
  %v8044 = vld [vmem:[%s8026 + $0x44] sm:$0xf]
  %v8045 = vld [vmem:[%s8026 + $0x48] sm:$0xf]
  %v8046 = vld [vmem:[%s8026 + $0x4c] sm:$0xf]
  %v8047 = vld [vmem:[%s8026 + $0x50] sm:$0xf]
  %v8048 = vld [vmem:[%s8026 + $0x54] sm:$0xf]
  %v8049 = vld [vmem:[%s8026 + $0x58] sm:$0xf]
  %v8050 = vld [vmem:[%s8026 + $0x5c] sm:$0xf]
  %v8051 = vld [vmem:[%s8026 + $0x60] sm:$0xf]
  %v8052 = vld [vmem:[%s8026 + $0x64] sm:$0xf]
  %v8053 = vld [vmem:[%s8026 + $0x68] sm:$0xf]
  %v8054 = vld [vmem:[%s8026 + $0x6c] sm:$0xf]
  %v8057 = vrot.slane %v7546, 4
  %v8058 = vrot.slane %v7547, 4
  %v8088 = vunpack.c.l.b16 %v8027
  %v8089 = vunpack.c.l.b16 %v8028
  %v8090 = vunpack.c.l.b16 %v8029
  %v8091 = vunpack.c.l.b16 %v8030
  %v8092 = vunpack.c.l.b16 %v8031
  %v8093 = vunpack.c.l.b16 %v8032
  %v8094 = vunpack.c.l.b16 %v8033
  %v8095 = vunpack.c.l.b16 %v8034
  %v8096 = vunpack.c.l.b16 %v8035
  %v8097 = vunpack.c.l.b16 %v8036
  %v8098 = vunpack.c.l.b16 %v8037
  %v8099 = vunpack.c.l.b16 %v8038
  %v8100 = vunpack.c.l.b16 %v8039
  %v8101 = vunpack.c.l.b16 %v8040
  %v8102 = vunpack.c.l.b16 %v8041
  %v8103 = vunpack.c.l.b16 %v8042
  %v8104 = vunpack.c.l.b16 %v8043
  %v8105 = vunpack.c.l.b16 %v8044
  %v8106 = vunpack.c.l.b16 %v8045
  %v8107 = vunpack.c.l.b16 %v8046
  %v8108 = vunpack.c.l.b16 %v8047
  %v8109 = vunpack.c.l.b16 %v8048
  %v8110 = vunpack.c.l.b16 %v8049
  %v8111 = vunpack.c.l.b16 %v8050
  %v8112 = vunpack.c.l.b16 %v8051
  %v8113 = vunpack.c.l.b16 %v8052
  %v8114 = vunpack.c.l.b16 %v8053
  %v8115 = vunpack.c.l.b16 %v8054
  %v8116 = vpack.c.b16 %v8089, %v8088
  %v8117 = vpack.c.b16 %v8091, %v8090
  %v8118 = vpack.c.b16 %v8093, %v8092
  %v8119 = vpack.c.b16 %v8095, %v8094
  %v8120 = vpack.c.b16 %v8097, %v8096
  %v8121 = vpack.c.b16 %v8099, %v8098
  %v8122 = vpack.c.b16 %v8101, %v8100
  %v8123 = vpack.c.b16 %v8103, %v8102
  %v8124 = vpack.c.b16 %v8105, %v8104
  %v8125 = vpack.c.b16 %v8107, %v8106
  %v8126 = vpack.c.b16 %v8109, %v8108
  %v8127 = vpack.c.b16 %v8111, %v8110
  %v8128 = vpack.c.b16 %v8113, %v8112
  %v8129 = vpack.c.b16 %v8115, %v8114
  %v8145 = vsel %vm7698, %v8058, 0
  %8147 = vmatprep.subr.bf16.mxu0 0
  %8148 = vmatpush1.bf16.msra.mxu0 %v8123
  %8149 = vmatprep.subr.bf16.mxu0 0
  %8150 = vmatpush1.bf16.msra.mxu0 %v8122
  %8151 = vmatprep.subr.bf16.mxu0 0
  %8152 = vmatpush1.bf16.msra.mxu0 %v8121
  %8153 = vmatprep.subr.bf16.mxu0 0
  %8154 = vmatpush1.bf16.msra.mxu0 %v8120
  %8155 = vmatprep.subr.bf16.mxu0 0
  %8156 = vmatpush1.bf16.msra.mxu0 %v8119
  %8157 = vmatprep.subr.bf16.mxu0 0
  %8158 = vmatpush1.bf16.msra.mxu0 %v8118
  %8159 = vmatprep.subr.bf16.mxu0 0
  %8160 = vmatpush1.bf16.msra.mxu0 %v8117
  %8161 = vmatprep.subr.bf16.mxu0 0
  %8162 = vmatpush1.bf16.msra.mxu0 %v8116
  %8163 = vmatprep.subr.bf16.mxu0 0
  %8164 = vmatpush2.bf16.msra.mxu0 0
  %8165 = vmatprep.subr.bf16.mxu0 0
  %8166 = vmatpush2.bf16.msra.mxu0 0
  %8167 = vmatprep.subr.bf16.mxu0 0
  %8168 = vmatpush2.bf16.msra.mxu0 %v8129
  %8169 = vmatprep.subr.bf16.mxu0 0
  %8170 = vmatpush2.bf16.msra.mxu0 %v8128
  %8171 = vmatprep.subr.bf16.mxu0 0
  %8172 = vmatpush2.bf16.msra.mxu0 %v8127
  %8173 = vmatprep.subr.bf16.mxu0 0
  %8174 = vmatpush2.bf16.msra.mxu0 %v8126
  %8175 = vmatprep.subr.bf16.mxu0 0
  %8176 = vmatpush2.bf16.msra.mxu0 %v8125
  %8177 = vmatprep.subr.bf16.mxu0 0
  %8178 = vmatpush2.bf16.msra.mxu0 %v8124
  %8179 = vmatprep.mubr.bf16.mxu0 %v8145
  %8180 = vmatmul.mubr.bf16.gmra.mxu0 %v8057
  %v8181 = vpop.f32.mrf.mxu0
  %v8182 = vadd.f32 0.0, %v8181
  %v8183 = vpop.f32.mrf.mxu0
  %v8184 = vpop.f32.mrf.mxu0
  %v8185 = vpop.f32.mrf.mxu0
  %8186 = vdwg.mxu0
  %v8187 = vadd.f32 %v8025, %v8182
  %s8188 = scalar_lea.vmem %s5, 448
  %v8189 = vld [vmem:[%s8188] sm:$0xf]
  %v8190 = vld [vmem:[%s8188 + $0x4] sm:$0xf]
  %v8191 = vld [vmem:[%s8188 + $0x8] sm:$0xf]
  %v8192 = vld [vmem:[%s8188 + $0xc] sm:$0xf]
  %v8193 = vld [vmem:[%s8188 + $0x10] sm:$0xf]
  %v8194 = vld [vmem:[%s8188 + $0x14] sm:$0xf]
  %v8195 = vld [vmem:[%s8188 + $0x18] sm:$0xf]
  %v8196 = vld [vmem:[%s8188 + $0x1c] sm:$0xf]
  %v8197 = vld [vmem:[%s8188 + $0x20] sm:$0xf]
  %v8198 = vld [vmem:[%s8188 + $0x24] sm:$0xf]
  %v8199 = vld [vmem:[%s8188 + $0x28] sm:$0xf]
  %v8200 = vld [vmem:[%s8188 + $0x2c] sm:$0xf]
  %v8201 = vld [vmem:[%s8188 + $0x30] sm:$0xf]
  %v8202 = vld [vmem:[%s8188 + $0x34] sm:$0xf]
  %v8203 = vld [vmem:[%s8188 + $0x38] sm:$0xf]
  %v8204 = vld [vmem:[%s8188 + $0x3c] sm:$0xf]
  %v8205 = vld [vmem:[%s8188 + $0x40] sm:$0xf]
  %v8206 = vld [vmem:[%s8188 + $0x44] sm:$0xf]
  %v8207 = vld [vmem:[%s8188 + $0x48] sm:$0xf]
  %v8208 = vld [vmem:[%s8188 + $0x4c] sm:$0xf]
  %v8209 = vld [vmem:[%s8188 + $0x50] sm:$0xf]
  %v8210 = vld [vmem:[%s8188 + $0x54] sm:$0xf]
  %v8211 = vld [vmem:[%s8188 + $0x58] sm:$0xf]
  %v8212 = vld [vmem:[%s8188 + $0x5c] sm:$0xf]
  %v8213 = vld [vmem:[%s8188 + $0x60] sm:$0xf]
  %v8214 = vld [vmem:[%s8188 + $0x64] sm:$0xf]
  %v8215 = vld [vmem:[%s8188 + $0x68] sm:$0xf]
  %v8216 = vld [vmem:[%s8188 + $0x6c] sm:$0xf]
  %v8245 = vunpack.c.l.b16 %v8189
  %v8246 = vunpack.c.l.b16 %v8190
  %v8247 = vunpack.c.l.b16 %v8191
  %v8248 = vunpack.c.l.b16 %v8192
  %v8249 = vunpack.c.l.b16 %v8193
  %v8250 = vunpack.c.l.b16 %v8194
  %v8251 = vunpack.c.l.b16 %v8195
  %v8252 = vunpack.c.l.b16 %v8196
  %v8253 = vunpack.c.l.b16 %v8197
  %v8254 = vunpack.c.l.b16 %v8198
  %v8255 = vunpack.c.l.b16 %v8199
  %v8256 = vunpack.c.l.b16 %v8200
  %v8257 = vunpack.c.l.b16 %v8201
  %v8258 = vunpack.c.l.b16 %v8202
  %v8259 = vunpack.c.l.b16 %v8203
  %v8260 = vunpack.c.l.b16 %v8204
  %v8261 = vunpack.c.l.b16 %v8205
  %v8262 = vunpack.c.l.b16 %v8206
  %v8263 = vunpack.c.l.b16 %v8207
  %v8264 = vunpack.c.l.b16 %v8208
  %v8265 = vunpack.c.l.b16 %v8209
  %v8266 = vunpack.c.l.b16 %v8210
  %v8267 = vunpack.c.l.b16 %v8211
  %v8268 = vunpack.c.l.b16 %v8212
  %v8269 = vunpack.c.l.b16 %v8213
  %v8270 = vunpack.c.l.b16 %v8214
  %v8271 = vunpack.c.l.b16 %v8215
  %v8272 = vunpack.c.l.b16 %v8216
  %v8273 = vpack.c.b16 %v8246, %v8245
  %v8274 = vpack.c.b16 %v8248, %v8247
  %v8275 = vpack.c.b16 %v8250, %v8249
  %v8276 = vpack.c.b16 %v8252, %v8251
  %v8277 = vpack.c.b16 %v8254, %v8253
  %v8278 = vpack.c.b16 %v8256, %v8255
  %v8279 = vpack.c.b16 %v8258, %v8257
  %v8280 = vpack.c.b16 %v8260, %v8259
  %v8281 = vpack.c.b16 %v8262, %v8261
  %v8282 = vpack.c.b16 %v8264, %v8263
  %v8283 = vpack.c.b16 %v8266, %v8265
  %v8284 = vpack.c.b16 %v8268, %v8267
  %v8285 = vpack.c.b16 %v8270, %v8269
  %v8286 = vpack.c.b16 %v8272, %v8271
  %v8302 = vsel %vm7698, %v7549, 0
  %8304 = vmatprep.subr.bf16.mxu0 0
  %8305 = vmatpush1.bf16.msra.mxu0 %v8280
  %8306 = vmatprep.subr.bf16.mxu0 0
  %8307 = vmatpush1.bf16.msra.mxu0 %v8279
  %8308 = vmatprep.subr.bf16.mxu0 0
  %8309 = vmatpush1.bf16.msra.mxu0 %v8278
  %8310 = vmatprep.subr.bf16.mxu0 0
  %8311 = vmatpush1.bf16.msra.mxu0 %v8277
  %8312 = vmatprep.subr.bf16.mxu0 0
  %8313 = vmatpush1.bf16.msra.mxu0 %v8276
  %8314 = vmatprep.subr.bf16.mxu0 0
  %8315 = vmatpush1.bf16.msra.mxu0 %v8275
  %8316 = vmatprep.subr.bf16.mxu0 0
  %8317 = vmatpush1.bf16.msra.mxu0 %v8274
  %8318 = vmatprep.subr.bf16.mxu0 0
  %8319 = vmatpush1.bf16.msra.mxu0 %v8273
  %8320 = vmatprep.subr.bf16.mxu0 0
  %8321 = vmatpush2.bf16.msra.mxu0 0
  %8322 = vmatprep.subr.bf16.mxu0 0
  %8323 = vmatpush2.bf16.msra.mxu0 0
  %8324 = vmatprep.subr.bf16.mxu0 0
  %8325 = vmatpush2.bf16.msra.mxu0 %v8286
  %8326 = vmatprep.subr.bf16.mxu0 0
  %8327 = vmatpush2.bf16.msra.mxu0 %v8285
  %8328 = vmatprep.subr.bf16.mxu0 0
  %8329 = vmatpush2.bf16.msra.mxu0 %v8284
  %8330 = vmatprep.subr.bf16.mxu0 0
  %8331 = vmatpush2.bf16.msra.mxu0 %v8283
  %8332 = vmatprep.subr.bf16.mxu0 0
  %8333 = vmatpush2.bf16.msra.mxu0 %v8282
  %8334 = vmatprep.subr.bf16.mxu0 0
  %8335 = vmatpush2.bf16.msra.mxu0 %v8281
  %8336 = vmatprep.mubr.bf16.mxu0 %v8302
  %8337 = vmatmul.mubr.bf16.gmra.mxu0 %v7548
  %v8338 = vpop.f32.mrf.mxu0
  %v8339 = vadd.f32 0.0, %v8338
  %v8340 = vpop.f32.mrf.mxu0
  %v8341 = vpop.f32.mrf.mxu0
  %v8342 = vpop.f32.mrf.mxu0
  %8343 = vdwg.mxu0
  %v8344 = vadd.f32 %v8187, %v8339
  %s8345 = scalar_lea.vmem %s5, 560
  %v8346 = vld [vmem:[%s8345] sm:$0xf]
  %v8347 = vld [vmem:[%s8345 + $0x4] sm:$0xf]
  %v8348 = vld [vmem:[%s8345 + $0x8] sm:$0xf]
  %v8349 = vld [vmem:[%s8345 + $0xc] sm:$0xf]
  %v8350 = vld [vmem:[%s8345 + $0x10] sm:$0xf]
  %v8351 = vld [vmem:[%s8345 + $0x14] sm:$0xf]
  %v8352 = vld [vmem:[%s8345 + $0x18] sm:$0xf]
  %v8353 = vld [vmem:[%s8345 + $0x1c] sm:$0xf]
  %v8354 = vld [vmem:[%s8345 + $0x20] sm:$0xf]
  %v8355 = vld [vmem:[%s8345 + $0x24] sm:$0xf]
  %v8356 = vld [vmem:[%s8345 + $0x28] sm:$0xf]
  %v8357 = vld [vmem:[%s8345 + $0x2c] sm:$0xf]
  %v8358 = vld [vmem:[%s8345 + $0x30] sm:$0xf]
  %v8359 = vld [vmem:[%s8345 + $0x34] sm:$0xf]
  %v8360 = vld [vmem:[%s8345 + $0x38] sm:$0xf]
  %v8361 = vld [vmem:[%s8345 + $0x3c] sm:$0xf]
  %v8362 = vld [vmem:[%s8345 + $0x40] sm:$0xf]
  %v8363 = vld [vmem:[%s8345 + $0x44] sm:$0xf]
  %v8364 = vld [vmem:[%s8345 + $0x48] sm:$0xf]
  %v8365 = vld [vmem:[%s8345 + $0x4c] sm:$0xf]
  %v8366 = vld [vmem:[%s8345 + $0x50] sm:$0xf]
  %v8367 = vld [vmem:[%s8345 + $0x54] sm:$0xf]
  %v8368 = vld [vmem:[%s8345 + $0x58] sm:$0xf]
  %v8369 = vld [vmem:[%s8345 + $0x5c] sm:$0xf]
  %v8370 = vld [vmem:[%s8345 + $0x60] sm:$0xf]
  %v8371 = vld [vmem:[%s8345 + $0x64] sm:$0xf]
  %v8372 = vld [vmem:[%s8345 + $0x68] sm:$0xf]
  %v8373 = vld [vmem:[%s8345 + $0x6c] sm:$0xf]
  %v8376 = vrot.slane %v7548, 4
  %v8377 = vrot.slane %v7549, 4
  %v8407 = vunpack.c.l.b16 %v8346
  %v8408 = vunpack.c.l.b16 %v8347
  %v8409 = vunpack.c.l.b16 %v8348
  %v8410 = vunpack.c.l.b16 %v8349
  %v8411 = vunpack.c.l.b16 %v8350
  %v8412 = vunpack.c.l.b16 %v8351
  %v8413 = vunpack.c.l.b16 %v8352
  %v8414 = vunpack.c.l.b16 %v8353
  %v8415 = vunpack.c.l.b16 %v8354
  %v8416 = vunpack.c.l.b16 %v8355
  %v8417 = vunpack.c.l.b16 %v8356
  %v8418 = vunpack.c.l.b16 %v8357
  %v8419 = vunpack.c.l.b16 %v8358
  %v8420 = vunpack.c.l.b16 %v8359
  %v8421 = vunpack.c.l.b16 %v8360
  %v8422 = vunpack.c.l.b16 %v8361
  %v8423 = vunpack.c.l.b16 %v8362
  %v8424 = vunpack.c.l.b16 %v8363
  %v8425 = vunpack.c.l.b16 %v8364
  %v8426 = vunpack.c.l.b16 %v8365
  %v8427 = vunpack.c.l.b16 %v8366
  %v8428 = vunpack.c.l.b16 %v8367
  %v8429 = vunpack.c.l.b16 %v8368
  %v8430 = vunpack.c.l.b16 %v8369
  %v8431 = vunpack.c.l.b16 %v8370
  %v8432 = vunpack.c.l.b16 %v8371
  %v8433 = vunpack.c.l.b16 %v8372
  %v8434 = vunpack.c.l.b16 %v8373
  %v8435 = vpack.c.b16 %v8408, %v8407
  %v8436 = vpack.c.b16 %v8410, %v8409
  %v8437 = vpack.c.b16 %v8412, %v8411
  %v8438 = vpack.c.b16 %v8414, %v8413
  %v8439 = vpack.c.b16 %v8416, %v8415
  %v8440 = vpack.c.b16 %v8418, %v8417
  %v8441 = vpack.c.b16 %v8420, %v8419
  %v8442 = vpack.c.b16 %v8422, %v8421
  %v8443 = vpack.c.b16 %v8424, %v8423
  %v8444 = vpack.c.b16 %v8426, %v8425
  %v8445 = vpack.c.b16 %v8428, %v8427
  %v8446 = vpack.c.b16 %v8430, %v8429
  %v8447 = vpack.c.b16 %v8432, %v8431
  %v8448 = vpack.c.b16 %v8434, %v8433
  %v8464 = vsel %vm7698, %v8377, 0
  %8466 = vmatprep.subr.bf16.mxu0 0
  %8467 = vmatpush1.bf16.msra.mxu0 %v8442
  %8468 = vmatprep.subr.bf16.mxu0 0
  %8469 = vmatpush1.bf16.msra.mxu0 %v8441
  %8470 = vmatprep.subr.bf16.mxu0 0
  %8471 = vmatpush1.bf16.msra.mxu0 %v8440
  %8472 = vmatprep.subr.bf16.mxu0 0
  %8473 = vmatpush1.bf16.msra.mxu0 %v8439
  %8474 = vmatprep.subr.bf16.mxu0 0
  %8475 = vmatpush1.bf16.msra.mxu0 %v8438
  %8476 = vmatprep.subr.bf16.mxu0 0
  %8477 = vmatpush1.bf16.msra.mxu0 %v8437
  %8478 = vmatprep.subr.bf16.mxu0 0
  %8479 = vmatpush1.bf16.msra.mxu0 %v8436
  %8480 = vmatprep.subr.bf16.mxu0 0
  %8481 = vmatpush1.bf16.msra.mxu0 %v8435
  %8482 = vmatprep.subr.bf16.mxu0 0
  %8483 = vmatpush2.bf16.msra.mxu0 0
  %8484 = vmatprep.subr.bf16.mxu0 0
  %8485 = vmatpush2.bf16.msra.mxu0 0
  %8486 = vmatprep.subr.bf16.mxu0 0
  %8487 = vmatpush2.bf16.msra.mxu0 %v8448
  %8488 = vmatprep.subr.bf16.mxu0 0
  %8489 = vmatpush2.bf16.msra.mxu0 %v8447
  %8490 = vmatprep.subr.bf16.mxu0 0
  %8491 = vmatpush2.bf16.msra.mxu0 %v8446
  %8492 = vmatprep.subr.bf16.mxu0 0
  %8493 = vmatpush2.bf16.msra.mxu0 %v8445
  %8494 = vmatprep.subr.bf16.mxu0 0
  %8495 = vmatpush2.bf16.msra.mxu0 %v8444
  %8496 = vmatprep.subr.bf16.mxu0 0
  %8497 = vmatpush2.bf16.msra.mxu0 %v8443
  %8498 = vmatprep.mubr.bf16.mxu0 %v8464
  %8499 = vmatmul.mubr.bf16.gmra.mxu0 %v8376
  %v8500 = vpop.f32.mrf.mxu0
  %v8501 = vadd.f32 0.0, %v8500
  %v8502 = vpop.f32.mrf.mxu0
  %v8503 = vpop.f32.mrf.mxu0
  %v8504 = vpop.f32.mrf.mxu0
  %8505 = vdwg.mxu0
  %v8506 = vadd.f32 %v8344, %v8501
  %s8507 = scalar_lea.vmem %s5, 672
  %v8508 = vld [vmem:[%s8507] sm:$0xf]
  %v8509 = vld [vmem:[%s8507 + $0x4] sm:$0xf]
  %v8510 = vld [vmem:[%s8507 + $0x8] sm:$0xf]
  %v8511 = vld [vmem:[%s8507 + $0xc] sm:$0xf]
  %v8512 = vld [vmem:[%s8507 + $0x10] sm:$0xf]
  %v8513 = vld [vmem:[%s8507 + $0x14] sm:$0xf]
  %v8514 = vld [vmem:[%s8507 + $0x18] sm:$0xf]
  %v8515 = vld [vmem:[%s8507 + $0x1c] sm:$0xf]
  %v8516 = vld [vmem:[%s8507 + $0x20] sm:$0xf]
  %v8517 = vld [vmem:[%s8507 + $0x24] sm:$0xf]
  %v8518 = vld [vmem:[%s8507 + $0x28] sm:$0xf]
  %v8519 = vld [vmem:[%s8507 + $0x2c] sm:$0xf]
  %v8520 = vld [vmem:[%s8507 + $0x30] sm:$0xf]
  %v8521 = vld [vmem:[%s8507 + $0x34] sm:$0xf]
  %v8522 = vld [vmem:[%s8507 + $0x38] sm:$0xf]
  %v8523 = vld [vmem:[%s8507 + $0x3c] sm:$0xf]
  %v8524 = vld [vmem:[%s8507 + $0x40] sm:$0xf]
  %v8525 = vld [vmem:[%s8507 + $0x44] sm:$0xf]
  %v8526 = vld [vmem:[%s8507 + $0x48] sm:$0xf]
  %v8527 = vld [vmem:[%s8507 + $0x4c] sm:$0xf]
  %v8528 = vld [vmem:[%s8507 + $0x50] sm:$0xf]
  %v8529 = vld [vmem:[%s8507 + $0x54] sm:$0xf]
  %v8530 = vld [vmem:[%s8507 + $0x58] sm:$0xf]
  %v8531 = vld [vmem:[%s8507 + $0x5c] sm:$0xf]
  %v8532 = vld [vmem:[%s8507 + $0x60] sm:$0xf]
  %v8533 = vld [vmem:[%s8507 + $0x64] sm:$0xf]
  %v8534 = vld [vmem:[%s8507 + $0x68] sm:$0xf]
  %v8535 = vld [vmem:[%s8507 + $0x6c] sm:$0xf]
  %v8564 = vunpack.c.l.b16 %v8508
  %v8565 = vunpack.c.l.b16 %v8509
  %v8566 = vunpack.c.l.b16 %v8510
  %v8567 = vunpack.c.l.b16 %v8511
  %v8568 = vunpack.c.l.b16 %v8512
  %v8569 = vunpack.c.l.b16 %v8513
  %v8570 = vunpack.c.l.b16 %v8514
  %v8571 = vunpack.c.l.b16 %v8515
  %v8572 = vunpack.c.l.b16 %v8516
  %v8573 = vunpack.c.l.b16 %v8517
  %v8574 = vunpack.c.l.b16 %v8518
  %v8575 = vunpack.c.l.b16 %v8519
  %v8576 = vunpack.c.l.b16 %v8520
  %v8577 = vunpack.c.l.b16 %v8521
  %v8578 = vunpack.c.l.b16 %v8522
  %v8579 = vunpack.c.l.b16 %v8523
  %v8580 = vunpack.c.l.b16 %v8524
  %v8581 = vunpack.c.l.b16 %v8525
  %v8582 = vunpack.c.l.b16 %v8526
  %v8583 = vunpack.c.l.b16 %v8527
  %v8584 = vunpack.c.l.b16 %v8528
  %v8585 = vunpack.c.l.b16 %v8529
  %v8586 = vunpack.c.l.b16 %v8530
  %v8587 = vunpack.c.l.b16 %v8531
  %v8588 = vunpack.c.l.b16 %v8532
  %v8589 = vunpack.c.l.b16 %v8533
  %v8590 = vunpack.c.l.b16 %v8534
  %v8591 = vunpack.c.l.b16 %v8535
  %v8592 = vpack.c.b16 %v8565, %v8564
  %v8593 = vpack.c.b16 %v8567, %v8566
  %v8594 = vpack.c.b16 %v8569, %v8568
  %v8595 = vpack.c.b16 %v8571, %v8570
  %v8596 = vpack.c.b16 %v8573, %v8572
  %v8597 = vpack.c.b16 %v8575, %v8574
  %v8598 = vpack.c.b16 %v8577, %v8576
  %v8599 = vpack.c.b16 %v8579, %v8578
  %v8600 = vpack.c.b16 %v8581, %v8580
  %v8601 = vpack.c.b16 %v8583, %v8582
  %v8602 = vpack.c.b16 %v8585, %v8584
  %v8603 = vpack.c.b16 %v8587, %v8586
  %v8604 = vpack.c.b16 %v8589, %v8588
  %v8605 = vpack.c.b16 %v8591, %v8590
  %v8621 = vsel %vm7698, %v7551, 0
  %8623 = vmatprep.subr.bf16.mxu0 0
  %8624 = vmatpush1.bf16.msra.mxu0 %v8599
  %8625 = vmatprep.subr.bf16.mxu0 0
  %8626 = vmatpush1.bf16.msra.mxu0 %v8598
  %8627 = vmatprep.subr.bf16.mxu0 0
  %8628 = vmatpush1.bf16.msra.mxu0 %v8597
  %8629 = vmatprep.subr.bf16.mxu0 0
  %8630 = vmatpush1.bf16.msra.mxu0 %v8596
  %8631 = vmatprep.subr.bf16.mxu0 0
  %8632 = vmatpush1.bf16.msra.mxu0 %v8595
  %8633 = vmatprep.subr.bf16.mxu0 0
  %8634 = vmatpush1.bf16.msra.mxu0 %v8594
  %8635 = vmatprep.subr.bf16.mxu0 0
  %8636 = vmatpush1.bf16.msra.mxu0 %v8593
  %8637 = vmatprep.subr.bf16.mxu0 0
  %8638 = vmatpush1.bf16.msra.mxu0 %v8592
  %8639 = vmatprep.subr.bf16.mxu0 0
  %8640 = vmatpush2.bf16.msra.mxu0 0
  %8641 = vmatprep.subr.bf16.mxu0 0
  %8642 = vmatpush2.bf16.msra.mxu0 0
  %8643 = vmatprep.subr.bf16.mxu0 0
  %8644 = vmatpush2.bf16.msra.mxu0 %v8605
  %8645 = vmatprep.subr.bf16.mxu0 0
  %8646 = vmatpush2.bf16.msra.mxu0 %v8604
  %8647 = vmatprep.subr.bf16.mxu0 0
  %8648 = vmatpush2.bf16.msra.mxu0 %v8603
  %8649 = vmatprep.subr.bf16.mxu0 0
  %8650 = vmatpush2.bf16.msra.mxu0 %v8602
  %8651 = vmatprep.subr.bf16.mxu0 0
  %8652 = vmatpush2.bf16.msra.mxu0 %v8601
  %8653 = vmatprep.subr.bf16.mxu0 0
  %8654 = vmatpush2.bf16.msra.mxu0 %v8600
  %8655 = vmatprep.mubr.bf16.mxu0 %v8621
  %8656 = vmatmul.mubr.bf16.gmra.mxu0 %v7550
  %v8657 = vpop.f32.mrf.mxu0
  %v8658 = vadd.f32 0.0, %v8657
  %v8659 = vpop.f32.mrf.mxu0
  %v8660 = vpop.f32.mrf.mxu0
  %v8661 = vpop.f32.mrf.mxu0
  %8662 = vdwg.mxu0
  %v8663 = vadd.f32 %v8506, %v8658
  %v8664 = vld [vmem:[%s6] sm:$0x1]
  %v8666 = vlaneseq
  %v8667 = vshrl.u32 %v8666, 7
  %v8668 = vsub.s32 0, %v8667
  %v8669 = vrot.slane %v8664, %v8668
  %v8671 = vadd.f32 %v8663, %v8669
  %8672 = vst [vmem:[%s7] sm:$0xff] %v8671
  // Predicated region
  $region30: #{cnn_forward.1} parent=0 // pred_check
    _
  $region31: #{cnn_forward.1} parent=0 // pred_check_branch
    %8674 = sbr.rel (0) target = $region33
  $region32: #{cnn_forward.1} parent=0 // pred_region
    _
  $region33: #{cnn_forward.1} parent=0 // pred_fallthru
    _
  // Predicated region
  $region34: #{cnn_forward.1} parent=0 // pred_check
    _
  $region35: #{cnn_forward.1} parent=0 // pred_check_branch
    %8676 = sbr.rel (0) target = $region37
  $region36: #{cnn_forward.1} parent=0 // pred_region
    _
  $region37: #{cnn_forward.1} parent=0 // pred_fallthru
    _

</llo_original>
